<compile_context>
chip_gen: v5e
topology: v5e:2x2
jax: 0.10.0
libtpu: 0.0.40
codegen_flags: <defaults>
</compile_context>

<pallas_src>
from functools import lru_cache

import numpy as np
import jax
import jax.numpy as jnp
from jax import lax
from jax.experimental import pallas as pl
from jax.experimental.pallas import tpu as pltpu


# --------------------------------------------------------------------------
# Pallas kernels
# --------------------------------------------------------------------------

def _seg_fused_kernel(mT_ref, yT_ref, b1_ref, w2T_ref, b2_ref, o_ref):
    # One (row-tile, batch) program of the fused segmentation head, computed
    # transposed so every matmul output and the final store are lane-dense:
    #   accT = Ycat[n].T @ McatT_tile        (15C, Kpad) @ (Kpad, TR)
    #   hT   = relu(accT + b1)
    #   segT = W2.T @ hT + b2                -> stored as (nc, TR)
    accT = jnp.dot(yT_ref[0], mT_ref[...], preferred_element_type=jnp.float32)
    hT = jnp.maximum(accT + b1_ref[...], 0.0)
    segT = jnp.dot(w2T_ref[...], hT,
                   preferred_element_type=jnp.float32) + b2_ref[...]
    o_ref[0] = segT.astype(o_ref.dtype)


def _pred_fused_kernel(x_ref, w1_ref, b1_ref, w2_ref, b2_ref, w3_ref, b3_ref,
                       wp_ref, bp_ref, f1w_ref, f1b_ref, f2w_ref, f2b_ref,
                       o_ref):
    # Fused lastPredictor + band_attention for the WHOLE batch:
    # the three 3x3 convs (BN folded) have been folded into one matmul each
    # (tap/shift structure baked into Wbig on the host), the avg-pool + 1x1
    # conv are one matmul, then Linear -> ReLU -> Linear -> Sigmoid -> gate.
    f32 = jnp.float32
    h = x_ref[...].astype(f32)                                        # (N, S*8C)
    h = jnp.maximum(jnp.dot(h, w1_ref[...], preferred_element_type=f32)
                    + b1_ref[...], 0.0)                               # (N, S*4C)
    h = jnp.maximum(jnp.dot(h, w2_ref[...], preferred_element_type=f32)
                    + b2_ref[...], 0.0)                               # (N, S*2C)
    h = jnp.maximum(jnp.dot(h, w3_ref[...], preferred_element_type=f32)
                    + b3_ref[...], 0.0)                               # (N, S*C)
    v = jnp.dot(h, wp_ref[...], preferred_element_type=f32) + bp_ref[...]
    a = jnp.maximum(jnp.dot(v, f1w_ref[...], preferred_element_type=f32)
                    + f1b_ref[...], 0.0)
    z = jnp.dot(a, f2w_ref[...], preferred_element_type=f32) + f2b_ref[...]
    att = 1.0 / (1.0 + jnp.exp(-z))
    # TODO(synk): training-mode Gaussian noise / Dropout not implemented (eval path).
    o_ref[...] = (v * att).astype(o_ref.dtype)


# --------------------------------------------------------------------------
# VMEM budget / tiling
# --------------------------------------------------------------------------

def _vmem_budget_bytes():
    # v7x: 64 MiB physical -> 32 MiB budget; v5e/v6e: 128 MiB -> 64 MiB.
    try:
        cap = int(pltpu.get_tpu_info().vmem_capacity_bytes)
    except Exception:
        cap = 64 * 1024 * 1024
    return max(32 * 1024 * 1024, cap // 2)


def _pick_tile_rows(P4, Kpad, c15, nc, N, budget):
    def rup(x, m):
        return ((x + m - 1) // m) * m

    def usage(tr):
        m_buf = 2 * Kpad * tr * 4                 # McatT double buffer
        y_buf = 2 * rup(c15, 8) * Kpad * 4        # YcatT double buffer
        o_buf = 2 * rup(nc, 8) * tr * 4           # output double buffer
        tmp = 3 * rup(c15, 8) * tr * 4            # accT / hT / temporaries
        return m_buf + y_buf + o_buf + tmp + (2 << 20)   # + headroom

    cands = [d for d in range(128, P4 + 1, 128) if P4 % d == 0]
    if not cands:
        cands = [P4]
    cands = sorted(set(cands), reverse=True)

    tr = cands[-1]
    for c in cands:
        if usage(c) <= budget:
            tr = c
            break
    # Keep >=2 parallel programs when the batch alone can't (v7x has 2 TCs).
    if N * (P4 // tr) < 2 and len(cands) > 1:
        for c in cands:
            if c < tr:
                tr = c
                break
    return tr


# --------------------------------------------------------------------------
# Pallas wrappers
# --------------------------------------------------------------------------

def _seg_fused(mcatT, yT, b1, w2, b2):
    # mcatT: (Kpad, P4)   composed+concatenated bilinear matrix, transposed
    # yT   : (N, 15C, Kpad) per-branch projected features, transposed, K-padded
    Kpad, P4 = mcatT.shape
    N, c15, _ = yT.shape
    nc = w2.shape[-1]

    b1c = b1.reshape(c15, 1)
    w2T = jnp.transpose(w2)            # (nc, 15C)
    b2c = b2.reshape(nc, 1)

    budget = _vmem_budget_bytes()
    TR = _pick_tile_rows(P4, Kpad, c15, nc, N, budget)
    R = P4 // TR

    return pl.pallas_call(
        _seg_fused_kernel,
        out_shape=jax.ShapeDtypeStruct((N, nc, P4), yT.dtype),
        grid=(R, N),
        in_specs=[
            pl.BlockSpec((Kpad, TR), lambda r, n: (0, r)),
            pl.BlockSpec((1, c15, Kpad), lambda r, n: (n, 0, 0)),
            pl.BlockSpec((c15, 1), lambda r, n: (0, 0)),
            pl.BlockSpec((nc, c15), lambda r, n: (0, 0)),
            pl.BlockSpec((nc, 1), lambda r, n: (0, 0)),
        ],
        out_specs=pl.BlockSpec((1, nc, TR), lambda r, n: (n, 0, r)),
        compiler_params=pltpu.CompilerParams(
            dimension_semantics=("parallel", "parallel"),
            vmem_limit_bytes=budget),
    )(mcatT, yT, b1c, w2T, b2c)


def _pred_fused(x_flat, w1, b1, w2, b2, w3, b3, wp, bp, f1w, f1b, f2w, f2b):
    N, _ = x_flat.shape
    B = wp.shape[-1]

    def full(a):
        return pl.BlockSpec(a.shape, lambda i, _nd=a.ndim: (0,) * _nd)

    return pl.pallas_call(
        _pred_fused_kernel,
        out_shape=jax.ShapeDtypeStruct((N, B), x_flat.dtype),
        grid=(1,),
        in_specs=[full(x_flat), full(w1), full(b1), full(w2), full(b2),
                  full(w3), full(b3), full(wp), full(bp),
                  full(f1w), full(f1b), full(f2w), full(f2b)],
        out_specs=pl.BlockSpec((N, B), lambda i: (0, 0)),
        compiler_params=pltpu.CompilerParams(
            dimension_semantics=("arbitrary",),
            vmem_limit_bytes=_vmem_budget_bytes()),
    )(x_flat, w1, b1, w2, b2, w3, b3, wp, bp, f1w, f1b, f2w, f2b)


# --------------------------------------------------------------------------
# Glue: interpolation / shift matrices, BN folding, parameter init
# --------------------------------------------------------------------------

@lru_cache(maxsize=None)
def _interp_matrix_1d(out_size, in_size):
    # bilinear, align_corners=True
    # TODO(synk): verify the out_size==1 branch against F.interpolate if
    # 1-pixel maps can occur (not exercised here).
    m = np.zeros((out_size, in_size), np.float32)
    if in_size == 1:
        m[:, 0] = 1.0
        return m
    if out_size == 1:
        m[0, 0] = 1.0
        return m
    scale = (in_size - 1) / (out_size - 1)
    for o in range(out_size):
        src = o * scale
        i0 = int(np.floor(src))
        i1 = min(i0 + 1, in_size - 1)
        w1 = src - i0
        m[o, i0] += 1.0 - w1
        m[o, i1] += w1
    return m


def _interp_matrix_2d(out_hw, in_hw):
    # (Hout*Wout, Hin*Win), row-major pixel order, separable kron structure
    return np.kron(_interp_matrix_1d(out_hw[0], in_hw[0]),
                   _interp_matrix_1d(out_hw[1], in_hw[1])).astype(np.float32)


@lru_cache(maxsize=None)
def _build_mcat_T(out_hw, large_hw, mid_hw, small_hw, tiny_hw, kpad):
    # Per-branch composed bilinear matrices [4x up] o [branch up], h-stacked
    # along the shared source-pixel axis, zero-padded to kpad, transposed.
    mb = _interp_matrix_2d(out_hw, large_hw)
    blocks = [mb,
              mb @ _interp_matrix_2d(large_hw, mid_hw),
              mb @ _interp_matrix_2d(large_hw, small_hw),
              mb @ _interp_matrix_2d(large_hw, tiny_hw)]
    mcat = np.concatenate(blocks, axis=1).astype(np.float32)   # (P4, Ktot)
    ktot = mcat.shape[1]
    if kpad > ktot:
        mcat = np.concatenate(
            [mcat, np.zeros((mcat.shape[0], kpad - ktot), np.float32)], axis=1)
    return np.ascontiguousarray(mcat.T)                        # (Kpad, P4)


@lru_cache(maxsize=None)
def _shift_matrices(H, W):
    # 9 zero-padded shift matrices for a 3x3 conv on an HxW map (row-major
    # pixels).  T[t] @ x gives, per output pixel, the input pixel of tap t
    # (dy, dx), or 0 when the tap falls outside the map.
    S = H * W
    T = np.zeros((9, S, S), np.float32)
    for dy in range(3):
        for dx in range(3):
            t = dy * 3 + dx
            for i in range(H):
                ii = i + dy - 1
                if ii < 0 or ii >= H:
                    continue
                for j in range(W):
                    jj = j + dx - 1
                    if jj < 0 or jj >= W:
                        continue
                    T[t, i * W + j, ii * W + jj] = 1.0
    return T


def fold_bn(w, b, gamma, beta, mean, var, eps=1e-5):
    # eval-mode BatchNorm folded into preceding conv (out-channel = last dim).
    s = gamma / jnp.sqrt(var + eps)
    return w * s, (b - mean) * s + beta


def init_params(key, C, num_class, bands_num):
    c15 = 15 * C
    ks = jax.random.split(key, 24)

    def nrm(k, shape, fan_in):
        return (jax.random.normal(k, shape, jnp.float32) /
                np.sqrt(float(fan_in))).astype(jnp.float32)

    def bnp(k, ch):
        k1, k2, k3, k4 = jax.random.split(k, 4)
        return dict(gamma=1.0 + 0.1 * jax.random.normal(k1, (ch,), jnp.float32),
                    beta=0.1 * jax.random.normal(k2, (ch,), jnp.float32),
                    mean=0.1 * jax.random.normal(k3, (ch,), jnp.float32),
                    var=jax.random.uniform(k4, (ch,), jnp.float32, 0.5, 1.5))

    p = {}
    # lastlayer: Conv1x1(15C->15C) + BN + ReLU + Conv1x1(15C->num_class)
    p['ll_w1'] = nrm(ks[0], (c15, c15), c15)
    p['ll_b1'] = 0.1 * jax.random.normal(ks[1], (c15,), jnp.float32)
    p['ll_bn'] = bnp(ks[2], c15)
    p['ll_w2'] = nrm(ks[3], (c15, num_class), c15)
    p['ll_b2'] = 0.1 * jax.random.normal(ks[4], (num_class,), jnp.float32)
    # lastPredictor 3x3 convs, stored as (9, Cin, Cout) [dy*3+dx major]
    p['p_w1'] = nrm(ks[5], (9, 8 * C, 4 * C), 9 * 8 * C)
    p['p_b1'] = 0.1 * jax.random.normal(ks[6], (4 * C,), jnp.float32)
    p['p_bn1'] = bnp(ks[7], 4 * C)
    p['p_w2'] = nrm(ks[8], (9, 4 * C, 2 * C), 9 * 4 * C)
    p['p_b2'] = 0.1 * jax.random.normal(ks[9], (2 * C,), jnp.float32)
    p['p_bn2'] = bnp(ks[10], 2 * C)
    p['p_w3'] = nrm(ks[11], (9, 2 * C, C), 9 * 2 * C)
    p['p_b3'] = 0.1 * jax.random.normal(ks[12], (C,), jnp.float32)
    p['p_bn3'] = bnp(ks[13], C)
    p['p_wc'] = nrm(ks[14], (C, bands_num), C)
    p['p_bc'] = 0.1 * jax.random.normal(ks[15], (bands_num,), jnp.float32)
    # band_attention MLP
    b4 = bands_num // 4
    p['fc1_w'] = nrm(ks[16], (bands_num, b4), bands_num)
    p['fc1_b'] = 0.1 * jax.random.normal(ks[17], (b4,), jnp.float32)
    p['fc2_w'] = nrm(ks[18], (b4, bands_num), b4)
    p['fc2_b'] = 0.1 * jax.random.normal(ks[19], (bands_num,), jnp.float32)
    return p


# --------------------------------------------------------------------------
# Forward pass (inference semantics of finalStage.forward)
# --------------------------------------------------------------------------

def final_stage_forward(x_large, x_middle, x_small, x_tiny, params):
    # inputs NCHW (like PyTorch); returns (out_seg NCHW, x_pred_bands (N, B))
    N, C, H, W = x_large.shape
    Hm, Wm = x_middle.shape[2:]
    Hs, Ws = x_small.shape[2:]
    Ht, Wt = x_tiny.shape[2:]
    H4, W4 = 4 * H, 4 * W
    num_class = params['ll_w2'].shape[-1]
    c15 = 15 * C

    # ---- segmentation head -------------------------------------------------
    Ktot = H * W + Hm * Wm + Hs * Ws + Ht * Wt
    Kpad = max(128, ((Ktot + 127) // 128) * 128)
    mcatT = jnp.asarray(_build_mcat_T((H4, W4), (H, W), (Hm, Wm),
                                      (Hs, Ws), (Ht, Wt), Kpad))    # (Kpad, P4)

    # Fold BN into the first 1x1 conv and split by input-channel block
    # (torch.cat order: large C, middle 2C, small 4C, tiny 8C).
    w1f, b1f = fold_bn(params['ll_w1'], params['ll_b1'], **params['ll_bn'])
    w1_l, w1_m = w1f[:C], w1f[C:3 * C]
    w1_s, w1_t = w1f[3 * C:7 * C], w1f[7 * C:15 * C]

    def proj_T(x, w):                    # (N,c,h,w) -> (N, 15C, h*w)
        n, c, h, wd = x.shape
        xp = jnp.transpose(x, (0, 2, 3, 1)).reshape(n, h * wd, c)
        return jnp.einsum('nsc,cd->nds', xp, w)

    yT = jnp.concatenate([proj_T(x_large, w1_l), proj_T(x_middle, w1_m),
                          proj_T(x_small, w1_s), proj_T(x_tiny, w1_t)],
                         axis=2)                                    # (N,15C,Ktot)
    if Kpad > Ktot:
        yT = jnp.pad(yT, ((0, 0), (0, 0), (0, Kpad - Ktot)))

    seg = _seg_fused(mcatT, yT, b1f, params['ll_w2'], params['ll_b2'])
    out_seg = seg.reshape(N, num_class, H4, W4)     # channel-major: free reshape

    # ---- lastPredictor + band_attention (eval mode) -------------------------
    pw1, pb1 = fold_bn(params['p_w1'], params['p_b1'], **params['p_bn1'])
    pw2, pb2 = fold_bn(params['p_w2'], params['p_b2'], **params['p_bn2'])
    pw3, pb3 = fold_bn(params['p_w3'], params['p_b3'], **params['p_bn3'])

    S = Ht * Wt
    T = jnp.asarray(_shift_matrices(Ht, Wt))                        # (9, S, S)

    def fold_taps(w9, b, cin, cout):
        # Wbig[(j*cin+ci),(i*cout+co)] = sum_t T[t,i,j] * w9[t,ci,co]
        wbig = jnp.einsum('tij,tcd->jcid', T, w9).reshape(S * cin, S * cout)
        bbig = jnp.tile(b, S).reshape(1, S * cout)
        return wbig, bbig

    W1b, B1b = fold_taps(pw1, pb1, 8 * C, 4 * C)
    W2b, B2b = fold_taps(pw2, pb2, 4 * C, 2 * C)
    W3b, B3b = fold_taps(pw3, pb3, 2 * C, C)
    Wp = jnp.tile(params['p_wc'], (S, 1)) / float(S)                # pool + 1x1
    Bp = params['p_bc'].reshape(1, -1)

    x_flat = jnp.transpose(x_tiny, (0, 2, 3, 1)).reshape(N, S * 8 * C)
    x_pred_bands = _pred_fused(x_flat, W1b, B1b, W2b, B2b, W3b, B3b, Wp, Bp,
                               params['fc1_w'], params['fc1_b'].reshape(1, -1),
                               params['fc2_w'], params['fc2_b'].reshape(1, -1))
    return out_seg, x_pred_bands


# --------------------------------------------------------------------------
# Pure-JAX reference (mirrors the PyTorch eval-mode forward)
# --------------------------------------------------------------------------

def reference_forward(x_large, x_middle, x_small, x_tiny, params):
    N, C, H, W = x_large.shape

    def up(x_nchw, Hout, Wout):
        n, ch, hin, win = x_nchw.shape
        m = jnp.asarray(_interp_matrix_2d((Hout, Wout), (hin, win)))
        y = jnp.einsum('op,ncp->nco', m, x_nchw.reshape(n, ch, hin * win))
        return y.reshape(n, ch, Hout, Wout)

    xm = up(x_middle, H, W)
    xs = up(x_small, H, W)
    xtu = up(x_tiny, H, W)
    cat = jnp.concatenate([x_large, xm, xs, xtu], axis=1)
    cat_up = up(cat, 4 * H, 4 * W)

    w1f, b1f = fold_bn(params['ll_w1'], params['ll_b1'], **params['ll_bn'])
    pix = jnp.transpose(cat_up, (0, 2, 3, 1)).reshape(-1, 15 * C)
    hh = jnp.maximum(pix @ w1f + b1f, 0.0)
    seg = hh @ params['ll_w2'] + params['ll_b2']
    out_seg = jnp.transpose(seg.reshape(N, 4 * H, 4 * W, -1), (0, 3, 1, 2))

    def conv3(x_nhwc, w9, b):
        cin, cout = w9.shape[1], w9.shape[2]
        w = w9.reshape(3, 3, cin, cout)
        y = lax.conv_general_dilated(x_nhwc, w, (1, 1), 'SAME',
                                     dimension_numbers=('NHWC', 'HWIO', 'NHWC'))
        return jnp.maximum(y + b, 0.0)

    xt = jnp.transpose(x_tiny, (0, 2, 3, 1))
    pw1, pb1 = fold_bn(params['p_w1'], params['p_b1'], **params['p_bn1'])
    pw2, pb2 = fold_bn(params['p_w2'], params['p_b2'], **params['p_bn2'])
    pw3, pb3 = fold_bn(params['p_w3'], params['p_b3'], **params['p_bn3'])
    h = conv3(xt, pw1, pb1)
    h = conv3(h, pw2, pb2)
    h = conv3(h, pw3, pb3)
    v = jnp.mean(jnp.einsum('nhwc,cb->nhwb', h, params['p_wc']) + params['p_bc'],
                 axis=(1, 2))
    a1 = jnp.maximum(v @ params['fc1_w'] + params['fc1_b'], 0.0)
    att = jax.nn.sigmoid(a1 @ params['fc2_w'] + params['fc2_b'])
    return out_seg, v * att


# --------------------------------------------------------------------------

if __name__ == "__main__":
    C, num_class, bands_num = 4, 6, 8
    N, H, W = 2, 16, 16

    key = jax.random.PRNGKey(0)
    k_in, k_p = jax.random.split(key)
    k1, k2, k3, k4 = jax.random.split(k_in, 4)
    x_large = jax.random.normal(k1, (N, C, H, W), jnp.float32)
    x_middle = jax.random.normal(k2, (N, 2 * C, H // 2, W // 2), jnp.float32)
    x_small = jax.random.normal(k3, (N, 4 * C, H // 4, W // 4), jnp.float32)
    x_tiny = jax.random.normal(k4, (N, 8 * C, H // 8, W // 8), jnp.float32)
    params = init_params(k_p, C, num_class, bands_num)

    fwd = jax.jit(final_stage_forward)
    out_seg, x_pred_bands = fwd(x_large, x_middle, x_small, x_tiny, params)
    jax.block_until_ready((out_seg, x_pred_bands))

    assert out_seg.shape == (N, num_class, 4 * H, 4 * W)
    assert x_pred_bands.shape == (N, bands_num)

    ref_seg, ref_bands = reference_forward(
        x_large, x_middle, x_small, x_tiny, params)
    np.testing.assert_allclose(np.asarray(out_seg), np.asarray(ref_seg),
                               rtol=2e-3, atol=2e-3)
    np.testing.assert_allclose(np.asarray(x_pred_bands), np.asarray(ref_bands),
                               rtol=2e-3, atol=2e-3)

    print("KERNEL_OK")
</pallas_src>

<mosaic_0001>
module attributes {stable_mosaic.version = 11 : i64} {
  func.func @_pred_fused_kernel(%arg0: i32, %arg1: memref<2x128xf32, #tpu.memory_space<vmem>>, %arg2: memref<128x64xf32, #tpu.memory_space<vmem>>, %arg3: memref<1x64xf32, #tpu.memory_space<vmem>>, %arg4: memref<64x32xf32, #tpu.memory_space<vmem>>, %arg5: memref<1x32xf32, #tpu.memory_space<vmem>>, %arg6: memref<32x16xf32, #tpu.memory_space<vmem>>, %arg7: memref<1x16xf32, #tpu.memory_space<vmem>>, %arg8: memref<16x8xf32, #tpu.memory_space<vmem>>, %arg9: memref<1x8xf32, #tpu.memory_space<vmem>>, %arg10: memref<8x2xf32, #tpu.memory_space<vmem>>, %arg11: memref<1x2xf32, #tpu.memory_space<vmem>>, %arg12: memref<2x8xf32, #tpu.memory_space<vmem>>, %arg13: memref<1x8xf32, #tpu.memory_space<vmem>>, %arg14: memref<2x8xf32, #tpu.memory_space<vmem>>) attributes {dimension_semantics = [#tpu.dimension_semantics<arbitrary>], iteration_bounds = array<i64: 1>, scalar_prefetch = 0 : i64, scratch_operands = 0 : i64, tpu.core_type = #tpu.core_type<tc>, window_params = [{pipeline_mode = #tpu.pipeline_mode<synchronous>, transform_indices = @transform_0, window_bounds = array<i64: 2, 128>}, {pipeline_mode = #tpu.pipeline_mode<synchronous>, transform_indices = @transform_1, window_bounds = array<i64: 128, 64>}, {pipeline_mode = #tpu.pipeline_mode<synchronous>, transform_indices = @transform_2, window_bounds = array<i64: 1, 64>}, {pipeline_mode = #tpu.pipeline_mode<synchronous>, transform_indices = @transform_3, window_bounds = array<i64: 64, 32>}, {pipeline_mode = #tpu.pipeline_mode<synchronous>, transform_indices = @transform_4, window_bounds = array<i64: 1, 32>}, {pipeline_mode = #tpu.pipeline_mode<synchronous>, transform_indices = @transform_5, window_bounds = array<i64: 32, 16>}, {pipeline_mode = #tpu.pipeline_mode<synchronous>, transform_indices = @transform_6, window_bounds = array<i64: 1, 16>}, {pipeline_mode = #tpu.pipeline_mode<synchronous>, transform_indices = @transform_7, window_bounds = array<i64: 16, 8>}, {pipeline_mode = #tpu.pipeline_mode<synchronous>, transform_indices = @transform_8, window_bounds = array<i64: 1, 8>}, {pipeline_mode = #tpu.pipeline_mode<synchronous>, transform_indices = @transform_9, window_bounds = array<i64: 8, 2>}, {pipeline_mode = #tpu.pipeline_mode<synchronous>, transform_indices = @transform_10, window_bounds = array<i64: 1, 2>}, {pipeline_mode = #tpu.pipeline_mode<synchronous>, transform_indices = @transform_11, window_bounds = array<i64: 2, 8>}, {pipeline_mode = #tpu.pipeline_mode<synchronous>, transform_indices = @transform_12, window_bounds = array<i64: 1, 8>}, {pipeline_mode = #tpu.pipeline_mode<synchronous>, transform_indices = @transform_13, window_bounds = array<i64: 2, 8>}]} {
    %c0 = arith.constant 0 : index
    %c0_0 = arith.constant 0 : index
    %0 = vector.load %arg1[%c0, %c0_0] : memref<2x128xf32, #tpu.memory_space<vmem>>, vector<2x128xf32>
    %c0_1 = arith.constant 0 : index
    %c0_2 = arith.constant 0 : index
    %1 = vector.load %arg2[%c0_1, %c0_2] : memref<128x64xf32, #tpu.memory_space<vmem>>, vector<128x64xf32>
    %cst = arith.constant dense<0.000000e+00> : vector<2x64xf32>
    %2 = tpu.matmul %0, %1, %cst {dimension_numbers = #tpu.dot_dimension_numbers<[1], [0], [0], [1], [0, 0, 1, 1], [], []>} : vector<2x128xf32>, vector<128x64xf32>, vector<2x64xf32> -> vector<2x64xf32>
    %c0_3 = arith.constant 0 : index
    %c0_4 = arith.constant 0 : index
    %3 = vector.load %arg3[%c0_3, %c0_4] : memref<1x64xf32, #tpu.memory_space<vmem>>, vector<1x64xf32>
    %4 = vector.broadcast %3 : vector<1x64xf32> to vector<2x64xf32>
    %5 = arith.addf %2, %4 : vector<2x64xf32>
    %cst_5 = arith.constant 0.000000e+00 : f32
    %6 = vector.broadcast %cst_5 : f32 to vector<2x64xf32>
    %7 = arith.maximumf %5, %6 : vector<2x64xf32>
    %c0_6 = arith.constant 0 : index
    %c0_7 = arith.constant 0 : index
    %8 = vector.load %arg4[%c0_6, %c0_7] : memref<64x32xf32, #tpu.memory_space<vmem>>, vector<64x32xf32>
    %cst_8 = arith.constant dense<0.000000e+00> : vector<2x32xf32>
    %9 = tpu.matmul %7, %8, %cst_8 {dimension_numbers = #tpu.dot_dimension_numbers<[1], [0], [0], [1], [0, 0, 1, 1], [], []>} : vector<2x64xf32>, vector<64x32xf32>, vector<2x32xf32> -> vector<2x32xf32>
    %c0_9 = arith.constant 0 : index
    %c0_10 = arith.constant 0 : index
    %10 = vector.load %arg5[%c0_9, %c0_10] : memref<1x32xf32, #tpu.memory_space<vmem>>, vector<1x32xf32>
    %11 = vector.broadcast %10 : vector<1x32xf32> to vector<2x32xf32>
    %12 = arith.addf %9, %11 : vector<2x32xf32>
    %cst_11 = arith.constant 0.000000e+00 : f32
    %13 = vector.broadcast %cst_11 : f32 to vector<2x32xf32>
    %14 = arith.maximumf %12, %13 : vector<2x32xf32>
    %c0_12 = arith.constant 0 : index
    %c0_13 = arith.constant 0 : index
    %15 = vector.load %arg6[%c0_12, %c0_13] : memref<32x16xf32, #tpu.memory_space<vmem>>, vector<32x16xf32>
    %cst_14 = arith.constant dense<0.000000e+00> : vector<2x16xf32>
    %16 = tpu.matmul %14, %15, %cst_14 {dimension_numbers = #tpu.dot_dimension_numbers<[1], [0], [0], [1], [0, 0, 1, 1], [], []>} : vector<2x32xf32>, vector<32x16xf32>, vector<2x16xf32> -> vector<2x16xf32>
    %c0_15 = arith.constant 0 : index
    %c0_16 = arith.constant 0 : index
    %17 = vector.load %arg7[%c0_15, %c0_16] : memref<1x16xf32, #tpu.memory_space<vmem>>, vector<1x16xf32>
    %18 = vector.broadcast %17 : vector<1x16xf32> to vector<2x16xf32>
    %19 = arith.addf %16, %18 : vector<2x16xf32>
    %cst_17 = arith.constant 0.000000e+00 : f32
    %20 = vector.broadcast %cst_17 : f32 to vector<2x16xf32>
    %21 = arith.maximumf %19, %20 : vector<2x16xf32>
    %c0_18 = arith.constant 0 : index
    %c0_19 = arith.constant 0 : index
    %22 = vector.load %arg8[%c0_18, %c0_19] : memref<16x8xf32, #tpu.memory_space<vmem>>, vector<16x8xf32>
    %cst_20 = arith.constant dense<0.000000e+00> : vector<2x8xf32>
    %23 = tpu.matmul %21, %22, %cst_20 {dimension_numbers = #tpu.dot_dimension_numbers<[1], [0], [0], [1], [0, 0, 1, 1], [], []>} : vector<2x16xf32>, vector<16x8xf32>, vector<2x8xf32> -> vector<2x8xf32>
    %c0_21 = arith.constant 0 : index
    %c0_22 = arith.constant 0 : index
    %24 = vector.load %arg9[%c0_21, %c0_22] : memref<1x8xf32, #tpu.memory_space<vmem>>, vector<1x8xf32>
    %25 = vector.broadcast %24 : vector<1x8xf32> to vector<2x8xf32>
    %26 = arith.addf %23, %25 : vector<2x8xf32>
    %c0_23 = arith.constant 0 : index
    %c0_24 = arith.constant 0 : index
    %27 = vector.load %arg10[%c0_23, %c0_24] : memref<8x2xf32, #tpu.memory_space<vmem>>, vector<8x2xf32>
    %cst_25 = arith.constant dense<0.000000e+00> : vector<2x2xf32>
    %28 = tpu.matmul %26, %27, %cst_25 {dimension_numbers = #tpu.dot_dimension_numbers<[1], [0], [0], [1], [0, 0, 1, 1], [], []>} : vector<2x8xf32>, vector<8x2xf32>, vector<2x2xf32> -> vector<2x2xf32>
    %c0_26 = arith.constant 0 : index
    %c0_27 = arith.constant 0 : index
    %29 = vector.load %arg11[%c0_26, %c0_27] : memref<1x2xf32, #tpu.memory_space<vmem>>, vector<1x2xf32>
    %30 = vector.broadcast %29 : vector<1x2xf32> to vector<2x2xf32>
    %31 = arith.addf %28, %30 : vector<2x2xf32>
    %cst_28 = arith.constant 0.000000e+00 : f32
    %32 = vector.broadcast %cst_28 : f32 to vector<2x2xf32>
    %33 = arith.maximumf %31, %32 : vector<2x2xf32>
    %c0_29 = arith.constant 0 : index
    %c0_30 = arith.constant 0 : index
    %34 = vector.load %arg12[%c0_29, %c0_30] : memref<2x8xf32, #tpu.memory_space<vmem>>, vector<2x8xf32>
    %cst_31 = arith.constant dense<0.000000e+00> : vector<2x8xf32>
    %35 = tpu.matmul %33, %34, %cst_31 {dimension_numbers = #tpu.dot_dimension_numbers<[1], [0], [0], [1], [0, 0, 1, 1], [], []>} : vector<2x2xf32>, vector<2x8xf32>, vector<2x8xf32> -> vector<2x8xf32>
    %c0_32 = arith.constant 0 : index
    %c0_33 = arith.constant 0 : index
    %36 = vector.load %arg13[%c0_32, %c0_33] : memref<1x8xf32, #tpu.memory_space<vmem>>, vector<1x8xf32>
    %37 = vector.broadcast %36 : vector<1x8xf32> to vector<2x8xf32>
    %38 = arith.addf %35, %37 : vector<2x8xf32>
    %cst_34 = arith.constant 0.000000e+00 : f32
    %39 = vector.broadcast %cst_34 : f32 to vector<2x8xf32>
    %40 = arith.subf %39, %38 : vector<2x8xf32>
    %41 = math.exp %40 : vector<2x8xf32>
    %cst_35 = arith.constant 1.000000e+00 : f32
    %42 = vector.broadcast %cst_35 : f32 to vector<2x8xf32>
    %43 = arith.addf %42, %41 : vector<2x8xf32>
    %cst_36 = arith.constant 1.000000e+00 : f32
    %44 = vector.broadcast %cst_36 : f32 to vector<2x8xf32>
    %45 = arith.divf %44, %43 : vector<2x8xf32>
    %46 = arith.mulf %26, %45 : vector<2x8xf32>
    %c0_37 = arith.constant 0 : index
    %c0_38 = arith.constant 0 : index
    %47 = vector.load %arg14[%c0_37, %c0_38] : memref<2x8xf32, #tpu.memory_space<vmem>>, vector<2x8xf32>
    tpu.vector_store %arg14[%c0_37, %c0_38], %46 {strides = array<i32>} : memref<2x8xf32, #tpu.memory_space<vmem>>, vector<2x8xf32>,
    return
  }
  func.func @transform_0(%arg0: i32) -> (i32, i32) {
    %c0_i32 = arith.constant 0 : i32
    %c0_i32_0 = arith.constant 0 : i32
    %c0_i32_1 = arith.constant 0 : i32
    return %c0_i32, %c0_i32_0 : i32, i32
  }
  func.func @transform_1(%arg0: i32) -> (i32, i32) {
    %c0_i32 = arith.constant 0 : i32
    %c0_i32_0 = arith.constant 0 : i32
    %c0_i32_1 = arith.constant 0 : i32
    return %c0_i32, %c0_i32_0 : i32, i32
  }
  func.func @transform_2(%arg0: i32) -> (i32, i32) {
    %c0_i32 = arith.constant 0 : i32
    %c0_i32_0 = arith.constant 0 : i32
    %c0_i32_1 = arith.constant 0 : i32
    return %c0_i32, %c0_i32_0 : i32, i32
  }
  func.func @transform_3(%arg0: i32) -> (i32, i32) {
    %c0_i32 = arith.constant 0 : i32
    %c0_i32_0 = arith.constant 0 : i32
    %c0_i32_1 = arith.constant 0 : i32
    return %c0_i32, %c0_i32_0 : i32, i32
  }
  func.func @transform_4(%arg0: i32) -> (i32, i32) {
    %c0_i32 = arith.constant 0 : i32
    %c0_i32_0 = arith.constant 0 : i32
    %c0_i32_1 = arith.constant 0 : i32
    return %c0_i32, %c0_i32_0 : i32, i32
  }
  func.func @transform_5(%arg0: i32) -> (i32, i32) {
    %c0_i32 = arith.constant 0 : i32
    %c0_i32_0 = arith.constant 0 : i32
    %c0_i32_1 = arith.constant 0 : i32
    return %c0_i32, %c0_i32_0 : i32, i32
  }
  func.func @transform_6(%arg0: i32) -> (i32, i32) {
    %c0_i32 = arith.constant 0 : i32
    %c0_i32_0 = arith.constant 0 : i32
    %c0_i32_1 = arith.constant 0 : i32
    return %c0_i32, %c0_i32_0 : i32, i32
  }
  func.func @transform_7(%arg0: i32) -> (i32, i32) {
    %c0_i32 = arith.constant 0 : i32
    %c0_i32_0 = arith.constant 0 : i32
    %c0_i32_1 = arith.constant 0 : i32
    return %c0_i32, %c0_i32_0 : i32, i32
  }
  func.func @transform_8(%arg0: i32) -> (i32, i32) {
    %c0_i32 = arith.constant 0 : i32
    %c0_i32_0 = arith.constant 0 : i32
    %c0_i32_1 = arith.constant 0 : i32
    return %c0_i32, %c0_i32_0 : i32, i32
  }
  func.func @transform_9(%arg0: i32) -> (i32, i32) {
    %c0_i32 = arith.constant 0 : i32
    %c0_i32_0 = arith.constant 0 : i32
    %c0_i32_1 = arith.constant 0 : i32
    return %c0_i32, %c0_i32_0 : i32, i32
  }
  func.func @transform_10(%arg0: i32) -> (i32, i32) {
    %c0_i32 = arith.constant 0 : i32
    %c0_i32_0 = arith.constant 0 : i32
    %c0_i32_1 = arith.constant 0 : i32
    return %c0_i32, %c0_i32_0 : i32, i32
  }
  func.func @transform_11(%arg0: i32) -> (i32, i32) {
    %c0_i32 = arith.constant 0 : i32
    %c0_i32_0 = arith.constant 0 : i32
    %c0_i32_1 = arith.constant 0 : i32
    return %c0_i32, %c0_i32_0 : i32, i32
  }
  func.func @transform_12(%arg0: i32) -> (i32, i32) {
    %c0_i32 = arith.constant 0 : i32
    %c0_i32_0 = arith.constant 0 : i32
    %c0_i32_1 = arith.constant 0 : i32
    return %c0_i32, %c0_i32_0 : i32, i32
  }
  func.func @transform_13(%arg0: i32) -> (i32, i32) {
    %c0_i32 = arith.constant 0 : i32
    %c0_i32_0 = arith.constant 0 : i32
    %c0_i32_1 = arith.constant 0 : i32
    return %c0_i32, %c0_i32_0 : i32, i32
  }
}

module attributes {stable_mosaic.version = 11 : i64} {
  func.func @_seg_fused_kernel(%arg0: i32, %arg1: i32, %arg2: memref<384x4096xf32, #tpu.memory_space<vmem>>, %arg3: memref<1x60x384xf32, #tpu.memory_space<vmem>>, %arg4: memref<60x1xf32, #tpu.memory_space<vmem>>, %arg5: memref<6x60xf32, #tpu.memory_space<vmem>>, %arg6: memref<6x1xf32, #tpu.memory_space<vmem>>, %arg7: memref<1x6x4096xf32, #tpu.memory_space<vmem>>) attributes {dimension_semantics = [#tpu.dimension_semantics<parallel>, #tpu.dimension_semantics<parallel>], iteration_bounds = array<i64: 1, 2>, scalar_prefetch = 0 : i64, scratch_operands = 0 : i64, tpu.core_type = #tpu.core_type<tc>, window_params = [{transform_indices = @transform_0, window_bounds = array<i64: 384, 4096>}, {transform_indices = @transform_1, window_bounds = array<i64: 1, 60, 384>}, {pipeline_mode = #tpu.pipeline_mode<synchronous>, transform_indices = @transform_2, window_bounds = array<i64: 60, 1>}, {pipeline_mode = #tpu.pipeline_mode<synchronous>, transform_indices = @transform_3, window_bounds = array<i64: 6, 60>}, {pipeline_mode = #tpu.pipeline_mode<synchronous>, transform_indices = @transform_4, window_bounds = array<i64: 6, 1>}, {transform_indices = @transform_5, window_bounds = array<i64: 1, 6, 4096>}]} {
    %c0 = arith.constant 0 : index
    %c0_0 = arith.constant 0 : index
    %c0_1 = arith.constant 0 : index
    %0 = vector.load %arg3[%c0, %c0_0, %c0_1] : memref<1x60x384xf32, #tpu.memory_space<vmem>>, vector<1x60x384xf32>
    %1 = vector.shape_cast %0 : vector<1x60x384xf32> to vector<60x384xf32>
    %c0_2 = arith.constant 0 : index
    %c0_3 = arith.constant 0 : index
    %2 = vector.load %arg2[%c0_2, %c0_3] : memref<384x4096xf32, #tpu.memory_space<vmem>>, vector<384x4096xf32>
    %cst = arith.constant dense<0.000000e+00> : vector<60x4096xf32>
    %3 = tpu.matmul %1, %2, %cst {dimension_numbers = #tpu.dot_dimension_numbers<[1], [0], [0], [1], [0, 0, 1, 1], [], []>} : vector<60x384xf32>, vector<384x4096xf32>, vector<60x4096xf32> -> vector<60x4096xf32>
    %c0_4 = arith.constant 0 : index
    %c0_5 = arith.constant 0 : index
    %4 = vector.load %arg4[%c0_4, %c0_5] : memref<60x1xf32, #tpu.memory_space<vmem>>, vector<60x1xf32>
    %5 = vector.broadcast %4 : vector<60x1xf32> to vector<60x4096xf32>
    %6 = arith.addf %3, %5 : vector<60x4096xf32>
    %cst_6 = arith.constant 0.000000e+00 : f32
    %7 = vector.broadcast %cst_6 : f32 to vector<60x4096xf32>
    %8 = arith.maximumf %6, %7 : vector<60x4096xf32>
    %c0_7 = arith.constant 0 : index
    %c0_8 = arith.constant 0 : index
    %9 = vector.load %arg5[%c0_7, %c0_8] : memref<6x60xf32, #tpu.memory_space<vmem>>, vector<6x60xf32>
    %cst_9 = arith.constant dense<0.000000e+00> : vector<6x4096xf32>
    %10 = tpu.matmul %9, %8, %cst_9 {dimension_numbers = #tpu.dot_dimension_numbers<[1], [0], [0], [1], [0, 0, 1, 1], [], []>} : vector<6x60xf32>, vector<60x4096xf32>, vector<6x4096xf32> -> vector<6x4096xf32>
    %c0_10 = arith.constant 0 : index
    %c0_11 = arith.constant 0 : index
    %11 = vector.load %arg6[%c0_10, %c0_11] : memref<6x1xf32, #tpu.memory_space<vmem>>, vector<6x1xf32>
    %12 = vector.broadcast %11 : vector<6x1xf32> to vector<6x4096xf32>
    %13 = arith.addf %10, %12 : vector<6x4096xf32>
    %c0_12 = arith.constant 0 : index
    %c0_13 = arith.constant 0 : index
    %c0_14 = arith.constant 0 : index
    %14 = vector.load %arg7[%c0_12, %c0_13, %c0_14] : memref<1x6x4096xf32, #tpu.memory_space<vmem>>, vector<1x6x4096xf32>
    %15 = vector.shape_cast %14 : vector<1x6x4096xf32> to vector<6x4096xf32>
    %16 = vector.shape_cast %13 : vector<6x4096xf32> to vector<1x6x4096xf32>
    tpu.vector_store %arg7[%c0_12, %c0_13, %c0_14], %16 {strides = array<i32>} : memref<1x6x4096xf32, #tpu.memory_space<vmem>>, vector<1x6x4096xf32>,
    return
  }
  func.func @transform_0(%arg0: i32, %arg1: i32) -> (i32, i32) {
    %c0_i32 = arith.constant 0 : i32
    %c0_i32_0 = arith.constant 0 : i32
    return %c0_i32, %arg0 : i32, i32
  }
  func.func @transform_1(%arg0: i32, %arg1: i32) -> (i32, i32, i32) {
    %c0_i32 = arith.constant 0 : i32
    %c0_i32_0 = arith.constant 0 : i32
    %c0_i32_1 = arith.constant 0 : i32
    return %arg1, %c0_i32, %c0_i32_0 : i32, i32, i32
  }
  func.func @transform_2(%arg0: i32, %arg1: i32) -> (i32, i32) {
    %c0_i32 = arith.constant 0 : i32
    %c0_i32_0 = arith.constant 0 : i32
    %c0_i32_1 = arith.constant 0 : i32
    return %c0_i32, %c0_i32_0 : i32, i32
  }
  func.func @transform_3(%arg0: i32, %arg1: i32) -> (i32, i32) {
    %c0_i32 = arith.constant 0 : i32
    %c0_i32_0 = arith.constant 0 : i32
    %c0_i32_1 = arith.constant 0 : i32
    return %c0_i32, %c0_i32_0 : i32, i32
  }
  func.func @transform_4(%arg0: i32, %arg1: i32) -> (i32, i32) {
    %c0_i32 = arith.constant 0 : i32
    %c0_i32_0 = arith.constant 0 : i32
    %c0_i32_1 = arith.constant 0 : i32
    return %c0_i32, %c0_i32_0 : i32, i32
  }
  func.func @transform_5(%arg0: i32, %arg1: i32) -> (i32, i32, i32) {
    %c0_i32 = arith.constant 0 : i32
    %c0_i32_0 = arith.constant 0 : i32
    return %arg1, %c0_i32, %arg0 : i32, i32, i32
  }
}

</mosaic_0001>

<llo_original>
// kernel: tile.33
$region0: #{tile.33}
  #allocation0 [shape = 's32[1]{0}', space=sflag, size = 0x4, scoped, tag = 'scoped memory for tile.33']
  %s0 = inlined_call_operand.vmem [shape: f32[4], index: 0, kind: input, shape index: {}]
  %s1 = inlined_call_operand.vmem [shape: f32[4,4], index: 1, kind: output, shape index: {}]
  // Predicated region
  $region2: #{tile.33} parent=0 // pred_check
    _
  $region3: #{tile.33} parent=0 // pred_check_branch
    %3 = sbr.rel (0) target = $region5
  $region4: #{tile.33} parent=0 // pred_region
    _
  $region5: #{tile.33} parent=0 // pred_fallthru
    _
  %v4 = vld [vmem:[%s0] ss:$0 sm:$0xff]
  %5 = vst [vmem:[%s1] sm:$0xf] %v4

// kernel: tile.34
$region0: #{tile.34}
  %s0 = inlined_call_operand.vmem [shape: f32[4,4], index: 0, kind: input, shape index: {}]
  %s1 = inlined_call_operand.vmem [shape: f32[1,16], index: 1, kind: output, shape index: {}]
  $region1: #{tile.34} parent=0
    #allocation0 [shape = 'u8[4096]{0}', space=vmem, size = 0x1000, scoped, tag = 'scoped mem for output reshape']
    #allocation1 [shape = 'u8[4096]{0}', space=vmem, size = 0x1000, scoped, tag = 'scoped mem for input reshape']
    %s3 = ssub.s32 16, 1
    %v4 = vld [vmem:[%s0] sm:%s3]
    %5 = vst [vmem:[#allocation1] sm:%s3] %v4
    %v6 = vld [vmem:[#allocation1] sm:$0x1]
    %vm7 = vcmask 31744
    %8 = vst.msk [vmem:[#allocation0] sm:$0x1] %vm7, %v6
    %s9 = scalar_lea.vmem [#allocation1], 3
    %v10 = vld [vmem:[%s9] sm:$0x1]
    %11 = vrot.lane.b32.xlu0 %v10, 12
    %v12 = vpop.permute.xlu0 %11
    %vm13 = vcmask 130144
    %14 = vst.msk [vmem:[#allocation0] sm:$0x1] %vm13, %v12
    %s15 = scalar_lea.vmem [#allocation1], 2
    %v16 = vld [vmem:[%s15] sm:$0x1]
    %17 = vrot.lane.b32.xlu0 %v16, 8
    %v18 = vpop.permute.xlu0 %17
    %vm19 = vcmask 97344
    %20 = vst.msk [vmem:[#allocation0] sm:$0x1] %vm19, %v18
    %s21 = scalar_lea.vmem [#allocation1], 1
    %v22 = vld [vmem:[%s21] sm:$0x1]
    %23 = vrot.lane.b32.xlu0 %v22, 4
    %v24 = vpop.permute.xlu0 %23
    %vm25 = vcmask 64544
    %26 = vst.msk [vmem:[#allocation0] sm:$0x1] %vm25, %v24
    %s28 = ssub.s32 2, 1
    %v29 = vld [vmem:[#allocation0] sm:%s28]
    %s31 = ssub.s32 2, 1
    %32 = vst [vmem:[%s1] sm:%s31] %v29

// kernel: tile.29
$region0: #{tile.29}
  %s0 = inlined_call_operand.vmem [shape: f32[4,8], index: 0, kind: input, shape index: {}]
  %s1 = inlined_call_operand.vmem [shape: f32[1,32], index: 1, kind: output, shape index: {}]
  $region1: #{tile.29} parent=0
    #allocation0 [shape = 'u8[4096]{0}', space=vmem, size = 0x1000, scoped, tag = 'scoped mem for output reshape']
    #allocation1 [shape = 'u8[4096]{0}', space=vmem, size = 0x1000, scoped, tag = 'scoped mem for input reshape']
    %s3 = ssub.s32 16, 1
    %v4 = vld [vmem:[%s0] sm:%s3]
    %5 = vst [vmem:[#allocation1] sm:%s3] %v4
    %v6 = vld [vmem:[#allocation1] sm:$0x1]
    %vm7 = vcmask 64512
    %8 = vst.msk [vmem:[#allocation0] sm:$0x1] %vm7, %v6
    %s9 = scalar_lea.vmem [#allocation1], 3
    %v10 = vld [vmem:[%s9] sm:$0x1]
    %11 = vrot.lane.b32.xlu0 %v10, 24
    %v12 = vpop.permute.xlu0 %11
    %vm13 = vcmask 261312
    %14 = vst.msk [vmem:[#allocation0] sm:$0x1] %vm13, %v12
    %s15 = scalar_lea.vmem [#allocation1], 2
    %v16 = vld [vmem:[%s15] sm:$0x1]
    %17 = vrot.lane.b32.xlu0 %v16, 16
    %v18 = vpop.permute.xlu0 %17
    %vm19 = vcmask 195712
    %20 = vst.msk [vmem:[#allocation0] sm:$0x1] %vm19, %v18
    %s21 = scalar_lea.vmem [#allocation1], 1
    %v22 = vld [vmem:[%s21] sm:$0x1]
    %23 = vrot.lane.b32.xlu0 %v22, 8
    %v24 = vpop.permute.xlu0 %23
    %vm25 = vcmask 130112
    %26 = vst.msk [vmem:[#allocation0] sm:$0x1] %vm25, %v24
    %s28 = ssub.s32 2, 1
    %v29 = vld [vmem:[#allocation0] sm:%s28]
    %s31 = ssub.s32 2, 1
    %32 = vst [vmem:[%s1] sm:%s31] %v29

// kernel: tile.28
$region0: #{tile.28}
  #allocation0 [shape = 's32[1]{0}', space=sflag, size = 0x4, scoped, tag = 'scoped memory for tile.28']
  %s0 = inlined_call_operand.vmem [shape: f32[8], index: 0, kind: input, shape index: {}]
  %s1 = inlined_call_operand.vmem [shape: f32[4,8], index: 1, kind: output, shape index: {}]
  // Predicated region
  $region2: #{tile.28} parent=0 // pred_check
    _
  $region3: #{tile.28} parent=0 // pred_check_branch
    %3 = sbr.rel (0) target = $region5
  $region4: #{tile.28} parent=0 // pred_region
    _
  $region5: #{tile.28} parent=0 // pred_fallthru
    _
  %v4 = vld [vmem:[%s0] ss:$0 sm:$0xff]
  %5 = vst [vmem:[%s1] sm:$0xf] %v4

// kernel: tile.24
$region0: #{tile.24}
  %s0 = inlined_call_operand.vmem [shape: f32[4,16], index: 0, kind: input, shape index: {}]
  %s1 = inlined_call_operand.vmem [shape: f32[1,64], index: 1, kind: output, shape index: {}]
  $region1: #{tile.24} parent=0
    #allocation0 [shape = 'u8[4096]{0}', space=vmem, size = 0x1000, scoped, tag = 'scoped mem for output reshape']
    #allocation1 [shape = 'u8[4096]{0}', space=vmem, size = 0x1000, scoped, tag = 'scoped mem for input reshape']
    %s3 = ssub.s32 16, 1
    %v4 = vld [vmem:[%s0] sm:%s3]
    %5 = vst [vmem:[#allocation1] sm:%s3] %v4
    %v6 = vld [vmem:[#allocation1] sm:$0x1]
    %vm7 = vcmask 130048
    %8 = vst.msk [vmem:[#allocation0] sm:$0x1] %vm7, %v6
    %s9 = scalar_lea.vmem [#allocation1], 3
    %v10 = vld [vmem:[%s9] sm:$0x1]
    %11 = vrot.lane.b32.xlu0 %v10, 48
    %v12 = vpop.permute.xlu0 %11
    %vm13 = vcmask 523648
    %14 = vst.msk [vmem:[#allocation0] sm:$0x1] %vm13, %v12
    %s15 = scalar_lea.vmem [#allocation1], 2
    %v16 = vld [vmem:[%s15] sm:$0x1]
    %17 = vrot.lane.b32.xlu0 %v16, 32
    %v18 = vpop.permute.xlu0 %17
    %vm19 = vcmask 392448
    %20 = vst.msk [vmem:[#allocation0] sm:$0x1] %vm19, %v18
    %s21 = scalar_lea.vmem [#allocation1], 1
    %v22 = vld [vmem:[%s21] sm:$0x1]
    %23 = vrot.lane.b32.xlu0 %v22, 16
    %v24 = vpop.permute.xlu0 %23
    %vm25 = vcmask 261248
    %26 = vst.msk [vmem:[#allocation0] sm:$0x1] %vm25, %v24
    %s28 = ssub.s32 2, 1
    %v29 = vld [vmem:[#allocation0] sm:%s28]
    %s31 = ssub.s32 2, 1
    %32 = vst [vmem:[%s1] sm:%s31] %v29

// kernel: tile.23
$region0: #{tile.23}
  #allocation0 [shape = 's32[1]{0}', space=sflag, size = 0x4, scoped, tag = 'scoped memory for tile.23']
  %s0 = inlined_call_operand.vmem [shape: f32[16], index: 0, kind: input, shape index: {}]
  %s1 = inlined_call_operand.vmem [shape: f32[4,16], index: 1, kind: output, shape index: {}]
  // Predicated region
  $region2: #{tile.23} parent=0 // pred_check
    _
  $region3: #{tile.23} parent=0 // pred_check_branch
    %3 = sbr.rel (0) target = $region5
  $region4: #{tile.23} parent=0 // pred_region
    _
  $region5: #{tile.23} parent=0 // pred_fallthru
    _
  %v4 = vld [vmem:[%s0] ss:$0 sm:$0xff]
  %5 = vst [vmem:[%s1] sm:$0xf] %v4

// kernel: final_stage_forward.3
$region0: #{final_stage_forward.3}
  #allocation0 [shape = 'u32[]', space=smem, size = 0x4, offset = 0x4, fixed_abs, tag = 'smem constant byte address 0x4 - core index']
  #allocation1 [shape = 'u32[72,128]{1,0:T(1,128)}', space=vmem, size = 0x9000, scoped, tag = 'internal scratch']
  %s0 = inlined_call_operand.vmem [shape: f32[2,128], index: 0, kind: input, shape index: {}]
  %s1 = inlined_call_operand.vmem [shape: f32[128,64], index: 1, kind: input, shape index: {}]
  %s2 = inlined_call_operand.vmem [shape: f32[1,64], index: 2, kind: input, shape index: {}]
  %s3 = inlined_call_operand.vmem [shape: f32[64,32], index: 3, kind: input, shape index: {}]
  %s4 = inlined_call_operand.vmem [shape: f32[1,32], index: 4, kind: input, shape index: {}]
  %s5 = inlined_call_operand.vmem [shape: f32[32,16], index: 5, kind: input, shape index: {}]
  %s6 = inlined_call_operand.vmem [shape: f32[1,16], index: 6, kind: input, shape index: {}]
  %s7 = inlined_call_operand.vmem [shape: f32[16,8], index: 7, kind: input, shape index: {}]
  %s8 = inlined_call_operand.hbm [shape: f32[1,8], index: 8, kind: input, shape index: {}]
  %s9 = inlined_call_operand.vmem [shape: f32[8,2], index: 9, kind: input, shape index: {}]
  %s10 = inlined_call_operand.hbm [shape: f32[1,2], index: 10, kind: input, shape index: {}]
  %s11 = inlined_call_operand.hbm [shape: f32[2,8], index: 11, kind: input, shape index: {}]
  %s12 = inlined_call_operand.hbm [shape: f32[1,8], index: 12, kind: input, shape index: {}]
  %s13 = inlined_call_operand.hbm [shape: f32[2,8], index: 13, kind: output, shape index: {}]
  %s14 = sld [smem:[#allocation0]]
  $region78: #{final_stage_forward.3} parent=0
    _
  %s16 = ssub.s32 1, %s14
  %s17 = scalar_select 0, %s16, %s14
  $region1: #{final_stage_forward.3} parent=0
    #allocation2 [shape = 'u8[512]{0}', space=vmem, size = 0x400, scoped, tag = 'input window, operand 8, single buffered']
    #allocation3 [shape = 's32[1]{0}', space=sflag, size = 0x4, scoped, tag = 'scoped memory for final_stage_forward.3']
    #allocation4 [shape = 's32[1]{0}', space=sflag, size = 0x4, scoped, tag = 'scoped memory for final_stage_forward.3']
    #allocation5 [shape = 'u8[512]{0}', space=vmem, size = 0x400, scoped, tag = 'input window, operand 10, single buffered']
    #allocation6 [shape = 's32[1]{0}', space=sflag, size = 0x4, scoped, tag = 'scoped memory for final_stage_forward.3']
    #allocation7 [shape = 'u8[1024]{0}', space=vmem, size = 0x400, scoped, tag = 'input window, operand 11, single buffered']
    #allocation8 [shape = 'u8[512]{0}', space=vmem, size = 0x400, scoped, tag = 'input window, operand 12, single buffered']
    #allocation9 [shape = 's32[1]{0}', space=sflag, size = 0x4, scoped, tag = 'scoped memory for final_stage_forward.3']
    #allocation10 [shape = 'u8[1024]{0}', space=vmem, size = 0x400, scoped, tag = 'output window, operand 0, single buffered']
    %18 = vsyncpa [#allocation3], 0
    %19 = vsyncpa [#allocation6], 0
    %20 = vsyncpa [#allocation9], 0
    %21 = vsyncpa [#allocation4], 0
    // Predicated region
    $region2: #{final_stage_forward.3} parent=1 // pred_check
      _
    $region3: #{final_stage_forward.3} parent=1 // pred_check_branch
      %23 = sbr.rel (0) target = $region5
    $region4: #{final_stage_forward.3} parent=1 // pred_region
      _
    $region5: #{final_stage_forward.3} parent=1 // pred_fallthru
      _
    // Predicated region
    $region6: #{final_stage_forward.3} parent=1 // pred_check
      _
    $region7: #{final_stage_forward.3} parent=1 // pred_check_branch
      %25 = sbr.rel (0) target = $region9
    $region8: #{final_stage_forward.3} parent=1 // pred_region
      _
    $region9: #{final_stage_forward.3} parent=1 // pred_fallthru
      _
    // Predicated region
    $region10: #{final_stage_forward.3} parent=1 // pred_check
      _
    $region11: #{final_stage_forward.3} parent=1 // pred_check_branch
      %27 = sbr.rel (0) target = $region13
    $region12: #{final_stage_forward.3} parent=1 // pred_region
      _
    $region13: #{final_stage_forward.3} parent=1 // pred_fallthru
      _
    // Predicated region
    $region14: #{final_stage_forward.3} parent=1 // pred_check
      _
    $region15: #{final_stage_forward.3} parent=1 // pred_check_branch
      %29 = sbr.rel (0) target = $region17
    $region16: #{final_stage_forward.3} parent=1 // pred_region
      _
    $region17: #{final_stage_forward.3} parent=1 // pred_fallthru
      _
    // Predicated region
    $region18: #{final_stage_forward.3} parent=1 // pred_check
      _
    $region19: #{final_stage_forward.3} parent=1 // pred_check_branch
      %31 = sbr.rel (0) target = $region21
    $region20: #{final_stage_forward.3} parent=1 // pred_region
      _
    $region21: #{final_stage_forward.3} parent=1 // pred_fallthru
      _
    // Predicated region
    $region22: #{final_stage_forward.3} parent=1 // pred_check
      _
    $region23: #{final_stage_forward.3} parent=1 // pred_check_branch
      %33 = sbr.rel (0) target = $region25
    $region24: #{final_stage_forward.3} parent=1 // pred_region
      _
    $region25: #{final_stage_forward.3} parent=1 // pred_fallthru
      _
    // Predicated region
    $region26: #{final_stage_forward.3} parent=1 // pred_check
      _
    $region27: #{final_stage_forward.3} parent=1 // pred_check_branch
      %35 = sbr.rel (0) target = $region29
    $region28: #{final_stage_forward.3} parent=1 // pred_region
      _
    $region29: #{final_stage_forward.3} parent=1 // pred_fallthru
      _
    // Predicated region
    $region30: #{final_stage_forward.3} parent=1 // pred_check
      _
    $region31: #{final_stage_forward.3} parent=1 // pred_check_branch
      %37 = sbr.rel (0) target = $region33
    $region32: #{final_stage_forward.3} parent=1 // pred_region
      _
    $region33: #{final_stage_forward.3} parent=1 // pred_fallthru
      _
    // Predicated region
    $region34: #{final_stage_forward.3} parent=1 // pred_check
      _
    $region35: #{final_stage_forward.3} parent=1 // pred_check_branch
      %39 = sbr.rel (0) target = $region37
    $region36: #{final_stage_forward.3} parent=1 // pred_region
      %41 = vsyncadd [#allocation3], 0
      %s43 = sshll.u32 %s8, 4
      %s44 = int_to_ptr.hbm [resolvable:$true] %s43
      %s45 = sshll.u32 [#allocation2], 4
      %s46 = int_to_ptr.vmem [resolvable:$true] %s45
      %48 = dma.hbm_to_vmem [thread:$0]  %s44, 16, %s46, [#allocation3]
    $region37: #{final_stage_forward.3} parent=1 // pred_fallthru
      _
    // Predicated region
    $region38: #{final_stage_forward.3} parent=1 // pred_check
      _
    $region39: #{final_stage_forward.3} parent=1 // pred_check_branch
      %50 = sbr.rel (0) target = $region41
    $region40: #{final_stage_forward.3} parent=1 // pred_region
      _
    $region41: #{final_stage_forward.3} parent=1 // pred_fallthru
      _
    // Predicated region
    $region42: #{final_stage_forward.3} parent=1 // pred_check
      _
    $region43: #{final_stage_forward.3} parent=1 // pred_check_branch
      %52 = sbr.rel (0) target = $region45
    $region44: #{final_stage_forward.3} parent=1 // pred_region
      %54 = vsyncadd [#allocation6], 0
      %s56 = sshll.u32 %s10, 4
      %s57 = int_to_ptr.hbm [resolvable:$true] %s56
      %s58 = sshll.u32 [#allocation5], 4
      %s59 = int_to_ptr.vmem [resolvable:$true] %s58
      %61 = dma.hbm_to_vmem [thread:$0]  %s57, 16, %s59, [#allocation6]
    $region45: #{final_stage_forward.3} parent=1 // pred_fallthru
      _
    // Predicated region
    $region46: #{final_stage_forward.3} parent=1 // pred_check
      _
    $region47: #{final_stage_forward.3} parent=1 // pred_check_branch
      %63 = sbr.rel (0) target = $region49
    $region48: #{final_stage_forward.3} parent=1 // pred_region
      %65 = vsyncadd [#allocation6], 0
      %s67 = sshll.u32 %s11, 4
      %s68 = int_to_ptr.hbm [resolvable:$true] %s67
      %s69 = sshll.u32 [#allocation7], 4
      %s70 = int_to_ptr.vmem [resolvable:$true] %s69
      %72 = dma.hbm_to_vmem [thread:$0]  %s68, 32, %s70, [#allocation6]
    $region49: #{final_stage_forward.3} parent=1 // pred_fallthru
      _
    // Predicated region
    $region50: #{final_stage_forward.3} parent=1 // pred_check
      _
    $region51: #{final_stage_forward.3} parent=1 // pred_check_branch
      %74 = sbr.rel (0) target = $region53
    $region52: #{final_stage_forward.3} parent=1 // pred_region
      %76 = vsyncadd [#allocation9], 0
      %s78 = sshll.u32 %s12, 4
      %s79 = int_to_ptr.hbm [resolvable:$true] %s78
      %s80 = sshll.u32 [#allocation8], 4
      %s81 = int_to_ptr.vmem [resolvable:$true] %s80
      %83 = dma.hbm_to_vmem [thread:$0]  %s79, 16, %s81, [#allocation9]
    $region53: #{final_stage_forward.3} parent=1 // pred_fallthru
      _
    // Predicated region
    $region54: #{final_stage_forward.3} parent=1 // pred_check
      _
    $region55: #{final_stage_forward.3} parent=1 // pred_check_branch
      %85 = sbr.rel (0) target = $region57
    $region56: #{final_stage_forward.3} parent=1 // pred_region
      %87 = dma.done [#allocation3], 16
    $region57: #{final_stage_forward.3} parent=1 // pred_fallthru
      _
    // Predicated region
    $region58: #{final_stage_forward.3} parent=1 // pred_check
      _
    $region59: #{final_stage_forward.3} parent=1 // pred_check_branch
      %89 = sbr.rel (0) target = $region61
    $region60: #{final_stage_forward.3} parent=1 // pred_region
      %91 = dma.done [#allocation6], 16
    $region61: #{final_stage_forward.3} parent=1 // pred_fallthru
      _
    // Predicated region
    $region62: #{final_stage_forward.3} parent=1 // pred_check
      _
    $region63: #{final_stage_forward.3} parent=1 // pred_check_branch
      %93 = sbr.rel (0) target = $region65
    $region64: #{final_stage_forward.3} parent=1 // pred_region
      %95 = dma.done [#allocation6], 32
    $region65: #{final_stage_forward.3} parent=1 // pred_fallthru
      _
    // Predicated region
    $region66: #{final_stage_forward.3} parent=1 // pred_check
      _
    $region67: #{final_stage_forward.3} parent=1 // pred_check_branch
      %97 = sbr.rel (0) target = $region69
    $region68: #{final_stage_forward.3} parent=1 // pred_region
      %99 = dma.done [#allocation9], 16
    $region69: #{final_stage_forward.3} parent=1 // pred_fallthru
      _
    %v100 = vld [vmem:[%s0] sm:$0x3]
    %v101 = vld [vmem:[%s1] sm:$0xff]
    %v102 = vld [vmem:[%s1 + $0x8] sm:$0xff]
    %v103 = vld [vmem:[%s1 + $0x10] sm:$0xff]
    %v104 = vld [vmem:[%s1 + $0x18] sm:$0xff]
    %v105 = vld [vmem:[%s1 + $0x20] sm:$0xff]
    %v106 = vld [vmem:[%s1 + $0x28] sm:$0xff]
    %v107 = vld [vmem:[%s1 + $0x30] sm:$0xff]
    %v108 = vld [vmem:[%s1 + $0x38] sm:$0xff]
    %v109 = vld [vmem:[%s1 + $0x40] sm:$0xff]
    %v110 = vld [vmem:[%s1 + $0x48] sm:$0xff]
    %v111 = vld [vmem:[%s1 + $0x50] sm:$0xff]
    %v112 = vld [vmem:[%s1 + $0x58] sm:$0xff]
    %v113 = vld [vmem:[%s1 + $0x60] sm:$0xff]
    %v114 = vld [vmem:[%s1 + $0x68] sm:$0xff]
    %v115 = vld [vmem:[%s1 + $0x70] sm:$0xff]
    %v116 = vld [vmem:[%s1 + $0x78] sm:$0xff]
    %v117 = vld [vmem:[%s2] sm:$0x1]
    %v119 = vperm.slane %v117, 0
    %121 = vmatpush.msra.mxu0 %v116
    %122 = vmatpush.msra.mxu0 %v115
    %123 = vmatpush.msra.mxu0 %v114
    %124 = vmatpush.msra.mxu0 %v113
    %125 = vmatpush.msra.mxu0 %v112
    %126 = vmatpush.msra.mxu0 %v111
    %127 = vmatpush.msra.mxu0 %v110
    %128 = vmatpush.msra.mxu0 %v109
    %129 = vmatpush.msra.mxu0 %v108
    %130 = vmatpush.msra.mxu0 %v107
    %131 = vmatpush.msra.mxu0 %v106
    %132 = vmatpush.msra.mxu0 %v105
    %133 = vmatpush.msra.mxu0 %v104
    %134 = vmatpush.msra.mxu0 %v103
    %135 = vmatpush.msra.mxu0 %v102
    %136 = vmatpush.msra.mxu0 %v101
    %137 = vmatmul.f32.gmra.mxu0 %v100
    %v138 = vpop.f32.mrf.mxu0
    %v139 = vadd.f32 %v119, %v138
    %140 = vdwg.mxu0
    %v141 = vmax.f32 %v139, 0.0
    %v142 = vld [vmem:[%s3] sm:$0xff]
    %v143 = vld [vmem:[%s3 + $0x8] sm:$0xff]
    %v144 = vld [vmem:[%s3 + $0x10] sm:$0xff]
    %v145 = vld [vmem:[%s3 + $0x18] sm:$0xff]
    %v146 = vld [vmem:[%s3 + $0x20] sm:$0xff]
    %v147 = vld [vmem:[%s3 + $0x28] sm:$0xff]
    %v148 = vld [vmem:[%s3 + $0x30] sm:$0xff]
    %v149 = vld [vmem:[%s3 + $0x38] sm:$0xff]
    %v150 = vld [vmem:[%s4] sm:$0x1]
    %v152 = vperm.slane %v150, 0
    %vm154 = vcmask 523264
    %v156 = vsel %vm154, %v141, 0
    %158 = vmatpush.msra.mxu0 0.0
    %159 = vmatpush.msra.mxu0 0.0
    %160 = vmatpush.msra.mxu0 0.0
    %161 = vmatpush.msra.mxu0 0.0
    %162 = vmatpush.msra.mxu0 0.0
    %163 = vmatpush.msra.mxu0 0.0
    %164 = vmatpush.msra.mxu0 0.0
    %165 = vmatpush.msra.mxu0 0.0
    %166 = vmatpush.msra.mxu0 %v149
    %167 = vmatpush.msra.mxu0 %v148
    %168 = vmatpush.msra.mxu0 %v147
    %169 = vmatpush.msra.mxu0 %v146
    %170 = vmatpush.msra.mxu0 %v145
    %171 = vmatpush.msra.mxu0 %v144
    %172 = vmatpush.msra.mxu0 %v143
    %173 = vmatpush.msra.mxu0 %v142
    %174 = vmatmul.f32.gmra.mxu0 %v156
    %v175 = vpop.f32.mrf.mxu0
    %v176 = vadd.f32 %v152, %v175
    %177 = vdwg.mxu0
    %v178 = vmax.f32 %v176, 0.0
    %v179 = vld [vmem:[%s5] sm:$0xff]
    %v180 = vld [vmem:[%s5 + $0x8] sm:$0xff]
    %v181 = vld [vmem:[%s5 + $0x10] sm:$0xff]
    %v182 = vld [vmem:[%s5 + $0x18] sm:$0xff]
    %v183 = vld [vmem:[%s6] sm:$0x1]
    %v185 = vperm.slane %v183, 0
    %vm187 = vcmask 261120
    %v189 = vsel %vm187, %v178, 0
    %191 = vmatpush.msra.mxu0 0.0
    %192 = vmatpush.msra.mxu0 0.0
    %193 = vmatpush.msra.mxu0 0.0
    %194 = vmatpush.msra.mxu0 0.0
    %195 = vmatpush.msra.mxu0 0.0
    %196 = vmatpush.msra.mxu0 0.0
    %197 = vmatpush.msra.mxu0 0.0
    %198 = vmatpush.msra.mxu0 0.0
    %199 = vmatpush.msra.mxu0 0.0
    %200 = vmatpush.msra.mxu0 0.0
    %201 = vmatpush.msra.mxu0 0.0
    %202 = vmatpush.msra.mxu0 0.0
    %203 = vmatpush.msra.mxu0 %v182
    %204 = vmatpush.msra.mxu0 %v181
    %205 = vmatpush.msra.mxu0 %v180
    %206 = vmatpush.msra.mxu0 %v179
    %207 = vmatmul.f32.gmra.mxu0 %v189
    %v208 = vpop.f32.mrf.mxu0
    %v209 = vadd.f32 %v185, %v208
    %210 = vdwg.mxu0
    %v211 = vmax.f32 %v209, 0.0
    %v212 = vld [vmem:[%s7] sm:$0xff]
    %v213 = vld [vmem:[%s7 + $0x8] sm:$0xff]
    %v214 = vld [vmem:[#allocation2] sm:$0x1]
    %v216 = vperm.slane %v214, 0
    %vm218 = vcmask 130048
    %v220 = vsel %vm218, %v211, 0
    %222 = vmatpush.msra.mxu0 0.0
    %223 = vmatpush.msra.mxu0 0.0
    %224 = vmatpush.msra.mxu0 0.0
    %225 = vmatpush.msra.mxu0 0.0
    %226 = vmatpush.msra.mxu0 0.0
    %227 = vmatpush.msra.mxu0 0.0
    %228 = vmatpush.msra.mxu0 0.0
    %229 = vmatpush.msra.mxu0 0.0
    %230 = vmatpush.msra.mxu0 0.0
    %231 = vmatpush.msra.mxu0 0.0
    %232 = vmatpush.msra.mxu0 0.0
    %233 = vmatpush.msra.mxu0 0.0
    %234 = vmatpush.msra.mxu0 0.0
    %235 = vmatpush.msra.mxu0 0.0
    %236 = vmatpush.msra.mxu0 %v213
    %237 = vmatpush.msra.mxu0 %v212
    %238 = vmatmul.f32.gmra.mxu0 %v220
    %v239 = vpop.f32.mrf.mxu0
    %v240 = vadd.f32 %v216, %v239
    %241 = vdwg.mxu0
    %v242 = vld [vmem:[%s9] sm:$0xff]
    %v243 = vld [vmem:[#allocation5] sm:$0x1]
    %v245 = vperm.slane %v243, 0
    %vm247 = vcmask 64512
    %v249 = vsel %vm247, %v240, 0
    %251 = vmatpush.msra.mxu0 0.0
    %252 = vmatpush.msra.mxu0 0.0
    %253 = vmatpush.msra.mxu0 0.0
    %254 = vmatpush.msra.mxu0 0.0
    %255 = vmatpush.msra.mxu0 0.0
    %256 = vmatpush.msra.mxu0 0.0
    %257 = vmatpush.msra.mxu0 0.0
    %258 = vmatpush.msra.mxu0 0.0
    %259 = vmatpush.msra.mxu0 0.0
    %260 = vmatpush.msra.mxu0 0.0
    %261 = vmatpush.msra.mxu0 0.0
    %262 = vmatpush.msra.mxu0 0.0
    %263 = vmatpush.msra.mxu0 0.0
    %264 = vmatpush.msra.mxu0 0.0
    %265 = vmatpush.msra.mxu0 0.0
    %266 = vmatpush.msra.mxu0 %v242
    %267 = vmatmul.f32.gmra.mxu0 %v249
    %v268 = vpop.f32.mrf.mxu0
    %v269 = vadd.f32 %v245, %v268
    %270 = vdwg.mxu0
    %v271 = vmax.f32 %v269, 0.0
    %v272 = vld [vmem:[#allocation7] sm:$0x3]
    %v273 = vld [vmem:[#allocation8] sm:$0x1]
    %v275 = vperm.slane %v273, 0
    %vm277 = vcmask 15360
    %v279 = vsel %vm277, %v271, 0
    %vm281 = vcmask 1041408
    %v283 = vsel %vm281, %v272, 0
    %285 = vmatpush.msra.mxu0 0.0
    %286 = vmatpush.msra.mxu0 0.0
    %287 = vmatpush.msra.mxu0 0.0
    %288 = vmatpush.msra.mxu0 0.0
    %289 = vmatpush.msra.mxu0 0.0
    %290 = vmatpush.msra.mxu0 0.0
    %291 = vmatpush.msra.mxu0 0.0
    %292 = vmatpush.msra.mxu0 0.0
    %293 = vmatpush.msra.mxu0 0.0
    %294 = vmatpush.msra.mxu0 0.0
    %295 = vmatpush.msra.mxu0 0.0
    %296 = vmatpush.msra.mxu0 0.0
    %297 = vmatpush.msra.mxu0 0.0
    %298 = vmatpush.msra.mxu0 0.0
    %299 = vmatpush.msra.mxu0 0.0
    %300 = vmatpush.msra.mxu0 %v283
    %301 = vmatmul.f32.gmra.mxu0 %v279
    %v302 = vpop.f32.mrf.mxu0
    %v303 = vadd.f32 %v275, %v302
    %304 = vdwg.mxu0
    %v305 = vsub.f32 0.0, %v303
    %v306 = vmul.f32 %v305, 1.442695
    %v307 = vpow.pop %v306
    %v308 = vadd.f32 %v307, 1.0
    %v309 = vrcp.pop %v308
    %v310 = vmul.f32 %v308, %v309
    %v311 = vsub.f32 1.0, %v310
    %v312 = vmul.f32 %v309, %v311
    %v313 = vadd.f32 %v309, %v312
    %vm314 = vweird.f32 %v308
    %vm315 = vweird.f32 %v309
    %vm316 = vmor %vm314, %vm315
    %v317 = vsel %vm316, %v309, %v313
    %v318 = vand.u32 2147483647, %v308
    %vm319 = vcmp.eq.f32.partialorder %v318, 8.507059e+37
    %v320 = vand.u32 %v308, 2147483648
    %v321 = vor.u32 1.1754944e-38, %v320
    %v322 = vsel %vm319, %v321, %v317
    %v323 = vmul.f32 1.0, %v322
    %v324 = vmul.f32 %v240, %v323
    %vm325 = vcmask 58368
    %326 = vst.msk [vmem:[#allocation10] sm:$0x3] %vm325, %v324
    // Predicated region
    $region70: #{final_stage_forward.3} parent=1 // pred_check
      _
    $region71: #{final_stage_forward.3} parent=1 // pred_check_branch
      %328 = sbr.rel (0) target = $region73
    $region72: #{final_stage_forward.3} parent=1 // pred_region
      %330 = vsyncadd [#allocation4], 0
      %s332 = sshll.u32 [#allocation10], 4
      %s333 = int_to_ptr.vmem [resolvable:$true] %s332
      %s334 = sshll.u32 %s13, 4
      %s335 = int_to_ptr.hbm [resolvable:$true] %s334
      %337 = dma.vmem_to_hbm [thread:$0]  %s333, 32, %s335, [#allocation4]
    $region73: #{final_stage_forward.3} parent=1 // pred_fallthru
      _
    // Predicated region
    $region74: #{final_stage_forward.3} parent=1 // pred_check
      _
    $region75: #{final_stage_forward.3} parent=1 // pred_check_branch
      %339 = sbr.rel (0) target = $region77
    $region76: #{final_stage_forward.3} parent=1 // pred_region
      %341 = dma.done [#allocation4], 32
    $region77: #{final_stage_forward.3} parent=1 // pred_fallthru
      _
    %342 = vsyncpa [#allocation3], 1
    %343 = vsyncpa [#allocation6], 1
    %344 = vsyncpa [#allocation9], 1
    %345 = vsyncpa [#allocation4], 1

// kernel: final_stage_forward.2
$region0: #{final_stage_forward.2}
  #allocation0 [shape = 'u32[]', space=smem, size = 0x4, offset = 0x4, fixed_abs, tag = 'smem constant byte address 0x4 - core index']
  #allocation1 [shape = 'u32[72,128]{1,0:T(1,128)}', space=vmem, size = 0x9000, scoped, tag = 'internal scratch']
  %s0 = inlined_call_operand.hbm [shape: f32[384,4096], index: 0, kind: input, shape index: {}]
  %s1 = inlined_call_operand.vmem [shape: f32[2,60,384], index: 1, kind: input, shape index: {}]
  %s2 = inlined_call_operand.vmem [shape: f32[60,1], index: 2, kind: input, shape index: {}]
  %s3 = inlined_call_operand.hbm [shape: f32[6,60], index: 3, kind: input, shape index: {}]
  %s4 = inlined_call_operand.vmem [shape: f32[6,1], index: 4, kind: input, shape index: {}]
  %s5 = inlined_call_operand.vmem [shape: f32[2,6,4096], index: 5, kind: output, shape index: {}]
  %s6 = sld [smem:[#allocation0]]
  $region61: #{final_stage_forward.2} parent=0
    _
  %s8 = ssub.s32 1, %s6
  %s9 = scalar_select 0, %s8, %s6
  $region1: #{final_stage_forward.2} parent=0
    #allocation2 [shape = 'u8[6291456]{0}', space=vmem, size = 0x600000, scoped, tag = 'input window, operand 0, single buffered']
    #allocation3 [shape = 's32[2]{0}', space=sflag, size = 0x8, scoped, tag = 'scoped memory for final_stage_forward.2']
    #allocation4 [shape = 'u8[4096]{0}', space=vmem, size = 0x1000, scoped, tag = 'input window, operand 3, single buffered']
    #allocation5 [shape = 's32[1]{0}', space=sflag, size = 0x4, scoped, tag = 'scoped memory for final_stage_forward.2']
    %10 = vsyncpa [#allocation3], 0
    %11 = vsyncpa [#allocation5], 0
    loop: start=0, step=1, limit=4
    $region2: #{final_stage_forward.2} parent=1 // loop_pre_header
      _
    $region3: #{final_stage_forward.2} parent=1 // loop_header
      %s13 = sphi 0, %s17
      %p14 = scmp.ge.s32.totalorder %s13, 4
      %s20 = sphi 0, %s32
      %s21 = sphi 0, %s28
      %s22 = sphi 0, %s20
      %s23 = sphi 0, %s21
      %s24 = sphi 0, %s22
      %s25 = sphi 0, %s23
      %s35 = sphi 0, %s37
      %s38 = sphi 0, %s35
      %s39 = sphi 0, %s38
      %s55 = sphi 0, %s39
      %s61 = sphi 0, %s63
      %s64 = sphi 0, %s61
      %s65 = sphi 0, %s64
      %s81 = sphi 0, %s65
      %s85 = sphi 0, %s85
      %s87 = sphi 0, %s85
      %s88 = sphi 0, %s87
      %s102 = sphi 0, %s88
      %s106 = sphi 0, %s106
      %s108 = sphi 0, %s106
      %s109 = sphi 0, %s108
      %s123 = sphi 0, %s109
      %s127 = sphi 0, %s127
      %s129 = sphi 0, %s127
      %s130 = sphi 0, %s129
      %s144 = sphi 0, %s130
      %s152 = sphi 0, %s154
      %s155 = sphi 0, %s152
      %s156 = sphi 0, %s155
      %s172 = sphi 0, %s156
    $region4: #{final_stage_forward.2} parent=1 // loop_header_branch
      %16 = sbr.rel (%p14) target = $region8
    $region5: #{final_stage_forward.2} parent=1 // loop_body
      %s18 = ssub.s32 %s13, 1
      %s19 = ssub.s32 %s13, 2
      %s26 = sadd.s32 1, %s21
      %p27 = scmp.ge.s32.totalorder %s26, 2
      %s28 = scalar_select %p27, 0, %s26
      %s29 = sadd.s32 1, %s20
      %s30 = scalar_select %p27, %s29, %s20
      %p31 = scmp.ge.s32.totalorder %s30, 1
      %s32 = scalar_select %p31, 0, %s30
      %s33 = ssub.s32 %s20, %s32
      %p34 = scmp.eq.s32.totalorder %s33, 0
      %s36 = sadd.s32 %s35, 1
      %s37 = scalar_select %p34, %s35, %s36
      %p40 = pneg %p34
      %p41 = scmp.eq.s32.totalorder %s13, 1
      %p42 = por %p40, %p41
      %p43 = scmp.ne.s32.totalorder %s35, %s38
      %p44 = scmp.eq.s32.totalorder %s13, 0
      %p45 = por %p43, %p44
      %p46 = scmp.ne.s32.totalorder %s35, %s38
      %p47 = scmp.eq.s32.totalorder %s18, 1
      %p48 = por %p46, %p47
      %p49 = scmp.ne.s32.totalorder %s38, %s39
      %p50 = scmp.eq.s32.totalorder %s18, 0
      %p51 = por %p49, %p50
      %p52 = scmp.ne.s32.totalorder %s38, %s39
      %p53 = scmp.eq.s32.totalorder %s19, 1
      %p54 = por %p52, %p53
      %p56 = scmp.ne.s32.totalorder %s39, %s55
      %p57 = scmp.eq.s32.totalorder %s19, 0
      %p58 = por %p56, %p57
      %s59 = ssub.s32 %s21, %s28
      %p60 = scmp.eq.s32.totalorder %s59, 0
      %s62 = sadd.s32 %s61, 1
      %s63 = scalar_select %p60, %s61, %s62
      %p66 = pneg %p60
      %p67 = scmp.eq.s32.totalorder %s13, 1
      %p68 = por %p66, %p67
      %p69 = scmp.ne.s32.totalorder %s61, %s64
      %p70 = scmp.eq.s32.totalorder %s13, 0
      %p71 = por %p69, %p70
      %p72 = scmp.ne.s32.totalorder %s61, %s64
      %p73 = scmp.eq.s32.totalorder %s18, 1
      %p74 = por %p72, %p73
      %p75 = scmp.ne.s32.totalorder %s64, %s65
      %p76 = scmp.eq.s32.totalorder %s18, 0
      %p77 = por %p75, %p76
      %p78 = scmp.ne.s32.totalorder %s64, %s65
      %p79 = scmp.eq.s32.totalorder %s19, 1
      %p80 = por %p78, %p79
      %p82 = scmp.ne.s32.totalorder %s65, %s81
      %p83 = scmp.eq.s32.totalorder %s19, 0
      %p84 = por %p82, %p83
      %s86 = sadd.s32 %s85, 1
      %p89 = scmp.eq.s32.totalorder %s13, 1
      %p90 = scmp.ne.s32.totalorder %s85, %s87
      %p91 = scmp.eq.s32.totalorder %s13, 0
      %p92 = por %p90, %p91
      %p93 = scmp.ne.s32.totalorder %s85, %s87
      %p94 = scmp.eq.s32.totalorder %s18, 1
      %p95 = por %p93, %p94
      %p96 = scmp.ne.s32.totalorder %s87, %s88
      %p97 = scmp.eq.s32.totalorder %s18, 0
      %p98 = por %p96, %p97
      %p99 = scmp.ne.s32.totalorder %s87, %s88
      %p100 = scmp.eq.s32.totalorder %s19, 1
      %p101 = por %p99, %p100
      %p103 = scmp.ne.s32.totalorder %s88, %s102
      %p104 = scmp.eq.s32.totalorder %s19, 0
      %p105 = por %p103, %p104
      %s107 = sadd.s32 %s106, 1
      %p110 = scmp.eq.s32.totalorder %s13, 1
      %p111 = scmp.ne.s32.totalorder %s106, %s108
      %p112 = scmp.eq.s32.totalorder %s13, 0
      %p113 = por %p111, %p112
      %p114 = scmp.ne.s32.totalorder %s106, %s108
      %p115 = scmp.eq.s32.totalorder %s18, 1
      %p116 = por %p114, %p115
      %p117 = scmp.ne.s32.totalorder %s108, %s109
      %p118 = scmp.eq.s32.totalorder %s18, 0
      %p119 = por %p117, %p118
      %p120 = scmp.ne.s32.totalorder %s108, %s109
      %p121 = scmp.eq.s32.totalorder %s19, 1
      %p122 = por %p120, %p121
      %p124 = scmp.ne.s32.totalorder %s109, %s123
      %p125 = scmp.eq.s32.totalorder %s19, 0
      %p126 = por %p124, %p125
      %s128 = sadd.s32 %s127, 1
      %p131 = scmp.eq.s32.totalorder %s13, 1
      %p132 = scmp.ne.s32.totalorder %s127, %s129
      %p133 = scmp.eq.s32.totalorder %s13, 0
      %p134 = por %p132, %p133
      %p135 = scmp.ne.s32.totalorder %s127, %s129
      %p136 = scmp.eq.s32.totalorder %s18, 1
      %p137 = por %p135, %p136
      %p138 = scmp.ne.s32.totalorder %s129, %s130
      %p139 = scmp.eq.s32.totalorder %s18, 0
      %p140 = por %p138, %p139
      %p141 = scmp.ne.s32.totalorder %s129, %s130
      %p142 = scmp.eq.s32.totalorder %s19, 1
      %p143 = por %p141, %p142
      %p145 = scmp.ne.s32.totalorder %s130, %s144
      %p146 = scmp.eq.s32.totalorder %s19, 0
      %p147 = por %p145, %p146
      %s148 = ssub.s32 %s21, %s28
      %s149 = ssub.s32 %s20, %s32
      %s150 = sor.u32 %s148, %s149
      %p151 = scmp.eq.s32.totalorder %s150, 0
      %s153 = sadd.s32 %s152, 1
      %s154 = scalar_select %p151, %s152, %s153
      %p157 = pneg %p151
      %p158 = scmp.eq.s32.totalorder %s13, 1
      %p159 = por %p157, %p158
      %p160 = scmp.ne.s32.totalorder %s152, %s155
      %p161 = scmp.eq.s32.totalorder %s13, 0
      %p162 = por %p160, %p161
      %p163 = scmp.ne.s32.totalorder %s152, %s155
      %p164 = scmp.eq.s32.totalorder %s18, 1
      %p165 = por %p163, %p164
      %p166 = scmp.ne.s32.totalorder %s155, %s156
      %p167 = scmp.eq.s32.totalorder %s18, 0
      %p168 = por %p166, %p167
      %p169 = scmp.ne.s32.totalorder %s155, %s156
      %p170 = scmp.eq.s32.totalorder %s19, 1
      %p171 = por %p169, %p170
      %p173 = scmp.ne.s32.totalorder %s156, %s172
      %p174 = scmp.eq.s32.totalorder %s19, 0
      %p175 = por %p173, %p174
      %p176 = scmp.le.s32.totalorder 1, %s13
      %p177 = scmp.lt.s32.totalorder %s13, 3
      %p178 = pnand %p176, %p177
      %p179 = pneg %p178
      // Predicated region
      $region9: #{final_stage_forward.2} parent=5 // pred_check
        _
      $region10: #{final_stage_forward.2} parent=5 // pred_check_branch
        %181 = sbr.rel (%p178) target = $region12
      $region11: #{final_stage_forward.2} parent=5 // pred_region
        %s182 = ssub.s32 %s13, 1
        // Predicated region
        $region13: #{final_stage_forward.2} parent=11 // pred_check
          %p183 = pneg %p51
        $region14: #{final_stage_forward.2} parent=11 // pred_check_branch
          %185 = sbr.rel (%p183) target = $region16
        $region15: #{final_stage_forward.2} parent=11 // pred_region
          %s186 = smul.u32 32, %s22
          %188 = vsyncadd [#allocation3], 0
          %s189 = smul.addr %s186, 8
          %s190 = scalar_lea.hbm %s0, %s189
          %s191 = sshll.u32 %s190, 4
          %s192 = int_to_ptr.hbm [resolvable:$true] %s191
          %s193 = sshll.u32 [#allocation2], 4
          %s194 = int_to_ptr.vmem [resolvable:$true] %s193
          %199 = dma.hbm_to_vmem [thread:$0]  %s192, 196608, %s194, [#allocation3], 4096, 4096, 256
        $region16: #{final_stage_forward.2} parent=11 // pred_fallthru
          _
        // Predicated region
        $region17: #{final_stage_forward.2} parent=11 // pred_check
          %p200 = pneg %p98
        $region18: #{final_stage_forward.2} parent=11 // pred_check_branch
          %202 = sbr.rel (%p200) target = $region20
        $region19: #{final_stage_forward.2} parent=11 // pred_region
          _
        $region20: #{final_stage_forward.2} parent=11 // pred_fallthru
          _
        // Predicated region
        $region21: #{final_stage_forward.2} parent=11 // pred_check
          %p203 = pneg %p119
        $region22: #{final_stage_forward.2} parent=11 // pred_check_branch
          %205 = sbr.rel (%p203) target = $region24
        $region23: #{final_stage_forward.2} parent=11 // pred_region
          %207 = vsyncadd [#allocation5], 0
          %s209 = sshll.u32 %s3, 4
          %s210 = int_to_ptr.hbm [resolvable:$true] %s209
          %s211 = sshll.u32 [#allocation4], 4
          %s212 = int_to_ptr.vmem [resolvable:$true] %s211
          %214 = dma.hbm_to_vmem [thread:$0]  %s210, 128, %s212, [#allocation5]
        $region24: #{final_stage_forward.2} parent=11 // pred_fallthru
          _
        // Predicated region
        $region25: #{final_stage_forward.2} parent=11 // pred_check
          %p215 = pneg %p140
        $region26: #{final_stage_forward.2} parent=11 // pred_check_branch
          %217 = sbr.rel (%p215) target = $region28
        $region27: #{final_stage_forward.2} parent=11 // pred_region
          _
        $region28: #{final_stage_forward.2} parent=11 // pred_fallthru
          _
      $region12: #{final_stage_forward.2} parent=5 // pred_fallthru
        _
      %p218 = scmp.lt.s32.totalorder %s13, 2
      // Predicated region
      $region29: #{final_stage_forward.2} parent=5 // pred_check
        %p219 = pneg %p218
      $region30: #{final_stage_forward.2} parent=5 // pred_check_branch
        %221 = sbr.rel (%p219) target = $region32
      $region31: #{final_stage_forward.2} parent=5 // pred_region
        // Predicated region
        $region33: #{final_stage_forward.2} parent=31 // pred_check
          %p222 = pneg %p71
        $region34: #{final_stage_forward.2} parent=31 // pred_check_branch
          %224 = sbr.rel (%p222) target = $region36
        $region35: #{final_stage_forward.2} parent=31 // pred_region
          %p225 = scmp.lt.s32.totalorder %s21, 1
          %s226 = scalar_select %p225, %s21, 1
          %s227 = smul.addr %s226, 24
          %s228 = smul.addr %s227, 8
          %s229 = scalar_lea.vmem %s1, %s228
        $region36: #{final_stage_forward.2} parent=31 // pred_fallthru
          _
      $region32: #{final_stage_forward.2} parent=5 // pred_fallthru
        _
      %p230 = scmp.le.s32.totalorder 1, %s13
      %p231 = scmp.lt.s32.totalorder %s13, 3
      %p232 = pnand %p230, %p231
      %p233 = pneg %p232
      // Predicated region
      $region37: #{final_stage_forward.2} parent=5 // pred_check
        _
      $region38: #{final_stage_forward.2} parent=5 // pred_check_branch
        %235 = sbr.rel (%p232) target = $region40
      $region39: #{final_stage_forward.2} parent=5 // pred_region
        %s236 = ssub.s32 %s13, 1
        // Predicated region
        $region41: #{final_stage_forward.2} parent=39 // pred_check
          %p237 = pneg %p51
        $region42: #{final_stage_forward.2} parent=39 // pred_check_branch
          %239 = sbr.rel (%p237) target = $region44
        $region43: #{final_stage_forward.2} parent=39 // pred_region
          %241 = dma.done [#allocation3], 196608
        $region44: #{final_stage_forward.2} parent=39 // pred_fallthru
          _
        // Predicated region
        $region45: #{final_stage_forward.2} parent=39 // pred_check
          %p242 = pneg %p119
        $region46: #{final_stage_forward.2} parent=39 // pred_check_branch
          %244 = sbr.rel (%p242) target = $region48
        $region47: #{final_stage_forward.2} parent=39 // pred_region
          %246 = dma.done [#allocation5], 128
        $region48: #{final_stage_forward.2} parent=39 // pred_fallthru
          _
        %p247 = pneg %p51
        %p248 = pneg %p48
        %p249 = scmp.lt.s32.totalorder %s23, 1
        %s250 = scalar_select %p249, %s23, 1
        %s251 = smul.addr %s250, 24
        %s252 = smul.addr %s251, 8
        %s253 = scalar_lea.vmem %s1, %s252
        %p254 = pneg %p77
        %p255 = pneg %p74
        %p256 = pneg %p98
        %p257 = pneg %p95
        %p258 = pneg %p119
        %p259 = pneg %p116
        %p260 = pneg %p140
        %p261 = pneg %p137
        %p262 = pneg %p168
        %p263 = pneg %p165
        %s264 = smul.u32 32, %s22
        %p265 = scmp.lt.s32.totalorder %s23, 1
        %s266 = scalar_select %p265, %s23, 1
        %p267 = scmp.lt.s32.totalorder %s264, 31
        %s268 = scalar_select %p267, %s264, 31
        %s269 = smul.addr %s266, 32
        %s270 = sadd.s32 %s268, %s269
        %s271 = smul.addr %s270, 8
        %s272 = scalar_lea.vmem %s5, %s271
        %s273 = smul.u32 32, %s22
        %p274 = scmp.lt.s32.totalorder %s23, 1
        %s275 = scalar_select %p274, %s23, 1
        %s276 = smul.addr %s275, 24
        %s277 = smul.addr %s276, 8
        %s278 = scalar_lea.vmem %s1, %s277
        %s279 = smul.u32 32, %s22
        %p280 = scmp.lt.s32.totalorder %s23, 1
        %s281 = scalar_select %p280, %s23, 1
        %p282 = scmp.lt.s32.totalorder %s279, 31
        %s283 = scalar_select %p282, %s279, 31
        %s284 = smul.addr %s281, 32
        %s285 = sadd.s32 %s283, %s284
        %s286 = smul.addr %s285, 8
        %s287 = scalar_lea.vmem %s5, %s286
        %s288 = smul.u32 32, %s22
        %v289 = vld [vmem:[%s278] sm:$0xff]
        %v290 = vld [vmem:[%s278 + $0x8] sm:$0xff]
        %v291 = vld [vmem:[%s278 + $0x10] sm:$0xff]
        %v292 = vld [vmem:[%s278 + $0x18] sm:$0xff]
        %v293 = vld [vmem:[%s278 + $0x20] sm:$0xff]
        %v294 = vld [vmem:[%s278 + $0x28] sm:$0xff]
        %v295 = vld [vmem:[%s278 + $0x30] sm:$0xff]
        %v296 = vld [vmem:[%s278 + $0x38] sm:$0xff]
        %v297 = vld [vmem:[%s278 + $0x40] sm:$0xff]
        %v298 = vld [vmem:[%s278 + $0x48] sm:$0xff]
        %v299 = vld [vmem:[%s278 + $0x50] sm:$0xff]
        %v300 = vld [vmem:[%s278 + $0x58] sm:$0xff]
        %v301 = vld [vmem:[%s278 + $0x60] sm:$0xff]
        %v302 = vld [vmem:[%s278 + $0x68] sm:$0xff]
        %v303 = vld [vmem:[%s278 + $0x70] sm:$0xff]
        %v304 = vld [vmem:[%s278 + $0x78] sm:$0xff]
        %v305 = vld [vmem:[%s278 + $0x80] sm:$0xff]
        %v306 = vld [vmem:[%s278 + $0x88] sm:$0xff]
        %v307 = vld [vmem:[%s278 + $0x90] sm:$0xff]
        %v308 = vld [vmem:[%s278 + $0x98] sm:$0xff]
        %v309 = vld [vmem:[%s278 + $0xa0] sm:$0xff]
        %v310 = vld [vmem:[%s278 + $0xa8] sm:$0xf]
        %v311 = vld [vmem:[%s278 + $0xb0] sm:$0xf]
        %v312 = vld [vmem:[%s278 + $0xb8] sm:$0xf]
        %v313 = vld [vmem:[#allocation2] sm:$0xff]
        %v314 = vld [vmem:[#allocation2 + $0x8] sm:$0xff]
        %v315 = vld [vmem:[#allocation2 + $0x10] sm:$0xff]
        %v316 = vld [vmem:[#allocation2 + $0x18] sm:$0xff]
        %v317 = vld [vmem:[#allocation2 + $0x20] sm:$0xff]
        %v318 = vld [vmem:[#allocation2 + $0x28] sm:$0xff]
        %v319 = vld [vmem:[#allocation2 + $0x30] sm:$0xff]
        %v320 = vld [vmem:[#allocation2 + $0x38] sm:$0xff]
        %v321 = vld [vmem:[#allocation2 + $0x40] sm:$0xff]
        %v322 = vld [vmem:[#allocation2 + $0x48] sm:$0xff]
        %v323 = vld [vmem:[#allocation2 + $0x50] sm:$0xff]
        %v324 = vld [vmem:[#allocation2 + $0x58] sm:$0xff]
        %v325 = vld [vmem:[#allocation2 + $0x60] sm:$0xff]
        %v326 = vld [vmem:[#allocation2 + $0x68] sm:$0xff]
        %v327 = vld [vmem:[#allocation2 + $0x70] sm:$0xff]
        %v328 = vld [vmem:[#allocation2 + $0x78] sm:$0xff]
        %v329 = vld [vmem:[#allocation2 + $0x80] sm:$0xff]
        %v330 = vld [vmem:[#allocation2 + $0x88] sm:$0xff]
        %v331 = vld [vmem:[#allocation2 + $0x90] sm:$0xff]
        %v332 = vld [vmem:[#allocation2 + $0x98] sm:$0xff]
        %v333 = vld [vmem:[#allocation2 + $0xa0] sm:$0xff]
        %v334 = vld [vmem:[#allocation2 + $0xa8] sm:$0xff]
        %v335 = vld [vmem:[#allocation2 + $0xb0] sm:$0xff]
        %v336 = vld [vmem:[#allocation2 + $0xb8] sm:$0xff]
        %v337 = vld [vmem:[#allocation2 + $0xc0] sm:$0xff]
        %v338 = vld [vmem:[#allocation2 + $0xc8] sm:$0xff]
        %v339 = vld [vmem:[#allocation2 + $0xd0] sm:$0xff]
        %v340 = vld [vmem:[#allocation2 + $0xd8] sm:$0xff]
        %v341 = vld [vmem:[#allocation2 + $0xe0] sm:$0xff]
        %v342 = vld [vmem:[#allocation2 + $0xe8] sm:$0xff]
        %v343 = vld [vmem:[#allocation2 + $0xf0] sm:$0xff]
        %v344 = vld [vmem:[#allocation2 + $0xf8] sm:$0xff]
        %v345 = vld [vmem:[#allocation2 + $0x100] sm:$0xff]
        %v346 = vld [vmem:[#allocation2 + $0x108] sm:$0xff]
        %v347 = vld [vmem:[#allocation2 + $0x110] sm:$0xff]
        %v348 = vld [vmem:[#allocation2 + $0x118] sm:$0xff]
        %v349 = vld [vmem:[#allocation2 + $0x120] sm:$0xff]
        %v350 = vld [vmem:[#allocation2 + $0x128] sm:$0xff]
        %v351 = vld [vmem:[#allocation2 + $0x130] sm:$0xff]
        %v352 = vld [vmem:[#allocation2 + $0x138] sm:$0xff]
        %v353 = vld [vmem:[#allocation2 + $0x140] sm:$0xff]
        %v354 = vld [vmem:[#allocation2 + $0x148] sm:$0xff]
        %v355 = vld [vmem:[#allocation2 + $0x150] sm:$0xff]
        %v356 = vld [vmem:[#allocation2 + $0x158] sm:$0xff]
        %v357 = vld [vmem:[#allocation2 + $0x160] sm:$0xff]
        %v358 = vld [vmem:[#allocation2 + $0x168] sm:$0xff]
        %v359 = vld [vmem:[#allocation2 + $0x170] sm:$0xff]
        %v360 = vld [vmem:[#allocation2 + $0x178] sm:$0xff]
        %v361 = vld [vmem:[#allocation2 + $0x180] sm:$0xff]
        %v362 = vld [vmem:[#allocation2 + $0x188] sm:$0xff]
        %v363 = vld [vmem:[#allocation2 + $0x190] sm:$0xff]
        %v364 = vld [vmem:[#allocation2 + $0x198] sm:$0xff]
        %v365 = vld [vmem:[#allocation2 + $0x1a0] sm:$0xff]
        %v366 = vld [vmem:[#allocation2 + $0x1a8] sm:$0xff]
        %v367 = vld [vmem:[#allocation2 + $0x1b0] sm:$0xff]
        %v368 = vld [vmem:[#allocation2 + $0x1b8] sm:$0xff]
        %v369 = vld [vmem:[#allocation2 + $0x1c0] sm:$0xff]
        %v370 = vld [vmem:[#allocation2 + $0x1c8] sm:$0xff]
        %v371 = vld [vmem:[#allocation2 + $0x1d0] sm:$0xff]
        %v372 = vld [vmem:[#allocation2 + $0x1d8] sm:$0xff]
        %v373 = vld [vmem:[#allocation2 + $0x1e0] sm:$0xff]
        %v374 = vld [vmem:[#allocation2 + $0x1e8] sm:$0xff]
        %v375 = vld [vmem:[#allocation2 + $0x1f0] sm:$0xff]
        %v376 = vld [vmem:[#allocation2 + $0x1f8] sm:$0xff]
        %v377 = vld [vmem:[#allocation2 + $0x200] sm:$0xff]
        %v378 = vld [vmem:[#allocation2 + $0x208] sm:$0xff]
        %v379 = vld [vmem:[#allocation2 + $0x210] sm:$0xff]
        %v380 = vld [vmem:[#allocation2 + $0x218] sm:$0xff]
        %v381 = vld [vmem:[#allocation2 + $0x220] sm:$0xff]
        %v382 = vld [vmem:[#allocation2 + $0x228] sm:$0xff]
        %v383 = vld [vmem:[#allocation2 + $0x230] sm:$0xff]
        %v384 = vld [vmem:[#allocation2 + $0x238] sm:$0xff]
        %v385 = vld [vmem:[#allocation2 + $0x240] sm:$0xff]
        %v386 = vld [vmem:[#allocation2 + $0x248] sm:$0xff]
        %v387 = vld [vmem:[#allocation2 + $0x250] sm:$0xff]
        %v388 = vld [vmem:[#allocation2 + $0x258] sm:$0xff]
        %v389 = vld [vmem:[#allocation2 + $0x260] sm:$0xff]
        %v390 = vld [vmem:[#allocation2 + $0x268] sm:$0xff]
        %v391 = vld [vmem:[#allocation2 + $0x270] sm:$0xff]
        %v392 = vld [vmem:[#allocation2 + $0x278] sm:$0xff]
        %v393 = vld [vmem:[#allocation2 + $0x280] sm:$0xff]
        %v394 = vld [vmem:[#allocation2 + $0x288] sm:$0xff]
        %v395 = vld [vmem:[#allocation2 + $0x290] sm:$0xff]
        %v396 = vld [vmem:[#allocation2 + $0x298] sm:$0xff]
        %v397 = vld [vmem:[#allocation2 + $0x2a0] sm:$0xff]
        %v398 = vld [vmem:[#allocation2 + $0x2a8] sm:$0xff]
        %v399 = vld [vmem:[#allocation2 + $0x2b0] sm:$0xff]
        %v400 = vld [vmem:[#allocation2 + $0x2b8] sm:$0xff]
        %v401 = vld [vmem:[#allocation2 + $0x2c0] sm:$0xff]
        %v402 = vld [vmem:[#allocation2 + $0x2c8] sm:$0xff]
        %v403 = vld [vmem:[#allocation2 + $0x2d0] sm:$0xff]
        %v404 = vld [vmem:[#allocation2 + $0x2d8] sm:$0xff]
        %v405 = vld [vmem:[#allocation2 + $0x2e0] sm:$0xff]
        %v406 = vld [vmem:[#allocation2 + $0x2e8] sm:$0xff]
        %v407 = vld [vmem:[#allocation2 + $0x2f0] sm:$0xff]
        %v408 = vld [vmem:[#allocation2 + $0x2f8] sm:$0xff]
        %v409 = vld [vmem:[#allocation2 + $0x300] sm:$0xff]
        %v410 = vld [vmem:[#allocation2 + $0x308] sm:$0xff]
        %v411 = vld [vmem:[#allocation2 + $0x310] sm:$0xff]
        %v412 = vld [vmem:[#allocation2 + $0x318] sm:$0xff]
        %v413 = vld [vmem:[#allocation2 + $0x320] sm:$0xff]
        %v414 = vld [vmem:[#allocation2 + $0x328] sm:$0xff]
        %v415 = vld [vmem:[#allocation2 + $0x330] sm:$0xff]
        %v416 = vld [vmem:[#allocation2 + $0x338] sm:$0xff]
        %v417 = vld [vmem:[#allocation2 + $0x340] sm:$0xff]
        %v418 = vld [vmem:[#allocation2 + $0x348] sm:$0xff]
        %v419 = vld [vmem:[#allocation2 + $0x350] sm:$0xff]
        %v420 = vld [vmem:[#allocation2 + $0x358] sm:$0xff]
        %v421 = vld [vmem:[#allocation2 + $0x360] sm:$0xff]
        %v422 = vld [vmem:[#allocation2 + $0x368] sm:$0xff]
        %v423 = vld [vmem:[#allocation2 + $0x370] sm:$0xff]
        %v424 = vld [vmem:[#allocation2 + $0x378] sm:$0xff]
        %v425 = vld [vmem:[#allocation2 + $0x380] sm:$0xff]
        %v426 = vld [vmem:[#allocation2 + $0x388] sm:$0xff]
        %v427 = vld [vmem:[#allocation2 + $0x390] sm:$0xff]
        %v428 = vld [vmem:[#allocation2 + $0x398] sm:$0xff]
        %v429 = vld [vmem:[#allocation2 + $0x3a0] sm:$0xff]
        %v430 = vld [vmem:[#allocation2 + $0x3a8] sm:$0xff]
        %v431 = vld [vmem:[#allocation2 + $0x3b0] sm:$0xff]
        %v432 = vld [vmem:[#allocation2 + $0x3b8] sm:$0xff]
        %v433 = vld [vmem:[#allocation2 + $0x3c0] sm:$0xff]
        %v434 = vld [vmem:[#allocation2 + $0x3c8] sm:$0xff]
        %v435 = vld [vmem:[#allocation2 + $0x3d0] sm:$0xff]
        %v436 = vld [vmem:[#allocation2 + $0x3d8] sm:$0xff]
        %v437 = vld [vmem:[#allocation2 + $0x3e0] sm:$0xff]
        %v438 = vld [vmem:[#allocation2 + $0x3e8] sm:$0xff]
        %v439 = vld [vmem:[#allocation2 + $0x3f0] sm:$0xff]
        %v440 = vld [vmem:[#allocation2 + $0x3f8] sm:$0xff]
        %v441 = vld [vmem:[#allocation2 + $0x400] sm:$0xff]
        %v442 = vld [vmem:[#allocation2 + $0x408] sm:$0xff]
        %v443 = vld [vmem:[#allocation2 + $0x410] sm:$0xff]
        %v444 = vld [vmem:[#allocation2 + $0x418] sm:$0xff]
        %v445 = vld [vmem:[#allocation2 + $0x420] sm:$0xff]
        %v446 = vld [vmem:[#allocation2 + $0x428] sm:$0xff]
        %v447 = vld [vmem:[#allocation2 + $0x430] sm:$0xff]
        %v448 = vld [vmem:[#allocation2 + $0x438] sm:$0xff]
        %v449 = vld [vmem:[#allocation2 + $0x440] sm:$0xff]
        %v450 = vld [vmem:[#allocation2 + $0x448] sm:$0xff]
        %v451 = vld [vmem:[#allocation2 + $0x450] sm:$0xff]
        %v452 = vld [vmem:[#allocation2 + $0x458] sm:$0xff]
        %v453 = vld [vmem:[#allocation2 + $0x460] sm:$0xff]
        %v454 = vld [vmem:[#allocation2 + $0x468] sm:$0xff]
        %v455 = vld [vmem:[#allocation2 + $0x470] sm:$0xff]
        %v456 = vld [vmem:[#allocation2 + $0x478] sm:$0xff]
        %v457 = vld [vmem:[#allocation2 + $0x480] sm:$0xff]
        %v458 = vld [vmem:[#allocation2 + $0x488] sm:$0xff]
        %v459 = vld [vmem:[#allocation2 + $0x490] sm:$0xff]
        %v460 = vld [vmem:[#allocation2 + $0x498] sm:$0xff]
        %v461 = vld [vmem:[#allocation2 + $0x4a0] sm:$0xff]
        %v462 = vld [vmem:[#allocation2 + $0x4a8] sm:$0xff]
        %v463 = vld [vmem:[#allocation2 + $0x4b0] sm:$0xff]
        %v464 = vld [vmem:[#allocation2 + $0x4b8] sm:$0xff]
        %v465 = vld [vmem:[#allocation2 + $0x4c0] sm:$0xff]
        %v466 = vld [vmem:[#allocation2 + $0x4c8] sm:$0xff]
        %v467 = vld [vmem:[#allocation2 + $0x4d0] sm:$0xff]
        %v468 = vld [vmem:[#allocation2 + $0x4d8] sm:$0xff]
        %v469 = vld [vmem:[#allocation2 + $0x4e0] sm:$0xff]
        %v470 = vld [vmem:[#allocation2 + $0x4e8] sm:$0xff]
        %v471 = vld [vmem:[#allocation2 + $0x4f0] sm:$0xff]
        %v472 = vld [vmem:[#allocation2 + $0x4f8] sm:$0xff]
        %v473 = vld [vmem:[#allocation2 + $0x500] sm:$0xff]
        %v474 = vld [vmem:[#allocation2 + $0x508] sm:$0xff]
        %v475 = vld [vmem:[#allocation2 + $0x510] sm:$0xff]
        %v476 = vld [vmem:[#allocation2 + $0x518] sm:$0xff]
        %v477 = vld [vmem:[#allocation2 + $0x520] sm:$0xff]
        %v478 = vld [vmem:[#allocation2 + $0x528] sm:$0xff]
        %v479 = vld [vmem:[#allocation2 + $0x530] sm:$0xff]
        %v480 = vld [vmem:[#allocation2 + $0x538] sm:$0xff]
        %v481 = vld [vmem:[#allocation2 + $0x540] sm:$0xff]
        %v482 = vld [vmem:[#allocation2 + $0x548] sm:$0xff]
        %v483 = vld [vmem:[#allocation2 + $0x550] sm:$0xff]
        %v484 = vld [vmem:[#allocation2 + $0x558] sm:$0xff]
        %v485 = vld [vmem:[#allocation2 + $0x560] sm:$0xff]
        %v486 = vld [vmem:[#allocation2 + $0x568] sm:$0xff]
        %v487 = vld [vmem:[#allocation2 + $0x570] sm:$0xff]
        %v488 = vld [vmem:[#allocation2 + $0x578] sm:$0xff]
        %v489 = vld [vmem:[#allocation2 + $0x580] sm:$0xff]
        %v490 = vld [vmem:[#allocation2 + $0x588] sm:$0xff]
        %v491 = vld [vmem:[#allocation2 + $0x590] sm:$0xff]
        %v492 = vld [vmem:[#allocation2 + $0x598] sm:$0xff]
        %v493 = vld [vmem:[#allocation2 + $0x5a0] sm:$0xff]
        %v494 = vld [vmem:[#allocation2 + $0x5a8] sm:$0xff]
        %v495 = vld [vmem:[#allocation2 + $0x5b0] sm:$0xff]
        %v496 = vld [vmem:[#allocation2 + $0x5b8] sm:$0xff]
        %v497 = vld [vmem:[#allocation2 + $0x5c0] sm:$0xff]
        %v498 = vld [vmem:[#allocation2 + $0x5c8] sm:$0xff]
        %v499 = vld [vmem:[#allocation2 + $0x5d0] sm:$0xff]
        %v500 = vld [vmem:[#allocation2 + $0x5d8] sm:$0xff]
        %v501 = vld [vmem:[#allocation2 + $0x5e0] sm:$0xff]
        %v502 = vld [vmem:[#allocation2 + $0x5e8] sm:$0xff]
        %v503 = vld [vmem:[#allocation2 + $0x5f0] sm:$0xff]
        %v504 = vld [vmem:[#allocation2 + $0x5f8] sm:$0xff]
        %v505 = vld [vmem:[#allocation2 + $0x600] sm:$0xff]
        %v506 = vld [vmem:[#allocation2 + $0x608] sm:$0xff]
        %v507 = vld [vmem:[#allocation2 + $0x610] sm:$0xff]
        %v508 = vld [vmem:[#allocation2 + $0x618] sm:$0xff]
        %v509 = vld [vmem:[#allocation2 + $0x620] sm:$0xff]
        %v510 = vld [vmem:[#allocation2 + $0x628] sm:$0xff]
        %v511 = vld [vmem:[#allocation2 + $0x630] sm:$0xff]
        %v512 = vld [vmem:[#allocation2 + $0x638] sm:$0xff]
        %v513 = vld [vmem:[#allocation2 + $0x640] sm:$0xff]
        %v514 = vld [vmem:[#allocation2 + $0x648] sm:$0xff]
        %v515 = vld [vmem:[#allocation2 + $0x650] sm:$0xff]
        %v516 = vld [vmem:[#allocation2 + $0x658] sm:$0xff]
        %v517 = vld [vmem:[#allocation2 + $0x660] sm:$0xff]
        %v518 = vld [vmem:[#allocation2 + $0x668] sm:$0xff]
        %v519 = vld [vmem:[#allocation2 + $0x670] sm:$0xff]
        %v520 = vld [vmem:[#allocation2 + $0x678] sm:$0xff]
        %v521 = vld [vmem:[#allocation2 + $0x680] sm:$0xff]
        %v522 = vld [vmem:[#allocation2 + $0x688] sm:$0xff]
        %v523 = vld [vmem:[#allocation2 + $0x690] sm:$0xff]
        %v524 = vld [vmem:[#allocation2 + $0x698] sm:$0xff]
        %v525 = vld [vmem:[#allocation2 + $0x6a0] sm:$0xff]
        %v526 = vld [vmem:[#allocation2 + $0x6a8] sm:$0xff]
        %v527 = vld [vmem:[#allocation2 + $0x6b0] sm:$0xff]
        %v528 = vld [vmem:[#allocation2 + $0x6b8] sm:$0xff]
        %v529 = vld [vmem:[#allocation2 + $0x6c0] sm:$0xff]
        %v530 = vld [vmem:[#allocation2 + $0x6c8] sm:$0xff]
        %v531 = vld [vmem:[#allocation2 + $0x6d0] sm:$0xff]
        %v532 = vld [vmem:[#allocation2 + $0x6d8] sm:$0xff]
        %v533 = vld [vmem:[#allocation2 + $0x6e0] sm:$0xff]
        %v534 = vld [vmem:[#allocation2 + $0x6e8] sm:$0xff]
        %v535 = vld [vmem:[#allocation2 + $0x6f0] sm:$0xff]
        %v536 = vld [vmem:[#allocation2 + $0x6f8] sm:$0xff]
        %v537 = vld [vmem:[#allocation2 + $0x700] sm:$0xff]
        %v538 = vld [vmem:[#allocation2 + $0x708] sm:$0xff]
        %v539 = vld [vmem:[#allocation2 + $0x710] sm:$0xff]
        %v540 = vld [vmem:[#allocation2 + $0x718] sm:$0xff]
        %v541 = vld [vmem:[#allocation2 + $0x720] sm:$0xff]
        %v542 = vld [vmem:[#allocation2 + $0x728] sm:$0xff]
        %v543 = vld [vmem:[#allocation2 + $0x730] sm:$0xff]
        %v544 = vld [vmem:[#allocation2 + $0x738] sm:$0xff]
        %v545 = vld [vmem:[#allocation2 + $0x740] sm:$0xff]
        %v546 = vld [vmem:[#allocation2 + $0x748] sm:$0xff]
        %v547 = vld [vmem:[#allocation2 + $0x750] sm:$0xff]
        %v548 = vld [vmem:[#allocation2 + $0x758] sm:$0xff]
        %v549 = vld [vmem:[#allocation2 + $0x760] sm:$0xff]
        %v550 = vld [vmem:[#allocation2 + $0x768] sm:$0xff]
        %v551 = vld [vmem:[#allocation2 + $0x770] sm:$0xff]
        %v552 = vld [vmem:[#allocation2 + $0x778] sm:$0xff]
        %v553 = vld [vmem:[#allocation2 + $0x780] sm:$0xff]
        %v554 = vld [vmem:[#allocation2 + $0x788] sm:$0xff]
        %v555 = vld [vmem:[#allocation2 + $0x790] sm:$0xff]
        %v556 = vld [vmem:[#allocation2 + $0x798] sm:$0xff]
        %v557 = vld [vmem:[#allocation2 + $0x7a0] sm:$0xff]
        %v558 = vld [vmem:[#allocation2 + $0x7a8] sm:$0xff]
        %v559 = vld [vmem:[#allocation2 + $0x7b0] sm:$0xff]
        %v560 = vld [vmem:[#allocation2 + $0x7b8] sm:$0xff]
        %v561 = vld [vmem:[#allocation2 + $0x7c0] sm:$0xff]
        %v562 = vld [vmem:[#allocation2 + $0x7c8] sm:$0xff]
        %v563 = vld [vmem:[#allocation2 + $0x7d0] sm:$0xff]
        %v564 = vld [vmem:[#allocation2 + $0x7d8] sm:$0xff]
        %v565 = vld [vmem:[#allocation2 + $0x7e0] sm:$0xff]
        %v566 = vld [vmem:[#allocation2 + $0x7e8] sm:$0xff]
        %v567 = vld [vmem:[#allocation2 + $0x7f0] sm:$0xff]
        %v568 = vld [vmem:[#allocation2 + $0x7f8] sm:$0xff]
        %v569 = vld [vmem:[#allocation2 + $0x800] sm:$0xff]
        %v570 = vld [vmem:[#allocation2 + $0x808] sm:$0xff]
        %v571 = vld [vmem:[#allocation2 + $0x810] sm:$0xff]
        %v572 = vld [vmem:[#allocation2 + $0x818] sm:$0xff]
        %v573 = vld [vmem:[#allocation2 + $0x820] sm:$0xff]
        %v574 = vld [vmem:[#allocation2 + $0x828] sm:$0xff]
        %v575 = vld [vmem:[#allocation2 + $0x830] sm:$0xff]
        %v576 = vld [vmem:[#allocation2 + $0x838] sm:$0xff]
        %v577 = vld [vmem:[#allocation2 + $0x840] sm:$0xff]
        %v578 = vld [vmem:[#allocation2 + $0x848] sm:$0xff]
        %v579 = vld [vmem:[#allocation2 + $0x850] sm:$0xff]
        %v580 = vld [vmem:[#allocation2 + $0x858] sm:$0xff]
        %v581 = vld [vmem:[#allocation2 + $0x860] sm:$0xff]
        %v582 = vld [vmem:[#allocation2 + $0x868] sm:$0xff]
        %v583 = vld [vmem:[#allocation2 + $0x870] sm:$0xff]
        %v584 = vld [vmem:[#allocation2 + $0x878] sm:$0xff]
        %v585 = vld [vmem:[#allocation2 + $0x880] sm:$0xff]
        %v586 = vld [vmem:[#allocation2 + $0x888] sm:$0xff]
        %v587 = vld [vmem:[#allocation2 + $0x890] sm:$0xff]
        %v588 = vld [vmem:[#allocation2 + $0x898] sm:$0xff]
        %v589 = vld [vmem:[#allocation2 + $0x8a0] sm:$0xff]
        %v590 = vld [vmem:[#allocation2 + $0x8a8] sm:$0xff]
        %v591 = vld [vmem:[#allocation2 + $0x8b0] sm:$0xff]
        %v592 = vld [vmem:[#allocation2 + $0x8b8] sm:$0xff]
        %v593 = vld [vmem:[#allocation2 + $0x8c0] sm:$0xff]
        %v594 = vld [vmem:[#allocation2 + $0x8c8] sm:$0xff]
        %v595 = vld [vmem:[#allocation2 + $0x8d0] sm:$0xff]
        %v596 = vld [vmem:[#allocation2 + $0x8d8] sm:$0xff]
        %v597 = vld [vmem:[#allocation2 + $0x8e0] sm:$0xff]
        %v598 = vld [vmem:[#allocation2 + $0x8e8] sm:$0xff]
        %v599 = vld [vmem:[#allocation2 + $0x8f0] sm:$0xff]
        %v600 = vld [vmem:[#allocation2 + $0x8f8] sm:$0xff]
        %v601 = vld [vmem:[#allocation2 + $0x900] sm:$0xff]
        %v602 = vld [vmem:[#allocation2 + $0x908] sm:$0xff]
        %v603 = vld [vmem:[#allocation2 + $0x910] sm:$0xff]
        %v604 = vld [vmem:[#allocation2 + $0x918] sm:$0xff]
        %v605 = vld [vmem:[#allocation2 + $0x920] sm:$0xff]
        %v606 = vld [vmem:[#allocation2 + $0x928] sm:$0xff]
        %v607 = vld [vmem:[#allocation2 + $0x930] sm:$0xff]
        %v608 = vld [vmem:[#allocation2 + $0x938] sm:$0xff]
        %v609 = vld [vmem:[#allocation2 + $0x940] sm:$0xff]
        %v610 = vld [vmem:[#allocation2 + $0x948] sm:$0xff]
        %v611 = vld [vmem:[#allocation2 + $0x950] sm:$0xff]
        %v612 = vld [vmem:[#allocation2 + $0x958] sm:$0xff]
        %v613 = vld [vmem:[#allocation2 + $0x960] sm:$0xff]
        %v614 = vld [vmem:[#allocation2 + $0x968] sm:$0xff]
        %v615 = vld [vmem:[#allocation2 + $0x970] sm:$0xff]
        %v616 = vld [vmem:[#allocation2 + $0x978] sm:$0xff]
        %v617 = vld [vmem:[#allocation2 + $0x980] sm:$0xff]
        %v618 = vld [vmem:[#allocation2 + $0x988] sm:$0xff]
        %v619 = vld [vmem:[#allocation2 + $0x990] sm:$0xff]
        %v620 = vld [vmem:[#allocation2 + $0x998] sm:$0xff]
        %v621 = vld [vmem:[#allocation2 + $0x9a0] sm:$0xff]
        %v622 = vld [vmem:[#allocation2 + $0x9a8] sm:$0xff]
        %v623 = vld [vmem:[#allocation2 + $0x9b0] sm:$0xff]
        %v624 = vld [vmem:[#allocation2 + $0x9b8] sm:$0xff]
        %v625 = vld [vmem:[#allocation2 + $0x9c0] sm:$0xff]
        %v626 = vld [vmem:[#allocation2 + $0x9c8] sm:$0xff]
        %v627 = vld [vmem:[#allocation2 + $0x9d0] sm:$0xff]
        %v628 = vld [vmem:[#allocation2 + $0x9d8] sm:$0xff]
        %v629 = vld [vmem:[#allocation2 + $0x9e0] sm:$0xff]
        %v630 = vld [vmem:[#allocation2 + $0x9e8] sm:$0xff]
        %v631 = vld [vmem:[#allocation2 + $0x9f0] sm:$0xff]
        %v632 = vld [vmem:[#allocation2 + $0x9f8] sm:$0xff]
        %v633 = vld [vmem:[#allocation2 + $0xa00] sm:$0xff]
        %v634 = vld [vmem:[#allocation2 + $0xa08] sm:$0xff]
        %v635 = vld [vmem:[#allocation2 + $0xa10] sm:$0xff]
        %v636 = vld [vmem:[#allocation2 + $0xa18] sm:$0xff]
        %v637 = vld [vmem:[#allocation2 + $0xa20] sm:$0xff]
        %v638 = vld [vmem:[#allocation2 + $0xa28] sm:$0xff]
        %v639 = vld [vmem:[#allocation2 + $0xa30] sm:$0xff]
        %v640 = vld [vmem:[#allocation2 + $0xa38] sm:$0xff]
        %v641 = vld [vmem:[#allocation2 + $0xa40] sm:$0xff]
        %v642 = vld [vmem:[#allocation2 + $0xa48] sm:$0xff]
        %v643 = vld [vmem:[#allocation2 + $0xa50] sm:$0xff]
        %v644 = vld [vmem:[#allocation2 + $0xa58] sm:$0xff]
        %v645 = vld [vmem:[#allocation2 + $0xa60] sm:$0xff]
        %v646 = vld [vmem:[#allocation2 + $0xa68] sm:$0xff]
        %v647 = vld [vmem:[#allocation2 + $0xa70] sm:$0xff]
        %v648 = vld [vmem:[#allocation2 + $0xa78] sm:$0xff]
        %v649 = vld [vmem:[#allocation2 + $0xa80] sm:$0xff]
        %v650 = vld [vmem:[#allocation2 + $0xa88] sm:$0xff]
        %v651 = vld [vmem:[#allocation2 + $0xa90] sm:$0xff]
        %v652 = vld [vmem:[#allocation2 + $0xa98] sm:$0xff]
        %v653 = vld [vmem:[#allocation2 + $0xaa0] sm:$0xff]
        %v654 = vld [vmem:[#allocation2 + $0xaa8] sm:$0xff]
        %v655 = vld [vmem:[#allocation2 + $0xab0] sm:$0xff]
        %v656 = vld [vmem:[#allocation2 + $0xab8] sm:$0xff]
        %v657 = vld [vmem:[#allocation2 + $0xac0] sm:$0xff]
        %v658 = vld [vmem:[#allocation2 + $0xac8] sm:$0xff]
        %v659 = vld [vmem:[#allocation2 + $0xad0] sm:$0xff]
        %v660 = vld [vmem:[#allocation2 + $0xad8] sm:$0xff]
        %v661 = vld [vmem:[#allocation2 + $0xae0] sm:$0xff]
        %v662 = vld [vmem:[#allocation2 + $0xae8] sm:$0xff]
        %v663 = vld [vmem:[#allocation2 + $0xaf0] sm:$0xff]
        %v664 = vld [vmem:[#allocation2 + $0xaf8] sm:$0xff]
        %v665 = vld [vmem:[#allocation2 + $0xb00] sm:$0xff]
        %v666 = vld [vmem:[#allocation2 + $0xb08] sm:$0xff]
        %v667 = vld [vmem:[#allocation2 + $0xb10] sm:$0xff]
        %v668 = vld [vmem:[#allocation2 + $0xb18] sm:$0xff]
        %v669 = vld [vmem:[#allocation2 + $0xb20] sm:$0xff]
        %v670 = vld [vmem:[#allocation2 + $0xb28] sm:$0xff]
        %v671 = vld [vmem:[#allocation2 + $0xb30] sm:$0xff]
        %v672 = vld [vmem:[#allocation2 + $0xb38] sm:$0xff]
        %v673 = vld [vmem:[#allocation2 + $0xb40] sm:$0xff]
        %v674 = vld [vmem:[#allocation2 + $0xb48] sm:$0xff]
        %v675 = vld [vmem:[#allocation2 + $0xb50] sm:$0xff]
        %v676 = vld [vmem:[#allocation2 + $0xb58] sm:$0xff]
        %v677 = vld [vmem:[#allocation2 + $0xb60] sm:$0xff]
        %v678 = vld [vmem:[#allocation2 + $0xb68] sm:$0xff]
        %v679 = vld [vmem:[#allocation2 + $0xb70] sm:$0xff]
        %v680 = vld [vmem:[#allocation2 + $0xb78] sm:$0xff]
        %v681 = vld [vmem:[#allocation2 + $0xb80] sm:$0xff]
        %v682 = vld [vmem:[#allocation2 + $0xb88] sm:$0xff]
        %v683 = vld [vmem:[#allocation2 + $0xb90] sm:$0xff]
        %v684 = vld [vmem:[#allocation2 + $0xb98] sm:$0xff]
        %v685 = vld [vmem:[#allocation2 + $0xba0] sm:$0xff]
        %v686 = vld [vmem:[#allocation2 + $0xba8] sm:$0xff]
        %v687 = vld [vmem:[#allocation2 + $0xbb0] sm:$0xff]
        %v688 = vld [vmem:[#allocation2 + $0xbb8] sm:$0xff]
        %v689 = vld [vmem:[#allocation2 + $0xbc0] sm:$0xff]
        %v690 = vld [vmem:[#allocation2 + $0xbc8] sm:$0xff]
        %v691 = vld [vmem:[#allocation2 + $0xbd0] sm:$0xff]
        %v692 = vld [vmem:[#allocation2 + $0xbd8] sm:$0xff]
        %v693 = vld [vmem:[#allocation2 + $0xbe0] sm:$0xff]
        %v694 = vld [vmem:[#allocation2 + $0xbe8] sm:$0xff]
        %v695 = vld [vmem:[#allocation2 + $0xbf0] sm:$0xff]
        %v696 = vld [vmem:[#allocation2 + $0xbf8] sm:$0xff]
        %v697 = vld [vmem:[#allocation2 + $0xc00] sm:$0xff]
        %v698 = vld [vmem:[#allocation2 + $0xc08] sm:$0xff]
        %v699 = vld [vmem:[#allocation2 + $0xc10] sm:$0xff]
        %v700 = vld [vmem:[#allocation2 + $0xc18] sm:$0xff]
        %v701 = vld [vmem:[#allocation2 + $0xc20] sm:$0xff]
        %v702 = vld [vmem:[#allocation2 + $0xc28] sm:$0xff]
        %v703 = vld [vmem:[#allocation2 + $0xc30] sm:$0xff]
        %v704 = vld [vmem:[#allocation2 + $0xc38] sm:$0xff]
        %v705 = vld [vmem:[#allocation2 + $0xc40] sm:$0xff]
        %v706 = vld [vmem:[#allocation2 + $0xc48] sm:$0xff]
        %v707 = vld [vmem:[#allocation2 + $0xc50] sm:$0xff]
        %v708 = vld [vmem:[#allocation2 + $0xc58] sm:$0xff]
        %v709 = vld [vmem:[#allocation2 + $0xc60] sm:$0xff]
        %v710 = vld [vmem:[#allocation2 + $0xc68] sm:$0xff]
        %v711 = vld [vmem:[#allocation2 + $0xc70] sm:$0xff]
        %v712 = vld [vmem:[#allocation2 + $0xc78] sm:$0xff]
        %v713 = vld [vmem:[#allocation2 + $0xc80] sm:$0xff]
        %v714 = vld [vmem:[#allocation2 + $0xc88] sm:$0xff]
        %v715 = vld [vmem:[#allocation2 + $0xc90] sm:$0xff]
        %v716 = vld [vmem:[#allocation2 + $0xc98] sm:$0xff]
        %v717 = vld [vmem:[#allocation2 + $0xca0] sm:$0xff]
        %v718 = vld [vmem:[#allocation2 + $0xca8] sm:$0xff]
        %v719 = vld [vmem:[#allocation2 + $0xcb0] sm:$0xff]
        %v720 = vld [vmem:[#allocation2 + $0xcb8] sm:$0xff]
        %v721 = vld [vmem:[#allocation2 + $0xcc0] sm:$0xff]
        %v722 = vld [vmem:[#allocation2 + $0xcc8] sm:$0xff]
        %v723 = vld [vmem:[#allocation2 + $0xcd0] sm:$0xff]
        %v724 = vld [vmem:[#allocation2 + $0xcd8] sm:$0xff]
        %v725 = vld [vmem:[#allocation2 + $0xce0] sm:$0xff]
        %v726 = vld [vmem:[#allocation2 + $0xce8] sm:$0xff]
        %v727 = vld [vmem:[#allocation2 + $0xcf0] sm:$0xff]
        %v728 = vld [vmem:[#allocation2 + $0xcf8] sm:$0xff]
        %v729 = vld [vmem:[#allocation2 + $0xd00] sm:$0xff]
        %v730 = vld [vmem:[#allocation2 + $0xd08] sm:$0xff]
        %v731 = vld [vmem:[#allocation2 + $0xd10] sm:$0xff]
        %v732 = vld [vmem:[#allocation2 + $0xd18] sm:$0xff]
        %v733 = vld [vmem:[#allocation2 + $0xd20] sm:$0xff]
        %v734 = vld [vmem:[#allocation2 + $0xd28] sm:$0xff]
        %v735 = vld [vmem:[#allocation2 + $0xd30] sm:$0xff]
        %v736 = vld [vmem:[#allocation2 + $0xd38] sm:$0xff]
        %v737 = vld [vmem:[#allocation2 + $0xd40] sm:$0xff]
        %v738 = vld [vmem:[#allocation2 + $0xd48] sm:$0xff]
        %v739 = vld [vmem:[#allocation2 + $0xd50] sm:$0xff]
        %v740 = vld [vmem:[#allocation2 + $0xd58] sm:$0xff]
        %v741 = vld [vmem:[#allocation2 + $0xd60] sm:$0xff]
        %v742 = vld [vmem:[#allocation2 + $0xd68] sm:$0xff]
        %v743 = vld [vmem:[#allocation2 + $0xd70] sm:$0xff]
        %v744 = vld [vmem:[#allocation2 + $0xd78] sm:$0xff]
        %v745 = vld [vmem:[#allocation2 + $0xd80] sm:$0xff]
        %v746 = vld [vmem:[#allocation2 + $0xd88] sm:$0xff]
        %v747 = vld [vmem:[#allocation2 + $0xd90] sm:$0xff]
        %v748 = vld [vmem:[#allocation2 + $0xd98] sm:$0xff]
        %v749 = vld [vmem:[#allocation2 + $0xda0] sm:$0xff]
        %v750 = vld [vmem:[#allocation2 + $0xda8] sm:$0xff]
        %v751 = vld [vmem:[#allocation2 + $0xdb0] sm:$0xff]
        %v752 = vld [vmem:[#allocation2 + $0xdb8] sm:$0xff]
        %v753 = vld [vmem:[#allocation2 + $0xdc0] sm:$0xff]
        %v754 = vld [vmem:[#allocation2 + $0xdc8] sm:$0xff]
        %v755 = vld [vmem:[#allocation2 + $0xdd0] sm:$0xff]
        %v756 = vld [vmem:[#allocation2 + $0xdd8] sm:$0xff]
        %v757 = vld [vmem:[#allocation2 + $0xde0] sm:$0xff]
        %v758 = vld [vmem:[#allocation2 + $0xde8] sm:$0xff]
        %v759 = vld [vmem:[#allocation2 + $0xdf0] sm:$0xff]
        %v760 = vld [vmem:[#allocation2 + $0xdf8] sm:$0xff]
        %v761 = vld [vmem:[#allocation2 + $0xe00] sm:$0xff]
        %v762 = vld [vmem:[#allocation2 + $0xe08] sm:$0xff]
        %v763 = vld [vmem:[#allocation2 + $0xe10] sm:$0xff]
        %v764 = vld [vmem:[#allocation2 + $0xe18] sm:$0xff]
        %v765 = vld [vmem:[#allocation2 + $0xe20] sm:$0xff]
        %v766 = vld [vmem:[#allocation2 + $0xe28] sm:$0xff]
        %v767 = vld [vmem:[#allocation2 + $0xe30] sm:$0xff]
        %v768 = vld [vmem:[#allocation2 + $0xe38] sm:$0xff]
        %v769 = vld [vmem:[#allocation2 + $0xe40] sm:$0xff]
        %v770 = vld [vmem:[#allocation2 + $0xe48] sm:$0xff]
        %v771 = vld [vmem:[#allocation2 + $0xe50] sm:$0xff]
        %v772 = vld [vmem:[#allocation2 + $0xe58] sm:$0xff]
        %v773 = vld [vmem:[#allocation2 + $0xe60] sm:$0xff]
        %v774 = vld [vmem:[#allocation2 + $0xe68] sm:$0xff]
        %v775 = vld [vmem:[#allocation2 + $0xe70] sm:$0xff]
        %v776 = vld [vmem:[#allocation2 + $0xe78] sm:$0xff]
        %v777 = vld [vmem:[#allocation2 + $0xe80] sm:$0xff]
        %v778 = vld [vmem:[#allocation2 + $0xe88] sm:$0xff]
        %v779 = vld [vmem:[#allocation2 + $0xe90] sm:$0xff]
        %v780 = vld [vmem:[#allocation2 + $0xe98] sm:$0xff]
        %v781 = vld [vmem:[#allocation2 + $0xea0] sm:$0xff]
        %v782 = vld [vmem:[#allocation2 + $0xea8] sm:$0xff]
        %v783 = vld [vmem:[#allocation2 + $0xeb0] sm:$0xff]
        %v784 = vld [vmem:[#allocation2 + $0xeb8] sm:$0xff]
        %v785 = vld [vmem:[#allocation2 + $0xec0] sm:$0xff]
        %v786 = vld [vmem:[#allocation2 + $0xec8] sm:$0xff]
        %v787 = vld [vmem:[#allocation2 + $0xed0] sm:$0xff]
        %v788 = vld [vmem:[#allocation2 + $0xed8] sm:$0xff]
        %v789 = vld [vmem:[#allocation2 + $0xee0] sm:$0xff]
        %v790 = vld [vmem:[#allocation2 + $0xee8] sm:$0xff]
        %v791 = vld [vmem:[#allocation2 + $0xef0] sm:$0xff]
        %v792 = vld [vmem:[#allocation2 + $0xef8] sm:$0xff]
        %v793 = vld [vmem:[#allocation2 + $0xf00] sm:$0xff]
        %v794 = vld [vmem:[#allocation2 + $0xf08] sm:$0xff]
        %v795 = vld [vmem:[#allocation2 + $0xf10] sm:$0xff]
        %v796 = vld [vmem:[#allocation2 + $0xf18] sm:$0xff]
        %v797 = vld [vmem:[#allocation2 + $0xf20] sm:$0xff]
        %v798 = vld [vmem:[#allocation2 + $0xf28] sm:$0xff]
        %v799 = vld [vmem:[#allocation2 + $0xf30] sm:$0xff]
        %v800 = vld [vmem:[#allocation2 + $0xf38] sm:$0xff]
        %v801 = vld [vmem:[#allocation2 + $0xf40] sm:$0xff]
        %v802 = vld [vmem:[#allocation2 + $0xf48] sm:$0xff]
        %v803 = vld [vmem:[#allocation2 + $0xf50] sm:$0xff]
        %v804 = vld [vmem:[#allocation2 + $0xf58] sm:$0xff]
        %v805 = vld [vmem:[#allocation2 + $0xf60] sm:$0xff]
        %v806 = vld [vmem:[#allocation2 + $0xf68] sm:$0xff]
        %v807 = vld [vmem:[#allocation2 + $0xf70] sm:$0xff]
        %v808 = vld [vmem:[#allocation2 + $0xf78] sm:$0xff]
        %v809 = vld [vmem:[#allocation2 + $0xf80] sm:$0xff]
        %v810 = vld [vmem:[#allocation2 + $0xf88] sm:$0xff]
        %v811 = vld [vmem:[#allocation2 + $0xf90] sm:$0xff]
        %v812 = vld [vmem:[#allocation2 + $0xf98] sm:$0xff]
        %v813 = vld [vmem:[#allocation2 + $0xfa0] sm:$0xff]
        %v814 = vld [vmem:[#allocation2 + $0xfa8] sm:$0xff]
        %v815 = vld [vmem:[#allocation2 + $0xfb0] sm:$0xff]
        %v816 = vld [vmem:[#allocation2 + $0xfb8] sm:$0xff]
        %v817 = vld [vmem:[#allocation2 + $0xfc0] sm:$0xff]
        %v818 = vld [vmem:[#allocation2 + $0xfc8] sm:$0xff]
        %v819 = vld [vmem:[#allocation2 + $0xfd0] sm:$0xff]
        %v820 = vld [vmem:[#allocation2 + $0xfd8] sm:$0xff]
        %v821 = vld [vmem:[#allocation2 + $0xfe0] sm:$0xff]
        %v822 = vld [vmem:[#allocation2 + $0xfe8] sm:$0xff]
        %v823 = vld [vmem:[#allocation2 + $0xff0] sm:$0xff]
        %v824 = vld [vmem:[#allocation2 + $0xff8] sm:$0xff]
        %v825 = vld [vmem:[#allocation2 + $0x1000] sm:$0xff]
        %v826 = vld [vmem:[#allocation2 + $0x1008] sm:$0xff]
        %v827 = vld [vmem:[#allocation2 + $0x1010] sm:$0xff]
        %v828 = vld [vmem:[#allocation2 + $0x1018] sm:$0xff]
        %v829 = vld [vmem:[#allocation2 + $0x1020] sm:$0xff]
        %v830 = vld [vmem:[#allocation2 + $0x1028] sm:$0xff]
        %v831 = vld [vmem:[#allocation2 + $0x1030] sm:$0xff]
        %v832 = vld [vmem:[#allocation2 + $0x1038] sm:$0xff]
        %v833 = vld [vmem:[#allocation2 + $0x1040] sm:$0xff]
        %v834 = vld [vmem:[#allocation2 + $0x1048] sm:$0xff]
        %v835 = vld [vmem:[#allocation2 + $0x1050] sm:$0xff]
        %v836 = vld [vmem:[#allocation2 + $0x1058] sm:$0xff]
        %v837 = vld [vmem:[#allocation2 + $0x1060] sm:$0xff]
        %v838 = vld [vmem:[#allocation2 + $0x1068] sm:$0xff]
        %v839 = vld [vmem:[#allocation2 + $0x1070] sm:$0xff]
        %v840 = vld [vmem:[#allocation2 + $0x1078] sm:$0xff]
        %v841 = vld [vmem:[#allocation2 + $0x1080] sm:$0xff]
        %v842 = vld [vmem:[#allocation2 + $0x1088] sm:$0xff]
        %v843 = vld [vmem:[#allocation2 + $0x1090] sm:$0xff]
        %v844 = vld [vmem:[#allocation2 + $0x1098] sm:$0xff]
        %v845 = vld [vmem:[#allocation2 + $0x10a0] sm:$0xff]
        %v846 = vld [vmem:[#allocation2 + $0x10a8] sm:$0xff]
        %v847 = vld [vmem:[#allocation2 + $0x10b0] sm:$0xff]
        %v848 = vld [vmem:[#allocation2 + $0x10b8] sm:$0xff]
        %v849 = vld [vmem:[#allocation2 + $0x10c0] sm:$0xff]
        %v850 = vld [vmem:[#allocation2 + $0x10c8] sm:$0xff]
        %v851 = vld [vmem:[#allocation2 + $0x10d0] sm:$0xff]
        %v852 = vld [vmem:[#allocation2 + $0x10d8] sm:$0xff]
        %v853 = vld [vmem:[#allocation2 + $0x10e0] sm:$0xff]
        %v854 = vld [vmem:[#allocation2 + $0x10e8] sm:$0xff]
        %v855 = vld [vmem:[#allocation2 + $0x10f0] sm:$0xff]
        %v856 = vld [vmem:[#allocation2 + $0x10f8] sm:$0xff]
        %v857 = vld [vmem:[#allocation2 + $0x1100] sm:$0xff]
        %v858 = vld [vmem:[#allocation2 + $0x1108] sm:$0xff]
        %v859 = vld [vmem:[#allocation2 + $0x1110] sm:$0xff]
        %v860 = vld [vmem:[#allocation2 + $0x1118] sm:$0xff]
        %v861 = vld [vmem:[#allocation2 + $0x1120] sm:$0xff]
        %v862 = vld [vmem:[#allocation2 + $0x1128] sm:$0xff]
        %v863 = vld [vmem:[#allocation2 + $0x1130] sm:$0xff]
        %v864 = vld [vmem:[#allocation2 + $0x1138] sm:$0xff]
        %v865 = vld [vmem:[#allocation2 + $0x1140] sm:$0xff]
        %v866 = vld [vmem:[#allocation2 + $0x1148] sm:$0xff]
        %v867 = vld [vmem:[#allocation2 + $0x1150] sm:$0xff]
        %v868 = vld [vmem:[#allocation2 + $0x1158] sm:$0xff]
        %v869 = vld [vmem:[#allocation2 + $0x1160] sm:$0xff]
        %v870 = vld [vmem:[#allocation2 + $0x1168] sm:$0xff]
        %v871 = vld [vmem:[#allocation2 + $0x1170] sm:$0xff]
        %v872 = vld [vmem:[#allocation2 + $0x1178] sm:$0xff]
        %v873 = vld [vmem:[#allocation2 + $0x1180] sm:$0xff]
        %v874 = vld [vmem:[#allocation2 + $0x1188] sm:$0xff]
        %v875 = vld [vmem:[#allocation2 + $0x1190] sm:$0xff]
        %v876 = vld [vmem:[#allocation2 + $0x1198] sm:$0xff]
        %v877 = vld [vmem:[#allocation2 + $0x11a0] sm:$0xff]
        %v878 = vld [vmem:[#allocation2 + $0x11a8] sm:$0xff]
        %v879 = vld [vmem:[#allocation2 + $0x11b0] sm:$0xff]
        %v880 = vld [vmem:[#allocation2 + $0x11b8] sm:$0xff]
        %v881 = vld [vmem:[#allocation2 + $0x11c0] sm:$0xff]
        %v882 = vld [vmem:[#allocation2 + $0x11c8] sm:$0xff]
        %v883 = vld [vmem:[#allocation2 + $0x11d0] sm:$0xff]
        %v884 = vld [vmem:[#allocation2 + $0x11d8] sm:$0xff]
        %v885 = vld [vmem:[#allocation2 + $0x11e0] sm:$0xff]
        %v886 = vld [vmem:[#allocation2 + $0x11e8] sm:$0xff]
        %v887 = vld [vmem:[#allocation2 + $0x11f0] sm:$0xff]
        %v888 = vld [vmem:[#allocation2 + $0x11f8] sm:$0xff]
        %v889 = vld [vmem:[#allocation2 + $0x1200] sm:$0xff]
        %v890 = vld [vmem:[#allocation2 + $0x1208] sm:$0xff]
        %v891 = vld [vmem:[#allocation2 + $0x1210] sm:$0xff]
        %v892 = vld [vmem:[#allocation2 + $0x1218] sm:$0xff]
        %v893 = vld [vmem:[#allocation2 + $0x1220] sm:$0xff]
        %v894 = vld [vmem:[#allocation2 + $0x1228] sm:$0xff]
        %v895 = vld [vmem:[#allocation2 + $0x1230] sm:$0xff]
        %v896 = vld [vmem:[#allocation2 + $0x1238] sm:$0xff]
        %v897 = vld [vmem:[#allocation2 + $0x1240] sm:$0xff]
        %v898 = vld [vmem:[#allocation2 + $0x1248] sm:$0xff]
        %v899 = vld [vmem:[#allocation2 + $0x1250] sm:$0xff]
        %v900 = vld [vmem:[#allocation2 + $0x1258] sm:$0xff]
        %v901 = vld [vmem:[#allocation2 + $0x1260] sm:$0xff]
        %v902 = vld [vmem:[#allocation2 + $0x1268] sm:$0xff]
        %v903 = vld [vmem:[#allocation2 + $0x1270] sm:$0xff]
        %v904 = vld [vmem:[#allocation2 + $0x1278] sm:$0xff]
        %v905 = vld [vmem:[#allocation2 + $0x1280] sm:$0xff]
        %v906 = vld [vmem:[#allocation2 + $0x1288] sm:$0xff]
        %v907 = vld [vmem:[#allocation2 + $0x1290] sm:$0xff]
        %v908 = vld [vmem:[#allocation2 + $0x1298] sm:$0xff]
        %v909 = vld [vmem:[#allocation2 + $0x12a0] sm:$0xff]
        %v910 = vld [vmem:[#allocation2 + $0x12a8] sm:$0xff]
        %v911 = vld [vmem:[#allocation2 + $0x12b0] sm:$0xff]
        %v912 = vld [vmem:[#allocation2 + $0x12b8] sm:$0xff]
        %v913 = vld [vmem:[#allocation2 + $0x12c0] sm:$0xff]
        %v914 = vld [vmem:[#allocation2 + $0x12c8] sm:$0xff]
        %v915 = vld [vmem:[#allocation2 + $0x12d0] sm:$0xff]
        %v916 = vld [vmem:[#allocation2 + $0x12d8] sm:$0xff]
        %v917 = vld [vmem:[#allocation2 + $0x12e0] sm:$0xff]
        %v918 = vld [vmem:[#allocation2 + $0x12e8] sm:$0xff]
        %v919 = vld [vmem:[#allocation2 + $0x12f0] sm:$0xff]
        %v920 = vld [vmem:[#allocation2 + $0x12f8] sm:$0xff]
        %v921 = vld [vmem:[#allocation2 + $0x1300] sm:$0xff]
        %v922 = vld [vmem:[#allocation2 + $0x1308] sm:$0xff]
        %v923 = vld [vmem:[#allocation2 + $0x1310] sm:$0xff]
        %v924 = vld [vmem:[#allocation2 + $0x1318] sm:$0xff]
        %v925 = vld [vmem:[#allocation2 + $0x1320] sm:$0xff]
        %v926 = vld [vmem:[#allocation2 + $0x1328] sm:$0xff]
        %v927 = vld [vmem:[#allocation2 + $0x1330] sm:$0xff]
        %v928 = vld [vmem:[#allocation2 + $0x1338] sm:$0xff]
        %v929 = vld [vmem:[#allocation2 + $0x1340] sm:$0xff]
        %v930 = vld [vmem:[#allocation2 + $0x1348] sm:$0xff]
        %v931 = vld [vmem:[#allocation2 + $0x1350] sm:$0xff]
        %v932 = vld [vmem:[#allocation2 + $0x1358] sm:$0xff]
        %v933 = vld [vmem:[#allocation2 + $0x1360] sm:$0xff]
        %v934 = vld [vmem:[#allocation2 + $0x1368] sm:$0xff]
        %v935 = vld [vmem:[#allocation2 + $0x1370] sm:$0xff]
        %v936 = vld [vmem:[#allocation2 + $0x1378] sm:$0xff]
        %v937 = vld [vmem:[#allocation2 + $0x1380] sm:$0xff]
        %v938 = vld [vmem:[#allocation2 + $0x1388] sm:$0xff]
        %v939 = vld [vmem:[#allocation2 + $0x1390] sm:$0xff]
        %v940 = vld [vmem:[#allocation2 + $0x1398] sm:$0xff]
        %v941 = vld [vmem:[#allocation2 + $0x13a0] sm:$0xff]
        %v942 = vld [vmem:[#allocation2 + $0x13a8] sm:$0xff]
        %v943 = vld [vmem:[#allocation2 + $0x13b0] sm:$0xff]
        %v944 = vld [vmem:[#allocation2 + $0x13b8] sm:$0xff]
        %v945 = vld [vmem:[#allocation2 + $0x13c0] sm:$0xff]
        %v946 = vld [vmem:[#allocation2 + $0x13c8] sm:$0xff]
        %v947 = vld [vmem:[#allocation2 + $0x13d0] sm:$0xff]
        %v948 = vld [vmem:[#allocation2 + $0x13d8] sm:$0xff]
        %v949 = vld [vmem:[#allocation2 + $0x13e0] sm:$0xff]
        %v950 = vld [vmem:[#allocation2 + $0x13e8] sm:$0xff]
        %v951 = vld [vmem:[#allocation2 + $0x13f0] sm:$0xff]
        %v952 = vld [vmem:[#allocation2 + $0x13f8] sm:$0xff]
        %v953 = vld [vmem:[#allocation2 + $0x1400] sm:$0xff]
        %v954 = vld [vmem:[#allocation2 + $0x1408] sm:$0xff]
        %v955 = vld [vmem:[#allocation2 + $0x1410] sm:$0xff]
        %v956 = vld [vmem:[#allocation2 + $0x1418] sm:$0xff]
        %v957 = vld [vmem:[#allocation2 + $0x1420] sm:$0xff]
        %v958 = vld [vmem:[#allocation2 + $0x1428] sm:$0xff]
        %v959 = vld [vmem:[#allocation2 + $0x1430] sm:$0xff]
        %v960 = vld [vmem:[#allocation2 + $0x1438] sm:$0xff]
        %v961 = vld [vmem:[#allocation2 + $0x1440] sm:$0xff]
        %v962 = vld [vmem:[#allocation2 + $0x1448] sm:$0xff]
        %v963 = vld [vmem:[#allocation2 + $0x1450] sm:$0xff]
        %v964 = vld [vmem:[#allocation2 + $0x1458] sm:$0xff]
        %v965 = vld [vmem:[#allocation2 + $0x1460] sm:$0xff]
        %v966 = vld [vmem:[#allocation2 + $0x1468] sm:$0xff]
        %v967 = vld [vmem:[#allocation2 + $0x1470] sm:$0xff]
        %v968 = vld [vmem:[#allocation2 + $0x1478] sm:$0xff]
        %v969 = vld [vmem:[#allocation2 + $0x1480] sm:$0xff]
        %v970 = vld [vmem:[#allocation2 + $0x1488] sm:$0xff]
        %v971 = vld [vmem:[#allocation2 + $0x1490] sm:$0xff]
        %v972 = vld [vmem:[#allocation2 + $0x1498] sm:$0xff]
        %v973 = vld [vmem:[#allocation2 + $0x14a0] sm:$0xff]
        %v974 = vld [vmem:[#allocation2 + $0x14a8] sm:$0xff]
        %v975 = vld [vmem:[#allocation2 + $0x14b0] sm:$0xff]
        %v976 = vld [vmem:[#allocation2 + $0x14b8] sm:$0xff]
        %v977 = vld [vmem:[#allocation2 + $0x14c0] sm:$0xff]
        %v978 = vld [vmem:[#allocation2 + $0x14c8] sm:$0xff]
        %v979 = vld [vmem:[#allocation2 + $0x14d0] sm:$0xff]
        %v980 = vld [vmem:[#allocation2 + $0x14d8] sm:$0xff]
        %v981 = vld [vmem:[#allocation2 + $0x14e0] sm:$0xff]
        %v982 = vld [vmem:[#allocation2 + $0x14e8] sm:$0xff]
        %v983 = vld [vmem:[#allocation2 + $0x14f0] sm:$0xff]
        %v984 = vld [vmem:[#allocation2 + $0x14f8] sm:$0xff]
        %v985 = vld [vmem:[#allocation2 + $0x1500] sm:$0xff]
        %v986 = vld [vmem:[#allocation2 + $0x1508] sm:$0xff]
        %v987 = vld [vmem:[#allocation2 + $0x1510] sm:$0xff]
        %v988 = vld [vmem:[#allocation2 + $0x1518] sm:$0xff]
        %v989 = vld [vmem:[#allocation2 + $0x1520] sm:$0xff]
        %v990 = vld [vmem:[#allocation2 + $0x1528] sm:$0xff]
        %v991 = vld [vmem:[#allocation2 + $0x1530] sm:$0xff]
        %v992 = vld [vmem:[#allocation2 + $0x1538] sm:$0xff]
        %v993 = vld [vmem:[#allocation2 + $0x1540] sm:$0xff]
        %v994 = vld [vmem:[#allocation2 + $0x1548] sm:$0xff]
        %v995 = vld [vmem:[#allocation2 + $0x1550] sm:$0xff]
        %v996 = vld [vmem:[#allocation2 + $0x1558] sm:$0xff]
        %v997 = vld [vmem:[#allocation2 + $0x1560] sm:$0xff]
        %v998 = vld [vmem:[#allocation2 + $0x1568] sm:$0xff]
        %v999 = vld [vmem:[#allocation2 + $0x1570] sm:$0xff]
        %v1000 = vld [vmem:[#allocation2 + $0x1578] sm:$0xff]
        %v1001 = vld [vmem:[#allocation2 + $0x1580] sm:$0xff]
        %v1002 = vld [vmem:[#allocation2 + $0x1588] sm:$0xff]
        %v1003 = vld [vmem:[#allocation2 + $0x1590] sm:$0xff]
        %v1004 = vld [vmem:[#allocation2 + $0x1598] sm:$0xff]
        %v1005 = vld [vmem:[#allocation2 + $0x15a0] sm:$0xff]
        %v1006 = vld [vmem:[#allocation2 + $0x15a8] sm:$0xff]
        %v1007 = vld [vmem:[#allocation2 + $0x15b0] sm:$0xff]
        %v1008 = vld [vmem:[#allocation2 + $0x15b8] sm:$0xff]
        %v1009 = vld [vmem:[#allocation2 + $0x15c0] sm:$0xff]
        %v1010 = vld [vmem:[#allocation2 + $0x15c8] sm:$0xff]
        %v1011 = vld [vmem:[#allocation2 + $0x15d0] sm:$0xff]
        %v1012 = vld [vmem:[#allocation2 + $0x15d8] sm:$0xff]
        %v1013 = vld [vmem:[#allocation2 + $0x15e0] sm:$0xff]
        %v1014 = vld [vmem:[#allocation2 + $0x15e8] sm:$0xff]
        %v1015 = vld [vmem:[#allocation2 + $0x15f0] sm:$0xff]
        %v1016 = vld [vmem:[#allocation2 + $0x15f8] sm:$0xff]
        %v1017 = vld [vmem:[#allocation2 + $0x1600] sm:$0xff]
        %v1018 = vld [vmem:[#allocation2 + $0x1608] sm:$0xff]
        %v1019 = vld [vmem:[#allocation2 + $0x1610] sm:$0xff]
        %v1020 = vld [vmem:[#allocation2 + $0x1618] sm:$0xff]
        %v1021 = vld [vmem:[#allocation2 + $0x1620] sm:$0xff]
        %v1022 = vld [vmem:[#allocation2 + $0x1628] sm:$0xff]
        %v1023 = vld [vmem:[#allocation2 + $0x1630] sm:$0xff]
        %v1024 = vld [vmem:[#allocation2 + $0x1638] sm:$0xff]
        %v1025 = vld [vmem:[#allocation2 + $0x1640] sm:$0xff]
        %v1026 = vld [vmem:[#allocation2 + $0x1648] sm:$0xff]
        %v1027 = vld [vmem:[#allocation2 + $0x1650] sm:$0xff]
        %v1028 = vld [vmem:[#allocation2 + $0x1658] sm:$0xff]
        %v1029 = vld [vmem:[#allocation2 + $0x1660] sm:$0xff]
        %v1030 = vld [vmem:[#allocation2 + $0x1668] sm:$0xff]
        %v1031 = vld [vmem:[#allocation2 + $0x1670] sm:$0xff]
        %v1032 = vld [vmem:[#allocation2 + $0x1678] sm:$0xff]
        %v1033 = vld [vmem:[#allocation2 + $0x1680] sm:$0xff]
        %v1034 = vld [vmem:[#allocation2 + $0x1688] sm:$0xff]
        %v1035 = vld [vmem:[#allocation2 + $0x1690] sm:$0xff]
        %v1036 = vld [vmem:[#allocation2 + $0x1698] sm:$0xff]
        %v1037 = vld [vmem:[#allocation2 + $0x16a0] sm:$0xff]
        %v1038 = vld [vmem:[#allocation2 + $0x16a8] sm:$0xff]
        %v1039 = vld [vmem:[#allocation2 + $0x16b0] sm:$0xff]
        %v1040 = vld [vmem:[#allocation2 + $0x16b8] sm:$0xff]
        %v1041 = vld [vmem:[#allocation2 + $0x16c0] sm:$0xff]
        %v1042 = vld [vmem:[#allocation2 + $0x16c8] sm:$0xff]
        %v1043 = vld [vmem:[#allocation2 + $0x16d0] sm:$0xff]
        %v1044 = vld [vmem:[#allocation2 + $0x16d8] sm:$0xff]
        %v1045 = vld [vmem:[#allocation2 + $0x16e0] sm:$0xff]
        %v1046 = vld [vmem:[#allocation2 + $0x16e8] sm:$0xff]
        %v1047 = vld [vmem:[#allocation2 + $0x16f0] sm:$0xff]
        %v1048 = vld [vmem:[#allocation2 + $0x16f8] sm:$0xff]
        %v1049 = vld [vmem:[#allocation2 + $0x1700] sm:$0xff]
        %v1050 = vld [vmem:[#allocation2 + $0x1708] sm:$0xff]
        %v1051 = vld [vmem:[#allocation2 + $0x1710] sm:$0xff]
        %v1052 = vld [vmem:[#allocation2 + $0x1718] sm:$0xff]
        %v1053 = vld [vmem:[#allocation2 + $0x1720] sm:$0xff]
        %v1054 = vld [vmem:[#allocation2 + $0x1728] sm:$0xff]
        %v1055 = vld [vmem:[#allocation2 + $0x1730] sm:$0xff]
        %v1056 = vld [vmem:[#allocation2 + $0x1738] sm:$0xff]
        %v1057 = vld [vmem:[#allocation2 + $0x1740] sm:$0xff]
        %v1058 = vld [vmem:[#allocation2 + $0x1748] sm:$0xff]
        %v1059 = vld [vmem:[#allocation2 + $0x1750] sm:$0xff]
        %v1060 = vld [vmem:[#allocation2 + $0x1758] sm:$0xff]
        %v1061 = vld [vmem:[#allocation2 + $0x1760] sm:$0xff]
        %v1062 = vld [vmem:[#allocation2 + $0x1768] sm:$0xff]
        %v1063 = vld [vmem:[#allocation2 + $0x1770] sm:$0xff]
        %v1064 = vld [vmem:[#allocation2 + $0x1778] sm:$0xff]
        %v1065 = vld [vmem:[#allocation2 + $0x1780] sm:$0xff]
        %v1066 = vld [vmem:[#allocation2 + $0x1788] sm:$0xff]
        %v1067 = vld [vmem:[#allocation2 + $0x1790] sm:$0xff]
        %v1068 = vld [vmem:[#allocation2 + $0x1798] sm:$0xff]
        %v1069 = vld [vmem:[#allocation2 + $0x17a0] sm:$0xff]
        %v1070 = vld [vmem:[#allocation2 + $0x17a8] sm:$0xff]
        %v1071 = vld [vmem:[#allocation2 + $0x17b0] sm:$0xff]
        %v1072 = vld [vmem:[#allocation2 + $0x17b8] sm:$0xff]
        %v1073 = vld [vmem:[#allocation2 + $0x17c0] sm:$0xff]
        %v1074 = vld [vmem:[#allocation2 + $0x17c8] sm:$0xff]
        %v1075 = vld [vmem:[#allocation2 + $0x17d0] sm:$0xff]
        %v1076 = vld [vmem:[#allocation2 + $0x17d8] sm:$0xff]
        %v1077 = vld [vmem:[#allocation2 + $0x17e0] sm:$0xff]
        %v1078 = vld [vmem:[#allocation2 + $0x17e8] sm:$0xff]
        %v1079 = vld [vmem:[#allocation2 + $0x17f0] sm:$0xff]
        %v1080 = vld [vmem:[#allocation2 + $0x17f8] sm:$0xff]
        %v1081 = vld [vmem:[#allocation2 + $0x1800] sm:$0xff]
        %v1082 = vld [vmem:[#allocation2 + $0x1808] sm:$0xff]
        %v1083 = vld [vmem:[#allocation2 + $0x1810] sm:$0xff]
        %v1084 = vld [vmem:[#allocation2 + $0x1818] sm:$0xff]
        %v1085 = vld [vmem:[#allocation2 + $0x1820] sm:$0xff]
        %v1086 = vld [vmem:[#allocation2 + $0x1828] sm:$0xff]
        %v1087 = vld [vmem:[#allocation2 + $0x1830] sm:$0xff]
        %v1088 = vld [vmem:[#allocation2 + $0x1838] sm:$0xff]
        %v1089 = vld [vmem:[#allocation2 + $0x1840] sm:$0xff]
        %v1090 = vld [vmem:[#allocation2 + $0x1848] sm:$0xff]
        %v1091 = vld [vmem:[#allocation2 + $0x1850] sm:$0xff]
        %v1092 = vld [vmem:[#allocation2 + $0x1858] sm:$0xff]
        %v1093 = vld [vmem:[#allocation2 + $0x1860] sm:$0xff]
        %v1094 = vld [vmem:[#allocation2 + $0x1868] sm:$0xff]
        %v1095 = vld [vmem:[#allocation2 + $0x1870] sm:$0xff]
        %v1096 = vld [vmem:[#allocation2 + $0x1878] sm:$0xff]
        %v1097 = vld [vmem:[#allocation2 + $0x1880] sm:$0xff]
        %v1098 = vld [vmem:[#allocation2 + $0x1888] sm:$0xff]
        %v1099 = vld [vmem:[#allocation2 + $0x1890] sm:$0xff]
        %v1100 = vld [vmem:[#allocation2 + $0x1898] sm:$0xff]
        %v1101 = vld [vmem:[#allocation2 + $0x18a0] sm:$0xff]
        %v1102 = vld [vmem:[#allocation2 + $0x18a8] sm:$0xff]
        %v1103 = vld [vmem:[#allocation2 + $0x18b0] sm:$0xff]
        %v1104 = vld [vmem:[#allocation2 + $0x18b8] sm:$0xff]
        %v1105 = vld [vmem:[#allocation2 + $0x18c0] sm:$0xff]
        %v1106 = vld [vmem:[#allocation2 + $0x18c8] sm:$0xff]
        %v1107 = vld [vmem:[#allocation2 + $0x18d0] sm:$0xff]
        %v1108 = vld [vmem:[#allocation2 + $0x18d8] sm:$0xff]
        %v1109 = vld [vmem:[#allocation2 + $0x18e0] sm:$0xff]
        %v1110 = vld [vmem:[#allocation2 + $0x18e8] sm:$0xff]
        %v1111 = vld [vmem:[#allocation2 + $0x18f0] sm:$0xff]
        %v1112 = vld [vmem:[#allocation2 + $0x18f8] sm:$0xff]
        %v1113 = vld [vmem:[#allocation2 + $0x1900] sm:$0xff]
        %v1114 = vld [vmem:[#allocation2 + $0x1908] sm:$0xff]
        %v1115 = vld [vmem:[#allocation2 + $0x1910] sm:$0xff]
        %v1116 = vld [vmem:[#allocation2 + $0x1918] sm:$0xff]
        %v1117 = vld [vmem:[#allocation2 + $0x1920] sm:$0xff]
        %v1118 = vld [vmem:[#allocation2 + $0x1928] sm:$0xff]
        %v1119 = vld [vmem:[#allocation2 + $0x1930] sm:$0xff]
        %v1120 = vld [vmem:[#allocation2 + $0x1938] sm:$0xff]
        %v1121 = vld [vmem:[#allocation2 + $0x1940] sm:$0xff]
        %v1122 = vld [vmem:[#allocation2 + $0x1948] sm:$0xff]
        %v1123 = vld [vmem:[#allocation2 + $0x1950] sm:$0xff]
        %v1124 = vld [vmem:[#allocation2 + $0x1958] sm:$0xff]
        %v1125 = vld [vmem:[#allocation2 + $0x1960] sm:$0xff]
        %v1126 = vld [vmem:[#allocation2 + $0x1968] sm:$0xff]
        %v1127 = vld [vmem:[#allocation2 + $0x1970] sm:$0xff]
        %v1128 = vld [vmem:[#allocation2 + $0x1978] sm:$0xff]
        %v1129 = vld [vmem:[#allocation2 + $0x1980] sm:$0xff]
        %v1130 = vld [vmem:[#allocation2 + $0x1988] sm:$0xff]
        %v1131 = vld [vmem:[#allocation2 + $0x1990] sm:$0xff]
        %v1132 = vld [vmem:[#allocation2 + $0x1998] sm:$0xff]
        %v1133 = vld [vmem:[#allocation2 + $0x19a0] sm:$0xff]
        %v1134 = vld [vmem:[#allocation2 + $0x19a8] sm:$0xff]
        %v1135 = vld [vmem:[#allocation2 + $0x19b0] sm:$0xff]
        %v1136 = vld [vmem:[#allocation2 + $0x19b8] sm:$0xff]
        %v1137 = vld [vmem:[#allocation2 + $0x19c0] sm:$0xff]
        %v1138 = vld [vmem:[#allocation2 + $0x19c8] sm:$0xff]
        %v1139 = vld [vmem:[#allocation2 + $0x19d0] sm:$0xff]
        %v1140 = vld [vmem:[#allocation2 + $0x19d8] sm:$0xff]
        %v1141 = vld [vmem:[#allocation2 + $0x19e0] sm:$0xff]
        %v1142 = vld [vmem:[#allocation2 + $0x19e8] sm:$0xff]
        %v1143 = vld [vmem:[#allocation2 + $0x19f0] sm:$0xff]
        %v1144 = vld [vmem:[#allocation2 + $0x19f8] sm:$0xff]
        %v1145 = vld [vmem:[#allocation2 + $0x1a00] sm:$0xff]
        %v1146 = vld [vmem:[#allocation2 + $0x1a08] sm:$0xff]
        %v1147 = vld [vmem:[#allocation2 + $0x1a10] sm:$0xff]
        %v1148 = vld [vmem:[#allocation2 + $0x1a18] sm:$0xff]
        %v1149 = vld [vmem:[#allocation2 + $0x1a20] sm:$0xff]
        %v1150 = vld [vmem:[#allocation2 + $0x1a28] sm:$0xff]
        %v1151 = vld [vmem:[#allocation2 + $0x1a30] sm:$0xff]
        %v1152 = vld [vmem:[#allocation2 + $0x1a38] sm:$0xff]
        %v1153 = vld [vmem:[#allocation2 + $0x1a40] sm:$0xff]
        %v1154 = vld [vmem:[#allocation2 + $0x1a48] sm:$0xff]
        %v1155 = vld [vmem:[#allocation2 + $0x1a50] sm:$0xff]
        %v1156 = vld [vmem:[#allocation2 + $0x1a58] sm:$0xff]
        %v1157 = vld [vmem:[#allocation2 + $0x1a60] sm:$0xff]
        %v1158 = vld [vmem:[#allocation2 + $0x1a68] sm:$0xff]
        %v1159 = vld [vmem:[#allocation2 + $0x1a70] sm:$0xff]
        %v1160 = vld [vmem:[#allocation2 + $0x1a78] sm:$0xff]
        %v1161 = vld [vmem:[#allocation2 + $0x1a80] sm:$0xff]
        %v1162 = vld [vmem:[#allocation2 + $0x1a88] sm:$0xff]
        %v1163 = vld [vmem:[#allocation2 + $0x1a90] sm:$0xff]
        %v1164 = vld [vmem:[#allocation2 + $0x1a98] sm:$0xff]
        %v1165 = vld [vmem:[#allocation2 + $0x1aa0] sm:$0xff]
        %v1166 = vld [vmem:[#allocation2 + $0x1aa8] sm:$0xff]
        %v1167 = vld [vmem:[#allocation2 + $0x1ab0] sm:$0xff]
        %v1168 = vld [vmem:[#allocation2 + $0x1ab8] sm:$0xff]
        %v1169 = vld [vmem:[#allocation2 + $0x1ac0] sm:$0xff]
        %v1170 = vld [vmem:[#allocation2 + $0x1ac8] sm:$0xff]
        %v1171 = vld [vmem:[#allocation2 + $0x1ad0] sm:$0xff]
        %v1172 = vld [vmem:[#allocation2 + $0x1ad8] sm:$0xff]
        %v1173 = vld [vmem:[#allocation2 + $0x1ae0] sm:$0xff]
        %v1174 = vld [vmem:[#allocation2 + $0x1ae8] sm:$0xff]
        %v1175 = vld [vmem:[#allocation2 + $0x1af0] sm:$0xff]
        %v1176 = vld [vmem:[#allocation2 + $0x1af8] sm:$0xff]
        %v1177 = vld [vmem:[#allocation2 + $0x1b00] sm:$0xff]
        %v1178 = vld [vmem:[#allocation2 + $0x1b08] sm:$0xff]
        %v1179 = vld [vmem:[#allocation2 + $0x1b10] sm:$0xff]
        %v1180 = vld [vmem:[#allocation2 + $0x1b18] sm:$0xff]
        %v1181 = vld [vmem:[#allocation2 + $0x1b20] sm:$0xff]
        %v1182 = vld [vmem:[#allocation2 + $0x1b28] sm:$0xff]
        %v1183 = vld [vmem:[#allocation2 + $0x1b30] sm:$0xff]
        %v1184 = vld [vmem:[#allocation2 + $0x1b38] sm:$0xff]
        %v1185 = vld [vmem:[#allocation2 + $0x1b40] sm:$0xff]
        %v1186 = vld [vmem:[#allocation2 + $0x1b48] sm:$0xff]
        %v1187 = vld [vmem:[#allocation2 + $0x1b50] sm:$0xff]
        %v1188 = vld [vmem:[#allocation2 + $0x1b58] sm:$0xff]
        %v1189 = vld [vmem:[#allocation2 + $0x1b60] sm:$0xff]
        %v1190 = vld [vmem:[#allocation2 + $0x1b68] sm:$0xff]
        %v1191 = vld [vmem:[#allocation2 + $0x1b70] sm:$0xff]
        %v1192 = vld [vmem:[#allocation2 + $0x1b78] sm:$0xff]
        %v1193 = vld [vmem:[#allocation2 + $0x1b80] sm:$0xff]
        %v1194 = vld [vmem:[#allocation2 + $0x1b88] sm:$0xff]
        %v1195 = vld [vmem:[#allocation2 + $0x1b90] sm:$0xff]
        %v1196 = vld [vmem:[#allocation2 + $0x1b98] sm:$0xff]
        %v1197 = vld [vmem:[#allocation2 + $0x1ba0] sm:$0xff]
        %v1198 = vld [vmem:[#allocation2 + $0x1ba8] sm:$0xff]
        %v1199 = vld [vmem:[#allocation2 + $0x1bb0] sm:$0xff]
        %v1200 = vld [vmem:[#allocation2 + $0x1bb8] sm:$0xff]
        %v1201 = vld [vmem:[#allocation2 + $0x1bc0] sm:$0xff]
        %v1202 = vld [vmem:[#allocation2 + $0x1bc8] sm:$0xff]
        %v1203 = vld [vmem:[#allocation2 + $0x1bd0] sm:$0xff]
        %v1204 = vld [vmem:[#allocation2 + $0x1bd8] sm:$0xff]
        %v1205 = vld [vmem:[#allocation2 + $0x1be0] sm:$0xff]
        %v1206 = vld [vmem:[#allocation2 + $0x1be8] sm:$0xff]
        %v1207 = vld [vmem:[#allocation2 + $0x1bf0] sm:$0xff]
        %v1208 = vld [vmem:[#allocation2 + $0x1bf8] sm:$0xff]
        %v1209 = vld [vmem:[#allocation2 + $0x1c00] sm:$0xff]
        %v1210 = vld [vmem:[#allocation2 + $0x1c08] sm:$0xff]
        %v1211 = vld [vmem:[#allocation2 + $0x1c10] sm:$0xff]
        %v1212 = vld [vmem:[#allocation2 + $0x1c18] sm:$0xff]
        %v1213 = vld [vmem:[#allocation2 + $0x1c20] sm:$0xff]
        %v1214 = vld [vmem:[#allocation2 + $0x1c28] sm:$0xff]
        %v1215 = vld [vmem:[#allocation2 + $0x1c30] sm:$0xff]
        %v1216 = vld [vmem:[#allocation2 + $0x1c38] sm:$0xff]
        %v1217 = vld [vmem:[#allocation2 + $0x1c40] sm:$0xff]
        %v1218 = vld [vmem:[#allocation2 + $0x1c48] sm:$0xff]
        %v1219 = vld [vmem:[#allocation2 + $0x1c50] sm:$0xff]
        %v1220 = vld [vmem:[#allocation2 + $0x1c58] sm:$0xff]
        %v1221 = vld [vmem:[#allocation2 + $0x1c60] sm:$0xff]
        %v1222 = vld [vmem:[#allocation2 + $0x1c68] sm:$0xff]
        %v1223 = vld [vmem:[#allocation2 + $0x1c70] sm:$0xff]
        %v1224 = vld [vmem:[#allocation2 + $0x1c78] sm:$0xff]
        %v1225 = vld [vmem:[#allocation2 + $0x1c80] sm:$0xff]
        %v1226 = vld [vmem:[#allocation2 + $0x1c88] sm:$0xff]
        %v1227 = vld [vmem:[#allocation2 + $0x1c90] sm:$0xff]
        %v1228 = vld [vmem:[#allocation2 + $0x1c98] sm:$0xff]
        %v1229 = vld [vmem:[#allocation2 + $0x1ca0] sm:$0xff]
        %v1230 = vld [vmem:[#allocation2 + $0x1ca8] sm:$0xff]
        %v1231 = vld [vmem:[#allocation2 + $0x1cb0] sm:$0xff]
        %v1232 = vld [vmem:[#allocation2 + $0x1cb8] sm:$0xff]
        %v1233 = vld [vmem:[#allocation2 + $0x1cc0] sm:$0xff]
        %v1234 = vld [vmem:[#allocation2 + $0x1cc8] sm:$0xff]
        %v1235 = vld [vmem:[#allocation2 + $0x1cd0] sm:$0xff]
        %v1236 = vld [vmem:[#allocation2 + $0x1cd8] sm:$0xff]
        %v1237 = vld [vmem:[#allocation2 + $0x1ce0] sm:$0xff]
        %v1238 = vld [vmem:[#allocation2 + $0x1ce8] sm:$0xff]
        %v1239 = vld [vmem:[#allocation2 + $0x1cf0] sm:$0xff]
        %v1240 = vld [vmem:[#allocation2 + $0x1cf8] sm:$0xff]
        %v1241 = vld [vmem:[#allocation2 + $0x1d00] sm:$0xff]
        %v1242 = vld [vmem:[#allocation2 + $0x1d08] sm:$0xff]
        %v1243 = vld [vmem:[#allocation2 + $0x1d10] sm:$0xff]
        %v1244 = vld [vmem:[#allocation2 + $0x1d18] sm:$0xff]
        %v1245 = vld [vmem:[#allocation2 + $0x1d20] sm:$0xff]
        %v1246 = vld [vmem:[#allocation2 + $0x1d28] sm:$0xff]
        %v1247 = vld [vmem:[#allocation2 + $0x1d30] sm:$0xff]
        %v1248 = vld [vmem:[#allocation2 + $0x1d38] sm:$0xff]
        %v1249 = vld [vmem:[#allocation2 + $0x1d40] sm:$0xff]
        %v1250 = vld [vmem:[#allocation2 + $0x1d48] sm:$0xff]
        %v1251 = vld [vmem:[#allocation2 + $0x1d50] sm:$0xff]
        %v1252 = vld [vmem:[#allocation2 + $0x1d58] sm:$0xff]
        %v1253 = vld [vmem:[#allocation2 + $0x1d60] sm:$0xff]
        %v1254 = vld [vmem:[#allocation2 + $0x1d68] sm:$0xff]
        %v1255 = vld [vmem:[#allocation2 + $0x1d70] sm:$0xff]
        %v1256 = vld [vmem:[#allocation2 + $0x1d78] sm:$0xff]
        %v1257 = vld [vmem:[#allocation2 + $0x1d80] sm:$0xff]
        %v1258 = vld [vmem:[#allocation2 + $0x1d88] sm:$0xff]
        %v1259 = vld [vmem:[#allocation2 + $0x1d90] sm:$0xff]
        %v1260 = vld [vmem:[#allocation2 + $0x1d98] sm:$0xff]
        %v1261 = vld [vmem:[#allocation2 + $0x1da0] sm:$0xff]
        %v1262 = vld [vmem:[#allocation2 + $0x1da8] sm:$0xff]
        %v1263 = vld [vmem:[#allocation2 + $0x1db0] sm:$0xff]
        %v1264 = vld [vmem:[#allocation2 + $0x1db8] sm:$0xff]
        %v1265 = vld [vmem:[#allocation2 + $0x1dc0] sm:$0xff]
        %v1266 = vld [vmem:[#allocation2 + $0x1dc8] sm:$0xff]
        %v1267 = vld [vmem:[#allocation2 + $0x1dd0] sm:$0xff]
        %v1268 = vld [vmem:[#allocation2 + $0x1dd8] sm:$0xff]
        %v1269 = vld [vmem:[#allocation2 + $0x1de0] sm:$0xff]
        %v1270 = vld [vmem:[#allocation2 + $0x1de8] sm:$0xff]
        %v1271 = vld [vmem:[#allocation2 + $0x1df0] sm:$0xff]
        %v1272 = vld [vmem:[#allocation2 + $0x1df8] sm:$0xff]
        %v1273 = vld [vmem:[#allocation2 + $0x1e00] sm:$0xff]
        %v1274 = vld [vmem:[#allocation2 + $0x1e08] sm:$0xff]
        %v1275 = vld [vmem:[#allocation2 + $0x1e10] sm:$0xff]
        %v1276 = vld [vmem:[#allocation2 + $0x1e18] sm:$0xff]
        %v1277 = vld [vmem:[#allocation2 + $0x1e20] sm:$0xff]
        %v1278 = vld [vmem:[#allocation2 + $0x1e28] sm:$0xff]
        %v1279 = vld [vmem:[#allocation2 + $0x1e30] sm:$0xff]
        %v1280 = vld [vmem:[#allocation2 + $0x1e38] sm:$0xff]
        %v1281 = vld [vmem:[#allocation2 + $0x1e40] sm:$0xff]
        %v1282 = vld [vmem:[#allocation2 + $0x1e48] sm:$0xff]
        %v1283 = vld [vmem:[#allocation2 + $0x1e50] sm:$0xff]
        %v1284 = vld [vmem:[#allocation2 + $0x1e58] sm:$0xff]
        %v1285 = vld [vmem:[#allocation2 + $0x1e60] sm:$0xff]
        %v1286 = vld [vmem:[#allocation2 + $0x1e68] sm:$0xff]
        %v1287 = vld [vmem:[#allocation2 + $0x1e70] sm:$0xff]
        %v1288 = vld [vmem:[#allocation2 + $0x1e78] sm:$0xff]
        %v1289 = vld [vmem:[#allocation2 + $0x1e80] sm:$0xff]
        %v1290 = vld [vmem:[#allocation2 + $0x1e88] sm:$0xff]
        %v1291 = vld [vmem:[#allocation2 + $0x1e90] sm:$0xff]
        %v1292 = vld [vmem:[#allocation2 + $0x1e98] sm:$0xff]
        %v1293 = vld [vmem:[#allocation2 + $0x1ea0] sm:$0xff]
        %v1294 = vld [vmem:[#allocation2 + $0x1ea8] sm:$0xff]
        %v1295 = vld [vmem:[#allocation2 + $0x1eb0] sm:$0xff]
        %v1296 = vld [vmem:[#allocation2 + $0x1eb8] sm:$0xff]
        %v1297 = vld [vmem:[#allocation2 + $0x1ec0] sm:$0xff]
        %v1298 = vld [vmem:[#allocation2 + $0x1ec8] sm:$0xff]
        %v1299 = vld [vmem:[#allocation2 + $0x1ed0] sm:$0xff]
        %v1300 = vld [vmem:[#allocation2 + $0x1ed8] sm:$0xff]
        %v1301 = vld [vmem:[#allocation2 + $0x1ee0] sm:$0xff]
        %v1302 = vld [vmem:[#allocation2 + $0x1ee8] sm:$0xff]
        %v1303 = vld [vmem:[#allocation2 + $0x1ef0] sm:$0xff]
        %v1304 = vld [vmem:[#allocation2 + $0x1ef8] sm:$0xff]
        %v1305 = vld [vmem:[#allocation2 + $0x1f00] sm:$0xff]
        %v1306 = vld [vmem:[#allocation2 + $0x1f08] sm:$0xff]
        %v1307 = vld [vmem:[#allocation2 + $0x1f10] sm:$0xff]
        %v1308 = vld [vmem:[#allocation2 + $0x1f18] sm:$0xff]
        %v1309 = vld [vmem:[#allocation2 + $0x1f20] sm:$0xff]
        %v1310 = vld [vmem:[#allocation2 + $0x1f28] sm:$0xff]
        %v1311 = vld [vmem:[#allocation2 + $0x1f30] sm:$0xff]
        %v1312 = vld [vmem:[#allocation2 + $0x1f38] sm:$0xff]
        %v1313 = vld [vmem:[#allocation2 + $0x1f40] sm:$0xff]
        %v1314 = vld [vmem:[#allocation2 + $0x1f48] sm:$0xff]
        %v1315 = vld [vmem:[#allocation2 + $0x1f50] sm:$0xff]
        %v1316 = vld [vmem:[#allocation2 + $0x1f58] sm:$0xff]
        %v1317 = vld [vmem:[#allocation2 + $0x1f60] sm:$0xff]
        %v1318 = vld [vmem:[#allocation2 + $0x1f68] sm:$0xff]
        %v1319 = vld [vmem:[#allocation2 + $0x1f70] sm:$0xff]
        %v1320 = vld [vmem:[#allocation2 + $0x1f78] sm:$0xff]
        %v1321 = vld [vmem:[#allocation2 + $0x1f80] sm:$0xff]
        %v1322 = vld [vmem:[#allocation2 + $0x1f88] sm:$0xff]
        %v1323 = vld [vmem:[#allocation2 + $0x1f90] sm:$0xff]
        %v1324 = vld [vmem:[#allocation2 + $0x1f98] sm:$0xff]
        %v1325 = vld [vmem:[#allocation2 + $0x1fa0] sm:$0xff]
        %v1326 = vld [vmem:[#allocation2 + $0x1fa8] sm:$0xff]
        %v1327 = vld [vmem:[#allocation2 + $0x1fb0] sm:$0xff]
        %v1328 = vld [vmem:[#allocation2 + $0x1fb8] sm:$0xff]
        %v1329 = vld [vmem:[#allocation2 + $0x1fc0] sm:$0xff]
        %v1330 = vld [vmem:[#allocation2 + $0x1fc8] sm:$0xff]
        %v1331 = vld [vmem:[#allocation2 + $0x1fd0] sm:$0xff]
        %v1332 = vld [vmem:[#allocation2 + $0x1fd8] sm:$0xff]
        %v1333 = vld [vmem:[#allocation2 + $0x1fe0] sm:$0xff]
        %v1334 = vld [vmem:[#allocation2 + $0x1fe8] sm:$0xff]
        %v1335 = vld [vmem:[#allocation2 + $0x1ff0] sm:$0xff]
        %v1336 = vld [vmem:[#allocation2 + $0x1ff8] sm:$0xff]
        %v1337 = vld [vmem:[#allocation2 + $0x2000] sm:$0xff]
        %v1338 = vld [vmem:[#allocation2 + $0x2008] sm:$0xff]
        %v1339 = vld [vmem:[#allocation2 + $0x2010] sm:$0xff]
        %v1340 = vld [vmem:[#allocation2 + $0x2018] sm:$0xff]
        %v1341 = vld [vmem:[#allocation2 + $0x2020] sm:$0xff]
        %v1342 = vld [vmem:[#allocation2 + $0x2028] sm:$0xff]
        %v1343 = vld [vmem:[#allocation2 + $0x2030] sm:$0xff]
        %v1344 = vld [vmem:[#allocation2 + $0x2038] sm:$0xff]
        %v1345 = vld [vmem:[#allocation2 + $0x2040] sm:$0xff]
        %v1346 = vld [vmem:[#allocation2 + $0x2048] sm:$0xff]
        %v1347 = vld [vmem:[#allocation2 + $0x2050] sm:$0xff]
        %v1348 = vld [vmem:[#allocation2 + $0x2058] sm:$0xff]
        %v1349 = vld [vmem:[#allocation2 + $0x2060] sm:$0xff]
        %v1350 = vld [vmem:[#allocation2 + $0x2068] sm:$0xff]
        %v1351 = vld [vmem:[#allocation2 + $0x2070] sm:$0xff]
        %v1352 = vld [vmem:[#allocation2 + $0x2078] sm:$0xff]
        %v1353 = vld [vmem:[#allocation2 + $0x2080] sm:$0xff]
        %v1354 = vld [vmem:[#allocation2 + $0x2088] sm:$0xff]
        %v1355 = vld [vmem:[#allocation2 + $0x2090] sm:$0xff]
        %v1356 = vld [vmem:[#allocation2 + $0x2098] sm:$0xff]
        %v1357 = vld [vmem:[#allocation2 + $0x20a0] sm:$0xff]
        %v1358 = vld [vmem:[#allocation2 + $0x20a8] sm:$0xff]
        %v1359 = vld [vmem:[#allocation2 + $0x20b0] sm:$0xff]
        %v1360 = vld [vmem:[#allocation2 + $0x20b8] sm:$0xff]
        %v1361 = vld [vmem:[#allocation2 + $0x20c0] sm:$0xff]
        %v1362 = vld [vmem:[#allocation2 + $0x20c8] sm:$0xff]
        %v1363 = vld [vmem:[#allocation2 + $0x20d0] sm:$0xff]
        %v1364 = vld [vmem:[#allocation2 + $0x20d8] sm:$0xff]
        %v1365 = vld [vmem:[#allocation2 + $0x20e0] sm:$0xff]
        %v1366 = vld [vmem:[#allocation2 + $0x20e8] sm:$0xff]
        %v1367 = vld [vmem:[#allocation2 + $0x20f0] sm:$0xff]
        %v1368 = vld [vmem:[#allocation2 + $0x20f8] sm:$0xff]
        %v1369 = vld [vmem:[#allocation2 + $0x2100] sm:$0xff]
        %v1370 = vld [vmem:[#allocation2 + $0x2108] sm:$0xff]
        %v1371 = vld [vmem:[#allocation2 + $0x2110] sm:$0xff]
        %v1372 = vld [vmem:[#allocation2 + $0x2118] sm:$0xff]
        %v1373 = vld [vmem:[#allocation2 + $0x2120] sm:$0xff]
        %v1374 = vld [vmem:[#allocation2 + $0x2128] sm:$0xff]
        %v1375 = vld [vmem:[#allocation2 + $0x2130] sm:$0xff]
        %v1376 = vld [vmem:[#allocation2 + $0x2138] sm:$0xff]
        %v1377 = vld [vmem:[#allocation2 + $0x2140] sm:$0xff]
        %v1378 = vld [vmem:[#allocation2 + $0x2148] sm:$0xff]
        %v1379 = vld [vmem:[#allocation2 + $0x2150] sm:$0xff]
        %v1380 = vld [vmem:[#allocation2 + $0x2158] sm:$0xff]
        %v1381 = vld [vmem:[#allocation2 + $0x2160] sm:$0xff]
        %v1382 = vld [vmem:[#allocation2 + $0x2168] sm:$0xff]
        %v1383 = vld [vmem:[#allocation2 + $0x2170] sm:$0xff]
        %v1384 = vld [vmem:[#allocation2 + $0x2178] sm:$0xff]
        %v1385 = vld [vmem:[#allocation2 + $0x2180] sm:$0xff]
        %v1386 = vld [vmem:[#allocation2 + $0x2188] sm:$0xff]
        %v1387 = vld [vmem:[#allocation2 + $0x2190] sm:$0xff]
        %v1388 = vld [vmem:[#allocation2 + $0x2198] sm:$0xff]
        %v1389 = vld [vmem:[#allocation2 + $0x21a0] sm:$0xff]
        %v1390 = vld [vmem:[#allocation2 + $0x21a8] sm:$0xff]
        %v1391 = vld [vmem:[#allocation2 + $0x21b0] sm:$0xff]
        %v1392 = vld [vmem:[#allocation2 + $0x21b8] sm:$0xff]
        %v1393 = vld [vmem:[#allocation2 + $0x21c0] sm:$0xff]
        %v1394 = vld [vmem:[#allocation2 + $0x21c8] sm:$0xff]
        %v1395 = vld [vmem:[#allocation2 + $0x21d0] sm:$0xff]
        %v1396 = vld [vmem:[#allocation2 + $0x21d8] sm:$0xff]
        %v1397 = vld [vmem:[#allocation2 + $0x21e0] sm:$0xff]
        %v1398 = vld [vmem:[#allocation2 + $0x21e8] sm:$0xff]
        %v1399 = vld [vmem:[#allocation2 + $0x21f0] sm:$0xff]
        %v1400 = vld [vmem:[#allocation2 + $0x21f8] sm:$0xff]
        %v1401 = vld [vmem:[#allocation2 + $0x2200] sm:$0xff]
        %v1402 = vld [vmem:[#allocation2 + $0x2208] sm:$0xff]
        %v1403 = vld [vmem:[#allocation2 + $0x2210] sm:$0xff]
        %v1404 = vld [vmem:[#allocation2 + $0x2218] sm:$0xff]
        %v1405 = vld [vmem:[#allocation2 + $0x2220] sm:$0xff]
        %v1406 = vld [vmem:[#allocation2 + $0x2228] sm:$0xff]
        %v1407 = vld [vmem:[#allocation2 + $0x2230] sm:$0xff]
        %v1408 = vld [vmem:[#allocation2 + $0x2238] sm:$0xff]
        %v1409 = vld [vmem:[#allocation2 + $0x2240] sm:$0xff]
        %v1410 = vld [vmem:[#allocation2 + $0x2248] sm:$0xff]
        %v1411 = vld [vmem:[#allocation2 + $0x2250] sm:$0xff]
        %v1412 = vld [vmem:[#allocation2 + $0x2258] sm:$0xff]
        %v1413 = vld [vmem:[#allocation2 + $0x2260] sm:$0xff]
        %v1414 = vld [vmem:[#allocation2 + $0x2268] sm:$0xff]
        %v1415 = vld [vmem:[#allocation2 + $0x2270] sm:$0xff]
        %v1416 = vld [vmem:[#allocation2 + $0x2278] sm:$0xff]
        %v1417 = vld [vmem:[#allocation2 + $0x2280] sm:$0xff]
        %v1418 = vld [vmem:[#allocation2 + $0x2288] sm:$0xff]
        %v1419 = vld [vmem:[#allocation2 + $0x2290] sm:$0xff]
        %v1420 = vld [vmem:[#allocation2 + $0x2298] sm:$0xff]
        %v1421 = vld [vmem:[#allocation2 + $0x22a0] sm:$0xff]
        %v1422 = vld [vmem:[#allocation2 + $0x22a8] sm:$0xff]
        %v1423 = vld [vmem:[#allocation2 + $0x22b0] sm:$0xff]
        %v1424 = vld [vmem:[#allocation2 + $0x22b8] sm:$0xff]
        %v1425 = vld [vmem:[#allocation2 + $0x22c0] sm:$0xff]
        %v1426 = vld [vmem:[#allocation2 + $0x22c8] sm:$0xff]
        %v1427 = vld [vmem:[#allocation2 + $0x22d0] sm:$0xff]
        %v1428 = vld [vmem:[#allocation2 + $0x22d8] sm:$0xff]
        %v1429 = vld [vmem:[#allocation2 + $0x22e0] sm:$0xff]
        %v1430 = vld [vmem:[#allocation2 + $0x22e8] sm:$0xff]
        %v1431 = vld [vmem:[#allocation2 + $0x22f0] sm:$0xff]
        %v1432 = vld [vmem:[#allocation2 + $0x22f8] sm:$0xff]
        %v1433 = vld [vmem:[#allocation2 + $0x2300] sm:$0xff]
        %v1434 = vld [vmem:[#allocation2 + $0x2308] sm:$0xff]
        %v1435 = vld [vmem:[#allocation2 + $0x2310] sm:$0xff]
        %v1436 = vld [vmem:[#allocation2 + $0x2318] sm:$0xff]
        %v1437 = vld [vmem:[#allocation2 + $0x2320] sm:$0xff]
        %v1438 = vld [vmem:[#allocation2 + $0x2328] sm:$0xff]
        %v1439 = vld [vmem:[#allocation2 + $0x2330] sm:$0xff]
        %v1440 = vld [vmem:[#allocation2 + $0x2338] sm:$0xff]
        %v1441 = vld [vmem:[#allocation2 + $0x2340] sm:$0xff]
        %v1442 = vld [vmem:[#allocation2 + $0x2348] sm:$0xff]
        %v1443 = vld [vmem:[#allocation2 + $0x2350] sm:$0xff]
        %v1444 = vld [vmem:[#allocation2 + $0x2358] sm:$0xff]
        %v1445 = vld [vmem:[#allocation2 + $0x2360] sm:$0xff]
        %v1446 = vld [vmem:[#allocation2 + $0x2368] sm:$0xff]
        %v1447 = vld [vmem:[#allocation2 + $0x2370] sm:$0xff]
        %v1448 = vld [vmem:[#allocation2 + $0x2378] sm:$0xff]
        %v1449 = vld [vmem:[#allocation2 + $0x2380] sm:$0xff]
        %v1450 = vld [vmem:[#allocation2 + $0x2388] sm:$0xff]
        %v1451 = vld [vmem:[#allocation2 + $0x2390] sm:$0xff]
        %v1452 = vld [vmem:[#allocation2 + $0x2398] sm:$0xff]
        %v1453 = vld [vmem:[#allocation2 + $0x23a0] sm:$0xff]
        %v1454 = vld [vmem:[#allocation2 + $0x23a8] sm:$0xff]
        %v1455 = vld [vmem:[#allocation2 + $0x23b0] sm:$0xff]
        %v1456 = vld [vmem:[#allocation2 + $0x23b8] sm:$0xff]
        %v1457 = vld [vmem:[#allocation2 + $0x23c0] sm:$0xff]
        %v1458 = vld [vmem:[#allocation2 + $0x23c8] sm:$0xff]
        %v1459 = vld [vmem:[#allocation2 + $0x23d0] sm:$0xff]
        %v1460 = vld [vmem:[#allocation2 + $0x23d8] sm:$0xff]
        %v1461 = vld [vmem:[#allocation2 + $0x23e0] sm:$0xff]
        %v1462 = vld [vmem:[#allocation2 + $0x23e8] sm:$0xff]
        %v1463 = vld [vmem:[#allocation2 + $0x23f0] sm:$0xff]
        %v1464 = vld [vmem:[#allocation2 + $0x23f8] sm:$0xff]
        %v1465 = vld [vmem:[#allocation2 + $0x2400] sm:$0xff]
        %v1466 = vld [vmem:[#allocation2 + $0x2408] sm:$0xff]
        %v1467 = vld [vmem:[#allocation2 + $0x2410] sm:$0xff]
        %v1468 = vld [vmem:[#allocation2 + $0x2418] sm:$0xff]
        %v1469 = vld [vmem:[#allocation2 + $0x2420] sm:$0xff]
        %v1470 = vld [vmem:[#allocation2 + $0x2428] sm:$0xff]
        %v1471 = vld [vmem:[#allocation2 + $0x2430] sm:$0xff]
        %v1472 = vld [vmem:[#allocation2 + $0x2438] sm:$0xff]
        %v1473 = vld [vmem:[#allocation2 + $0x2440] sm:$0xff]
        %v1474 = vld [vmem:[#allocation2 + $0x2448] sm:$0xff]
        %v1475 = vld [vmem:[#allocation2 + $0x2450] sm:$0xff]
        %v1476 = vld [vmem:[#allocation2 + $0x2458] sm:$0xff]
        %v1477 = vld [vmem:[#allocation2 + $0x2460] sm:$0xff]
        %v1478 = vld [vmem:[#allocation2 + $0x2468] sm:$0xff]
        %v1479 = vld [vmem:[#allocation2 + $0x2470] sm:$0xff]
        %v1480 = vld [vmem:[#allocation2 + $0x2478] sm:$0xff]
        %v1481 = vld [vmem:[#allocation2 + $0x2480] sm:$0xff]
        %v1482 = vld [vmem:[#allocation2 + $0x2488] sm:$0xff]
        %v1483 = vld [vmem:[#allocation2 + $0x2490] sm:$0xff]
        %v1484 = vld [vmem:[#allocation2 + $0x2498] sm:$0xff]
        %v1485 = vld [vmem:[#allocation2 + $0x24a0] sm:$0xff]
        %v1486 = vld [vmem:[#allocation2 + $0x24a8] sm:$0xff]
        %v1487 = vld [vmem:[#allocation2 + $0x24b0] sm:$0xff]
        %v1488 = vld [vmem:[#allocation2 + $0x24b8] sm:$0xff]
        %v1489 = vld [vmem:[#allocation2 + $0x24c0] sm:$0xff]
        %v1490 = vld [vmem:[#allocation2 + $0x24c8] sm:$0xff]
        %v1491 = vld [vmem:[#allocation2 + $0x24d0] sm:$0xff]
        %v1492 = vld [vmem:[#allocation2 + $0x24d8] sm:$0xff]
        %v1493 = vld [vmem:[#allocation2 + $0x24e0] sm:$0xff]
        %v1494 = vld [vmem:[#allocation2 + $0x24e8] sm:$0xff]
        %v1495 = vld [vmem:[#allocation2 + $0x24f0] sm:$0xff]
        %v1496 = vld [vmem:[#allocation2 + $0x24f8] sm:$0xff]
        %v1497 = vld [vmem:[#allocation2 + $0x2500] sm:$0xff]
        %v1498 = vld [vmem:[#allocation2 + $0x2508] sm:$0xff]
        %v1499 = vld [vmem:[#allocation2 + $0x2510] sm:$0xff]
        %v1500 = vld [vmem:[#allocation2 + $0x2518] sm:$0xff]
        %v1501 = vld [vmem:[#allocation2 + $0x2520] sm:$0xff]
        %v1502 = vld [vmem:[#allocation2 + $0x2528] sm:$0xff]
        %v1503 = vld [vmem:[#allocation2 + $0x2530] sm:$0xff]
        %v1504 = vld [vmem:[#allocation2 + $0x2538] sm:$0xff]
        %v1505 = vld [vmem:[#allocation2 + $0x2540] sm:$0xff]
        %v1506 = vld [vmem:[#allocation2 + $0x2548] sm:$0xff]
        %v1507 = vld [vmem:[#allocation2 + $0x2550] sm:$0xff]
        %v1508 = vld [vmem:[#allocation2 + $0x2558] sm:$0xff]
        %v1509 = vld [vmem:[#allocation2 + $0x2560] sm:$0xff]
        %v1510 = vld [vmem:[#allocation2 + $0x2568] sm:$0xff]
        %v1511 = vld [vmem:[#allocation2 + $0x2570] sm:$0xff]
        %v1512 = vld [vmem:[#allocation2 + $0x2578] sm:$0xff]
        %v1513 = vld [vmem:[#allocation2 + $0x2580] sm:$0xff]
        %v1514 = vld [vmem:[#allocation2 + $0x2588] sm:$0xff]
        %v1515 = vld [vmem:[#allocation2 + $0x2590] sm:$0xff]
        %v1516 = vld [vmem:[#allocation2 + $0x2598] sm:$0xff]
        %v1517 = vld [vmem:[#allocation2 + $0x25a0] sm:$0xff]
        %v1518 = vld [vmem:[#allocation2 + $0x25a8] sm:$0xff]
        %v1519 = vld [vmem:[#allocation2 + $0x25b0] sm:$0xff]
        %v1520 = vld [vmem:[#allocation2 + $0x25b8] sm:$0xff]
        %v1521 = vld [vmem:[#allocation2 + $0x25c0] sm:$0xff]
        %v1522 = vld [vmem:[#allocation2 + $0x25c8] sm:$0xff]
        %v1523 = vld [vmem:[#allocation2 + $0x25d0] sm:$0xff]
        %v1524 = vld [vmem:[#allocation2 + $0x25d8] sm:$0xff]
        %v1525 = vld [vmem:[#allocation2 + $0x25e0] sm:$0xff]
        %v1526 = vld [vmem:[#allocation2 + $0x25e8] sm:$0xff]
        %v1527 = vld [vmem:[#allocation2 + $0x25f0] sm:$0xff]
        %v1528 = vld [vmem:[#allocation2 + $0x25f8] sm:$0xff]
        %v1529 = vld [vmem:[#allocation2 + $0x2600] sm:$0xff]
        %v1530 = vld [vmem:[#allocation2 + $0x2608] sm:$0xff]
        %v1531 = vld [vmem:[#allocation2 + $0x2610] sm:$0xff]
        %v1532 = vld [vmem:[#allocation2 + $0x2618] sm:$0xff]
        %v1533 = vld [vmem:[#allocation2 + $0x2620] sm:$0xff]
        %v1534 = vld [vmem:[#allocation2 + $0x2628] sm:$0xff]
        %v1535 = vld [vmem:[#allocation2 + $0x2630] sm:$0xff]
        %v1536 = vld [vmem:[#allocation2 + $0x2638] sm:$0xff]
        %v1537 = vld [vmem:[#allocation2 + $0x2640] sm:$0xff]
        %v1538 = vld [vmem:[#allocation2 + $0x2648] sm:$0xff]
        %v1539 = vld [vmem:[#allocation2 + $0x2650] sm:$0xff]
        %v1540 = vld [vmem:[#allocation2 + $0x2658] sm:$0xff]
        %v1541 = vld [vmem:[#allocation2 + $0x2660] sm:$0xff]
        %v1542 = vld [vmem:[#allocation2 + $0x2668] sm:$0xff]
        %v1543 = vld [vmem:[#allocation2 + $0x2670] sm:$0xff]
        %v1544 = vld [vmem:[#allocation2 + $0x2678] sm:$0xff]
        %v1545 = vld [vmem:[#allocation2 + $0x2680] sm:$0xff]
        %v1546 = vld [vmem:[#allocation2 + $0x2688] sm:$0xff]
        %v1547 = vld [vmem:[#allocation2 + $0x2690] sm:$0xff]
        %v1548 = vld [vmem:[#allocation2 + $0x2698] sm:$0xff]
        %v1549 = vld [vmem:[#allocation2 + $0x26a0] sm:$0xff]
        %v1550 = vld [vmem:[#allocation2 + $0x26a8] sm:$0xff]
        %v1551 = vld [vmem:[#allocation2 + $0x26b0] sm:$0xff]
        %v1552 = vld [vmem:[#allocation2 + $0x26b8] sm:$0xff]
        %v1553 = vld [vmem:[#allocation2 + $0x26c0] sm:$0xff]
        %v1554 = vld [vmem:[#allocation2 + $0x26c8] sm:$0xff]
        %v1555 = vld [vmem:[#allocation2 + $0x26d0] sm:$0xff]
        %v1556 = vld [vmem:[#allocation2 + $0x26d8] sm:$0xff]
        %v1557 = vld [vmem:[#allocation2 + $0x26e0] sm:$0xff]
        %v1558 = vld [vmem:[#allocation2 + $0x26e8] sm:$0xff]
        %v1559 = vld [vmem:[#allocation2 + $0x26f0] sm:$0xff]
        %v1560 = vld [vmem:[#allocation2 + $0x26f8] sm:$0xff]
        %v1561 = vld [vmem:[#allocation2 + $0x2700] sm:$0xff]
        %v1562 = vld [vmem:[#allocation2 + $0x2708] sm:$0xff]
        %v1563 = vld [vmem:[#allocation2 + $0x2710] sm:$0xff]
        %v1564 = vld [vmem:[#allocation2 + $0x2718] sm:$0xff]
        %v1565 = vld [vmem:[#allocation2 + $0x2720] sm:$0xff]
        %v1566 = vld [vmem:[#allocation2 + $0x2728] sm:$0xff]
        %v1567 = vld [vmem:[#allocation2 + $0x2730] sm:$0xff]
        %v1568 = vld [vmem:[#allocation2 + $0x2738] sm:$0xff]
        %v1569 = vld [vmem:[#allocation2 + $0x2740] sm:$0xff]
        %v1570 = vld [vmem:[#allocation2 + $0x2748] sm:$0xff]
        %v1571 = vld [vmem:[#allocation2 + $0x2750] sm:$0xff]
        %v1572 = vld [vmem:[#allocation2 + $0x2758] sm:$0xff]
        %v1573 = vld [vmem:[#allocation2 + $0x2760] sm:$0xff]
        %v1574 = vld [vmem:[#allocation2 + $0x2768] sm:$0xff]
        %v1575 = vld [vmem:[#allocation2 + $0x2770] sm:$0xff]
        %v1576 = vld [vmem:[#allocation2 + $0x2778] sm:$0xff]
        %v1577 = vld [vmem:[#allocation2 + $0x2780] sm:$0xff]
        %v1578 = vld [vmem:[#allocation2 + $0x2788] sm:$0xff]
        %v1579 = vld [vmem:[#allocation2 + $0x2790] sm:$0xff]
        %v1580 = vld [vmem:[#allocation2 + $0x2798] sm:$0xff]
        %v1581 = vld [vmem:[#allocation2 + $0x27a0] sm:$0xff]
        %v1582 = vld [vmem:[#allocation2 + $0x27a8] sm:$0xff]
        %v1583 = vld [vmem:[#allocation2 + $0x27b0] sm:$0xff]
        %v1584 = vld [vmem:[#allocation2 + $0x27b8] sm:$0xff]
        %v1585 = vld [vmem:[#allocation2 + $0x27c0] sm:$0xff]
        %v1586 = vld [vmem:[#allocation2 + $0x27c8] sm:$0xff]
        %v1587 = vld [vmem:[#allocation2 + $0x27d0] sm:$0xff]
        %v1588 = vld [vmem:[#allocation2 + $0x27d8] sm:$0xff]
        %v1589 = vld [vmem:[#allocation2 + $0x27e0] sm:$0xff]
        %v1590 = vld [vmem:[#allocation2 + $0x27e8] sm:$0xff]
        %v1591 = vld [vmem:[#allocation2 + $0x27f0] sm:$0xff]
        %v1592 = vld [vmem:[#allocation2 + $0x27f8] sm:$0xff]
        %v1593 = vld [vmem:[#allocation2 + $0x2800] sm:$0xff]
        %v1594 = vld [vmem:[#allocation2 + $0x2808] sm:$0xff]
        %v1595 = vld [vmem:[#allocation2 + $0x2810] sm:$0xff]
        %v1596 = vld [vmem:[#allocation2 + $0x2818] sm:$0xff]
        %v1597 = vld [vmem:[#allocation2 + $0x2820] sm:$0xff]
        %v1598 = vld [vmem:[#allocation2 + $0x2828] sm:$0xff]
        %v1599 = vld [vmem:[#allocation2 + $0x2830] sm:$0xff]
        %v1600 = vld [vmem:[#allocation2 + $0x2838] sm:$0xff]
        %v1601 = vld [vmem:[#allocation2 + $0x2840] sm:$0xff]
        %v1602 = vld [vmem:[#allocation2 + $0x2848] sm:$0xff]
        %v1603 = vld [vmem:[#allocation2 + $0x2850] sm:$0xff]
        %v1604 = vld [vmem:[#allocation2 + $0x2858] sm:$0xff]
        %v1605 = vld [vmem:[#allocation2 + $0x2860] sm:$0xff]
        %v1606 = vld [vmem:[#allocation2 + $0x2868] sm:$0xff]
        %v1607 = vld [vmem:[#allocation2 + $0x2870] sm:$0xff]
        %v1608 = vld [vmem:[#allocation2 + $0x2878] sm:$0xff]
        %v1609 = vld [vmem:[#allocation2 + $0x2880] sm:$0xff]
        %v1610 = vld [vmem:[#allocation2 + $0x2888] sm:$0xff]
        %v1611 = vld [vmem:[#allocation2 + $0x2890] sm:$0xff]
        %v1612 = vld [vmem:[#allocation2 + $0x2898] sm:$0xff]
        %v1613 = vld [vmem:[#allocation2 + $0x28a0] sm:$0xff]
        %v1614 = vld [vmem:[#allocation2 + $0x28a8] sm:$0xff]
        %v1615 = vld [vmem:[#allocation2 + $0x28b0] sm:$0xff]
        %v1616 = vld [vmem:[#allocation2 + $0x28b8] sm:$0xff]
        %v1617 = vld [vmem:[#allocation2 + $0x28c0] sm:$0xff]
        %v1618 = vld [vmem:[#allocation2 + $0x28c8] sm:$0xff]
        %v1619 = vld [vmem:[#allocation2 + $0x28d0] sm:$0xff]
        %v1620 = vld [vmem:[#allocation2 + $0x28d8] sm:$0xff]
        %v1621 = vld [vmem:[#allocation2 + $0x28e0] sm:$0xff]
        %v1622 = vld [vmem:[#allocation2 + $0x28e8] sm:$0xff]
        %v1623 = vld [vmem:[#allocation2 + $0x28f0] sm:$0xff]
        %v1624 = vld [vmem:[#allocation2 + $0x28f8] sm:$0xff]
        %v1625 = vld [vmem:[#allocation2 + $0x2900] sm:$0xff]
        %v1626 = vld [vmem:[#allocation2 + $0x2908] sm:$0xff]
        %v1627 = vld [vmem:[#allocation2 + $0x2910] sm:$0xff]
        %v1628 = vld [vmem:[#allocation2 + $0x2918] sm:$0xff]
        %v1629 = vld [vmem:[#allocation2 + $0x2920] sm:$0xff]
        %v1630 = vld [vmem:[#allocation2 + $0x2928] sm:$0xff]
        %v1631 = vld [vmem:[#allocation2 + $0x2930] sm:$0xff]
        %v1632 = vld [vmem:[#allocation2 + $0x2938] sm:$0xff]
        %v1633 = vld [vmem:[#allocation2 + $0x2940] sm:$0xff]
        %v1634 = vld [vmem:[#allocation2 + $0x2948] sm:$0xff]
        %v1635 = vld [vmem:[#allocation2 + $0x2950] sm:$0xff]
        %v1636 = vld [vmem:[#allocation2 + $0x2958] sm:$0xff]
        %v1637 = vld [vmem:[#allocation2 + $0x2960] sm:$0xff]
        %v1638 = vld [vmem:[#allocation2 + $0x2968] sm:$0xff]
        %v1639 = vld [vmem:[#allocation2 + $0x2970] sm:$0xff]
        %v1640 = vld [vmem:[#allocation2 + $0x2978] sm:$0xff]
        %v1641 = vld [vmem:[#allocation2 + $0x2980] sm:$0xff]
        %v1642 = vld [vmem:[#allocation2 + $0x2988] sm:$0xff]
        %v1643 = vld [vmem:[#allocation2 + $0x2990] sm:$0xff]
        %v1644 = vld [vmem:[#allocation2 + $0x2998] sm:$0xff]
        %v1645 = vld [vmem:[#allocation2 + $0x29a0] sm:$0xff]
        %v1646 = vld [vmem:[#allocation2 + $0x29a8] sm:$0xff]
        %v1647 = vld [vmem:[#allocation2 + $0x29b0] sm:$0xff]
        %v1648 = vld [vmem:[#allocation2 + $0x29b8] sm:$0xff]
        %v1649 = vld [vmem:[#allocation2 + $0x29c0] sm:$0xff]
        %v1650 = vld [vmem:[#allocation2 + $0x29c8] sm:$0xff]
        %v1651 = vld [vmem:[#allocation2 + $0x29d0] sm:$0xff]
        %v1652 = vld [vmem:[#allocation2 + $0x29d8] sm:$0xff]
        %v1653 = vld [vmem:[#allocation2 + $0x29e0] sm:$0xff]
        %v1654 = vld [vmem:[#allocation2 + $0x29e8] sm:$0xff]
        %v1655 = vld [vmem:[#allocation2 + $0x29f0] sm:$0xff]
        %v1656 = vld [vmem:[#allocation2 + $0x29f8] sm:$0xff]
        %v1657 = vld [vmem:[#allocation2 + $0x2a00] sm:$0xff]
        %v1658 = vld [vmem:[#allocation2 + $0x2a08] sm:$0xff]
        %v1659 = vld [vmem:[#allocation2 + $0x2a10] sm:$0xff]
        %v1660 = vld [vmem:[#allocation2 + $0x2a18] sm:$0xff]
        %v1661 = vld [vmem:[#allocation2 + $0x2a20] sm:$0xff]
        %v1662 = vld [vmem:[#allocation2 + $0x2a28] sm:$0xff]
        %v1663 = vld [vmem:[#allocation2 + $0x2a30] sm:$0xff]
        %v1664 = vld [vmem:[#allocation2 + $0x2a38] sm:$0xff]
        %v1665 = vld [vmem:[#allocation2 + $0x2a40] sm:$0xff]
        %v1666 = vld [vmem:[#allocation2 + $0x2a48] sm:$0xff]
        %v1667 = vld [vmem:[#allocation2 + $0x2a50] sm:$0xff]
        %v1668 = vld [vmem:[#allocation2 + $0x2a58] sm:$0xff]
        %v1669 = vld [vmem:[#allocation2 + $0x2a60] sm:$0xff]
        %v1670 = vld [vmem:[#allocation2 + $0x2a68] sm:$0xff]
        %v1671 = vld [vmem:[#allocation2 + $0x2a70] sm:$0xff]
        %v1672 = vld [vmem:[#allocation2 + $0x2a78] sm:$0xff]
        %v1673 = vld [vmem:[#allocation2 + $0x2a80] sm:$0xff]
        %v1674 = vld [vmem:[#allocation2 + $0x2a88] sm:$0xff]
        %v1675 = vld [vmem:[#allocation2 + $0x2a90] sm:$0xff]
        %v1676 = vld [vmem:[#allocation2 + $0x2a98] sm:$0xff]
        %v1677 = vld [vmem:[#allocation2 + $0x2aa0] sm:$0xff]
        %v1678 = vld [vmem:[#allocation2 + $0x2aa8] sm:$0xff]
        %v1679 = vld [vmem:[#allocation2 + $0x2ab0] sm:$0xff]
        %v1680 = vld [vmem:[#allocation2 + $0x2ab8] sm:$0xff]
        %v1681 = vld [vmem:[#allocation2 + $0x2ac0] sm:$0xff]
        %v1682 = vld [vmem:[#allocation2 + $0x2ac8] sm:$0xff]
        %v1683 = vld [vmem:[#allocation2 + $0x2ad0] sm:$0xff]
        %v1684 = vld [vmem:[#allocation2 + $0x2ad8] sm:$0xff]
        %v1685 = vld [vmem:[#allocation2 + $0x2ae0] sm:$0xff]
        %v1686 = vld [vmem:[#allocation2 + $0x2ae8] sm:$0xff]
        %v1687 = vld [vmem:[#allocation2 + $0x2af0] sm:$0xff]
        %v1688 = vld [vmem:[#allocation2 + $0x2af8] sm:$0xff]
        %v1689 = vld [vmem:[#allocation2 + $0x2b00] sm:$0xff]
        %v1690 = vld [vmem:[#allocation2 + $0x2b08] sm:$0xff]
        %v1691 = vld [vmem:[#allocation2 + $0x2b10] sm:$0xff]
        %v1692 = vld [vmem:[#allocation2 + $0x2b18] sm:$0xff]
        %v1693 = vld [vmem:[#allocation2 + $0x2b20] sm:$0xff]
        %v1694 = vld [vmem:[#allocation2 + $0x2b28] sm:$0xff]
        %v1695 = vld [vmem:[#allocation2 + $0x2b30] sm:$0xff]
        %v1696 = vld [vmem:[#allocation2 + $0x2b38] sm:$0xff]
        %v1697 = vld [vmem:[#allocation2 + $0x2b40] sm:$0xff]
        %v1698 = vld [vmem:[#allocation2 + $0x2b48] sm:$0xff]
        %v1699 = vld [vmem:[#allocation2 + $0x2b50] sm:$0xff]
        %v1700 = vld [vmem:[#allocation2 + $0x2b58] sm:$0xff]
        %v1701 = vld [vmem:[#allocation2 + $0x2b60] sm:$0xff]
        %v1702 = vld [vmem:[#allocation2 + $0x2b68] sm:$0xff]
        %v1703 = vld [vmem:[#allocation2 + $0x2b70] sm:$0xff]
        %v1704 = vld [vmem:[#allocation2 + $0x2b78] sm:$0xff]
        %v1705 = vld [vmem:[#allocation2 + $0x2b80] sm:$0xff]
        %v1706 = vld [vmem:[#allocation2 + $0x2b88] sm:$0xff]
        %v1707 = vld [vmem:[#allocation2 + $0x2b90] sm:$0xff]
        %v1708 = vld [vmem:[#allocation2 + $0x2b98] sm:$0xff]
        %v1709 = vld [vmem:[#allocation2 + $0x2ba0] sm:$0xff]
        %v1710 = vld [vmem:[#allocation2 + $0x2ba8] sm:$0xff]
        %v1711 = vld [vmem:[#allocation2 + $0x2bb0] sm:$0xff]
        %v1712 = vld [vmem:[#allocation2 + $0x2bb8] sm:$0xff]
        %v1713 = vld [vmem:[#allocation2 + $0x2bc0] sm:$0xff]
        %v1714 = vld [vmem:[#allocation2 + $0x2bc8] sm:$0xff]
        %v1715 = vld [vmem:[#allocation2 + $0x2bd0] sm:$0xff]
        %v1716 = vld [vmem:[#allocation2 + $0x2bd8] sm:$0xff]
        %v1717 = vld [vmem:[#allocation2 + $0x2be0] sm:$0xff]
        %v1718 = vld [vmem:[#allocation2 + $0x2be8] sm:$0xff]
        %v1719 = vld [vmem:[#allocation2 + $0x2bf0] sm:$0xff]
        %v1720 = vld [vmem:[#allocation2 + $0x2bf8] sm:$0xff]
        %v1721 = vld [vmem:[#allocation2 + $0x2c00] sm:$0xff]
        %v1722 = vld [vmem:[#allocation2 + $0x2c08] sm:$0xff]
        %v1723 = vld [vmem:[#allocation2 + $0x2c10] sm:$0xff]
        %v1724 = vld [vmem:[#allocation2 + $0x2c18] sm:$0xff]
        %v1725 = vld [vmem:[#allocation2 + $0x2c20] sm:$0xff]
        %v1726 = vld [vmem:[#allocation2 + $0x2c28] sm:$0xff]
        %v1727 = vld [vmem:[#allocation2 + $0x2c30] sm:$0xff]
        %v1728 = vld [vmem:[#allocation2 + $0x2c38] sm:$0xff]
        %v1729 = vld [vmem:[#allocation2 + $0x2c40] sm:$0xff]
        %v1730 = vld [vmem:[#allocation2 + $0x2c48] sm:$0xff]
        %v1731 = vld [vmem:[#allocation2 + $0x2c50] sm:$0xff]
        %v1732 = vld [vmem:[#allocation2 + $0x2c58] sm:$0xff]
        %v1733 = vld [vmem:[#allocation2 + $0x2c60] sm:$0xff]
        %v1734 = vld [vmem:[#allocation2 + $0x2c68] sm:$0xff]
        %v1735 = vld [vmem:[#allocation2 + $0x2c70] sm:$0xff]
        %v1736 = vld [vmem:[#allocation2 + $0x2c78] sm:$0xff]
        %v1737 = vld [vmem:[#allocation2 + $0x2c80] sm:$0xff]
        %v1738 = vld [vmem:[#allocation2 + $0x2c88] sm:$0xff]
        %v1739 = vld [vmem:[#allocation2 + $0x2c90] sm:$0xff]
        %v1740 = vld [vmem:[#allocation2 + $0x2c98] sm:$0xff]
        %v1741 = vld [vmem:[#allocation2 + $0x2ca0] sm:$0xff]
        %v1742 = vld [vmem:[#allocation2 + $0x2ca8] sm:$0xff]
        %v1743 = vld [vmem:[#allocation2 + $0x2cb0] sm:$0xff]
        %v1744 = vld [vmem:[#allocation2 + $0x2cb8] sm:$0xff]
        %v1745 = vld [vmem:[#allocation2 + $0x2cc0] sm:$0xff]
        %v1746 = vld [vmem:[#allocation2 + $0x2cc8] sm:$0xff]
        %v1747 = vld [vmem:[#allocation2 + $0x2cd0] sm:$0xff]
        %v1748 = vld [vmem:[#allocation2 + $0x2cd8] sm:$0xff]
        %v1749 = vld [vmem:[#allocation2 + $0x2ce0] sm:$0xff]
        %v1750 = vld [vmem:[#allocation2 + $0x2ce8] sm:$0xff]
        %v1751 = vld [vmem:[#allocation2 + $0x2cf0] sm:$0xff]
        %v1752 = vld [vmem:[#allocation2 + $0x2cf8] sm:$0xff]
        %v1753 = vld [vmem:[#allocation2 + $0x2d00] sm:$0xff]
        %v1754 = vld [vmem:[#allocation2 + $0x2d08] sm:$0xff]
        %v1755 = vld [vmem:[#allocation2 + $0x2d10] sm:$0xff]
        %v1756 = vld [vmem:[#allocation2 + $0x2d18] sm:$0xff]
        %v1757 = vld [vmem:[#allocation2 + $0x2d20] sm:$0xff]
        %v1758 = vld [vmem:[#allocation2 + $0x2d28] sm:$0xff]
        %v1759 = vld [vmem:[#allocation2 + $0x2d30] sm:$0xff]
        %v1760 = vld [vmem:[#allocation2 + $0x2d38] sm:$0xff]
        %v1761 = vld [vmem:[#allocation2 + $0x2d40] sm:$0xff]
        %v1762 = vld [vmem:[#allocation2 + $0x2d48] sm:$0xff]
        %v1763 = vld [vmem:[#allocation2 + $0x2d50] sm:$0xff]
        %v1764 = vld [vmem:[#allocation2 + $0x2d58] sm:$0xff]
        %v1765 = vld [vmem:[#allocation2 + $0x2d60] sm:$0xff]
        %v1766 = vld [vmem:[#allocation2 + $0x2d68] sm:$0xff]
        %v1767 = vld [vmem:[#allocation2 + $0x2d70] sm:$0xff]
        %v1768 = vld [vmem:[#allocation2 + $0x2d78] sm:$0xff]
        %v1769 = vld [vmem:[#allocation2 + $0x2d80] sm:$0xff]
        %v1770 = vld [vmem:[#allocation2 + $0x2d88] sm:$0xff]
        %v1771 = vld [vmem:[#allocation2 + $0x2d90] sm:$0xff]
        %v1772 = vld [vmem:[#allocation2 + $0x2d98] sm:$0xff]
        %v1773 = vld [vmem:[#allocation2 + $0x2da0] sm:$0xff]
        %v1774 = vld [vmem:[#allocation2 + $0x2da8] sm:$0xff]
        %v1775 = vld [vmem:[#allocation2 + $0x2db0] sm:$0xff]
        %v1776 = vld [vmem:[#allocation2 + $0x2db8] sm:$0xff]
        %v1777 = vld [vmem:[#allocation2 + $0x2dc0] sm:$0xff]
        %v1778 = vld [vmem:[#allocation2 + $0x2dc8] sm:$0xff]
        %v1779 = vld [vmem:[#allocation2 + $0x2dd0] sm:$0xff]
        %v1780 = vld [vmem:[#allocation2 + $0x2dd8] sm:$0xff]
        %v1781 = vld [vmem:[#allocation2 + $0x2de0] sm:$0xff]
        %v1782 = vld [vmem:[#allocation2 + $0x2de8] sm:$0xff]
        %v1783 = vld [vmem:[#allocation2 + $0x2df0] sm:$0xff]
        %v1784 = vld [vmem:[#allocation2 + $0x2df8] sm:$0xff]
        %v1785 = vld [vmem:[#allocation2 + $0x2e00] sm:$0xff]
        %v1786 = vld [vmem:[#allocation2 + $0x2e08] sm:$0xff]
        %v1787 = vld [vmem:[#allocation2 + $0x2e10] sm:$0xff]
        %v1788 = vld [vmem:[#allocation2 + $0x2e18] sm:$0xff]
        %v1789 = vld [vmem:[#allocation2 + $0x2e20] sm:$0xff]
        %v1790 = vld [vmem:[#allocation2 + $0x2e28] sm:$0xff]
        %v1791 = vld [vmem:[#allocation2 + $0x2e30] sm:$0xff]
        %v1792 = vld [vmem:[#allocation2 + $0x2e38] sm:$0xff]
        %v1793 = vld [vmem:[#allocation2 + $0x2e40] sm:$0xff]
        %v1794 = vld [vmem:[#allocation2 + $0x2e48] sm:$0xff]
        %v1795 = vld [vmem:[#allocation2 + $0x2e50] sm:$0xff]
        %v1796 = vld [vmem:[#allocation2 + $0x2e58] sm:$0xff]
        %v1797 = vld [vmem:[#allocation2 + $0x2e60] sm:$0xff]
        %v1798 = vld [vmem:[#allocation2 + $0x2e68] sm:$0xff]
        %v1799 = vld [vmem:[#allocation2 + $0x2e70] sm:$0xff]
        %v1800 = vld [vmem:[#allocation2 + $0x2e78] sm:$0xff]
        %v1801 = vld [vmem:[#allocation2 + $0x2e80] sm:$0xff]
        %v1802 = vld [vmem:[#allocation2 + $0x2e88] sm:$0xff]
        %v1803 = vld [vmem:[#allocation2 + $0x2e90] sm:$0xff]
        %v1804 = vld [vmem:[#allocation2 + $0x2e98] sm:$0xff]
        %v1805 = vld [vmem:[#allocation2 + $0x2ea0] sm:$0xff]
        %v1806 = vld [vmem:[#allocation2 + $0x2ea8] sm:$0xff]
        %v1807 = vld [vmem:[#allocation2 + $0x2eb0] sm:$0xff]
        %v1808 = vld [vmem:[#allocation2 + $0x2eb8] sm:$0xff]
        %v1809 = vld [vmem:[#allocation2 + $0x2ec0] sm:$0xff]
        %v1810 = vld [vmem:[#allocation2 + $0x2ec8] sm:$0xff]
        %v1811 = vld [vmem:[#allocation2 + $0x2ed0] sm:$0xff]
        %v1812 = vld [vmem:[#allocation2 + $0x2ed8] sm:$0xff]
        %v1813 = vld [vmem:[#allocation2 + $0x2ee0] sm:$0xff]
        %v1814 = vld [vmem:[#allocation2 + $0x2ee8] sm:$0xff]
        %v1815 = vld [vmem:[#allocation2 + $0x2ef0] sm:$0xff]
        %v1816 = vld [vmem:[#allocation2 + $0x2ef8] sm:$0xff]
        %v1817 = vld [vmem:[#allocation2 + $0x2f00] sm:$0xff]
        %v1818 = vld [vmem:[#allocation2 + $0x2f08] sm:$0xff]
        %v1819 = vld [vmem:[#allocation2 + $0x2f10] sm:$0xff]
        %v1820 = vld [vmem:[#allocation2 + $0x2f18] sm:$0xff]
        %v1821 = vld [vmem:[#allocation2 + $0x2f20] sm:$0xff]
        %v1822 = vld [vmem:[#allocation2 + $0x2f28] sm:$0xff]
        %v1823 = vld [vmem:[#allocation2 + $0x2f30] sm:$0xff]
        %v1824 = vld [vmem:[#allocation2 + $0x2f38] sm:$0xff]
        %v1825 = vld [vmem:[#allocation2 + $0x2f40] sm:$0xff]
        %v1826 = vld [vmem:[#allocation2 + $0x2f48] sm:$0xff]
        %v1827 = vld [vmem:[#allocation2 + $0x2f50] sm:$0xff]
        %v1828 = vld [vmem:[#allocation2 + $0x2f58] sm:$0xff]
        %v1829 = vld [vmem:[#allocation2 + $0x2f60] sm:$0xff]
        %v1830 = vld [vmem:[#allocation2 + $0x2f68] sm:$0xff]
        %v1831 = vld [vmem:[#allocation2 + $0x2f70] sm:$0xff]
        %v1832 = vld [vmem:[#allocation2 + $0x2f78] sm:$0xff]
        %v1833 = vld [vmem:[#allocation2 + $0x2f80] sm:$0xff]
        %v1834 = vld [vmem:[#allocation2 + $0x2f88] sm:$0xff]
        %v1835 = vld [vmem:[#allocation2 + $0x2f90] sm:$0xff]
        %v1836 = vld [vmem:[#allocation2 + $0x2f98] sm:$0xff]
        %v1837 = vld [vmem:[#allocation2 + $0x2fa0] sm:$0xff]
        %v1838 = vld [vmem:[#allocation2 + $0x2fa8] sm:$0xff]
        %v1839 = vld [vmem:[#allocation2 + $0x2fb0] sm:$0xff]
        %v1840 = vld [vmem:[#allocation2 + $0x2fb8] sm:$0xff]
        %v1841 = vld [vmem:[#allocation2 + $0x2fc0] sm:$0xff]
        %v1842 = vld [vmem:[#allocation2 + $0x2fc8] sm:$0xff]
        %v1843 = vld [vmem:[#allocation2 + $0x2fd0] sm:$0xff]
        %v1844 = vld [vmem:[#allocation2 + $0x2fd8] sm:$0xff]
        %v1845 = vld [vmem:[#allocation2 + $0x2fe0] sm:$0xff]
        %v1846 = vld [vmem:[#allocation2 + $0x2fe8] sm:$0xff]
        %v1847 = vld [vmem:[#allocation2 + $0x2ff0] sm:$0xff]
        %v1848 = vld [vmem:[#allocation2 + $0x2ff8] sm:$0xff]
        %v1849 = vld [vmem:[%s2] sm:$0xff]
        %v1850 = vld [vmem:[%s2 + $0x8] sm:$0xff]
        %v1851 = vld [vmem:[%s2 + $0x10] sm:$0xff]
        %v1852 = vld [vmem:[%s2 + $0x18] sm:$0xff]
        %v1853 = vld [vmem:[%s2 + $0x20] sm:$0xff]
        %v1854 = vld [vmem:[%s2 + $0x28] sm:$0xff]
        %v1855 = vld [vmem:[%s2 + $0x30] sm:$0xff]
        %v1856 = vld [vmem:[%s2 + $0x38] sm:$0xf]
        %1858 = vset.pattern.permute.xlu0 0
        %1859 = vperm.xlu0 %1858, %v1849
        %v1860 = vpop.permute.xlu0 %1859
        %1863 = vset.pattern.permute.xlu0 0
        %1864 = vperm.xlu0 %1863, %v1850
        %v1865 = vpop.permute.xlu0 %1864
        %1868 = vset.pattern.permute.xlu0 0
        %1869 = vperm.xlu0 %1868, %v1851
        %v1870 = vpop.permute.xlu0 %1869
        %1873 = vset.pattern.permute.xlu0 0
        %1874 = vperm.xlu0 %1873, %v1852
        %v1875 = vpop.permute.xlu0 %1874
        %1878 = vset.pattern.permute.xlu0 0
        %1879 = vperm.xlu0 %1878, %v1853
        %v1880 = vpop.permute.xlu0 %1879
        %1883 = vset.pattern.permute.xlu0 0
        %1884 = vperm.xlu0 %1883, %v1854
        %v1885 = vpop.permute.xlu0 %1884
        %1888 = vset.pattern.permute.xlu0 0
        %1889 = vperm.xlu0 %1888, %v1855
        %v1890 = vpop.permute.xlu0 %1889
        %1893 = vset.pattern.permute.xlu0 0
        %1894 = vperm.xlu0 %1893, %v1856
        %v1895 = vpop.permute.xlu0 %1894
        %1897 = vmatpush.msra.mxu0 %v793
        %1898 = vmatpush.msra.mxu0 %v761
        %1899 = vmatpush.msra.mxu0 %v729
        %1900 = vmatpush.msra.mxu0 %v697
        %1901 = vmatpush.msra.mxu0 %v665
        %1902 = vmatpush.msra.mxu0 %v633
        %1903 = vmatpush.msra.mxu0 %v601
        %1904 = vmatpush.msra.mxu0 %v569
        %1905 = vmatpush.msra.mxu0 %v537
        %1906 = vmatpush.msra.mxu0 %v505
        %1907 = vmatpush.msra.mxu0 %v473
        %1908 = vmatpush.msra.mxu0 %v441
        %1909 = vmatpush.msra.mxu0 %v409
        %1910 = vmatpush.msra.mxu0 %v377
        %1911 = vmatpush.msra.mxu0 %v345
        %1912 = vmatpush.msra.mxu0 %v313
        %1913 = vmatmul.f32.gmra.mxu0 %v289
        %v1914 = vpop.f32.mrf.mxu0
        %v1915 = vadd.f32 %v1860, %v1914
        %1916 = vmatmul.f32.gmra.mxu0 %v292
        %v1917 = vpop.f32.mrf.mxu0
        %v1918 = vadd.f32 %v1865, %v1917
        %1919 = vmatmul.f32.gmra.mxu0 %v295
        %v1920 = vpop.f32.mrf.mxu0
        %v1921 = vadd.f32 %v1870, %v1920
        %1922 = vmatmul.f32.gmra.mxu0 %v298
        %v1923 = vpop.f32.mrf.mxu0
        %v1924 = vadd.f32 %v1875, %v1923
        %1925 = vmatmul.f32.gmra.mxu0 %v301
        %v1926 = vpop.f32.mrf.mxu0
        %v1927 = vadd.f32 %v1880, %v1926
        %1928 = vmatmul.f32.gmra.mxu0 %v304
        %v1929 = vpop.f32.mrf.mxu0
        %v1930 = vadd.f32 %v1885, %v1929
        %1931 = vmatmul.f32.gmra.mxu0 %v307
        %v1932 = vpop.f32.mrf.mxu0
        %v1933 = vadd.f32 %v1890, %v1932
        %1934 = vmatmul.f32.gmra.mxu0 %v310
        %v1935 = vpop.f32.mrf.mxu0
        %v1936 = vadd.f32 %v1895, %v1935
        %1937 = vdwg.mxu0
        %1938 = vmatpush.msra.mxu0 %v1305
        %1939 = vmatpush.msra.mxu0 %v1273
        %1940 = vmatpush.msra.mxu0 %v1241
        %1941 = vmatpush.msra.mxu0 %v1209
        %1942 = vmatpush.msra.mxu0 %v1177
        %1943 = vmatpush.msra.mxu0 %v1145
        %1944 = vmatpush.msra.mxu0 %v1113
        %1945 = vmatpush.msra.mxu0 %v1081
        %1946 = vmatpush.msra.mxu0 %v1049
        %1947 = vmatpush.msra.mxu0 %v1017
        %1948 = vmatpush.msra.mxu0 %v985
        %1949 = vmatpush.msra.mxu0 %v953
        %1950 = vmatpush.msra.mxu0 %v921
        %1951 = vmatpush.msra.mxu0 %v889
        %1952 = vmatpush.msra.mxu0 %v857
        %1953 = vmatpush.msra.mxu0 %v825
        %1954 = vmatmul.f32.gmra.mxu0 %v290
        %v1955 = vpop.f32.mrf.mxu0
        %v1956 = vadd.f32 %v1915, %v1955
        %1957 = vmatmul.f32.gmra.mxu0 %v293
        %v1958 = vpop.f32.mrf.mxu0
        %v1959 = vadd.f32 %v1918, %v1958
        %1960 = vmatmul.f32.gmra.mxu0 %v296
        %v1961 = vpop.f32.mrf.mxu0
        %v1962 = vadd.f32 %v1921, %v1961
        %1963 = vmatmul.f32.gmra.mxu0 %v299
        %v1964 = vpop.f32.mrf.mxu0
        %v1965 = vadd.f32 %v1924, %v1964
        %1966 = vmatmul.f32.gmra.mxu0 %v302
        %v1967 = vpop.f32.mrf.mxu0
        %v1968 = vadd.f32 %v1927, %v1967
        %1969 = vmatmul.f32.gmra.mxu0 %v305
        %v1970 = vpop.f32.mrf.mxu0
        %v1971 = vadd.f32 %v1930, %v1970
        %1972 = vmatmul.f32.gmra.mxu0 %v308
        %v1973 = vpop.f32.mrf.mxu0
        %v1974 = vadd.f32 %v1933, %v1973
        %1975 = vmatmul.f32.gmra.mxu0 %v311
        %v1976 = vpop.f32.mrf.mxu0
        %v1977 = vadd.f32 %v1936, %v1976
        %1978 = vdwg.mxu0
        %1979 = vmatpush.msra.mxu0 %v1817
        %1980 = vmatpush.msra.mxu0 %v1785
        %1981 = vmatpush.msra.mxu0 %v1753
        %1982 = vmatpush.msra.mxu0 %v1721
        %1983 = vmatpush.msra.mxu0 %v1689
        %1984 = vmatpush.msra.mxu0 %v1657
        %1985 = vmatpush.msra.mxu0 %v1625
        %1986 = vmatpush.msra.mxu0 %v1593
        %1987 = vmatpush.msra.mxu0 %v1561
        %1988 = vmatpush.msra.mxu0 %v1529
        %1989 = vmatpush.msra.mxu0 %v1497
        %1990 = vmatpush.msra.mxu0 %v1465
        %1991 = vmatpush.msra.mxu0 %v1433
        %1992 = vmatpush.msra.mxu0 %v1401
        %1993 = vmatpush.msra.mxu0 %v1369
        %1994 = vmatpush.msra.mxu0 %v1337
        %1995 = vmatmul.f32.gmra.mxu0 %v291
        %v1996 = vpop.f32.mrf.mxu0
        %v1997 = vadd.f32 %v1956, %v1996
        %1998 = vmatmul.f32.gmra.mxu0 %v294
        %v1999 = vpop.f32.mrf.mxu0
        %v2000 = vadd.f32 %v1959, %v1999
        %2001 = vmatmul.f32.gmra.mxu0 %v297
        %v2002 = vpop.f32.mrf.mxu0
        %v2003 = vadd.f32 %v1962, %v2002
        %2004 = vmatmul.f32.gmra.mxu0 %v300
        %v2005 = vpop.f32.mrf.mxu0
        %v2006 = vadd.f32 %v1965, %v2005
        %2007 = vmatmul.f32.gmra.mxu0 %v303
        %v2008 = vpop.f32.mrf.mxu0
        %v2009 = vadd.f32 %v1968, %v2008
        %2010 = vmatmul.f32.gmra.mxu0 %v306
        %v2011 = vpop.f32.mrf.mxu0
        %v2012 = vadd.f32 %v1971, %v2011
        %2013 = vmatmul.f32.gmra.mxu0 %v309
        %v2014 = vpop.f32.mrf.mxu0
        %v2015 = vadd.f32 %v1974, %v2014
        %2016 = vmatmul.f32.gmra.mxu0 %v312
        %v2017 = vpop.f32.mrf.mxu0
        %v2018 = vadd.f32 %v1977, %v2017
        %2019 = vdwg.mxu0
        %2020 = vmatpush.msra.mxu0 %v794
        %2021 = vmatpush.msra.mxu0 %v762
        %2022 = vmatpush.msra.mxu0 %v730
        %2023 = vmatpush.msra.mxu0 %v698
        %2024 = vmatpush.msra.mxu0 %v666
        %2025 = vmatpush.msra.mxu0 %v634
        %2026 = vmatpush.msra.mxu0 %v602
        %2027 = vmatpush.msra.mxu0 %v570
        %2028 = vmatpush.msra.mxu0 %v538
        %2029 = vmatpush.msra.mxu0 %v506
        %2030 = vmatpush.msra.mxu0 %v474
        %2031 = vmatpush.msra.mxu0 %v442
        %2032 = vmatpush.msra.mxu0 %v410
        %2033 = vmatpush.msra.mxu0 %v378
        %2034 = vmatpush.msra.mxu0 %v346
        %2035 = vmatpush.msra.mxu0 %v314
        %2036 = vmatmul.f32.gmra.mxu0 %v289
        %v2037 = vpop.f32.mrf.mxu0
        %v2038 = vadd.f32 %v1860, %v2037
        %2039 = vmatmul.f32.gmra.mxu0 %v292
        %v2040 = vpop.f32.mrf.mxu0
        %v2041 = vadd.f32 %v1865, %v2040
        %2042 = vmatmul.f32.gmra.mxu0 %v295
        %v2043 = vpop.f32.mrf.mxu0
        %v2044 = vadd.f32 %v1870, %v2043
        %2045 = vmatmul.f32.gmra.mxu0 %v298
        %v2046 = vpop.f32.mrf.mxu0
        %v2047 = vadd.f32 %v1875, %v2046
        %2048 = vmatmul.f32.gmra.mxu0 %v301
        %v2049 = vpop.f32.mrf.mxu0
        %v2050 = vadd.f32 %v1880, %v2049
        %2051 = vmatmul.f32.gmra.mxu0 %v304
        %v2052 = vpop.f32.mrf.mxu0
        %v2053 = vadd.f32 %v1885, %v2052
        %2054 = vmatmul.f32.gmra.mxu0 %v307
        %v2055 = vpop.f32.mrf.mxu0
        %v2056 = vadd.f32 %v1890, %v2055
        %2057 = vmatmul.f32.gmra.mxu0 %v310
        %v2058 = vpop.f32.mrf.mxu0
        %v2059 = vadd.f32 %v1895, %v2058
        %2060 = vdwg.mxu0
        %2061 = vmatpush.msra.mxu0 %v1306
        %2062 = vmatpush.msra.mxu0 %v1274
        %2063 = vmatpush.msra.mxu0 %v1242
        %2064 = vmatpush.msra.mxu0 %v1210
        %2065 = vmatpush.msra.mxu0 %v1178
        %2066 = vmatpush.msra.mxu0 %v1146
        %2067 = vmatpush.msra.mxu0 %v1114
        %2068 = vmatpush.msra.mxu0 %v1082
        %2069 = vmatpush.msra.mxu0 %v1050
        %2070 = vmatpush.msra.mxu0 %v1018
        %2071 = vmatpush.msra.mxu0 %v986
        %2072 = vmatpush.msra.mxu0 %v954
        %2073 = vmatpush.msra.mxu0 %v922
        %2074 = vmatpush.msra.mxu0 %v890
        %2075 = vmatpush.msra.mxu0 %v858
        %2076 = vmatpush.msra.mxu0 %v826
        %2077 = vmatmul.f32.gmra.mxu0 %v290
        %v2078 = vpop.f32.mrf.mxu0
        %v2079 = vadd.f32 %v2038, %v2078
        %2080 = vmatmul.f32.gmra.mxu0 %v293
        %v2081 = vpop.f32.mrf.mxu0
        %v2082 = vadd.f32 %v2041, %v2081
        %2083 = vmatmul.f32.gmra.mxu0 %v296
        %v2084 = vpop.f32.mrf.mxu0
        %v2085 = vadd.f32 %v2044, %v2084
        %2086 = vmatmul.f32.gmra.mxu0 %v299
        %v2087 = vpop.f32.mrf.mxu0
        %v2088 = vadd.f32 %v2047, %v2087
        %2089 = vmatmul.f32.gmra.mxu0 %v302
        %v2090 = vpop.f32.mrf.mxu0
        %v2091 = vadd.f32 %v2050, %v2090
        %2092 = vmatmul.f32.gmra.mxu0 %v305
        %v2093 = vpop.f32.mrf.mxu0
        %v2094 = vadd.f32 %v2053, %v2093
        %2095 = vmatmul.f32.gmra.mxu0 %v308
        %v2096 = vpop.f32.mrf.mxu0
        %v2097 = vadd.f32 %v2056, %v2096
        %2098 = vmatmul.f32.gmra.mxu0 %v311
        %v2099 = vpop.f32.mrf.mxu0
        %v2100 = vadd.f32 %v2059, %v2099
        %2101 = vdwg.mxu0
        %2102 = vmatpush.msra.mxu0 %v1818
        %2103 = vmatpush.msra.mxu0 %v1786
        %2104 = vmatpush.msra.mxu0 %v1754
        %2105 = vmatpush.msra.mxu0 %v1722
        %2106 = vmatpush.msra.mxu0 %v1690
        %2107 = vmatpush.msra.mxu0 %v1658
        %2108 = vmatpush.msra.mxu0 %v1626
        %2109 = vmatpush.msra.mxu0 %v1594
        %2110 = vmatpush.msra.mxu0 %v1562
        %2111 = vmatpush.msra.mxu0 %v1530
        %2112 = vmatpush.msra.mxu0 %v1498
        %2113 = vmatpush.msra.mxu0 %v1466
        %2114 = vmatpush.msra.mxu0 %v1434
        %2115 = vmatpush.msra.mxu0 %v1402
        %2116 = vmatpush.msra.mxu0 %v1370
        %2117 = vmatpush.msra.mxu0 %v1338
        %2118 = vmatmul.f32.gmra.mxu0 %v291
        %v2119 = vpop.f32.mrf.mxu0
        %v2120 = vadd.f32 %v2079, %v2119
        %2121 = vmatmul.f32.gmra.mxu0 %v294
        %v2122 = vpop.f32.mrf.mxu0
        %v2123 = vadd.f32 %v2082, %v2122
        %2124 = vmatmul.f32.gmra.mxu0 %v297
        %v2125 = vpop.f32.mrf.mxu0
        %v2126 = vadd.f32 %v2085, %v2125
        %2127 = vmatmul.f32.gmra.mxu0 %v300
        %v2128 = vpop.f32.mrf.mxu0
        %v2129 = vadd.f32 %v2088, %v2128
        %2130 = vmatmul.f32.gmra.mxu0 %v303
        %v2131 = vpop.f32.mrf.mxu0
        %v2132 = vadd.f32 %v2091, %v2131
        %2133 = vmatmul.f32.gmra.mxu0 %v306
        %v2134 = vpop.f32.mrf.mxu0
        %v2135 = vadd.f32 %v2094, %v2134
        %2136 = vmatmul.f32.gmra.mxu0 %v309
        %v2137 = vpop.f32.mrf.mxu0
        %v2138 = vadd.f32 %v2097, %v2137
        %2139 = vmatmul.f32.gmra.mxu0 %v312
        %v2140 = vpop.f32.mrf.mxu0
        %v2141 = vadd.f32 %v2100, %v2140
        %2142 = vdwg.mxu0
        %2143 = vmatpush.msra.mxu0 %v795
        %2144 = vmatpush.msra.mxu0 %v763
        %2145 = vmatpush.msra.mxu0 %v731
        %2146 = vmatpush.msra.mxu0 %v699
        %2147 = vmatpush.msra.mxu0 %v667
        %2148 = vmatpush.msra.mxu0 %v635
        %2149 = vmatpush.msra.mxu0 %v603
        %2150 = vmatpush.msra.mxu0 %v571
        %2151 = vmatpush.msra.mxu0 %v539
        %2152 = vmatpush.msra.mxu0 %v507
        %2153 = vmatpush.msra.mxu0 %v475
        %2154 = vmatpush.msra.mxu0 %v443
        %2155 = vmatpush.msra.mxu0 %v411
        %2156 = vmatpush.msra.mxu0 %v379
        %2157 = vmatpush.msra.mxu0 %v347
        %2158 = vmatpush.msra.mxu0 %v315
        %2159 = vmatmul.f32.gmra.mxu0 %v289
        %v2160 = vpop.f32.mrf.mxu0
        %v2161 = vadd.f32 %v1860, %v2160
        %2162 = vmatmul.f32.gmra.mxu0 %v292
        %v2163 = vpop.f32.mrf.mxu0
        %v2164 = vadd.f32 %v1865, %v2163
        %2165 = vmatmul.f32.gmra.mxu0 %v295
        %v2166 = vpop.f32.mrf.mxu0
        %v2167 = vadd.f32 %v1870, %v2166
        %2168 = vmatmul.f32.gmra.mxu0 %v298
        %v2169 = vpop.f32.mrf.mxu0
        %v2170 = vadd.f32 %v1875, %v2169
        %2171 = vmatmul.f32.gmra.mxu0 %v301
        %v2172 = vpop.f32.mrf.mxu0
        %v2173 = vadd.f32 %v1880, %v2172
        %2174 = vmatmul.f32.gmra.mxu0 %v304
        %v2175 = vpop.f32.mrf.mxu0
        %v2176 = vadd.f32 %v1885, %v2175
        %2177 = vmatmul.f32.gmra.mxu0 %v307
        %v2178 = vpop.f32.mrf.mxu0
        %v2179 = vadd.f32 %v1890, %v2178
        %2180 = vmatmul.f32.gmra.mxu0 %v310
        %v2181 = vpop.f32.mrf.mxu0
        %v2182 = vadd.f32 %v1895, %v2181
        %2183 = vdwg.mxu0
        %2184 = vmatpush.msra.mxu0 %v1307
        %2185 = vmatpush.msra.mxu0 %v1275
        %2186 = vmatpush.msra.mxu0 %v1243
        %2187 = vmatpush.msra.mxu0 %v1211
        %2188 = vmatpush.msra.mxu0 %v1179
        %2189 = vmatpush.msra.mxu0 %v1147
        %2190 = vmatpush.msra.mxu0 %v1115
        %2191 = vmatpush.msra.mxu0 %v1083
        %2192 = vmatpush.msra.mxu0 %v1051
        %2193 = vmatpush.msra.mxu0 %v1019
        %2194 = vmatpush.msra.mxu0 %v987
        %2195 = vmatpush.msra.mxu0 %v955
        %2196 = vmatpush.msra.mxu0 %v923
        %2197 = vmatpush.msra.mxu0 %v891
        %2198 = vmatpush.msra.mxu0 %v859
        %2199 = vmatpush.msra.mxu0 %v827
        %2200 = vmatmul.f32.gmra.mxu0 %v290
        %v2201 = vpop.f32.mrf.mxu0
        %v2202 = vadd.f32 %v2161, %v2201
        %2203 = vmatmul.f32.gmra.mxu0 %v293
        %v2204 = vpop.f32.mrf.mxu0
        %v2205 = vadd.f32 %v2164, %v2204
        %2206 = vmatmul.f32.gmra.mxu0 %v296
        %v2207 = vpop.f32.mrf.mxu0
        %v2208 = vadd.f32 %v2167, %v2207
        %2209 = vmatmul.f32.gmra.mxu0 %v299
        %v2210 = vpop.f32.mrf.mxu0
        %v2211 = vadd.f32 %v2170, %v2210
        %2212 = vmatmul.f32.gmra.mxu0 %v302
        %v2213 = vpop.f32.mrf.mxu0
        %v2214 = vadd.f32 %v2173, %v2213
        %2215 = vmatmul.f32.gmra.mxu0 %v305
        %v2216 = vpop.f32.mrf.mxu0
        %v2217 = vadd.f32 %v2176, %v2216
        %2218 = vmatmul.f32.gmra.mxu0 %v308
        %v2219 = vpop.f32.mrf.mxu0
        %v2220 = vadd.f32 %v2179, %v2219
        %2221 = vmatmul.f32.gmra.mxu0 %v311
        %v2222 = vpop.f32.mrf.mxu0
        %v2223 = vadd.f32 %v2182, %v2222
        %2224 = vdwg.mxu0
        %2225 = vmatpush.msra.mxu0 %v1819
        %2226 = vmatpush.msra.mxu0 %v1787
        %2227 = vmatpush.msra.mxu0 %v1755
        %2228 = vmatpush.msra.mxu0 %v1723
        %2229 = vmatpush.msra.mxu0 %v1691
        %2230 = vmatpush.msra.mxu0 %v1659
        %2231 = vmatpush.msra.mxu0 %v1627
        %2232 = vmatpush.msra.mxu0 %v1595
        %2233 = vmatpush.msra.mxu0 %v1563
        %2234 = vmatpush.msra.mxu0 %v1531
        %2235 = vmatpush.msra.mxu0 %v1499
        %2236 = vmatpush.msra.mxu0 %v1467
        %2237 = vmatpush.msra.mxu0 %v1435
        %2238 = vmatpush.msra.mxu0 %v1403
        %2239 = vmatpush.msra.mxu0 %v1371
        %2240 = vmatpush.msra.mxu0 %v1339
        %2241 = vmatmul.f32.gmra.mxu0 %v291
        %v2242 = vpop.f32.mrf.mxu0
        %v2243 = vadd.f32 %v2202, %v2242
        %2244 = vmatmul.f32.gmra.mxu0 %v294
        %v2245 = vpop.f32.mrf.mxu0
        %v2246 = vadd.f32 %v2205, %v2245
        %2247 = vmatmul.f32.gmra.mxu0 %v297
        %v2248 = vpop.f32.mrf.mxu0
        %v2249 = vadd.f32 %v2208, %v2248
        %2250 = vmatmul.f32.gmra.mxu0 %v300
        %v2251 = vpop.f32.mrf.mxu0
        %v2252 = vadd.f32 %v2211, %v2251
        %2253 = vmatmul.f32.gmra.mxu0 %v303
        %v2254 = vpop.f32.mrf.mxu0
        %v2255 = vadd.f32 %v2214, %v2254
        %2256 = vmatmul.f32.gmra.mxu0 %v306
        %v2257 = vpop.f32.mrf.mxu0
        %v2258 = vadd.f32 %v2217, %v2257
        %2259 = vmatmul.f32.gmra.mxu0 %v309
        %v2260 = vpop.f32.mrf.mxu0
        %v2261 = vadd.f32 %v2220, %v2260
        %2262 = vmatmul.f32.gmra.mxu0 %v312
        %v2263 = vpop.f32.mrf.mxu0
        %v2264 = vadd.f32 %v2223, %v2263
        %2265 = vdwg.mxu0
        %2266 = vmatpush.msra.mxu0 %v796
        %2267 = vmatpush.msra.mxu0 %v764
        %2268 = vmatpush.msra.mxu0 %v732
        %2269 = vmatpush.msra.mxu0 %v700
        %2270 = vmatpush.msra.mxu0 %v668
        %2271 = vmatpush.msra.mxu0 %v636
        %2272 = vmatpush.msra.mxu0 %v604
        %2273 = vmatpush.msra.mxu0 %v572
        %2274 = vmatpush.msra.mxu0 %v540
        %2275 = vmatpush.msra.mxu0 %v508
        %2276 = vmatpush.msra.mxu0 %v476
        %2277 = vmatpush.msra.mxu0 %v444
        %2278 = vmatpush.msra.mxu0 %v412
        %2279 = vmatpush.msra.mxu0 %v380
        %2280 = vmatpush.msra.mxu0 %v348
        %2281 = vmatpush.msra.mxu0 %v316
        %2282 = vmatmul.f32.gmra.mxu0 %v289
        %v2283 = vpop.f32.mrf.mxu0
        %v2284 = vadd.f32 %v1860, %v2283
        %2285 = vmatmul.f32.gmra.mxu0 %v292
        %v2286 = vpop.f32.mrf.mxu0
        %v2287 = vadd.f32 %v1865, %v2286
        %2288 = vmatmul.f32.gmra.mxu0 %v295
        %v2289 = vpop.f32.mrf.mxu0
        %v2290 = vadd.f32 %v1870, %v2289
        %2291 = vmatmul.f32.gmra.mxu0 %v298
        %v2292 = vpop.f32.mrf.mxu0
        %v2293 = vadd.f32 %v1875, %v2292
        %2294 = vmatmul.f32.gmra.mxu0 %v301
        %v2295 = vpop.f32.mrf.mxu0
        %v2296 = vadd.f32 %v1880, %v2295
        %2297 = vmatmul.f32.gmra.mxu0 %v304
        %v2298 = vpop.f32.mrf.mxu0
        %v2299 = vadd.f32 %v1885, %v2298
        %2300 = vmatmul.f32.gmra.mxu0 %v307
        %v2301 = vpop.f32.mrf.mxu0
        %v2302 = vadd.f32 %v1890, %v2301
        %2303 = vmatmul.f32.gmra.mxu0 %v310
        %v2304 = vpop.f32.mrf.mxu0
        %v2305 = vadd.f32 %v1895, %v2304
        %2306 = vdwg.mxu0
        %2307 = vmatpush.msra.mxu0 %v1308
        %2308 = vmatpush.msra.mxu0 %v1276
        %2309 = vmatpush.msra.mxu0 %v1244
        %2310 = vmatpush.msra.mxu0 %v1212
        %2311 = vmatpush.msra.mxu0 %v1180
        %2312 = vmatpush.msra.mxu0 %v1148
        %2313 = vmatpush.msra.mxu0 %v1116
        %2314 = vmatpush.msra.mxu0 %v1084
        %2315 = vmatpush.msra.mxu0 %v1052
        %2316 = vmatpush.msra.mxu0 %v1020
        %2317 = vmatpush.msra.mxu0 %v988
        %2318 = vmatpush.msra.mxu0 %v956
        %2319 = vmatpush.msra.mxu0 %v924
        %2320 = vmatpush.msra.mxu0 %v892
        %2321 = vmatpush.msra.mxu0 %v860
        %2322 = vmatpush.msra.mxu0 %v828
        %2323 = vmatmul.f32.gmra.mxu0 %v290
        %v2324 = vpop.f32.mrf.mxu0
        %v2325 = vadd.f32 %v2284, %v2324
        %2326 = vmatmul.f32.gmra.mxu0 %v293
        %v2327 = vpop.f32.mrf.mxu0
        %v2328 = vadd.f32 %v2287, %v2327
        %2329 = vmatmul.f32.gmra.mxu0 %v296
        %v2330 = vpop.f32.mrf.mxu0
        %v2331 = vadd.f32 %v2290, %v2330
        %2332 = vmatmul.f32.gmra.mxu0 %v299
        %v2333 = vpop.f32.mrf.mxu0
        %v2334 = vadd.f32 %v2293, %v2333
        %2335 = vmatmul.f32.gmra.mxu0 %v302
        %v2336 = vpop.f32.mrf.mxu0
        %v2337 = vadd.f32 %v2296, %v2336
        %2338 = vmatmul.f32.gmra.mxu0 %v305
        %v2339 = vpop.f32.mrf.mxu0
        %v2340 = vadd.f32 %v2299, %v2339
        %2341 = vmatmul.f32.gmra.mxu0 %v308
        %v2342 = vpop.f32.mrf.mxu0
        %v2343 = vadd.f32 %v2302, %v2342
        %2344 = vmatmul.f32.gmra.mxu0 %v311
        %v2345 = vpop.f32.mrf.mxu0
        %v2346 = vadd.f32 %v2305, %v2345
        %2347 = vdwg.mxu0
        %2348 = vmatpush.msra.mxu0 %v1820
        %2349 = vmatpush.msra.mxu0 %v1788
        %2350 = vmatpush.msra.mxu0 %v1756
        %2351 = vmatpush.msra.mxu0 %v1724
        %2352 = vmatpush.msra.mxu0 %v1692
        %2353 = vmatpush.msra.mxu0 %v1660
        %2354 = vmatpush.msra.mxu0 %v1628
        %2355 = vmatpush.msra.mxu0 %v1596
        %2356 = vmatpush.msra.mxu0 %v1564
        %2357 = vmatpush.msra.mxu0 %v1532
        %2358 = vmatpush.msra.mxu0 %v1500
        %2359 = vmatpush.msra.mxu0 %v1468
        %2360 = vmatpush.msra.mxu0 %v1436
        %2361 = vmatpush.msra.mxu0 %v1404
        %2362 = vmatpush.msra.mxu0 %v1372
        %2363 = vmatpush.msra.mxu0 %v1340
        %2364 = vmatmul.f32.gmra.mxu0 %v291
        %v2365 = vpop.f32.mrf.mxu0
        %v2366 = vadd.f32 %v2325, %v2365
        %2367 = vmatmul.f32.gmra.mxu0 %v294
        %v2368 = vpop.f32.mrf.mxu0
        %v2369 = vadd.f32 %v2328, %v2368
        %2370 = vmatmul.f32.gmra.mxu0 %v297
        %v2371 = vpop.f32.mrf.mxu0
        %v2372 = vadd.f32 %v2331, %v2371
        %2373 = vmatmul.f32.gmra.mxu0 %v300
        %v2374 = vpop.f32.mrf.mxu0
        %v2375 = vadd.f32 %v2334, %v2374
        %2376 = vmatmul.f32.gmra.mxu0 %v303
        %v2377 = vpop.f32.mrf.mxu0
        %v2378 = vadd.f32 %v2337, %v2377
        %2379 = vmatmul.f32.gmra.mxu0 %v306
        %v2380 = vpop.f32.mrf.mxu0
        %v2381 = vadd.f32 %v2340, %v2380
        %2382 = vmatmul.f32.gmra.mxu0 %v309
        %v2383 = vpop.f32.mrf.mxu0
        %v2384 = vadd.f32 %v2343, %v2383
        %2385 = vmatmul.f32.gmra.mxu0 %v312
        %v2386 = vpop.f32.mrf.mxu0
        %v2387 = vadd.f32 %v2346, %v2386
        %2388 = vdwg.mxu0
        %2389 = vmatpush.msra.mxu0 %v797
        %2390 = vmatpush.msra.mxu0 %v765
        %2391 = vmatpush.msra.mxu0 %v733
        %2392 = vmatpush.msra.mxu0 %v701
        %2393 = vmatpush.msra.mxu0 %v669
        %2394 = vmatpush.msra.mxu0 %v637
        %2395 = vmatpush.msra.mxu0 %v605
        %2396 = vmatpush.msra.mxu0 %v573
        %2397 = vmatpush.msra.mxu0 %v541
        %2398 = vmatpush.msra.mxu0 %v509
        %2399 = vmatpush.msra.mxu0 %v477
        %2400 = vmatpush.msra.mxu0 %v445
        %2401 = vmatpush.msra.mxu0 %v413
        %2402 = vmatpush.msra.mxu0 %v381
        %2403 = vmatpush.msra.mxu0 %v349
        %2404 = vmatpush.msra.mxu0 %v317
        %2405 = vmatmul.f32.gmra.mxu0 %v289
        %v2406 = vpop.f32.mrf.mxu0
        %v2407 = vadd.f32 %v1860, %v2406
        %2408 = vmatmul.f32.gmra.mxu0 %v292
        %v2409 = vpop.f32.mrf.mxu0
        %v2410 = vadd.f32 %v1865, %v2409
        %2411 = vmatmul.f32.gmra.mxu0 %v295
        %v2412 = vpop.f32.mrf.mxu0
        %v2413 = vadd.f32 %v1870, %v2412
        %2414 = vmatmul.f32.gmra.mxu0 %v298
        %v2415 = vpop.f32.mrf.mxu0
        %v2416 = vadd.f32 %v1875, %v2415
        %2417 = vmatmul.f32.gmra.mxu0 %v301
        %v2418 = vpop.f32.mrf.mxu0
        %v2419 = vadd.f32 %v1880, %v2418
        %2420 = vmatmul.f32.gmra.mxu0 %v304
        %v2421 = vpop.f32.mrf.mxu0
        %v2422 = vadd.f32 %v1885, %v2421
        %2423 = vmatmul.f32.gmra.mxu0 %v307
        %v2424 = vpop.f32.mrf.mxu0
        %v2425 = vadd.f32 %v1890, %v2424
        %2426 = vmatmul.f32.gmra.mxu0 %v310
        %v2427 = vpop.f32.mrf.mxu0
        %v2428 = vadd.f32 %v1895, %v2427
        %2429 = vdwg.mxu0
        %2430 = vmatpush.msra.mxu0 %v1309
        %2431 = vmatpush.msra.mxu0 %v1277
        %2432 = vmatpush.msra.mxu0 %v1245
        %2433 = vmatpush.msra.mxu0 %v1213
        %2434 = vmatpush.msra.mxu0 %v1181
        %2435 = vmatpush.msra.mxu0 %v1149
        %2436 = vmatpush.msra.mxu0 %v1117
        %2437 = vmatpush.msra.mxu0 %v1085
        %2438 = vmatpush.msra.mxu0 %v1053
        %2439 = vmatpush.msra.mxu0 %v1021
        %2440 = vmatpush.msra.mxu0 %v989
        %2441 = vmatpush.msra.mxu0 %v957
        %2442 = vmatpush.msra.mxu0 %v925
        %2443 = vmatpush.msra.mxu0 %v893
        %2444 = vmatpush.msra.mxu0 %v861
        %2445 = vmatpush.msra.mxu0 %v829
        %2446 = vmatmul.f32.gmra.mxu0 %v290
        %v2447 = vpop.f32.mrf.mxu0
        %v2448 = vadd.f32 %v2407, %v2447
        %2449 = vmatmul.f32.gmra.mxu0 %v293
        %v2450 = vpop.f32.mrf.mxu0
        %v2451 = vadd.f32 %v2410, %v2450
        %2452 = vmatmul.f32.gmra.mxu0 %v296
        %v2453 = vpop.f32.mrf.mxu0
        %v2454 = vadd.f32 %v2413, %v2453
        %2455 = vmatmul.f32.gmra.mxu0 %v299
        %v2456 = vpop.f32.mrf.mxu0
        %v2457 = vadd.f32 %v2416, %v2456
        %2458 = vmatmul.f32.gmra.mxu0 %v302
        %v2459 = vpop.f32.mrf.mxu0
        %v2460 = vadd.f32 %v2419, %v2459
        %2461 = vmatmul.f32.gmra.mxu0 %v305
        %v2462 = vpop.f32.mrf.mxu0
        %v2463 = vadd.f32 %v2422, %v2462
        %2464 = vmatmul.f32.gmra.mxu0 %v308
        %v2465 = vpop.f32.mrf.mxu0
        %v2466 = vadd.f32 %v2425, %v2465
        %2467 = vmatmul.f32.gmra.mxu0 %v311
        %v2468 = vpop.f32.mrf.mxu0
        %v2469 = vadd.f32 %v2428, %v2468
        %2470 = vdwg.mxu0
        %2471 = vmatpush.msra.mxu0 %v1821
        %2472 = vmatpush.msra.mxu0 %v1789
        %2473 = vmatpush.msra.mxu0 %v1757
        %2474 = vmatpush.msra.mxu0 %v1725
        %2475 = vmatpush.msra.mxu0 %v1693
        %2476 = vmatpush.msra.mxu0 %v1661
        %2477 = vmatpush.msra.mxu0 %v1629
        %2478 = vmatpush.msra.mxu0 %v1597
        %2479 = vmatpush.msra.mxu0 %v1565
        %2480 = vmatpush.msra.mxu0 %v1533
        %2481 = vmatpush.msra.mxu0 %v1501
        %2482 = vmatpush.msra.mxu0 %v1469
        %2483 = vmatpush.msra.mxu0 %v1437
        %2484 = vmatpush.msra.mxu0 %v1405
        %2485 = vmatpush.msra.mxu0 %v1373
        %2486 = vmatpush.msra.mxu0 %v1341
        %2487 = vmatmul.f32.gmra.mxu0 %v291
        %v2488 = vpop.f32.mrf.mxu0
        %v2489 = vadd.f32 %v2448, %v2488
        %2490 = vmatmul.f32.gmra.mxu0 %v294
        %v2491 = vpop.f32.mrf.mxu0
        %v2492 = vadd.f32 %v2451, %v2491
        %2493 = vmatmul.f32.gmra.mxu0 %v297
        %v2494 = vpop.f32.mrf.mxu0
        %v2495 = vadd.f32 %v2454, %v2494
        %2496 = vmatmul.f32.gmra.mxu0 %v300
        %v2497 = vpop.f32.mrf.mxu0
        %v2498 = vadd.f32 %v2457, %v2497
        %2499 = vmatmul.f32.gmra.mxu0 %v303
        %v2500 = vpop.f32.mrf.mxu0
        %v2501 = vadd.f32 %v2460, %v2500
        %2502 = vmatmul.f32.gmra.mxu0 %v306
        %v2503 = vpop.f32.mrf.mxu0
        %v2504 = vadd.f32 %v2463, %v2503
        %2505 = vmatmul.f32.gmra.mxu0 %v309
        %v2506 = vpop.f32.mrf.mxu0
        %v2507 = vadd.f32 %v2466, %v2506
        %2508 = vmatmul.f32.gmra.mxu0 %v312
        %v2509 = vpop.f32.mrf.mxu0
        %v2510 = vadd.f32 %v2469, %v2509
        %2511 = vdwg.mxu0
        %2512 = vmatpush.msra.mxu0 %v798
        %2513 = vmatpush.msra.mxu0 %v766
        %2514 = vmatpush.msra.mxu0 %v734
        %2515 = vmatpush.msra.mxu0 %v702
        %2516 = vmatpush.msra.mxu0 %v670
        %2517 = vmatpush.msra.mxu0 %v638
        %2518 = vmatpush.msra.mxu0 %v606
        %2519 = vmatpush.msra.mxu0 %v574
        %2520 = vmatpush.msra.mxu0 %v542
        %2521 = vmatpush.msra.mxu0 %v510
        %2522 = vmatpush.msra.mxu0 %v478
        %2523 = vmatpush.msra.mxu0 %v446
        %2524 = vmatpush.msra.mxu0 %v414
        %2525 = vmatpush.msra.mxu0 %v382
        %2526 = vmatpush.msra.mxu0 %v350
        %2527 = vmatpush.msra.mxu0 %v318
        %2528 = vmatmul.f32.gmra.mxu0 %v289
        %v2529 = vpop.f32.mrf.mxu0
        %v2530 = vadd.f32 %v1860, %v2529
        %2531 = vmatmul.f32.gmra.mxu0 %v292
        %v2532 = vpop.f32.mrf.mxu0
        %v2533 = vadd.f32 %v1865, %v2532
        %2534 = vmatmul.f32.gmra.mxu0 %v295
        %v2535 = vpop.f32.mrf.mxu0
        %v2536 = vadd.f32 %v1870, %v2535
        %2537 = vmatmul.f32.gmra.mxu0 %v298
        %v2538 = vpop.f32.mrf.mxu0
        %v2539 = vadd.f32 %v1875, %v2538
        %2540 = vmatmul.f32.gmra.mxu0 %v301
        %v2541 = vpop.f32.mrf.mxu0
        %v2542 = vadd.f32 %v1880, %v2541
        %2543 = vmatmul.f32.gmra.mxu0 %v304
        %v2544 = vpop.f32.mrf.mxu0
        %v2545 = vadd.f32 %v1885, %v2544
        %2546 = vmatmul.f32.gmra.mxu0 %v307
        %v2547 = vpop.f32.mrf.mxu0
        %v2548 = vadd.f32 %v1890, %v2547
        %2549 = vmatmul.f32.gmra.mxu0 %v310
        %v2550 = vpop.f32.mrf.mxu0
        %v2551 = vadd.f32 %v1895, %v2550
        %2552 = vdwg.mxu0
        %2553 = vmatpush.msra.mxu0 %v1310
        %2554 = vmatpush.msra.mxu0 %v1278
        %2555 = vmatpush.msra.mxu0 %v1246
        %2556 = vmatpush.msra.mxu0 %v1214
        %2557 = vmatpush.msra.mxu0 %v1182
        %2558 = vmatpush.msra.mxu0 %v1150
        %2559 = vmatpush.msra.mxu0 %v1118
        %2560 = vmatpush.msra.mxu0 %v1086
        %2561 = vmatpush.msra.mxu0 %v1054
        %2562 = vmatpush.msra.mxu0 %v1022
        %2563 = vmatpush.msra.mxu0 %v990
        %2564 = vmatpush.msra.mxu0 %v958
        %2565 = vmatpush.msra.mxu0 %v926
        %2566 = vmatpush.msra.mxu0 %v894
        %2567 = vmatpush.msra.mxu0 %v862
        %2568 = vmatpush.msra.mxu0 %v830
        %2569 = vmatmul.f32.gmra.mxu0 %v290
        %v2570 = vpop.f32.mrf.mxu0
        %v2571 = vadd.f32 %v2530, %v2570
        %2572 = vmatmul.f32.gmra.mxu0 %v293
        %v2573 = vpop.f32.mrf.mxu0
        %v2574 = vadd.f32 %v2533, %v2573
        %2575 = vmatmul.f32.gmra.mxu0 %v296
        %v2576 = vpop.f32.mrf.mxu0
        %v2577 = vadd.f32 %v2536, %v2576
        %2578 = vmatmul.f32.gmra.mxu0 %v299
        %v2579 = vpop.f32.mrf.mxu0
        %v2580 = vadd.f32 %v2539, %v2579
        %2581 = vmatmul.f32.gmra.mxu0 %v302
        %v2582 = vpop.f32.mrf.mxu0
        %v2583 = vadd.f32 %v2542, %v2582
        %2584 = vmatmul.f32.gmra.mxu0 %v305
        %v2585 = vpop.f32.mrf.mxu0
        %v2586 = vadd.f32 %v2545, %v2585
        %2587 = vmatmul.f32.gmra.mxu0 %v308
        %v2588 = vpop.f32.mrf.mxu0
        %v2589 = vadd.f32 %v2548, %v2588
        %2590 = vmatmul.f32.gmra.mxu0 %v311
        %v2591 = vpop.f32.mrf.mxu0
        %v2592 = vadd.f32 %v2551, %v2591
        %2593 = vdwg.mxu0
        %2594 = vmatpush.msra.mxu0 %v1822
        %2595 = vmatpush.msra.mxu0 %v1790
        %2596 = vmatpush.msra.mxu0 %v1758
        %2597 = vmatpush.msra.mxu0 %v1726
        %2598 = vmatpush.msra.mxu0 %v1694
        %2599 = vmatpush.msra.mxu0 %v1662
        %2600 = vmatpush.msra.mxu0 %v1630
        %2601 = vmatpush.msra.mxu0 %v1598
        %2602 = vmatpush.msra.mxu0 %v1566
        %2603 = vmatpush.msra.mxu0 %v1534
        %2604 = vmatpush.msra.mxu0 %v1502
        %2605 = vmatpush.msra.mxu0 %v1470
        %2606 = vmatpush.msra.mxu0 %v1438
        %2607 = vmatpush.msra.mxu0 %v1406
        %2608 = vmatpush.msra.mxu0 %v1374
        %2609 = vmatpush.msra.mxu0 %v1342
        %2610 = vmatmul.f32.gmra.mxu0 %v291
        %v2611 = vpop.f32.mrf.mxu0
        %v2612 = vadd.f32 %v2571, %v2611
        %2613 = vmatmul.f32.gmra.mxu0 %v294
        %v2614 = vpop.f32.mrf.mxu0
        %v2615 = vadd.f32 %v2574, %v2614
        %2616 = vmatmul.f32.gmra.mxu0 %v297
        %v2617 = vpop.f32.mrf.mxu0
        %v2618 = vadd.f32 %v2577, %v2617
        %2619 = vmatmul.f32.gmra.mxu0 %v300
        %v2620 = vpop.f32.mrf.mxu0
        %v2621 = vadd.f32 %v2580, %v2620
        %2622 = vmatmul.f32.gmra.mxu0 %v303
        %v2623 = vpop.f32.mrf.mxu0
        %v2624 = vadd.f32 %v2583, %v2623
        %2625 = vmatmul.f32.gmra.mxu0 %v306
        %v2626 = vpop.f32.mrf.mxu0
        %v2627 = vadd.f32 %v2586, %v2626
        %2628 = vmatmul.f32.gmra.mxu0 %v309
        %v2629 = vpop.f32.mrf.mxu0
        %v2630 = vadd.f32 %v2589, %v2629
        %2631 = vmatmul.f32.gmra.mxu0 %v312
        %v2632 = vpop.f32.mrf.mxu0
        %v2633 = vadd.f32 %v2592, %v2632
        %2634 = vdwg.mxu0
        %2635 = vmatpush.msra.mxu0 %v799
        %2636 = vmatpush.msra.mxu0 %v767
        %2637 = vmatpush.msra.mxu0 %v735
        %2638 = vmatpush.msra.mxu0 %v703
        %2639 = vmatpush.msra.mxu0 %v671
        %2640 = vmatpush.msra.mxu0 %v639
        %2641 = vmatpush.msra.mxu0 %v607
        %2642 = vmatpush.msra.mxu0 %v575
        %2643 = vmatpush.msra.mxu0 %v543
        %2644 = vmatpush.msra.mxu0 %v511
        %2645 = vmatpush.msra.mxu0 %v479
        %2646 = vmatpush.msra.mxu0 %v447
        %2647 = vmatpush.msra.mxu0 %v415
        %2648 = vmatpush.msra.mxu0 %v383
        %2649 = vmatpush.msra.mxu0 %v351
        %2650 = vmatpush.msra.mxu0 %v319
        %2651 = vmatmul.f32.gmra.mxu0 %v289
        %v2652 = vpop.f32.mrf.mxu0
        %v2653 = vadd.f32 %v1860, %v2652
        %2654 = vmatmul.f32.gmra.mxu0 %v292
        %v2655 = vpop.f32.mrf.mxu0
        %v2656 = vadd.f32 %v1865, %v2655
        %2657 = vmatmul.f32.gmra.mxu0 %v295
        %v2658 = vpop.f32.mrf.mxu0
        %v2659 = vadd.f32 %v1870, %v2658
        %2660 = vmatmul.f32.gmra.mxu0 %v298
        %v2661 = vpop.f32.mrf.mxu0
        %v2662 = vadd.f32 %v1875, %v2661
        %2663 = vmatmul.f32.gmra.mxu0 %v301
        %v2664 = vpop.f32.mrf.mxu0
        %v2665 = vadd.f32 %v1880, %v2664
        %2666 = vmatmul.f32.gmra.mxu0 %v304
        %v2667 = vpop.f32.mrf.mxu0
        %v2668 = vadd.f32 %v1885, %v2667
        %2669 = vmatmul.f32.gmra.mxu0 %v307
        %v2670 = vpop.f32.mrf.mxu0
        %v2671 = vadd.f32 %v1890, %v2670
        %2672 = vmatmul.f32.gmra.mxu0 %v310
        %v2673 = vpop.f32.mrf.mxu0
        %v2674 = vadd.f32 %v1895, %v2673
        %2675 = vdwg.mxu0
        %2676 = vmatpush.msra.mxu0 %v1311
        %2677 = vmatpush.msra.mxu0 %v1279
        %2678 = vmatpush.msra.mxu0 %v1247
        %2679 = vmatpush.msra.mxu0 %v1215
        %2680 = vmatpush.msra.mxu0 %v1183
        %2681 = vmatpush.msra.mxu0 %v1151
        %2682 = vmatpush.msra.mxu0 %v1119
        %2683 = vmatpush.msra.mxu0 %v1087
        %2684 = vmatpush.msra.mxu0 %v1055
        %2685 = vmatpush.msra.mxu0 %v1023
        %2686 = vmatpush.msra.mxu0 %v991
        %2687 = vmatpush.msra.mxu0 %v959
        %2688 = vmatpush.msra.mxu0 %v927
        %2689 = vmatpush.msra.mxu0 %v895
        %2690 = vmatpush.msra.mxu0 %v863
        %2691 = vmatpush.msra.mxu0 %v831
        %2692 = vmatmul.f32.gmra.mxu0 %v290
        %v2693 = vpop.f32.mrf.mxu0
        %v2694 = vadd.f32 %v2653, %v2693
        %2695 = vmatmul.f32.gmra.mxu0 %v293
        %v2696 = vpop.f32.mrf.mxu0
        %v2697 = vadd.f32 %v2656, %v2696
        %2698 = vmatmul.f32.gmra.mxu0 %v296
        %v2699 = vpop.f32.mrf.mxu0
        %v2700 = vadd.f32 %v2659, %v2699
        %2701 = vmatmul.f32.gmra.mxu0 %v299
        %v2702 = vpop.f32.mrf.mxu0
        %v2703 = vadd.f32 %v2662, %v2702
        %2704 = vmatmul.f32.gmra.mxu0 %v302
        %v2705 = vpop.f32.mrf.mxu0
        %v2706 = vadd.f32 %v2665, %v2705
        %2707 = vmatmul.f32.gmra.mxu0 %v305
        %v2708 = vpop.f32.mrf.mxu0
        %v2709 = vadd.f32 %v2668, %v2708
        %2710 = vmatmul.f32.gmra.mxu0 %v308
        %v2711 = vpop.f32.mrf.mxu0
        %v2712 = vadd.f32 %v2671, %v2711
        %2713 = vmatmul.f32.gmra.mxu0 %v311
        %v2714 = vpop.f32.mrf.mxu0
        %v2715 = vadd.f32 %v2674, %v2714
        %2716 = vdwg.mxu0
        %2717 = vmatpush.msra.mxu0 %v1823
        %2718 = vmatpush.msra.mxu0 %v1791
        %2719 = vmatpush.msra.mxu0 %v1759
        %2720 = vmatpush.msra.mxu0 %v1727
        %2721 = vmatpush.msra.mxu0 %v1695
        %2722 = vmatpush.msra.mxu0 %v1663
        %2723 = vmatpush.msra.mxu0 %v1631
        %2724 = vmatpush.msra.mxu0 %v1599
        %2725 = vmatpush.msra.mxu0 %v1567
        %2726 = vmatpush.msra.mxu0 %v1535
        %2727 = vmatpush.msra.mxu0 %v1503
        %2728 = vmatpush.msra.mxu0 %v1471
        %2729 = vmatpush.msra.mxu0 %v1439
        %2730 = vmatpush.msra.mxu0 %v1407
        %2731 = vmatpush.msra.mxu0 %v1375
        %2732 = vmatpush.msra.mxu0 %v1343
        %2733 = vmatmul.f32.gmra.mxu0 %v291
        %v2734 = vpop.f32.mrf.mxu0
        %v2735 = vadd.f32 %v2694, %v2734
        %2736 = vmatmul.f32.gmra.mxu0 %v294
        %v2737 = vpop.f32.mrf.mxu0
        %v2738 = vadd.f32 %v2697, %v2737
        %2739 = vmatmul.f32.gmra.mxu0 %v297
        %v2740 = vpop.f32.mrf.mxu0
        %v2741 = vadd.f32 %v2700, %v2740
        %2742 = vmatmul.f32.gmra.mxu0 %v300
        %v2743 = vpop.f32.mrf.mxu0
        %v2744 = vadd.f32 %v2703, %v2743
        %2745 = vmatmul.f32.gmra.mxu0 %v303
        %v2746 = vpop.f32.mrf.mxu0
        %v2747 = vadd.f32 %v2706, %v2746
        %2748 = vmatmul.f32.gmra.mxu0 %v306
        %v2749 = vpop.f32.mrf.mxu0
        %v2750 = vadd.f32 %v2709, %v2749
        %2751 = vmatmul.f32.gmra.mxu0 %v309
        %v2752 = vpop.f32.mrf.mxu0
        %v2753 = vadd.f32 %v2712, %v2752
        %2754 = vmatmul.f32.gmra.mxu0 %v312
        %v2755 = vpop.f32.mrf.mxu0
        %v2756 = vadd.f32 %v2715, %v2755
        %2757 = vdwg.mxu0
        %2758 = vmatpush.msra.mxu0 %v800
        %2759 = vmatpush.msra.mxu0 %v768
        %2760 = vmatpush.msra.mxu0 %v736
        %2761 = vmatpush.msra.mxu0 %v704
        %2762 = vmatpush.msra.mxu0 %v672
        %2763 = vmatpush.msra.mxu0 %v640
        %2764 = vmatpush.msra.mxu0 %v608
        %2765 = vmatpush.msra.mxu0 %v576
        %2766 = vmatpush.msra.mxu0 %v544
        %2767 = vmatpush.msra.mxu0 %v512
        %2768 = vmatpush.msra.mxu0 %v480
        %2769 = vmatpush.msra.mxu0 %v448
        %2770 = vmatpush.msra.mxu0 %v416
        %2771 = vmatpush.msra.mxu0 %v384
        %2772 = vmatpush.msra.mxu0 %v352
        %2773 = vmatpush.msra.mxu0 %v320
        %2774 = vmatmul.f32.gmra.mxu0 %v289
        %v2775 = vpop.f32.mrf.mxu0
        %v2776 = vadd.f32 %v1860, %v2775
        %2777 = vmatmul.f32.gmra.mxu0 %v292
        %v2778 = vpop.f32.mrf.mxu0
        %v2779 = vadd.f32 %v1865, %v2778
        %2780 = vmatmul.f32.gmra.mxu0 %v295
        %v2781 = vpop.f32.mrf.mxu0
        %v2782 = vadd.f32 %v1870, %v2781
        %2783 = vmatmul.f32.gmra.mxu0 %v298
        %v2784 = vpop.f32.mrf.mxu0
        %v2785 = vadd.f32 %v1875, %v2784
        %2786 = vmatmul.f32.gmra.mxu0 %v301
        %v2787 = vpop.f32.mrf.mxu0
        %v2788 = vadd.f32 %v1880, %v2787
        %2789 = vmatmul.f32.gmra.mxu0 %v304
        %v2790 = vpop.f32.mrf.mxu0
        %v2791 = vadd.f32 %v1885, %v2790
        %2792 = vmatmul.f32.gmra.mxu0 %v307
        %v2793 = vpop.f32.mrf.mxu0
        %v2794 = vadd.f32 %v1890, %v2793
        %2795 = vmatmul.f32.gmra.mxu0 %v310
        %v2796 = vpop.f32.mrf.mxu0
        %v2797 = vadd.f32 %v1895, %v2796
        %2798 = vdwg.mxu0
        %2799 = vmatpush.msra.mxu0 %v1312
        %2800 = vmatpush.msra.mxu0 %v1280
        %2801 = vmatpush.msra.mxu0 %v1248
        %2802 = vmatpush.msra.mxu0 %v1216
        %2803 = vmatpush.msra.mxu0 %v1184
        %2804 = vmatpush.msra.mxu0 %v1152
        %2805 = vmatpush.msra.mxu0 %v1120
        %2806 = vmatpush.msra.mxu0 %v1088
        %2807 = vmatpush.msra.mxu0 %v1056
        %2808 = vmatpush.msra.mxu0 %v1024
        %2809 = vmatpush.msra.mxu0 %v992
        %2810 = vmatpush.msra.mxu0 %v960
        %2811 = vmatpush.msra.mxu0 %v928
        %2812 = vmatpush.msra.mxu0 %v896
        %2813 = vmatpush.msra.mxu0 %v864
        %2814 = vmatpush.msra.mxu0 %v832
        %2815 = vmatmul.f32.gmra.mxu0 %v290
        %v2816 = vpop.f32.mrf.mxu0
        %v2817 = vadd.f32 %v2776, %v2816
        %2818 = vmatmul.f32.gmra.mxu0 %v293
        %v2819 = vpop.f32.mrf.mxu0
        %v2820 = vadd.f32 %v2779, %v2819
        %2821 = vmatmul.f32.gmra.mxu0 %v296
        %v2822 = vpop.f32.mrf.mxu0
        %v2823 = vadd.f32 %v2782, %v2822
        %2824 = vmatmul.f32.gmra.mxu0 %v299
        %v2825 = vpop.f32.mrf.mxu0
        %v2826 = vadd.f32 %v2785, %v2825
        %2827 = vmatmul.f32.gmra.mxu0 %v302
        %v2828 = vpop.f32.mrf.mxu0
        %v2829 = vadd.f32 %v2788, %v2828
        %2830 = vmatmul.f32.gmra.mxu0 %v305
        %v2831 = vpop.f32.mrf.mxu0
        %v2832 = vadd.f32 %v2791, %v2831
        %2833 = vmatmul.f32.gmra.mxu0 %v308
        %v2834 = vpop.f32.mrf.mxu0
        %v2835 = vadd.f32 %v2794, %v2834
        %2836 = vmatmul.f32.gmra.mxu0 %v311
        %v2837 = vpop.f32.mrf.mxu0
        %v2838 = vadd.f32 %v2797, %v2837
        %2839 = vdwg.mxu0
        %2840 = vmatpush.msra.mxu0 %v1824
        %2841 = vmatpush.msra.mxu0 %v1792
        %2842 = vmatpush.msra.mxu0 %v1760
        %2843 = vmatpush.msra.mxu0 %v1728
        %2844 = vmatpush.msra.mxu0 %v1696
        %2845 = vmatpush.msra.mxu0 %v1664
        %2846 = vmatpush.msra.mxu0 %v1632
        %2847 = vmatpush.msra.mxu0 %v1600
        %2848 = vmatpush.msra.mxu0 %v1568
        %2849 = vmatpush.msra.mxu0 %v1536
        %2850 = vmatpush.msra.mxu0 %v1504
        %2851 = vmatpush.msra.mxu0 %v1472
        %2852 = vmatpush.msra.mxu0 %v1440
        %2853 = vmatpush.msra.mxu0 %v1408
        %2854 = vmatpush.msra.mxu0 %v1376
        %2855 = vmatpush.msra.mxu0 %v1344
        %2856 = vmatmul.f32.gmra.mxu0 %v291
        %v2857 = vpop.f32.mrf.mxu0
        %v2858 = vadd.f32 %v2817, %v2857
        %2859 = vmatmul.f32.gmra.mxu0 %v294
        %v2860 = vpop.f32.mrf.mxu0
        %v2861 = vadd.f32 %v2820, %v2860
        %2862 = vmatmul.f32.gmra.mxu0 %v297
        %v2863 = vpop.f32.mrf.mxu0
        %v2864 = vadd.f32 %v2823, %v2863
        %2865 = vmatmul.f32.gmra.mxu0 %v300
        %v2866 = vpop.f32.mrf.mxu0
        %v2867 = vadd.f32 %v2826, %v2866
        %2868 = vmatmul.f32.gmra.mxu0 %v303
        %v2869 = vpop.f32.mrf.mxu0
        %v2870 = vadd.f32 %v2829, %v2869
        %2871 = vmatmul.f32.gmra.mxu0 %v306
        %v2872 = vpop.f32.mrf.mxu0
        %v2873 = vadd.f32 %v2832, %v2872
        %2874 = vmatmul.f32.gmra.mxu0 %v309
        %v2875 = vpop.f32.mrf.mxu0
        %v2876 = vadd.f32 %v2835, %v2875
        %2877 = vmatmul.f32.gmra.mxu0 %v312
        %v2878 = vpop.f32.mrf.mxu0
        %v2879 = vadd.f32 %v2838, %v2878
        %2880 = vdwg.mxu0
        %2881 = vmatpush.msra.mxu0 %v801
        %2882 = vmatpush.msra.mxu0 %v769
        %2883 = vmatpush.msra.mxu0 %v737
        %2884 = vmatpush.msra.mxu0 %v705
        %2885 = vmatpush.msra.mxu0 %v673
        %2886 = vmatpush.msra.mxu0 %v641
        %2887 = vmatpush.msra.mxu0 %v609
        %2888 = vmatpush.msra.mxu0 %v577
        %2889 = vmatpush.msra.mxu0 %v545
        %2890 = vmatpush.msra.mxu0 %v513
        %2891 = vmatpush.msra.mxu0 %v481
        %2892 = vmatpush.msra.mxu0 %v449
        %2893 = vmatpush.msra.mxu0 %v417
        %2894 = vmatpush.msra.mxu0 %v385
        %2895 = vmatpush.msra.mxu0 %v353
        %2896 = vmatpush.msra.mxu0 %v321
        %2897 = vmatmul.f32.gmra.mxu0 %v289
        %v2898 = vpop.f32.mrf.mxu0
        %v2899 = vadd.f32 %v1860, %v2898
        %2900 = vmatmul.f32.gmra.mxu0 %v292
        %v2901 = vpop.f32.mrf.mxu0
        %v2902 = vadd.f32 %v1865, %v2901
        %2903 = vmatmul.f32.gmra.mxu0 %v295
        %v2904 = vpop.f32.mrf.mxu0
        %v2905 = vadd.f32 %v1870, %v2904
        %2906 = vmatmul.f32.gmra.mxu0 %v298
        %v2907 = vpop.f32.mrf.mxu0
        %v2908 = vadd.f32 %v1875, %v2907
        %2909 = vmatmul.f32.gmra.mxu0 %v301
        %v2910 = vpop.f32.mrf.mxu0
        %v2911 = vadd.f32 %v1880, %v2910
        %2912 = vmatmul.f32.gmra.mxu0 %v304
        %v2913 = vpop.f32.mrf.mxu0
        %v2914 = vadd.f32 %v1885, %v2913
        %2915 = vmatmul.f32.gmra.mxu0 %v307
        %v2916 = vpop.f32.mrf.mxu0
        %v2917 = vadd.f32 %v1890, %v2916
        %2918 = vmatmul.f32.gmra.mxu0 %v310
        %v2919 = vpop.f32.mrf.mxu0
        %v2920 = vadd.f32 %v1895, %v2919
        %2921 = vdwg.mxu0
        %2922 = vmatpush.msra.mxu0 %v1313
        %2923 = vmatpush.msra.mxu0 %v1281
        %2924 = vmatpush.msra.mxu0 %v1249
        %2925 = vmatpush.msra.mxu0 %v1217
        %2926 = vmatpush.msra.mxu0 %v1185
        %2927 = vmatpush.msra.mxu0 %v1153
        %2928 = vmatpush.msra.mxu0 %v1121
        %2929 = vmatpush.msra.mxu0 %v1089
        %2930 = vmatpush.msra.mxu0 %v1057
        %2931 = vmatpush.msra.mxu0 %v1025
        %2932 = vmatpush.msra.mxu0 %v993
        %2933 = vmatpush.msra.mxu0 %v961
        %2934 = vmatpush.msra.mxu0 %v929
        %2935 = vmatpush.msra.mxu0 %v897
        %2936 = vmatpush.msra.mxu0 %v865
        %2937 = vmatpush.msra.mxu0 %v833
        %2938 = vmatmul.f32.gmra.mxu0 %v290
        %v2939 = vpop.f32.mrf.mxu0
        %v2940 = vadd.f32 %v2899, %v2939
        %2941 = vmatmul.f32.gmra.mxu0 %v293
        %v2942 = vpop.f32.mrf.mxu0
        %v2943 = vadd.f32 %v2902, %v2942
        %2944 = vmatmul.f32.gmra.mxu0 %v296
        %v2945 = vpop.f32.mrf.mxu0
        %v2946 = vadd.f32 %v2905, %v2945
        %2947 = vmatmul.f32.gmra.mxu0 %v299
        %v2948 = vpop.f32.mrf.mxu0
        %v2949 = vadd.f32 %v2908, %v2948
        %2950 = vmatmul.f32.gmra.mxu0 %v302
        %v2951 = vpop.f32.mrf.mxu0
        %v2952 = vadd.f32 %v2911, %v2951
        %2953 = vmatmul.f32.gmra.mxu0 %v305
        %v2954 = vpop.f32.mrf.mxu0
        %v2955 = vadd.f32 %v2914, %v2954
        %2956 = vmatmul.f32.gmra.mxu0 %v308
        %v2957 = vpop.f32.mrf.mxu0
        %v2958 = vadd.f32 %v2917, %v2957
        %2959 = vmatmul.f32.gmra.mxu0 %v311
        %v2960 = vpop.f32.mrf.mxu0
        %v2961 = vadd.f32 %v2920, %v2960
        %2962 = vdwg.mxu0
        %2963 = vmatpush.msra.mxu0 %v1825
        %2964 = vmatpush.msra.mxu0 %v1793
        %2965 = vmatpush.msra.mxu0 %v1761
        %2966 = vmatpush.msra.mxu0 %v1729
        %2967 = vmatpush.msra.mxu0 %v1697
        %2968 = vmatpush.msra.mxu0 %v1665
        %2969 = vmatpush.msra.mxu0 %v1633
        %2970 = vmatpush.msra.mxu0 %v1601
        %2971 = vmatpush.msra.mxu0 %v1569
        %2972 = vmatpush.msra.mxu0 %v1537
        %2973 = vmatpush.msra.mxu0 %v1505
        %2974 = vmatpush.msra.mxu0 %v1473
        %2975 = vmatpush.msra.mxu0 %v1441
        %2976 = vmatpush.msra.mxu0 %v1409
        %2977 = vmatpush.msra.mxu0 %v1377
        %2978 = vmatpush.msra.mxu0 %v1345
        %2979 = vmatmul.f32.gmra.mxu0 %v291
        %v2980 = vpop.f32.mrf.mxu0
        %v2981 = vadd.f32 %v2940, %v2980
        %2982 = vmatmul.f32.gmra.mxu0 %v294
        %v2983 = vpop.f32.mrf.mxu0
        %v2984 = vadd.f32 %v2943, %v2983
        %2985 = vmatmul.f32.gmra.mxu0 %v297
        %v2986 = vpop.f32.mrf.mxu0
        %v2987 = vadd.f32 %v2946, %v2986
        %2988 = vmatmul.f32.gmra.mxu0 %v300
        %v2989 = vpop.f32.mrf.mxu0
        %v2990 = vadd.f32 %v2949, %v2989
        %2991 = vmatmul.f32.gmra.mxu0 %v303
        %v2992 = vpop.f32.mrf.mxu0
        %v2993 = vadd.f32 %v2952, %v2992
        %2994 = vmatmul.f32.gmra.mxu0 %v306
        %v2995 = vpop.f32.mrf.mxu0
        %v2996 = vadd.f32 %v2955, %v2995
        %2997 = vmatmul.f32.gmra.mxu0 %v309
        %v2998 = vpop.f32.mrf.mxu0
        %v2999 = vadd.f32 %v2958, %v2998
        %3000 = vmatmul.f32.gmra.mxu0 %v312
        %v3001 = vpop.f32.mrf.mxu0
        %v3002 = vadd.f32 %v2961, %v3001
        %3003 = vdwg.mxu0
        %3004 = vmatpush.msra.mxu0 %v802
        %3005 = vmatpush.msra.mxu0 %v770
        %3006 = vmatpush.msra.mxu0 %v738
        %3007 = vmatpush.msra.mxu0 %v706
        %3008 = vmatpush.msra.mxu0 %v674
        %3009 = vmatpush.msra.mxu0 %v642
        %3010 = vmatpush.msra.mxu0 %v610
        %3011 = vmatpush.msra.mxu0 %v578
        %3012 = vmatpush.msra.mxu0 %v546
        %3013 = vmatpush.msra.mxu0 %v514
        %3014 = vmatpush.msra.mxu0 %v482
        %3015 = vmatpush.msra.mxu0 %v450
        %3016 = vmatpush.msra.mxu0 %v418
        %3017 = vmatpush.msra.mxu0 %v386
        %3018 = vmatpush.msra.mxu0 %v354
        %3019 = vmatpush.msra.mxu0 %v322
        %3020 = vmatmul.f32.gmra.mxu0 %v289
        %v3021 = vpop.f32.mrf.mxu0
        %v3022 = vadd.f32 %v1860, %v3021
        %3023 = vmatmul.f32.gmra.mxu0 %v292
        %v3024 = vpop.f32.mrf.mxu0
        %v3025 = vadd.f32 %v1865, %v3024
        %3026 = vmatmul.f32.gmra.mxu0 %v295
        %v3027 = vpop.f32.mrf.mxu0
        %v3028 = vadd.f32 %v1870, %v3027
        %3029 = vmatmul.f32.gmra.mxu0 %v298
        %v3030 = vpop.f32.mrf.mxu0
        %v3031 = vadd.f32 %v1875, %v3030
        %3032 = vmatmul.f32.gmra.mxu0 %v301
        %v3033 = vpop.f32.mrf.mxu0
        %v3034 = vadd.f32 %v1880, %v3033
        %3035 = vmatmul.f32.gmra.mxu0 %v304
        %v3036 = vpop.f32.mrf.mxu0
        %v3037 = vadd.f32 %v1885, %v3036
        %3038 = vmatmul.f32.gmra.mxu0 %v307
        %v3039 = vpop.f32.mrf.mxu0
        %v3040 = vadd.f32 %v1890, %v3039
        %3041 = vmatmul.f32.gmra.mxu0 %v310
        %v3042 = vpop.f32.mrf.mxu0
        %v3043 = vadd.f32 %v1895, %v3042
        %3044 = vdwg.mxu0
        %3045 = vmatpush.msra.mxu0 %v1314
        %3046 = vmatpush.msra.mxu0 %v1282
        %3047 = vmatpush.msra.mxu0 %v1250
        %3048 = vmatpush.msra.mxu0 %v1218
        %3049 = vmatpush.msra.mxu0 %v1186
        %3050 = vmatpush.msra.mxu0 %v1154
        %3051 = vmatpush.msra.mxu0 %v1122
        %3052 = vmatpush.msra.mxu0 %v1090
        %3053 = vmatpush.msra.mxu0 %v1058
        %3054 = vmatpush.msra.mxu0 %v1026
        %3055 = vmatpush.msra.mxu0 %v994
        %3056 = vmatpush.msra.mxu0 %v962
        %3057 = vmatpush.msra.mxu0 %v930
        %3058 = vmatpush.msra.mxu0 %v898
        %3059 = vmatpush.msra.mxu0 %v866
        %3060 = vmatpush.msra.mxu0 %v834
        %3061 = vmatmul.f32.gmra.mxu0 %v290
        %v3062 = vpop.f32.mrf.mxu0
        %v3063 = vadd.f32 %v3022, %v3062
        %3064 = vmatmul.f32.gmra.mxu0 %v293
        %v3065 = vpop.f32.mrf.mxu0
        %v3066 = vadd.f32 %v3025, %v3065
        %3067 = vmatmul.f32.gmra.mxu0 %v296
        %v3068 = vpop.f32.mrf.mxu0
        %v3069 = vadd.f32 %v3028, %v3068
        %3070 = vmatmul.f32.gmra.mxu0 %v299
        %v3071 = vpop.f32.mrf.mxu0
        %v3072 = vadd.f32 %v3031, %v3071
        %3073 = vmatmul.f32.gmra.mxu0 %v302
        %v3074 = vpop.f32.mrf.mxu0
        %v3075 = vadd.f32 %v3034, %v3074
        %3076 = vmatmul.f32.gmra.mxu0 %v305
        %v3077 = vpop.f32.mrf.mxu0
        %v3078 = vadd.f32 %v3037, %v3077
        %3079 = vmatmul.f32.gmra.mxu0 %v308
        %v3080 = vpop.f32.mrf.mxu0
        %v3081 = vadd.f32 %v3040, %v3080
        %3082 = vmatmul.f32.gmra.mxu0 %v311
        %v3083 = vpop.f32.mrf.mxu0
        %v3084 = vadd.f32 %v3043, %v3083
        %3085 = vdwg.mxu0
        %3086 = vmatpush.msra.mxu0 %v1826
        %3087 = vmatpush.msra.mxu0 %v1794
        %3088 = vmatpush.msra.mxu0 %v1762
        %3089 = vmatpush.msra.mxu0 %v1730
        %3090 = vmatpush.msra.mxu0 %v1698
        %3091 = vmatpush.msra.mxu0 %v1666
        %3092 = vmatpush.msra.mxu0 %v1634
        %3093 = vmatpush.msra.mxu0 %v1602
        %3094 = vmatpush.msra.mxu0 %v1570
        %3095 = vmatpush.msra.mxu0 %v1538
        %3096 = vmatpush.msra.mxu0 %v1506
        %3097 = vmatpush.msra.mxu0 %v1474
        %3098 = vmatpush.msra.mxu0 %v1442
        %3099 = vmatpush.msra.mxu0 %v1410
        %3100 = vmatpush.msra.mxu0 %v1378
        %3101 = vmatpush.msra.mxu0 %v1346
        %3102 = vmatmul.f32.gmra.mxu0 %v291
        %v3103 = vpop.f32.mrf.mxu0
        %v3104 = vadd.f32 %v3063, %v3103
        %3105 = vmatmul.f32.gmra.mxu0 %v294
        %v3106 = vpop.f32.mrf.mxu0
        %v3107 = vadd.f32 %v3066, %v3106
        %3108 = vmatmul.f32.gmra.mxu0 %v297
        %v3109 = vpop.f32.mrf.mxu0
        %v3110 = vadd.f32 %v3069, %v3109
        %3111 = vmatmul.f32.gmra.mxu0 %v300
        %v3112 = vpop.f32.mrf.mxu0
        %v3113 = vadd.f32 %v3072, %v3112
        %3114 = vmatmul.f32.gmra.mxu0 %v303
        %v3115 = vpop.f32.mrf.mxu0
        %v3116 = vadd.f32 %v3075, %v3115
        %3117 = vmatmul.f32.gmra.mxu0 %v306
        %v3118 = vpop.f32.mrf.mxu0
        %v3119 = vadd.f32 %v3078, %v3118
        %3120 = vmatmul.f32.gmra.mxu0 %v309
        %v3121 = vpop.f32.mrf.mxu0
        %v3122 = vadd.f32 %v3081, %v3121
        %3123 = vmatmul.f32.gmra.mxu0 %v312
        %v3124 = vpop.f32.mrf.mxu0
        %v3125 = vadd.f32 %v3084, %v3124
        %3126 = vdwg.mxu0
        %3127 = vmatpush.msra.mxu0 %v803
        %3128 = vmatpush.msra.mxu0 %v771
        %3129 = vmatpush.msra.mxu0 %v739
        %3130 = vmatpush.msra.mxu0 %v707
        %3131 = vmatpush.msra.mxu0 %v675
        %3132 = vmatpush.msra.mxu0 %v643
        %3133 = vmatpush.msra.mxu0 %v611
        %3134 = vmatpush.msra.mxu0 %v579
        %3135 = vmatpush.msra.mxu0 %v547
        %3136 = vmatpush.msra.mxu0 %v515
        %3137 = vmatpush.msra.mxu0 %v483
        %3138 = vmatpush.msra.mxu0 %v451
        %3139 = vmatpush.msra.mxu0 %v419
        %3140 = vmatpush.msra.mxu0 %v387
        %3141 = vmatpush.msra.mxu0 %v355
        %3142 = vmatpush.msra.mxu0 %v323
        %3143 = vmatmul.f32.gmra.mxu0 %v289
        %v3144 = vpop.f32.mrf.mxu0
        %v3145 = vadd.f32 %v1860, %v3144
        %3146 = vmatmul.f32.gmra.mxu0 %v292
        %v3147 = vpop.f32.mrf.mxu0
        %v3148 = vadd.f32 %v1865, %v3147
        %3149 = vmatmul.f32.gmra.mxu0 %v295
        %v3150 = vpop.f32.mrf.mxu0
        %v3151 = vadd.f32 %v1870, %v3150
        %3152 = vmatmul.f32.gmra.mxu0 %v298
        %v3153 = vpop.f32.mrf.mxu0
        %v3154 = vadd.f32 %v1875, %v3153
        %3155 = vmatmul.f32.gmra.mxu0 %v301
        %v3156 = vpop.f32.mrf.mxu0
        %v3157 = vadd.f32 %v1880, %v3156
        %3158 = vmatmul.f32.gmra.mxu0 %v304
        %v3159 = vpop.f32.mrf.mxu0
        %v3160 = vadd.f32 %v1885, %v3159
        %3161 = vmatmul.f32.gmra.mxu0 %v307
        %v3162 = vpop.f32.mrf.mxu0
        %v3163 = vadd.f32 %v1890, %v3162
        %3164 = vmatmul.f32.gmra.mxu0 %v310
        %v3165 = vpop.f32.mrf.mxu0
        %v3166 = vadd.f32 %v1895, %v3165
        %3167 = vdwg.mxu0
        %3168 = vmatpush.msra.mxu0 %v1315
        %3169 = vmatpush.msra.mxu0 %v1283
        %3170 = vmatpush.msra.mxu0 %v1251
        %3171 = vmatpush.msra.mxu0 %v1219
        %3172 = vmatpush.msra.mxu0 %v1187
        %3173 = vmatpush.msra.mxu0 %v1155
        %3174 = vmatpush.msra.mxu0 %v1123
        %3175 = vmatpush.msra.mxu0 %v1091
        %3176 = vmatpush.msra.mxu0 %v1059
        %3177 = vmatpush.msra.mxu0 %v1027
        %3178 = vmatpush.msra.mxu0 %v995
        %3179 = vmatpush.msra.mxu0 %v963
        %3180 = vmatpush.msra.mxu0 %v931
        %3181 = vmatpush.msra.mxu0 %v899
        %3182 = vmatpush.msra.mxu0 %v867
        %3183 = vmatpush.msra.mxu0 %v835
        %3184 = vmatmul.f32.gmra.mxu0 %v290
        %v3185 = vpop.f32.mrf.mxu0
        %v3186 = vadd.f32 %v3145, %v3185
        %3187 = vmatmul.f32.gmra.mxu0 %v293
        %v3188 = vpop.f32.mrf.mxu0
        %v3189 = vadd.f32 %v3148, %v3188
        %3190 = vmatmul.f32.gmra.mxu0 %v296
        %v3191 = vpop.f32.mrf.mxu0
        %v3192 = vadd.f32 %v3151, %v3191
        %3193 = vmatmul.f32.gmra.mxu0 %v299
        %v3194 = vpop.f32.mrf.mxu0
        %v3195 = vadd.f32 %v3154, %v3194
        %3196 = vmatmul.f32.gmra.mxu0 %v302
        %v3197 = vpop.f32.mrf.mxu0
        %v3198 = vadd.f32 %v3157, %v3197
        %3199 = vmatmul.f32.gmra.mxu0 %v305
        %v3200 = vpop.f32.mrf.mxu0
        %v3201 = vadd.f32 %v3160, %v3200
        %3202 = vmatmul.f32.gmra.mxu0 %v308
        %v3203 = vpop.f32.mrf.mxu0
        %v3204 = vadd.f32 %v3163, %v3203
        %3205 = vmatmul.f32.gmra.mxu0 %v311
        %v3206 = vpop.f32.mrf.mxu0
        %v3207 = vadd.f32 %v3166, %v3206
        %3208 = vdwg.mxu0
        %3209 = vmatpush.msra.mxu0 %v1827
        %3210 = vmatpush.msra.mxu0 %v1795
        %3211 = vmatpush.msra.mxu0 %v1763
        %3212 = vmatpush.msra.mxu0 %v1731
        %3213 = vmatpush.msra.mxu0 %v1699
        %3214 = vmatpush.msra.mxu0 %v1667
        %3215 = vmatpush.msra.mxu0 %v1635
        %3216 = vmatpush.msra.mxu0 %v1603
        %3217 = vmatpush.msra.mxu0 %v1571
        %3218 = vmatpush.msra.mxu0 %v1539
        %3219 = vmatpush.msra.mxu0 %v1507
        %3220 = vmatpush.msra.mxu0 %v1475
        %3221 = vmatpush.msra.mxu0 %v1443
        %3222 = vmatpush.msra.mxu0 %v1411
        %3223 = vmatpush.msra.mxu0 %v1379
        %3224 = vmatpush.msra.mxu0 %v1347
        %3225 = vmatmul.f32.gmra.mxu0 %v291
        %v3226 = vpop.f32.mrf.mxu0
        %v3227 = vadd.f32 %v3186, %v3226
        %3228 = vmatmul.f32.gmra.mxu0 %v294
        %v3229 = vpop.f32.mrf.mxu0
        %v3230 = vadd.f32 %v3189, %v3229
        %3231 = vmatmul.f32.gmra.mxu0 %v297
        %v3232 = vpop.f32.mrf.mxu0
        %v3233 = vadd.f32 %v3192, %v3232
        %3234 = vmatmul.f32.gmra.mxu0 %v300
        %v3235 = vpop.f32.mrf.mxu0
        %v3236 = vadd.f32 %v3195, %v3235
        %3237 = vmatmul.f32.gmra.mxu0 %v303
        %v3238 = vpop.f32.mrf.mxu0
        %v3239 = vadd.f32 %v3198, %v3238
        %3240 = vmatmul.f32.gmra.mxu0 %v306
        %v3241 = vpop.f32.mrf.mxu0
        %v3242 = vadd.f32 %v3201, %v3241
        %3243 = vmatmul.f32.gmra.mxu0 %v309
        %v3244 = vpop.f32.mrf.mxu0
        %v3245 = vadd.f32 %v3204, %v3244
        %3246 = vmatmul.f32.gmra.mxu0 %v312
        %v3247 = vpop.f32.mrf.mxu0
        %v3248 = vadd.f32 %v3207, %v3247
        %3249 = vdwg.mxu0
        %3250 = vmatpush.msra.mxu0 %v804
        %3251 = vmatpush.msra.mxu0 %v772
        %3252 = vmatpush.msra.mxu0 %v740
        %3253 = vmatpush.msra.mxu0 %v708
        %3254 = vmatpush.msra.mxu0 %v676
        %3255 = vmatpush.msra.mxu0 %v644
        %3256 = vmatpush.msra.mxu0 %v612
        %3257 = vmatpush.msra.mxu0 %v580
        %3258 = vmatpush.msra.mxu0 %v548
        %3259 = vmatpush.msra.mxu0 %v516
        %3260 = vmatpush.msra.mxu0 %v484
        %3261 = vmatpush.msra.mxu0 %v452
        %3262 = vmatpush.msra.mxu0 %v420
        %3263 = vmatpush.msra.mxu0 %v388
        %3264 = vmatpush.msra.mxu0 %v356
        %3265 = vmatpush.msra.mxu0 %v324
        %3266 = vmatmul.f32.gmra.mxu0 %v289
        %v3267 = vpop.f32.mrf.mxu0
        %v3268 = vadd.f32 %v1860, %v3267
        %3269 = vmatmul.f32.gmra.mxu0 %v292
        %v3270 = vpop.f32.mrf.mxu0
        %v3271 = vadd.f32 %v1865, %v3270
        %3272 = vmatmul.f32.gmra.mxu0 %v295
        %v3273 = vpop.f32.mrf.mxu0
        %v3274 = vadd.f32 %v1870, %v3273
        %3275 = vmatmul.f32.gmra.mxu0 %v298
        %v3276 = vpop.f32.mrf.mxu0
        %v3277 = vadd.f32 %v1875, %v3276
        %3278 = vmatmul.f32.gmra.mxu0 %v301
        %v3279 = vpop.f32.mrf.mxu0
        %v3280 = vadd.f32 %v1880, %v3279
        %3281 = vmatmul.f32.gmra.mxu0 %v304
        %v3282 = vpop.f32.mrf.mxu0
        %v3283 = vadd.f32 %v1885, %v3282
        %3284 = vmatmul.f32.gmra.mxu0 %v307
        %v3285 = vpop.f32.mrf.mxu0
        %v3286 = vadd.f32 %v1890, %v3285
        %3287 = vmatmul.f32.gmra.mxu0 %v310
        %v3288 = vpop.f32.mrf.mxu0
        %v3289 = vadd.f32 %v1895, %v3288
        %3290 = vdwg.mxu0
        %3291 = vmatpush.msra.mxu0 %v1316
        %3292 = vmatpush.msra.mxu0 %v1284
        %3293 = vmatpush.msra.mxu0 %v1252
        %3294 = vmatpush.msra.mxu0 %v1220
        %3295 = vmatpush.msra.mxu0 %v1188
        %3296 = vmatpush.msra.mxu0 %v1156
        %3297 = vmatpush.msra.mxu0 %v1124
        %3298 = vmatpush.msra.mxu0 %v1092
        %3299 = vmatpush.msra.mxu0 %v1060
        %3300 = vmatpush.msra.mxu0 %v1028
        %3301 = vmatpush.msra.mxu0 %v996
        %3302 = vmatpush.msra.mxu0 %v964
        %3303 = vmatpush.msra.mxu0 %v932
        %3304 = vmatpush.msra.mxu0 %v900
        %3305 = vmatpush.msra.mxu0 %v868
        %3306 = vmatpush.msra.mxu0 %v836
        %3307 = vmatmul.f32.gmra.mxu0 %v290
        %v3308 = vpop.f32.mrf.mxu0
        %v3309 = vadd.f32 %v3268, %v3308
        %3310 = vmatmul.f32.gmra.mxu0 %v293
        %v3311 = vpop.f32.mrf.mxu0
        %v3312 = vadd.f32 %v3271, %v3311
        %3313 = vmatmul.f32.gmra.mxu0 %v296
        %v3314 = vpop.f32.mrf.mxu0
        %v3315 = vadd.f32 %v3274, %v3314
        %3316 = vmatmul.f32.gmra.mxu0 %v299
        %v3317 = vpop.f32.mrf.mxu0
        %v3318 = vadd.f32 %v3277, %v3317
        %3319 = vmatmul.f32.gmra.mxu0 %v302
        %v3320 = vpop.f32.mrf.mxu0
        %v3321 = vadd.f32 %v3280, %v3320
        %3322 = vmatmul.f32.gmra.mxu0 %v305
        %v3323 = vpop.f32.mrf.mxu0
        %v3324 = vadd.f32 %v3283, %v3323
        %3325 = vmatmul.f32.gmra.mxu0 %v308
        %v3326 = vpop.f32.mrf.mxu0
        %v3327 = vadd.f32 %v3286, %v3326
        %3328 = vmatmul.f32.gmra.mxu0 %v311
        %v3329 = vpop.f32.mrf.mxu0
        %v3330 = vadd.f32 %v3289, %v3329
        %3331 = vdwg.mxu0
        %3332 = vmatpush.msra.mxu0 %v1828
        %3333 = vmatpush.msra.mxu0 %v1796
        %3334 = vmatpush.msra.mxu0 %v1764
        %3335 = vmatpush.msra.mxu0 %v1732
        %3336 = vmatpush.msra.mxu0 %v1700
        %3337 = vmatpush.msra.mxu0 %v1668
        %3338 = vmatpush.msra.mxu0 %v1636
        %3339 = vmatpush.msra.mxu0 %v1604
        %3340 = vmatpush.msra.mxu0 %v1572
        %3341 = vmatpush.msra.mxu0 %v1540
        %3342 = vmatpush.msra.mxu0 %v1508
        %3343 = vmatpush.msra.mxu0 %v1476
        %3344 = vmatpush.msra.mxu0 %v1444
        %3345 = vmatpush.msra.mxu0 %v1412
        %3346 = vmatpush.msra.mxu0 %v1380
        %3347 = vmatpush.msra.mxu0 %v1348
        %3348 = vmatmul.f32.gmra.mxu0 %v291
        %v3349 = vpop.f32.mrf.mxu0
        %v3350 = vadd.f32 %v3309, %v3349
        %3351 = vmatmul.f32.gmra.mxu0 %v294
        %v3352 = vpop.f32.mrf.mxu0
        %v3353 = vadd.f32 %v3312, %v3352
        %3354 = vmatmul.f32.gmra.mxu0 %v297
        %v3355 = vpop.f32.mrf.mxu0
        %v3356 = vadd.f32 %v3315, %v3355
        %3357 = vmatmul.f32.gmra.mxu0 %v300
        %v3358 = vpop.f32.mrf.mxu0
        %v3359 = vadd.f32 %v3318, %v3358
        %3360 = vmatmul.f32.gmra.mxu0 %v303
        %v3361 = vpop.f32.mrf.mxu0
        %v3362 = vadd.f32 %v3321, %v3361
        %3363 = vmatmul.f32.gmra.mxu0 %v306
        %v3364 = vpop.f32.mrf.mxu0
        %v3365 = vadd.f32 %v3324, %v3364
        %3366 = vmatmul.f32.gmra.mxu0 %v309
        %v3367 = vpop.f32.mrf.mxu0
        %v3368 = vadd.f32 %v3327, %v3367
        %3369 = vmatmul.f32.gmra.mxu0 %v312
        %v3370 = vpop.f32.mrf.mxu0
        %v3371 = vadd.f32 %v3330, %v3370
        %3372 = vdwg.mxu0
        %3373 = vmatpush.msra.mxu0 %v805
        %3374 = vmatpush.msra.mxu0 %v773
        %3375 = vmatpush.msra.mxu0 %v741
        %3376 = vmatpush.msra.mxu0 %v709
        %3377 = vmatpush.msra.mxu0 %v677
        %3378 = vmatpush.msra.mxu0 %v645
        %3379 = vmatpush.msra.mxu0 %v613
        %3380 = vmatpush.msra.mxu0 %v581
        %3381 = vmatpush.msra.mxu0 %v549
        %3382 = vmatpush.msra.mxu0 %v517
        %3383 = vmatpush.msra.mxu0 %v485
        %3384 = vmatpush.msra.mxu0 %v453
        %3385 = vmatpush.msra.mxu0 %v421
        %3386 = vmatpush.msra.mxu0 %v389
        %3387 = vmatpush.msra.mxu0 %v357
        %3388 = vmatpush.msra.mxu0 %v325
        %3389 = vmatmul.f32.gmra.mxu0 %v289
        %v3390 = vpop.f32.mrf.mxu0
        %v3391 = vadd.f32 %v1860, %v3390
        %3392 = vmatmul.f32.gmra.mxu0 %v292
        %v3393 = vpop.f32.mrf.mxu0
        %v3394 = vadd.f32 %v1865, %v3393
        %3395 = vmatmul.f32.gmra.mxu0 %v295
        %v3396 = vpop.f32.mrf.mxu0
        %v3397 = vadd.f32 %v1870, %v3396
        %3398 = vmatmul.f32.gmra.mxu0 %v298
        %v3399 = vpop.f32.mrf.mxu0
        %v3400 = vadd.f32 %v1875, %v3399
        %3401 = vmatmul.f32.gmra.mxu0 %v301
        %v3402 = vpop.f32.mrf.mxu0
        %v3403 = vadd.f32 %v1880, %v3402
        %3404 = vmatmul.f32.gmra.mxu0 %v304
        %v3405 = vpop.f32.mrf.mxu0
        %v3406 = vadd.f32 %v1885, %v3405
        %3407 = vmatmul.f32.gmra.mxu0 %v307
        %v3408 = vpop.f32.mrf.mxu0
        %v3409 = vadd.f32 %v1890, %v3408
        %3410 = vmatmul.f32.gmra.mxu0 %v310
        %v3411 = vpop.f32.mrf.mxu0
        %v3412 = vadd.f32 %v1895, %v3411
        %3413 = vdwg.mxu0
        %3414 = vmatpush.msra.mxu0 %v1317
        %3415 = vmatpush.msra.mxu0 %v1285
        %3416 = vmatpush.msra.mxu0 %v1253
        %3417 = vmatpush.msra.mxu0 %v1221
        %3418 = vmatpush.msra.mxu0 %v1189
        %3419 = vmatpush.msra.mxu0 %v1157
        %3420 = vmatpush.msra.mxu0 %v1125
        %3421 = vmatpush.msra.mxu0 %v1093
        %3422 = vmatpush.msra.mxu0 %v1061
        %3423 = vmatpush.msra.mxu0 %v1029
        %3424 = vmatpush.msra.mxu0 %v997
        %3425 = vmatpush.msra.mxu0 %v965
        %3426 = vmatpush.msra.mxu0 %v933
        %3427 = vmatpush.msra.mxu0 %v901
        %3428 = vmatpush.msra.mxu0 %v869
        %3429 = vmatpush.msra.mxu0 %v837
        %3430 = vmatmul.f32.gmra.mxu0 %v290
        %v3431 = vpop.f32.mrf.mxu0
        %v3432 = vadd.f32 %v3391, %v3431
        %3433 = vmatmul.f32.gmra.mxu0 %v293
        %v3434 = vpop.f32.mrf.mxu0
        %v3435 = vadd.f32 %v3394, %v3434
        %3436 = vmatmul.f32.gmra.mxu0 %v296
        %v3437 = vpop.f32.mrf.mxu0
        %v3438 = vadd.f32 %v3397, %v3437
        %3439 = vmatmul.f32.gmra.mxu0 %v299
        %v3440 = vpop.f32.mrf.mxu0
        %v3441 = vadd.f32 %v3400, %v3440
        %3442 = vmatmul.f32.gmra.mxu0 %v302
        %v3443 = vpop.f32.mrf.mxu0
        %v3444 = vadd.f32 %v3403, %v3443
        %3445 = vmatmul.f32.gmra.mxu0 %v305
        %v3446 = vpop.f32.mrf.mxu0
        %v3447 = vadd.f32 %v3406, %v3446
        %3448 = vmatmul.f32.gmra.mxu0 %v308
        %v3449 = vpop.f32.mrf.mxu0
        %v3450 = vadd.f32 %v3409, %v3449
        %3451 = vmatmul.f32.gmra.mxu0 %v311
        %v3452 = vpop.f32.mrf.mxu0
        %v3453 = vadd.f32 %v3412, %v3452
        %3454 = vdwg.mxu0
        %3455 = vmatpush.msra.mxu0 %v1829
        %3456 = vmatpush.msra.mxu0 %v1797
        %3457 = vmatpush.msra.mxu0 %v1765
        %3458 = vmatpush.msra.mxu0 %v1733
        %3459 = vmatpush.msra.mxu0 %v1701
        %3460 = vmatpush.msra.mxu0 %v1669
        %3461 = vmatpush.msra.mxu0 %v1637
        %3462 = vmatpush.msra.mxu0 %v1605
        %3463 = vmatpush.msra.mxu0 %v1573
        %3464 = vmatpush.msra.mxu0 %v1541
        %3465 = vmatpush.msra.mxu0 %v1509
        %3466 = vmatpush.msra.mxu0 %v1477
        %3467 = vmatpush.msra.mxu0 %v1445
        %3468 = vmatpush.msra.mxu0 %v1413
        %3469 = vmatpush.msra.mxu0 %v1381
        %3470 = vmatpush.msra.mxu0 %v1349
        %3471 = vmatmul.f32.gmra.mxu0 %v291
        %v3472 = vpop.f32.mrf.mxu0
        %v3473 = vadd.f32 %v3432, %v3472
        %3474 = vmatmul.f32.gmra.mxu0 %v294
        %v3475 = vpop.f32.mrf.mxu0
        %v3476 = vadd.f32 %v3435, %v3475
        %3477 = vmatmul.f32.gmra.mxu0 %v297
        %v3478 = vpop.f32.mrf.mxu0
        %v3479 = vadd.f32 %v3438, %v3478
        %3480 = vmatmul.f32.gmra.mxu0 %v300
        %v3481 = vpop.f32.mrf.mxu0
        %v3482 = vadd.f32 %v3441, %v3481
        %3483 = vmatmul.f32.gmra.mxu0 %v303
        %v3484 = vpop.f32.mrf.mxu0
        %v3485 = vadd.f32 %v3444, %v3484
        %3486 = vmatmul.f32.gmra.mxu0 %v306
        %v3487 = vpop.f32.mrf.mxu0
        %v3488 = vadd.f32 %v3447, %v3487
        %3489 = vmatmul.f32.gmra.mxu0 %v309
        %v3490 = vpop.f32.mrf.mxu0
        %v3491 = vadd.f32 %v3450, %v3490
        %3492 = vmatmul.f32.gmra.mxu0 %v312
        %v3493 = vpop.f32.mrf.mxu0
        %v3494 = vadd.f32 %v3453, %v3493
        %3495 = vdwg.mxu0
        %3496 = vmatpush.msra.mxu0 %v806
        %3497 = vmatpush.msra.mxu0 %v774
        %3498 = vmatpush.msra.mxu0 %v742
        %3499 = vmatpush.msra.mxu0 %v710
        %3500 = vmatpush.msra.mxu0 %v678
        %3501 = vmatpush.msra.mxu0 %v646
        %3502 = vmatpush.msra.mxu0 %v614
        %3503 = vmatpush.msra.mxu0 %v582
        %3504 = vmatpush.msra.mxu0 %v550
        %3505 = vmatpush.msra.mxu0 %v518
        %3506 = vmatpush.msra.mxu0 %v486
        %3507 = vmatpush.msra.mxu0 %v454
        %3508 = vmatpush.msra.mxu0 %v422
        %3509 = vmatpush.msra.mxu0 %v390
        %3510 = vmatpush.msra.mxu0 %v358
        %3511 = vmatpush.msra.mxu0 %v326
        %3512 = vmatmul.f32.gmra.mxu0 %v289
        %v3513 = vpop.f32.mrf.mxu0
        %v3514 = vadd.f32 %v1860, %v3513
        %3515 = vmatmul.f32.gmra.mxu0 %v292
        %v3516 = vpop.f32.mrf.mxu0
        %v3517 = vadd.f32 %v1865, %v3516
        %3518 = vmatmul.f32.gmra.mxu0 %v295
        %v3519 = vpop.f32.mrf.mxu0
        %v3520 = vadd.f32 %v1870, %v3519
        %3521 = vmatmul.f32.gmra.mxu0 %v298
        %v3522 = vpop.f32.mrf.mxu0
        %v3523 = vadd.f32 %v1875, %v3522
        %3524 = vmatmul.f32.gmra.mxu0 %v301
        %v3525 = vpop.f32.mrf.mxu0
        %v3526 = vadd.f32 %v1880, %v3525
        %3527 = vmatmul.f32.gmra.mxu0 %v304
        %v3528 = vpop.f32.mrf.mxu0
        %v3529 = vadd.f32 %v1885, %v3528
        %3530 = vmatmul.f32.gmra.mxu0 %v307
        %v3531 = vpop.f32.mrf.mxu0
        %v3532 = vadd.f32 %v1890, %v3531
        %3533 = vmatmul.f32.gmra.mxu0 %v310
        %v3534 = vpop.f32.mrf.mxu0
        %v3535 = vadd.f32 %v1895, %v3534
        %3536 = vdwg.mxu0
        %3537 = vmatpush.msra.mxu0 %v1318
        %3538 = vmatpush.msra.mxu0 %v1286
        %3539 = vmatpush.msra.mxu0 %v1254
        %3540 = vmatpush.msra.mxu0 %v1222
        %3541 = vmatpush.msra.mxu0 %v1190
        %3542 = vmatpush.msra.mxu0 %v1158
        %3543 = vmatpush.msra.mxu0 %v1126
        %3544 = vmatpush.msra.mxu0 %v1094
        %3545 = vmatpush.msra.mxu0 %v1062
        %3546 = vmatpush.msra.mxu0 %v1030
        %3547 = vmatpush.msra.mxu0 %v998
        %3548 = vmatpush.msra.mxu0 %v966
        %3549 = vmatpush.msra.mxu0 %v934
        %3550 = vmatpush.msra.mxu0 %v902
        %3551 = vmatpush.msra.mxu0 %v870
        %3552 = vmatpush.msra.mxu0 %v838
        %3553 = vmatmul.f32.gmra.mxu0 %v290
        %v3554 = vpop.f32.mrf.mxu0
        %v3555 = vadd.f32 %v3514, %v3554
        %3556 = vmatmul.f32.gmra.mxu0 %v293
        %v3557 = vpop.f32.mrf.mxu0
        %v3558 = vadd.f32 %v3517, %v3557
        %3559 = vmatmul.f32.gmra.mxu0 %v296
        %v3560 = vpop.f32.mrf.mxu0
        %v3561 = vadd.f32 %v3520, %v3560
        %3562 = vmatmul.f32.gmra.mxu0 %v299
        %v3563 = vpop.f32.mrf.mxu0
        %v3564 = vadd.f32 %v3523, %v3563
        %3565 = vmatmul.f32.gmra.mxu0 %v302
        %v3566 = vpop.f32.mrf.mxu0
        %v3567 = vadd.f32 %v3526, %v3566
        %3568 = vmatmul.f32.gmra.mxu0 %v305
        %v3569 = vpop.f32.mrf.mxu0
        %v3570 = vadd.f32 %v3529, %v3569
        %3571 = vmatmul.f32.gmra.mxu0 %v308
        %v3572 = vpop.f32.mrf.mxu0
        %v3573 = vadd.f32 %v3532, %v3572
        %3574 = vmatmul.f32.gmra.mxu0 %v311
        %v3575 = vpop.f32.mrf.mxu0
        %v3576 = vadd.f32 %v3535, %v3575
        %3577 = vdwg.mxu0
        %3578 = vmatpush.msra.mxu0 %v1830
        %3579 = vmatpush.msra.mxu0 %v1798
        %3580 = vmatpush.msra.mxu0 %v1766
        %3581 = vmatpush.msra.mxu0 %v1734
        %3582 = vmatpush.msra.mxu0 %v1702
        %3583 = vmatpush.msra.mxu0 %v1670
        %3584 = vmatpush.msra.mxu0 %v1638
        %3585 = vmatpush.msra.mxu0 %v1606
        %3586 = vmatpush.msra.mxu0 %v1574
        %3587 = vmatpush.msra.mxu0 %v1542
        %3588 = vmatpush.msra.mxu0 %v1510
        %3589 = vmatpush.msra.mxu0 %v1478
        %3590 = vmatpush.msra.mxu0 %v1446
        %3591 = vmatpush.msra.mxu0 %v1414
        %3592 = vmatpush.msra.mxu0 %v1382
        %3593 = vmatpush.msra.mxu0 %v1350
        %3594 = vmatmul.f32.gmra.mxu0 %v291
        %v3595 = vpop.f32.mrf.mxu0
        %v3596 = vadd.f32 %v3555, %v3595
        %3597 = vmatmul.f32.gmra.mxu0 %v294
        %v3598 = vpop.f32.mrf.mxu0
        %v3599 = vadd.f32 %v3558, %v3598
        %3600 = vmatmul.f32.gmra.mxu0 %v297
        %v3601 = vpop.f32.mrf.mxu0
        %v3602 = vadd.f32 %v3561, %v3601
        %3603 = vmatmul.f32.gmra.mxu0 %v300
        %v3604 = vpop.f32.mrf.mxu0
        %v3605 = vadd.f32 %v3564, %v3604
        %3606 = vmatmul.f32.gmra.mxu0 %v303
        %v3607 = vpop.f32.mrf.mxu0
        %v3608 = vadd.f32 %v3567, %v3607
        %3609 = vmatmul.f32.gmra.mxu0 %v306
        %v3610 = vpop.f32.mrf.mxu0
        %v3611 = vadd.f32 %v3570, %v3610
        %3612 = vmatmul.f32.gmra.mxu0 %v309
        %v3613 = vpop.f32.mrf.mxu0
        %v3614 = vadd.f32 %v3573, %v3613
        %3615 = vmatmul.f32.gmra.mxu0 %v312
        %v3616 = vpop.f32.mrf.mxu0
        %v3617 = vadd.f32 %v3576, %v3616
        %3618 = vdwg.mxu0
        %3619 = vmatpush.msra.mxu0 %v807
        %3620 = vmatpush.msra.mxu0 %v775
        %3621 = vmatpush.msra.mxu0 %v743
        %3622 = vmatpush.msra.mxu0 %v711
        %3623 = vmatpush.msra.mxu0 %v679
        %3624 = vmatpush.msra.mxu0 %v647
        %3625 = vmatpush.msra.mxu0 %v615
        %3626 = vmatpush.msra.mxu0 %v583
        %3627 = vmatpush.msra.mxu0 %v551
        %3628 = vmatpush.msra.mxu0 %v519
        %3629 = vmatpush.msra.mxu0 %v487
        %3630 = vmatpush.msra.mxu0 %v455
        %3631 = vmatpush.msra.mxu0 %v423
        %3632 = vmatpush.msra.mxu0 %v391
        %3633 = vmatpush.msra.mxu0 %v359
        %3634 = vmatpush.msra.mxu0 %v327
        %3635 = vmatmul.f32.gmra.mxu0 %v289
        %v3636 = vpop.f32.mrf.mxu0
        %v3637 = vadd.f32 %v1860, %v3636
        %3638 = vmatmul.f32.gmra.mxu0 %v292
        %v3639 = vpop.f32.mrf.mxu0
        %v3640 = vadd.f32 %v1865, %v3639
        %3641 = vmatmul.f32.gmra.mxu0 %v295
        %v3642 = vpop.f32.mrf.mxu0
        %v3643 = vadd.f32 %v1870, %v3642
        %3644 = vmatmul.f32.gmra.mxu0 %v298
        %v3645 = vpop.f32.mrf.mxu0
        %v3646 = vadd.f32 %v1875, %v3645
        %3647 = vmatmul.f32.gmra.mxu0 %v301
        %v3648 = vpop.f32.mrf.mxu0
        %v3649 = vadd.f32 %v1880, %v3648
        %3650 = vmatmul.f32.gmra.mxu0 %v304
        %v3651 = vpop.f32.mrf.mxu0
        %v3652 = vadd.f32 %v1885, %v3651
        %3653 = vmatmul.f32.gmra.mxu0 %v307
        %v3654 = vpop.f32.mrf.mxu0
        %v3655 = vadd.f32 %v1890, %v3654
        %3656 = vmatmul.f32.gmra.mxu0 %v310
        %v3657 = vpop.f32.mrf.mxu0
        %v3658 = vadd.f32 %v1895, %v3657
        %3659 = vdwg.mxu0
        %3660 = vmatpush.msra.mxu0 %v1319
        %3661 = vmatpush.msra.mxu0 %v1287
        %3662 = vmatpush.msra.mxu0 %v1255
        %3663 = vmatpush.msra.mxu0 %v1223
        %3664 = vmatpush.msra.mxu0 %v1191
        %3665 = vmatpush.msra.mxu0 %v1159
        %3666 = vmatpush.msra.mxu0 %v1127
        %3667 = vmatpush.msra.mxu0 %v1095
        %3668 = vmatpush.msra.mxu0 %v1063
        %3669 = vmatpush.msra.mxu0 %v1031
        %3670 = vmatpush.msra.mxu0 %v999
        %3671 = vmatpush.msra.mxu0 %v967
        %3672 = vmatpush.msra.mxu0 %v935
        %3673 = vmatpush.msra.mxu0 %v903
        %3674 = vmatpush.msra.mxu0 %v871
        %3675 = vmatpush.msra.mxu0 %v839
        %3676 = vmatmul.f32.gmra.mxu0 %v290
        %v3677 = vpop.f32.mrf.mxu0
        %v3678 = vadd.f32 %v3637, %v3677
        %3679 = vmatmul.f32.gmra.mxu0 %v293
        %v3680 = vpop.f32.mrf.mxu0
        %v3681 = vadd.f32 %v3640, %v3680
        %3682 = vmatmul.f32.gmra.mxu0 %v296
        %v3683 = vpop.f32.mrf.mxu0
        %v3684 = vadd.f32 %v3643, %v3683
        %3685 = vmatmul.f32.gmra.mxu0 %v299
        %v3686 = vpop.f32.mrf.mxu0
        %v3687 = vadd.f32 %v3646, %v3686
        %3688 = vmatmul.f32.gmra.mxu0 %v302
        %v3689 = vpop.f32.mrf.mxu0
        %v3690 = vadd.f32 %v3649, %v3689
        %3691 = vmatmul.f32.gmra.mxu0 %v305
        %v3692 = vpop.f32.mrf.mxu0
        %v3693 = vadd.f32 %v3652, %v3692
        %3694 = vmatmul.f32.gmra.mxu0 %v308
        %v3695 = vpop.f32.mrf.mxu0
        %v3696 = vadd.f32 %v3655, %v3695
        %3697 = vmatmul.f32.gmra.mxu0 %v311
        %v3698 = vpop.f32.mrf.mxu0
        %v3699 = vadd.f32 %v3658, %v3698
        %3700 = vdwg.mxu0
        %3701 = vmatpush.msra.mxu0 %v1831
        %3702 = vmatpush.msra.mxu0 %v1799
        %3703 = vmatpush.msra.mxu0 %v1767
        %3704 = vmatpush.msra.mxu0 %v1735
        %3705 = vmatpush.msra.mxu0 %v1703
        %3706 = vmatpush.msra.mxu0 %v1671
        %3707 = vmatpush.msra.mxu0 %v1639
        %3708 = vmatpush.msra.mxu0 %v1607
        %3709 = vmatpush.msra.mxu0 %v1575
        %3710 = vmatpush.msra.mxu0 %v1543
        %3711 = vmatpush.msra.mxu0 %v1511
        %3712 = vmatpush.msra.mxu0 %v1479
        %3713 = vmatpush.msra.mxu0 %v1447
        %3714 = vmatpush.msra.mxu0 %v1415
        %3715 = vmatpush.msra.mxu0 %v1383
        %3716 = vmatpush.msra.mxu0 %v1351
        %3717 = vmatmul.f32.gmra.mxu0 %v291
        %v3718 = vpop.f32.mrf.mxu0
        %v3719 = vadd.f32 %v3678, %v3718
        %3720 = vmatmul.f32.gmra.mxu0 %v294
        %v3721 = vpop.f32.mrf.mxu0
        %v3722 = vadd.f32 %v3681, %v3721
        %3723 = vmatmul.f32.gmra.mxu0 %v297
        %v3724 = vpop.f32.mrf.mxu0
        %v3725 = vadd.f32 %v3684, %v3724
        %3726 = vmatmul.f32.gmra.mxu0 %v300
        %v3727 = vpop.f32.mrf.mxu0
        %v3728 = vadd.f32 %v3687, %v3727
        %3729 = vmatmul.f32.gmra.mxu0 %v303
        %v3730 = vpop.f32.mrf.mxu0
        %v3731 = vadd.f32 %v3690, %v3730
        %3732 = vmatmul.f32.gmra.mxu0 %v306
        %v3733 = vpop.f32.mrf.mxu0
        %v3734 = vadd.f32 %v3693, %v3733
        %3735 = vmatmul.f32.gmra.mxu0 %v309
        %v3736 = vpop.f32.mrf.mxu0
        %v3737 = vadd.f32 %v3696, %v3736
        %3738 = vmatmul.f32.gmra.mxu0 %v312
        %v3739 = vpop.f32.mrf.mxu0
        %v3740 = vadd.f32 %v3699, %v3739
        %3741 = vdwg.mxu0
        %3742 = vmatpush.msra.mxu0 %v808
        %3743 = vmatpush.msra.mxu0 %v776
        %3744 = vmatpush.msra.mxu0 %v744
        %3745 = vmatpush.msra.mxu0 %v712
        %3746 = vmatpush.msra.mxu0 %v680
        %3747 = vmatpush.msra.mxu0 %v648
        %3748 = vmatpush.msra.mxu0 %v616
        %3749 = vmatpush.msra.mxu0 %v584
        %3750 = vmatpush.msra.mxu0 %v552
        %3751 = vmatpush.msra.mxu0 %v520
        %3752 = vmatpush.msra.mxu0 %v488
        %3753 = vmatpush.msra.mxu0 %v456
        %3754 = vmatpush.msra.mxu0 %v424
        %3755 = vmatpush.msra.mxu0 %v392
        %3756 = vmatpush.msra.mxu0 %v360
        %3757 = vmatpush.msra.mxu0 %v328
        %3758 = vmatmul.f32.gmra.mxu0 %v289
        %v3759 = vpop.f32.mrf.mxu0
        %v3760 = vadd.f32 %v1860, %v3759
        %3761 = vmatmul.f32.gmra.mxu0 %v292
        %v3762 = vpop.f32.mrf.mxu0
        %v3763 = vadd.f32 %v1865, %v3762
        %3764 = vmatmul.f32.gmra.mxu0 %v295
        %v3765 = vpop.f32.mrf.mxu0
        %v3766 = vadd.f32 %v1870, %v3765
        %3767 = vmatmul.f32.gmra.mxu0 %v298
        %v3768 = vpop.f32.mrf.mxu0
        %v3769 = vadd.f32 %v1875, %v3768
        %3770 = vmatmul.f32.gmra.mxu0 %v301
        %v3771 = vpop.f32.mrf.mxu0
        %v3772 = vadd.f32 %v1880, %v3771
        %3773 = vmatmul.f32.gmra.mxu0 %v304
        %v3774 = vpop.f32.mrf.mxu0
        %v3775 = vadd.f32 %v1885, %v3774
        %3776 = vmatmul.f32.gmra.mxu0 %v307
        %v3777 = vpop.f32.mrf.mxu0
        %v3778 = vadd.f32 %v1890, %v3777
        %3779 = vmatmul.f32.gmra.mxu0 %v310
        %v3780 = vpop.f32.mrf.mxu0
        %v3781 = vadd.f32 %v1895, %v3780
        %3782 = vdwg.mxu0
        %3783 = vmatpush.msra.mxu0 %v1320
        %3784 = vmatpush.msra.mxu0 %v1288
        %3785 = vmatpush.msra.mxu0 %v1256
        %3786 = vmatpush.msra.mxu0 %v1224
        %3787 = vmatpush.msra.mxu0 %v1192
        %3788 = vmatpush.msra.mxu0 %v1160
        %3789 = vmatpush.msra.mxu0 %v1128
        %3790 = vmatpush.msra.mxu0 %v1096
        %3791 = vmatpush.msra.mxu0 %v1064
        %3792 = vmatpush.msra.mxu0 %v1032
        %3793 = vmatpush.msra.mxu0 %v1000
        %3794 = vmatpush.msra.mxu0 %v968
        %3795 = vmatpush.msra.mxu0 %v936
        %3796 = vmatpush.msra.mxu0 %v904
        %3797 = vmatpush.msra.mxu0 %v872
        %3798 = vmatpush.msra.mxu0 %v840
        %3799 = vmatmul.f32.gmra.mxu0 %v290
        %v3800 = vpop.f32.mrf.mxu0
        %v3801 = vadd.f32 %v3760, %v3800
        %3802 = vmatmul.f32.gmra.mxu0 %v293
        %v3803 = vpop.f32.mrf.mxu0
        %v3804 = vadd.f32 %v3763, %v3803
        %3805 = vmatmul.f32.gmra.mxu0 %v296
        %v3806 = vpop.f32.mrf.mxu0
        %v3807 = vadd.f32 %v3766, %v3806
        %3808 = vmatmul.f32.gmra.mxu0 %v299
        %v3809 = vpop.f32.mrf.mxu0
        %v3810 = vadd.f32 %v3769, %v3809
        %3811 = vmatmul.f32.gmra.mxu0 %v302
        %v3812 = vpop.f32.mrf.mxu0
        %v3813 = vadd.f32 %v3772, %v3812
        %3814 = vmatmul.f32.gmra.mxu0 %v305
        %v3815 = vpop.f32.mrf.mxu0
        %v3816 = vadd.f32 %v3775, %v3815
        %3817 = vmatmul.f32.gmra.mxu0 %v308
        %v3818 = vpop.f32.mrf.mxu0
        %v3819 = vadd.f32 %v3778, %v3818
        %3820 = vmatmul.f32.gmra.mxu0 %v311
        %v3821 = vpop.f32.mrf.mxu0
        %v3822 = vadd.f32 %v3781, %v3821
        %3823 = vdwg.mxu0
        %3824 = vmatpush.msra.mxu0 %v1832
        %3825 = vmatpush.msra.mxu0 %v1800
        %3826 = vmatpush.msra.mxu0 %v1768
        %3827 = vmatpush.msra.mxu0 %v1736
        %3828 = vmatpush.msra.mxu0 %v1704
        %3829 = vmatpush.msra.mxu0 %v1672
        %3830 = vmatpush.msra.mxu0 %v1640
        %3831 = vmatpush.msra.mxu0 %v1608
        %3832 = vmatpush.msra.mxu0 %v1576
        %3833 = vmatpush.msra.mxu0 %v1544
        %3834 = vmatpush.msra.mxu0 %v1512
        %3835 = vmatpush.msra.mxu0 %v1480
        %3836 = vmatpush.msra.mxu0 %v1448
        %3837 = vmatpush.msra.mxu0 %v1416
        %3838 = vmatpush.msra.mxu0 %v1384
        %3839 = vmatpush.msra.mxu0 %v1352
        %3840 = vmatmul.f32.gmra.mxu0 %v291
        %v3841 = vpop.f32.mrf.mxu0
        %v3842 = vadd.f32 %v3801, %v3841
        %3843 = vmatmul.f32.gmra.mxu0 %v294
        %v3844 = vpop.f32.mrf.mxu0
        %v3845 = vadd.f32 %v3804, %v3844
        %3846 = vmatmul.f32.gmra.mxu0 %v297
        %v3847 = vpop.f32.mrf.mxu0
        %v3848 = vadd.f32 %v3807, %v3847
        %3849 = vmatmul.f32.gmra.mxu0 %v300
        %v3850 = vpop.f32.mrf.mxu0
        %v3851 = vadd.f32 %v3810, %v3850
        %3852 = vmatmul.f32.gmra.mxu0 %v303
        %v3853 = vpop.f32.mrf.mxu0
        %v3854 = vadd.f32 %v3813, %v3853
        %3855 = vmatmul.f32.gmra.mxu0 %v306
        %v3856 = vpop.f32.mrf.mxu0
        %v3857 = vadd.f32 %v3816, %v3856
        %3858 = vmatmul.f32.gmra.mxu0 %v309
        %v3859 = vpop.f32.mrf.mxu0
        %v3860 = vadd.f32 %v3819, %v3859
        %3861 = vmatmul.f32.gmra.mxu0 %v312
        %v3862 = vpop.f32.mrf.mxu0
        %v3863 = vadd.f32 %v3822, %v3862
        %3864 = vdwg.mxu0
        %3865 = vmatpush.msra.mxu0 %v809
        %3866 = vmatpush.msra.mxu0 %v777
        %3867 = vmatpush.msra.mxu0 %v745
        %3868 = vmatpush.msra.mxu0 %v713
        %3869 = vmatpush.msra.mxu0 %v681
        %3870 = vmatpush.msra.mxu0 %v649
        %3871 = vmatpush.msra.mxu0 %v617
        %3872 = vmatpush.msra.mxu0 %v585
        %3873 = vmatpush.msra.mxu0 %v553
        %3874 = vmatpush.msra.mxu0 %v521
        %3875 = vmatpush.msra.mxu0 %v489
        %3876 = vmatpush.msra.mxu0 %v457
        %3877 = vmatpush.msra.mxu0 %v425
        %3878 = vmatpush.msra.mxu0 %v393
        %3879 = vmatpush.msra.mxu0 %v361
        %3880 = vmatpush.msra.mxu0 %v329
        %3881 = vmatmul.f32.gmra.mxu0 %v289
        %v3882 = vpop.f32.mrf.mxu0
        %v3883 = vadd.f32 %v1860, %v3882
        %3884 = vmatmul.f32.gmra.mxu0 %v292
        %v3885 = vpop.f32.mrf.mxu0
        %v3886 = vadd.f32 %v1865, %v3885
        %3887 = vmatmul.f32.gmra.mxu0 %v295
        %v3888 = vpop.f32.mrf.mxu0
        %v3889 = vadd.f32 %v1870, %v3888
        %3890 = vmatmul.f32.gmra.mxu0 %v298
        %v3891 = vpop.f32.mrf.mxu0
        %v3892 = vadd.f32 %v1875, %v3891
        %3893 = vmatmul.f32.gmra.mxu0 %v301
        %v3894 = vpop.f32.mrf.mxu0
        %v3895 = vadd.f32 %v1880, %v3894
        %3896 = vmatmul.f32.gmra.mxu0 %v304
        %v3897 = vpop.f32.mrf.mxu0
        %v3898 = vadd.f32 %v1885, %v3897
        %3899 = vmatmul.f32.gmra.mxu0 %v307
        %v3900 = vpop.f32.mrf.mxu0
        %v3901 = vadd.f32 %v1890, %v3900
        %3902 = vmatmul.f32.gmra.mxu0 %v310
        %v3903 = vpop.f32.mrf.mxu0
        %v3904 = vadd.f32 %v1895, %v3903
        %3905 = vdwg.mxu0
        %3906 = vmatpush.msra.mxu0 %v1321
        %3907 = vmatpush.msra.mxu0 %v1289
        %3908 = vmatpush.msra.mxu0 %v1257
        %3909 = vmatpush.msra.mxu0 %v1225
        %3910 = vmatpush.msra.mxu0 %v1193
        %3911 = vmatpush.msra.mxu0 %v1161
        %3912 = vmatpush.msra.mxu0 %v1129
        %3913 = vmatpush.msra.mxu0 %v1097
        %3914 = vmatpush.msra.mxu0 %v1065
        %3915 = vmatpush.msra.mxu0 %v1033
        %3916 = vmatpush.msra.mxu0 %v1001
        %3917 = vmatpush.msra.mxu0 %v969
        %3918 = vmatpush.msra.mxu0 %v937
        %3919 = vmatpush.msra.mxu0 %v905
        %3920 = vmatpush.msra.mxu0 %v873
        %3921 = vmatpush.msra.mxu0 %v841
        %3922 = vmatmul.f32.gmra.mxu0 %v290
        %v3923 = vpop.f32.mrf.mxu0
        %v3924 = vadd.f32 %v3883, %v3923
        %3925 = vmatmul.f32.gmra.mxu0 %v293
        %v3926 = vpop.f32.mrf.mxu0
        %v3927 = vadd.f32 %v3886, %v3926
        %3928 = vmatmul.f32.gmra.mxu0 %v296
        %v3929 = vpop.f32.mrf.mxu0
        %v3930 = vadd.f32 %v3889, %v3929
        %3931 = vmatmul.f32.gmra.mxu0 %v299
        %v3932 = vpop.f32.mrf.mxu0
        %v3933 = vadd.f32 %v3892, %v3932
        %3934 = vmatmul.f32.gmra.mxu0 %v302
        %v3935 = vpop.f32.mrf.mxu0
        %v3936 = vadd.f32 %v3895, %v3935
        %3937 = vmatmul.f32.gmra.mxu0 %v305
        %v3938 = vpop.f32.mrf.mxu0
        %v3939 = vadd.f32 %v3898, %v3938
        %3940 = vmatmul.f32.gmra.mxu0 %v308
        %v3941 = vpop.f32.mrf.mxu0
        %v3942 = vadd.f32 %v3901, %v3941
        %3943 = vmatmul.f32.gmra.mxu0 %v311
        %v3944 = vpop.f32.mrf.mxu0
        %v3945 = vadd.f32 %v3904, %v3944
        %3946 = vdwg.mxu0
        %3947 = vmatpush.msra.mxu0 %v1833
        %3948 = vmatpush.msra.mxu0 %v1801
        %3949 = vmatpush.msra.mxu0 %v1769
        %3950 = vmatpush.msra.mxu0 %v1737
        %3951 = vmatpush.msra.mxu0 %v1705
        %3952 = vmatpush.msra.mxu0 %v1673
        %3953 = vmatpush.msra.mxu0 %v1641
        %3954 = vmatpush.msra.mxu0 %v1609
        %3955 = vmatpush.msra.mxu0 %v1577
        %3956 = vmatpush.msra.mxu0 %v1545
        %3957 = vmatpush.msra.mxu0 %v1513
        %3958 = vmatpush.msra.mxu0 %v1481
        %3959 = vmatpush.msra.mxu0 %v1449
        %3960 = vmatpush.msra.mxu0 %v1417
        %3961 = vmatpush.msra.mxu0 %v1385
        %3962 = vmatpush.msra.mxu0 %v1353
        %3963 = vmatmul.f32.gmra.mxu0 %v291
        %v3964 = vpop.f32.mrf.mxu0
        %v3965 = vadd.f32 %v3924, %v3964
        %3966 = vmatmul.f32.gmra.mxu0 %v294
        %v3967 = vpop.f32.mrf.mxu0
        %v3968 = vadd.f32 %v3927, %v3967
        %3969 = vmatmul.f32.gmra.mxu0 %v297
        %v3970 = vpop.f32.mrf.mxu0
        %v3971 = vadd.f32 %v3930, %v3970
        %3972 = vmatmul.f32.gmra.mxu0 %v300
        %v3973 = vpop.f32.mrf.mxu0
        %v3974 = vadd.f32 %v3933, %v3973
        %3975 = vmatmul.f32.gmra.mxu0 %v303
        %v3976 = vpop.f32.mrf.mxu0
        %v3977 = vadd.f32 %v3936, %v3976
        %3978 = vmatmul.f32.gmra.mxu0 %v306
        %v3979 = vpop.f32.mrf.mxu0
        %v3980 = vadd.f32 %v3939, %v3979
        %3981 = vmatmul.f32.gmra.mxu0 %v309
        %v3982 = vpop.f32.mrf.mxu0
        %v3983 = vadd.f32 %v3942, %v3982
        %3984 = vmatmul.f32.gmra.mxu0 %v312
        %v3985 = vpop.f32.mrf.mxu0
        %v3986 = vadd.f32 %v3945, %v3985
        %3987 = vdwg.mxu0
        %3988 = vmatpush.msra.mxu0 %v810
        %3989 = vmatpush.msra.mxu0 %v778
        %3990 = vmatpush.msra.mxu0 %v746
        %3991 = vmatpush.msra.mxu0 %v714
        %3992 = vmatpush.msra.mxu0 %v682
        %3993 = vmatpush.msra.mxu0 %v650
        %3994 = vmatpush.msra.mxu0 %v618
        %3995 = vmatpush.msra.mxu0 %v586
        %3996 = vmatpush.msra.mxu0 %v554
        %3997 = vmatpush.msra.mxu0 %v522
        %3998 = vmatpush.msra.mxu0 %v490
        %3999 = vmatpush.msra.mxu0 %v458
        %4000 = vmatpush.msra.mxu0 %v426
        %4001 = vmatpush.msra.mxu0 %v394
        %4002 = vmatpush.msra.mxu0 %v362
        %4003 = vmatpush.msra.mxu0 %v330
        %4004 = vmatmul.f32.gmra.mxu0 %v289
        %v4005 = vpop.f32.mrf.mxu0
        %v4006 = vadd.f32 %v1860, %v4005
        %4007 = vmatmul.f32.gmra.mxu0 %v292
        %v4008 = vpop.f32.mrf.mxu0
        %v4009 = vadd.f32 %v1865, %v4008
        %4010 = vmatmul.f32.gmra.mxu0 %v295
        %v4011 = vpop.f32.mrf.mxu0
        %v4012 = vadd.f32 %v1870, %v4011
        %4013 = vmatmul.f32.gmra.mxu0 %v298
        %v4014 = vpop.f32.mrf.mxu0
        %v4015 = vadd.f32 %v1875, %v4014
        %4016 = vmatmul.f32.gmra.mxu0 %v301
        %v4017 = vpop.f32.mrf.mxu0
        %v4018 = vadd.f32 %v1880, %v4017
        %4019 = vmatmul.f32.gmra.mxu0 %v304
        %v4020 = vpop.f32.mrf.mxu0
        %v4021 = vadd.f32 %v1885, %v4020
        %4022 = vmatmul.f32.gmra.mxu0 %v307
        %v4023 = vpop.f32.mrf.mxu0
        %v4024 = vadd.f32 %v1890, %v4023
        %4025 = vmatmul.f32.gmra.mxu0 %v310
        %v4026 = vpop.f32.mrf.mxu0
        %v4027 = vadd.f32 %v1895, %v4026
        %4028 = vdwg.mxu0
        %4029 = vmatpush.msra.mxu0 %v1322
        %4030 = vmatpush.msra.mxu0 %v1290
        %4031 = vmatpush.msra.mxu0 %v1258
        %4032 = vmatpush.msra.mxu0 %v1226
        %4033 = vmatpush.msra.mxu0 %v1194
        %4034 = vmatpush.msra.mxu0 %v1162
        %4035 = vmatpush.msra.mxu0 %v1130
        %4036 = vmatpush.msra.mxu0 %v1098
        %4037 = vmatpush.msra.mxu0 %v1066
        %4038 = vmatpush.msra.mxu0 %v1034
        %4039 = vmatpush.msra.mxu0 %v1002
        %4040 = vmatpush.msra.mxu0 %v970
        %4041 = vmatpush.msra.mxu0 %v938
        %4042 = vmatpush.msra.mxu0 %v906
        %4043 = vmatpush.msra.mxu0 %v874
        %4044 = vmatpush.msra.mxu0 %v842
        %4045 = vmatmul.f32.gmra.mxu0 %v290
        %v4046 = vpop.f32.mrf.mxu0
        %v4047 = vadd.f32 %v4006, %v4046
        %4048 = vmatmul.f32.gmra.mxu0 %v293
        %v4049 = vpop.f32.mrf.mxu0
        %v4050 = vadd.f32 %v4009, %v4049
        %4051 = vmatmul.f32.gmra.mxu0 %v296
        %v4052 = vpop.f32.mrf.mxu0
        %v4053 = vadd.f32 %v4012, %v4052
        %4054 = vmatmul.f32.gmra.mxu0 %v299
        %v4055 = vpop.f32.mrf.mxu0
        %v4056 = vadd.f32 %v4015, %v4055
        %4057 = vmatmul.f32.gmra.mxu0 %v302
        %v4058 = vpop.f32.mrf.mxu0
        %v4059 = vadd.f32 %v4018, %v4058
        %4060 = vmatmul.f32.gmra.mxu0 %v305
        %v4061 = vpop.f32.mrf.mxu0
        %v4062 = vadd.f32 %v4021, %v4061
        %4063 = vmatmul.f32.gmra.mxu0 %v308
        %v4064 = vpop.f32.mrf.mxu0
        %v4065 = vadd.f32 %v4024, %v4064
        %4066 = vmatmul.f32.gmra.mxu0 %v311
        %v4067 = vpop.f32.mrf.mxu0
        %v4068 = vadd.f32 %v4027, %v4067
        %4069 = vdwg.mxu0
        %4070 = vmatpush.msra.mxu0 %v1834
        %4071 = vmatpush.msra.mxu0 %v1802
        %4072 = vmatpush.msra.mxu0 %v1770
        %4073 = vmatpush.msra.mxu0 %v1738
        %4074 = vmatpush.msra.mxu0 %v1706
        %4075 = vmatpush.msra.mxu0 %v1674
        %4076 = vmatpush.msra.mxu0 %v1642
        %4077 = vmatpush.msra.mxu0 %v1610
        %4078 = vmatpush.msra.mxu0 %v1578
        %4079 = vmatpush.msra.mxu0 %v1546
        %4080 = vmatpush.msra.mxu0 %v1514
        %4081 = vmatpush.msra.mxu0 %v1482
        %4082 = vmatpush.msra.mxu0 %v1450
        %4083 = vmatpush.msra.mxu0 %v1418
        %4084 = vmatpush.msra.mxu0 %v1386
        %4085 = vmatpush.msra.mxu0 %v1354
        %4086 = vmatmul.f32.gmra.mxu0 %v291
        %v4087 = vpop.f32.mrf.mxu0
        %v4088 = vadd.f32 %v4047, %v4087
        %4089 = vmatmul.f32.gmra.mxu0 %v294
        %v4090 = vpop.f32.mrf.mxu0
        %v4091 = vadd.f32 %v4050, %v4090
        %4092 = vmatmul.f32.gmra.mxu0 %v297
        %v4093 = vpop.f32.mrf.mxu0
        %v4094 = vadd.f32 %v4053, %v4093
        %4095 = vmatmul.f32.gmra.mxu0 %v300
        %v4096 = vpop.f32.mrf.mxu0
        %v4097 = vadd.f32 %v4056, %v4096
        %4098 = vmatmul.f32.gmra.mxu0 %v303
        %v4099 = vpop.f32.mrf.mxu0
        %v4100 = vadd.f32 %v4059, %v4099
        %4101 = vmatmul.f32.gmra.mxu0 %v306
        %v4102 = vpop.f32.mrf.mxu0
        %v4103 = vadd.f32 %v4062, %v4102
        %4104 = vmatmul.f32.gmra.mxu0 %v309
        %v4105 = vpop.f32.mrf.mxu0
        %v4106 = vadd.f32 %v4065, %v4105
        %4107 = vmatmul.f32.gmra.mxu0 %v312
        %v4108 = vpop.f32.mrf.mxu0
        %v4109 = vadd.f32 %v4068, %v4108
        %4110 = vdwg.mxu0
        %4111 = vmatpush.msra.mxu0 %v811
        %4112 = vmatpush.msra.mxu0 %v779
        %4113 = vmatpush.msra.mxu0 %v747
        %4114 = vmatpush.msra.mxu0 %v715
        %4115 = vmatpush.msra.mxu0 %v683
        %4116 = vmatpush.msra.mxu0 %v651
        %4117 = vmatpush.msra.mxu0 %v619
        %4118 = vmatpush.msra.mxu0 %v587
        %4119 = vmatpush.msra.mxu0 %v555
        %4120 = vmatpush.msra.mxu0 %v523
        %4121 = vmatpush.msra.mxu0 %v491
        %4122 = vmatpush.msra.mxu0 %v459
        %4123 = vmatpush.msra.mxu0 %v427
        %4124 = vmatpush.msra.mxu0 %v395
        %4125 = vmatpush.msra.mxu0 %v363
        %4126 = vmatpush.msra.mxu0 %v331
        %4127 = vmatmul.f32.gmra.mxu0 %v289
        %v4128 = vpop.f32.mrf.mxu0
        %v4129 = vadd.f32 %v1860, %v4128
        %4130 = vmatmul.f32.gmra.mxu0 %v292
        %v4131 = vpop.f32.mrf.mxu0
        %v4132 = vadd.f32 %v1865, %v4131
        %4133 = vmatmul.f32.gmra.mxu0 %v295
        %v4134 = vpop.f32.mrf.mxu0
        %v4135 = vadd.f32 %v1870, %v4134
        %4136 = vmatmul.f32.gmra.mxu0 %v298
        %v4137 = vpop.f32.mrf.mxu0
        %v4138 = vadd.f32 %v1875, %v4137
        %4139 = vmatmul.f32.gmra.mxu0 %v301
        %v4140 = vpop.f32.mrf.mxu0
        %v4141 = vadd.f32 %v1880, %v4140
        %4142 = vmatmul.f32.gmra.mxu0 %v304
        %v4143 = vpop.f32.mrf.mxu0
        %v4144 = vadd.f32 %v1885, %v4143
        %4145 = vmatmul.f32.gmra.mxu0 %v307
        %v4146 = vpop.f32.mrf.mxu0
        %v4147 = vadd.f32 %v1890, %v4146
        %4148 = vmatmul.f32.gmra.mxu0 %v310
        %v4149 = vpop.f32.mrf.mxu0
        %v4150 = vadd.f32 %v1895, %v4149
        %4151 = vdwg.mxu0
        %4152 = vmatpush.msra.mxu0 %v1323
        %4153 = vmatpush.msra.mxu0 %v1291
        %4154 = vmatpush.msra.mxu0 %v1259
        %4155 = vmatpush.msra.mxu0 %v1227
        %4156 = vmatpush.msra.mxu0 %v1195
        %4157 = vmatpush.msra.mxu0 %v1163
        %4158 = vmatpush.msra.mxu0 %v1131
        %4159 = vmatpush.msra.mxu0 %v1099
        %4160 = vmatpush.msra.mxu0 %v1067
        %4161 = vmatpush.msra.mxu0 %v1035
        %4162 = vmatpush.msra.mxu0 %v1003
        %4163 = vmatpush.msra.mxu0 %v971
        %4164 = vmatpush.msra.mxu0 %v939
        %4165 = vmatpush.msra.mxu0 %v907
        %4166 = vmatpush.msra.mxu0 %v875
        %4167 = vmatpush.msra.mxu0 %v843
        %4168 = vmatmul.f32.gmra.mxu0 %v290
        %v4169 = vpop.f32.mrf.mxu0
        %v4170 = vadd.f32 %v4129, %v4169
        %4171 = vmatmul.f32.gmra.mxu0 %v293
        %v4172 = vpop.f32.mrf.mxu0
        %v4173 = vadd.f32 %v4132, %v4172
        %4174 = vmatmul.f32.gmra.mxu0 %v296
        %v4175 = vpop.f32.mrf.mxu0
        %v4176 = vadd.f32 %v4135, %v4175
        %4177 = vmatmul.f32.gmra.mxu0 %v299
        %v4178 = vpop.f32.mrf.mxu0
        %v4179 = vadd.f32 %v4138, %v4178
        %4180 = vmatmul.f32.gmra.mxu0 %v302
        %v4181 = vpop.f32.mrf.mxu0
        %v4182 = vadd.f32 %v4141, %v4181
        %4183 = vmatmul.f32.gmra.mxu0 %v305
        %v4184 = vpop.f32.mrf.mxu0
        %v4185 = vadd.f32 %v4144, %v4184
        %4186 = vmatmul.f32.gmra.mxu0 %v308
        %v4187 = vpop.f32.mrf.mxu0
        %v4188 = vadd.f32 %v4147, %v4187
        %4189 = vmatmul.f32.gmra.mxu0 %v311
        %v4190 = vpop.f32.mrf.mxu0
        %v4191 = vadd.f32 %v4150, %v4190
        %4192 = vdwg.mxu0
        %4193 = vmatpush.msra.mxu0 %v1835
        %4194 = vmatpush.msra.mxu0 %v1803
        %4195 = vmatpush.msra.mxu0 %v1771
        %4196 = vmatpush.msra.mxu0 %v1739
        %4197 = vmatpush.msra.mxu0 %v1707
        %4198 = vmatpush.msra.mxu0 %v1675
        %4199 = vmatpush.msra.mxu0 %v1643
        %4200 = vmatpush.msra.mxu0 %v1611
        %4201 = vmatpush.msra.mxu0 %v1579
        %4202 = vmatpush.msra.mxu0 %v1547
        %4203 = vmatpush.msra.mxu0 %v1515
        %4204 = vmatpush.msra.mxu0 %v1483
        %4205 = vmatpush.msra.mxu0 %v1451
        %4206 = vmatpush.msra.mxu0 %v1419
        %4207 = vmatpush.msra.mxu0 %v1387
        %4208 = vmatpush.msra.mxu0 %v1355
        %4209 = vmatmul.f32.gmra.mxu0 %v291
        %v4210 = vpop.f32.mrf.mxu0
        %v4211 = vadd.f32 %v4170, %v4210
        %4212 = vmatmul.f32.gmra.mxu0 %v294
        %v4213 = vpop.f32.mrf.mxu0
        %v4214 = vadd.f32 %v4173, %v4213
        %4215 = vmatmul.f32.gmra.mxu0 %v297
        %v4216 = vpop.f32.mrf.mxu0
        %v4217 = vadd.f32 %v4176, %v4216
        %4218 = vmatmul.f32.gmra.mxu0 %v300
        %v4219 = vpop.f32.mrf.mxu0
        %v4220 = vadd.f32 %v4179, %v4219
        %4221 = vmatmul.f32.gmra.mxu0 %v303
        %v4222 = vpop.f32.mrf.mxu0
        %v4223 = vadd.f32 %v4182, %v4222
        %4224 = vmatmul.f32.gmra.mxu0 %v306
        %v4225 = vpop.f32.mrf.mxu0
        %v4226 = vadd.f32 %v4185, %v4225
        %4227 = vmatmul.f32.gmra.mxu0 %v309
        %v4228 = vpop.f32.mrf.mxu0
        %v4229 = vadd.f32 %v4188, %v4228
        %4230 = vmatmul.f32.gmra.mxu0 %v312
        %v4231 = vpop.f32.mrf.mxu0
        %v4232 = vadd.f32 %v4191, %v4231
        %4233 = vdwg.mxu0
        %4234 = vmatpush.msra.mxu0 %v812
        %4235 = vmatpush.msra.mxu0 %v780
        %4236 = vmatpush.msra.mxu0 %v748
        %4237 = vmatpush.msra.mxu0 %v716
        %4238 = vmatpush.msra.mxu0 %v684
        %4239 = vmatpush.msra.mxu0 %v652
        %4240 = vmatpush.msra.mxu0 %v620
        %4241 = vmatpush.msra.mxu0 %v588
        %4242 = vmatpush.msra.mxu0 %v556
        %4243 = vmatpush.msra.mxu0 %v524
        %4244 = vmatpush.msra.mxu0 %v492
        %4245 = vmatpush.msra.mxu0 %v460
        %4246 = vmatpush.msra.mxu0 %v428
        %4247 = vmatpush.msra.mxu0 %v396
        %4248 = vmatpush.msra.mxu0 %v364
        %4249 = vmatpush.msra.mxu0 %v332
        %4250 = vmatmul.f32.gmra.mxu0 %v289
        %v4251 = vpop.f32.mrf.mxu0
        %v4252 = vadd.f32 %v1860, %v4251
        %4253 = vmatmul.f32.gmra.mxu0 %v292
        %v4254 = vpop.f32.mrf.mxu0
        %v4255 = vadd.f32 %v1865, %v4254
        %4256 = vmatmul.f32.gmra.mxu0 %v295
        %v4257 = vpop.f32.mrf.mxu0
        %v4258 = vadd.f32 %v1870, %v4257
        %4259 = vmatmul.f32.gmra.mxu0 %v298
        %v4260 = vpop.f32.mrf.mxu0
        %v4261 = vadd.f32 %v1875, %v4260
        %4262 = vmatmul.f32.gmra.mxu0 %v301
        %v4263 = vpop.f32.mrf.mxu0
        %v4264 = vadd.f32 %v1880, %v4263
        %4265 = vmatmul.f32.gmra.mxu0 %v304
        %v4266 = vpop.f32.mrf.mxu0
        %v4267 = vadd.f32 %v1885, %v4266
        %4268 = vmatmul.f32.gmra.mxu0 %v307
        %v4269 = vpop.f32.mrf.mxu0
        %v4270 = vadd.f32 %v1890, %v4269
        %4271 = vmatmul.f32.gmra.mxu0 %v310
        %v4272 = vpop.f32.mrf.mxu0
        %v4273 = vadd.f32 %v1895, %v4272
        %4274 = vdwg.mxu0
        %4275 = vmatpush.msra.mxu0 %v1324
        %4276 = vmatpush.msra.mxu0 %v1292
        %4277 = vmatpush.msra.mxu0 %v1260
        %4278 = vmatpush.msra.mxu0 %v1228
        %4279 = vmatpush.msra.mxu0 %v1196
        %4280 = vmatpush.msra.mxu0 %v1164
        %4281 = vmatpush.msra.mxu0 %v1132
        %4282 = vmatpush.msra.mxu0 %v1100
        %4283 = vmatpush.msra.mxu0 %v1068
        %4284 = vmatpush.msra.mxu0 %v1036
        %4285 = vmatpush.msra.mxu0 %v1004
        %4286 = vmatpush.msra.mxu0 %v972
        %4287 = vmatpush.msra.mxu0 %v940
        %4288 = vmatpush.msra.mxu0 %v908
        %4289 = vmatpush.msra.mxu0 %v876
        %4290 = vmatpush.msra.mxu0 %v844
        %4291 = vmatmul.f32.gmra.mxu0 %v290
        %v4292 = vpop.f32.mrf.mxu0
        %v4293 = vadd.f32 %v4252, %v4292
        %4294 = vmatmul.f32.gmra.mxu0 %v293
        %v4295 = vpop.f32.mrf.mxu0
        %v4296 = vadd.f32 %v4255, %v4295
        %4297 = vmatmul.f32.gmra.mxu0 %v296
        %v4298 = vpop.f32.mrf.mxu0
        %v4299 = vadd.f32 %v4258, %v4298
        %4300 = vmatmul.f32.gmra.mxu0 %v299
        %v4301 = vpop.f32.mrf.mxu0
        %v4302 = vadd.f32 %v4261, %v4301
        %4303 = vmatmul.f32.gmra.mxu0 %v302
        %v4304 = vpop.f32.mrf.mxu0
        %v4305 = vadd.f32 %v4264, %v4304
        %4306 = vmatmul.f32.gmra.mxu0 %v305
        %v4307 = vpop.f32.mrf.mxu0
        %v4308 = vadd.f32 %v4267, %v4307
        %4309 = vmatmul.f32.gmra.mxu0 %v308
        %v4310 = vpop.f32.mrf.mxu0
        %v4311 = vadd.f32 %v4270, %v4310
        %4312 = vmatmul.f32.gmra.mxu0 %v311
        %v4313 = vpop.f32.mrf.mxu0
        %v4314 = vadd.f32 %v4273, %v4313
        %4315 = vdwg.mxu0
        %4316 = vmatpush.msra.mxu0 %v1836
        %4317 = vmatpush.msra.mxu0 %v1804
        %4318 = vmatpush.msra.mxu0 %v1772
        %4319 = vmatpush.msra.mxu0 %v1740
        %4320 = vmatpush.msra.mxu0 %v1708
        %4321 = vmatpush.msra.mxu0 %v1676
        %4322 = vmatpush.msra.mxu0 %v1644
        %4323 = vmatpush.msra.mxu0 %v1612
        %4324 = vmatpush.msra.mxu0 %v1580
        %4325 = vmatpush.msra.mxu0 %v1548
        %4326 = vmatpush.msra.mxu0 %v1516
        %4327 = vmatpush.msra.mxu0 %v1484
        %4328 = vmatpush.msra.mxu0 %v1452
        %4329 = vmatpush.msra.mxu0 %v1420
        %4330 = vmatpush.msra.mxu0 %v1388
        %4331 = vmatpush.msra.mxu0 %v1356
        %4332 = vmatmul.f32.gmra.mxu0 %v291
        %v4333 = vpop.f32.mrf.mxu0
        %v4334 = vadd.f32 %v4293, %v4333
        %4335 = vmatmul.f32.gmra.mxu0 %v294
        %v4336 = vpop.f32.mrf.mxu0
        %v4337 = vadd.f32 %v4296, %v4336
        %4338 = vmatmul.f32.gmra.mxu0 %v297
        %v4339 = vpop.f32.mrf.mxu0
        %v4340 = vadd.f32 %v4299, %v4339
        %4341 = vmatmul.f32.gmra.mxu0 %v300
        %v4342 = vpop.f32.mrf.mxu0
        %v4343 = vadd.f32 %v4302, %v4342
        %4344 = vmatmul.f32.gmra.mxu0 %v303
        %v4345 = vpop.f32.mrf.mxu0
        %v4346 = vadd.f32 %v4305, %v4345
        %4347 = vmatmul.f32.gmra.mxu0 %v306
        %v4348 = vpop.f32.mrf.mxu0
        %v4349 = vadd.f32 %v4308, %v4348
        %4350 = vmatmul.f32.gmra.mxu0 %v309
        %v4351 = vpop.f32.mrf.mxu0
        %v4352 = vadd.f32 %v4311, %v4351
        %4353 = vmatmul.f32.gmra.mxu0 %v312
        %v4354 = vpop.f32.mrf.mxu0
        %v4355 = vadd.f32 %v4314, %v4354
        %4356 = vdwg.mxu0
        %4357 = vmatpush.msra.mxu0 %v813
        %4358 = vmatpush.msra.mxu0 %v781
        %4359 = vmatpush.msra.mxu0 %v749
        %4360 = vmatpush.msra.mxu0 %v717
        %4361 = vmatpush.msra.mxu0 %v685
        %4362 = vmatpush.msra.mxu0 %v653
        %4363 = vmatpush.msra.mxu0 %v621
        %4364 = vmatpush.msra.mxu0 %v589
        %4365 = vmatpush.msra.mxu0 %v557
        %4366 = vmatpush.msra.mxu0 %v525
        %4367 = vmatpush.msra.mxu0 %v493
        %4368 = vmatpush.msra.mxu0 %v461
        %4369 = vmatpush.msra.mxu0 %v429
        %4370 = vmatpush.msra.mxu0 %v397
        %4371 = vmatpush.msra.mxu0 %v365
        %4372 = vmatpush.msra.mxu0 %v333
        %4373 = vmatmul.f32.gmra.mxu0 %v289
        %v4374 = vpop.f32.mrf.mxu0
        %v4375 = vadd.f32 %v1860, %v4374
        %4376 = vmatmul.f32.gmra.mxu0 %v292
        %v4377 = vpop.f32.mrf.mxu0
        %v4378 = vadd.f32 %v1865, %v4377
        %4379 = vmatmul.f32.gmra.mxu0 %v295
        %v4380 = vpop.f32.mrf.mxu0
        %v4381 = vadd.f32 %v1870, %v4380
        %4382 = vmatmul.f32.gmra.mxu0 %v298
        %v4383 = vpop.f32.mrf.mxu0
        %v4384 = vadd.f32 %v1875, %v4383
        %4385 = vmatmul.f32.gmra.mxu0 %v301
        %v4386 = vpop.f32.mrf.mxu0
        %v4387 = vadd.f32 %v1880, %v4386
        %4388 = vmatmul.f32.gmra.mxu0 %v304
        %v4389 = vpop.f32.mrf.mxu0
        %v4390 = vadd.f32 %v1885, %v4389
        %4391 = vmatmul.f32.gmra.mxu0 %v307
        %v4392 = vpop.f32.mrf.mxu0
        %v4393 = vadd.f32 %v1890, %v4392
        %4394 = vmatmul.f32.gmra.mxu0 %v310
        %v4395 = vpop.f32.mrf.mxu0
        %v4396 = vadd.f32 %v1895, %v4395
        %4397 = vdwg.mxu0
        %4398 = vmatpush.msra.mxu0 %v1325
        %4399 = vmatpush.msra.mxu0 %v1293
        %4400 = vmatpush.msra.mxu0 %v1261
        %4401 = vmatpush.msra.mxu0 %v1229
        %4402 = vmatpush.msra.mxu0 %v1197
        %4403 = vmatpush.msra.mxu0 %v1165
        %4404 = vmatpush.msra.mxu0 %v1133
        %4405 = vmatpush.msra.mxu0 %v1101
        %4406 = vmatpush.msra.mxu0 %v1069
        %4407 = vmatpush.msra.mxu0 %v1037
        %4408 = vmatpush.msra.mxu0 %v1005
        %4409 = vmatpush.msra.mxu0 %v973
        %4410 = vmatpush.msra.mxu0 %v941
        %4411 = vmatpush.msra.mxu0 %v909
        %4412 = vmatpush.msra.mxu0 %v877
        %4413 = vmatpush.msra.mxu0 %v845
        %4414 = vmatmul.f32.gmra.mxu0 %v290
        %v4415 = vpop.f32.mrf.mxu0
        %v4416 = vadd.f32 %v4375, %v4415
        %4417 = vmatmul.f32.gmra.mxu0 %v293
        %v4418 = vpop.f32.mrf.mxu0
        %v4419 = vadd.f32 %v4378, %v4418
        %4420 = vmatmul.f32.gmra.mxu0 %v296
        %v4421 = vpop.f32.mrf.mxu0
        %v4422 = vadd.f32 %v4381, %v4421
        %4423 = vmatmul.f32.gmra.mxu0 %v299
        %v4424 = vpop.f32.mrf.mxu0
        %v4425 = vadd.f32 %v4384, %v4424
        %4426 = vmatmul.f32.gmra.mxu0 %v302
        %v4427 = vpop.f32.mrf.mxu0
        %v4428 = vadd.f32 %v4387, %v4427
        %4429 = vmatmul.f32.gmra.mxu0 %v305
        %v4430 = vpop.f32.mrf.mxu0
        %v4431 = vadd.f32 %v4390, %v4430
        %4432 = vmatmul.f32.gmra.mxu0 %v308
        %v4433 = vpop.f32.mrf.mxu0
        %v4434 = vadd.f32 %v4393, %v4433
        %4435 = vmatmul.f32.gmra.mxu0 %v311
        %v4436 = vpop.f32.mrf.mxu0
        %v4437 = vadd.f32 %v4396, %v4436
        %4438 = vdwg.mxu0
        %4439 = vmatpush.msra.mxu0 %v1837
        %4440 = vmatpush.msra.mxu0 %v1805
        %4441 = vmatpush.msra.mxu0 %v1773
        %4442 = vmatpush.msra.mxu0 %v1741
        %4443 = vmatpush.msra.mxu0 %v1709
        %4444 = vmatpush.msra.mxu0 %v1677
        %4445 = vmatpush.msra.mxu0 %v1645
        %4446 = vmatpush.msra.mxu0 %v1613
        %4447 = vmatpush.msra.mxu0 %v1581
        %4448 = vmatpush.msra.mxu0 %v1549
        %4449 = vmatpush.msra.mxu0 %v1517
        %4450 = vmatpush.msra.mxu0 %v1485
        %4451 = vmatpush.msra.mxu0 %v1453
        %4452 = vmatpush.msra.mxu0 %v1421
        %4453 = vmatpush.msra.mxu0 %v1389
        %4454 = vmatpush.msra.mxu0 %v1357
        %4455 = vmatmul.f32.gmra.mxu0 %v291
        %v4456 = vpop.f32.mrf.mxu0
        %v4457 = vadd.f32 %v4416, %v4456
        %4458 = vmatmul.f32.gmra.mxu0 %v294
        %v4459 = vpop.f32.mrf.mxu0
        %v4460 = vadd.f32 %v4419, %v4459
        %4461 = vmatmul.f32.gmra.mxu0 %v297
        %v4462 = vpop.f32.mrf.mxu0
        %v4463 = vadd.f32 %v4422, %v4462
        %4464 = vmatmul.f32.gmra.mxu0 %v300
        %v4465 = vpop.f32.mrf.mxu0
        %v4466 = vadd.f32 %v4425, %v4465
        %4467 = vmatmul.f32.gmra.mxu0 %v303
        %v4468 = vpop.f32.mrf.mxu0
        %v4469 = vadd.f32 %v4428, %v4468
        %4470 = vmatmul.f32.gmra.mxu0 %v306
        %v4471 = vpop.f32.mrf.mxu0
        %v4472 = vadd.f32 %v4431, %v4471
        %4473 = vmatmul.f32.gmra.mxu0 %v309
        %v4474 = vpop.f32.mrf.mxu0
        %v4475 = vadd.f32 %v4434, %v4474
        %4476 = vmatmul.f32.gmra.mxu0 %v312
        %v4477 = vpop.f32.mrf.mxu0
        %v4478 = vadd.f32 %v4437, %v4477
        %4479 = vdwg.mxu0
        %4480 = vmatpush.msra.mxu0 %v814
        %4481 = vmatpush.msra.mxu0 %v782
        %4482 = vmatpush.msra.mxu0 %v750
        %4483 = vmatpush.msra.mxu0 %v718
        %4484 = vmatpush.msra.mxu0 %v686
        %4485 = vmatpush.msra.mxu0 %v654
        %4486 = vmatpush.msra.mxu0 %v622
        %4487 = vmatpush.msra.mxu0 %v590
        %4488 = vmatpush.msra.mxu0 %v558
        %4489 = vmatpush.msra.mxu0 %v526
        %4490 = vmatpush.msra.mxu0 %v494
        %4491 = vmatpush.msra.mxu0 %v462
        %4492 = vmatpush.msra.mxu0 %v430
        %4493 = vmatpush.msra.mxu0 %v398
        %4494 = vmatpush.msra.mxu0 %v366
        %4495 = vmatpush.msra.mxu0 %v334
        %4496 = vmatmul.f32.gmra.mxu0 %v289
        %v4497 = vpop.f32.mrf.mxu0
        %v4498 = vadd.f32 %v1860, %v4497
        %4499 = vmatmul.f32.gmra.mxu0 %v292
        %v4500 = vpop.f32.mrf.mxu0
        %v4501 = vadd.f32 %v1865, %v4500
        %4502 = vmatmul.f32.gmra.mxu0 %v295
        %v4503 = vpop.f32.mrf.mxu0
        %v4504 = vadd.f32 %v1870, %v4503
        %4505 = vmatmul.f32.gmra.mxu0 %v298
        %v4506 = vpop.f32.mrf.mxu0
        %v4507 = vadd.f32 %v1875, %v4506
        %4508 = vmatmul.f32.gmra.mxu0 %v301
        %v4509 = vpop.f32.mrf.mxu0
        %v4510 = vadd.f32 %v1880, %v4509
        %4511 = vmatmul.f32.gmra.mxu0 %v304
        %v4512 = vpop.f32.mrf.mxu0
        %v4513 = vadd.f32 %v1885, %v4512
        %4514 = vmatmul.f32.gmra.mxu0 %v307
        %v4515 = vpop.f32.mrf.mxu0
        %v4516 = vadd.f32 %v1890, %v4515
        %4517 = vmatmul.f32.gmra.mxu0 %v310
        %v4518 = vpop.f32.mrf.mxu0
        %v4519 = vadd.f32 %v1895, %v4518
        %4520 = vdwg.mxu0
        %4521 = vmatpush.msra.mxu0 %v1326
        %4522 = vmatpush.msra.mxu0 %v1294
        %4523 = vmatpush.msra.mxu0 %v1262
        %4524 = vmatpush.msra.mxu0 %v1230
        %4525 = vmatpush.msra.mxu0 %v1198
        %4526 = vmatpush.msra.mxu0 %v1166
        %4527 = vmatpush.msra.mxu0 %v1134
        %4528 = vmatpush.msra.mxu0 %v1102
        %4529 = vmatpush.msra.mxu0 %v1070
        %4530 = vmatpush.msra.mxu0 %v1038
        %4531 = vmatpush.msra.mxu0 %v1006
        %4532 = vmatpush.msra.mxu0 %v974
        %4533 = vmatpush.msra.mxu0 %v942
        %4534 = vmatpush.msra.mxu0 %v910
        %4535 = vmatpush.msra.mxu0 %v878
        %4536 = vmatpush.msra.mxu0 %v846
        %4537 = vmatmul.f32.gmra.mxu0 %v290
        %v4538 = vpop.f32.mrf.mxu0
        %v4539 = vadd.f32 %v4498, %v4538
        %4540 = vmatmul.f32.gmra.mxu0 %v293
        %v4541 = vpop.f32.mrf.mxu0
        %v4542 = vadd.f32 %v4501, %v4541
        %4543 = vmatmul.f32.gmra.mxu0 %v296
        %v4544 = vpop.f32.mrf.mxu0
        %v4545 = vadd.f32 %v4504, %v4544
        %4546 = vmatmul.f32.gmra.mxu0 %v299
        %v4547 = vpop.f32.mrf.mxu0
        %v4548 = vadd.f32 %v4507, %v4547
        %4549 = vmatmul.f32.gmra.mxu0 %v302
        %v4550 = vpop.f32.mrf.mxu0
        %v4551 = vadd.f32 %v4510, %v4550
        %4552 = vmatmul.f32.gmra.mxu0 %v305
        %v4553 = vpop.f32.mrf.mxu0
        %v4554 = vadd.f32 %v4513, %v4553
        %4555 = vmatmul.f32.gmra.mxu0 %v308
        %v4556 = vpop.f32.mrf.mxu0
        %v4557 = vadd.f32 %v4516, %v4556
        %4558 = vmatmul.f32.gmra.mxu0 %v311
        %v4559 = vpop.f32.mrf.mxu0
        %v4560 = vadd.f32 %v4519, %v4559
        %4561 = vdwg.mxu0
        %4562 = vmatpush.msra.mxu0 %v1838
        %4563 = vmatpush.msra.mxu0 %v1806
        %4564 = vmatpush.msra.mxu0 %v1774
        %4565 = vmatpush.msra.mxu0 %v1742
        %4566 = vmatpush.msra.mxu0 %v1710
        %4567 = vmatpush.msra.mxu0 %v1678
        %4568 = vmatpush.msra.mxu0 %v1646
        %4569 = vmatpush.msra.mxu0 %v1614
        %4570 = vmatpush.msra.mxu0 %v1582
        %4571 = vmatpush.msra.mxu0 %v1550
        %4572 = vmatpush.msra.mxu0 %v1518
        %4573 = vmatpush.msra.mxu0 %v1486
        %4574 = vmatpush.msra.mxu0 %v1454
        %4575 = vmatpush.msra.mxu0 %v1422
        %4576 = vmatpush.msra.mxu0 %v1390
        %4577 = vmatpush.msra.mxu0 %v1358
        %4578 = vmatmul.f32.gmra.mxu0 %v291
        %v4579 = vpop.f32.mrf.mxu0
        %v4580 = vadd.f32 %v4539, %v4579
        %4581 = vmatmul.f32.gmra.mxu0 %v294
        %v4582 = vpop.f32.mrf.mxu0
        %v4583 = vadd.f32 %v4542, %v4582
        %4584 = vmatmul.f32.gmra.mxu0 %v297
        %v4585 = vpop.f32.mrf.mxu0
        %v4586 = vadd.f32 %v4545, %v4585
        %4587 = vmatmul.f32.gmra.mxu0 %v300
        %v4588 = vpop.f32.mrf.mxu0
        %v4589 = vadd.f32 %v4548, %v4588
        %4590 = vmatmul.f32.gmra.mxu0 %v303
        %v4591 = vpop.f32.mrf.mxu0
        %v4592 = vadd.f32 %v4551, %v4591
        %4593 = vmatmul.f32.gmra.mxu0 %v306
        %v4594 = vpop.f32.mrf.mxu0
        %v4595 = vadd.f32 %v4554, %v4594
        %4596 = vmatmul.f32.gmra.mxu0 %v309
        %v4597 = vpop.f32.mrf.mxu0
        %v4598 = vadd.f32 %v4557, %v4597
        %4599 = vmatmul.f32.gmra.mxu0 %v312
        %v4600 = vpop.f32.mrf.mxu0
        %v4601 = vadd.f32 %v4560, %v4600
        %4602 = vdwg.mxu0
        %4603 = vmatpush.msra.mxu0 %v815
        %4604 = vmatpush.msra.mxu0 %v783
        %4605 = vmatpush.msra.mxu0 %v751
        %4606 = vmatpush.msra.mxu0 %v719
        %4607 = vmatpush.msra.mxu0 %v687
        %4608 = vmatpush.msra.mxu0 %v655
        %4609 = vmatpush.msra.mxu0 %v623
        %4610 = vmatpush.msra.mxu0 %v591
        %4611 = vmatpush.msra.mxu0 %v559
        %4612 = vmatpush.msra.mxu0 %v527
        %4613 = vmatpush.msra.mxu0 %v495
        %4614 = vmatpush.msra.mxu0 %v463
        %4615 = vmatpush.msra.mxu0 %v431
        %4616 = vmatpush.msra.mxu0 %v399
        %4617 = vmatpush.msra.mxu0 %v367
        %4618 = vmatpush.msra.mxu0 %v335
        %4619 = vmatmul.f32.gmra.mxu0 %v289
        %v4620 = vpop.f32.mrf.mxu0
        %v4621 = vadd.f32 %v1860, %v4620
        %4622 = vmatmul.f32.gmra.mxu0 %v292
        %v4623 = vpop.f32.mrf.mxu0
        %v4624 = vadd.f32 %v1865, %v4623
        %4625 = vmatmul.f32.gmra.mxu0 %v295
        %v4626 = vpop.f32.mrf.mxu0
        %v4627 = vadd.f32 %v1870, %v4626
        %4628 = vmatmul.f32.gmra.mxu0 %v298
        %v4629 = vpop.f32.mrf.mxu0
        %v4630 = vadd.f32 %v1875, %v4629
        %4631 = vmatmul.f32.gmra.mxu0 %v301
        %v4632 = vpop.f32.mrf.mxu0
        %v4633 = vadd.f32 %v1880, %v4632
        %4634 = vmatmul.f32.gmra.mxu0 %v304
        %v4635 = vpop.f32.mrf.mxu0
        %v4636 = vadd.f32 %v1885, %v4635
        %4637 = vmatmul.f32.gmra.mxu0 %v307
        %v4638 = vpop.f32.mrf.mxu0
        %v4639 = vadd.f32 %v1890, %v4638
        %4640 = vmatmul.f32.gmra.mxu0 %v310
        %v4641 = vpop.f32.mrf.mxu0
        %v4642 = vadd.f32 %v1895, %v4641
        %4643 = vdwg.mxu0
        %4644 = vmatpush.msra.mxu0 %v1327
        %4645 = vmatpush.msra.mxu0 %v1295
        %4646 = vmatpush.msra.mxu0 %v1263
        %4647 = vmatpush.msra.mxu0 %v1231
        %4648 = vmatpush.msra.mxu0 %v1199
        %4649 = vmatpush.msra.mxu0 %v1167
        %4650 = vmatpush.msra.mxu0 %v1135
        %4651 = vmatpush.msra.mxu0 %v1103
        %4652 = vmatpush.msra.mxu0 %v1071
        %4653 = vmatpush.msra.mxu0 %v1039
        %4654 = vmatpush.msra.mxu0 %v1007
        %4655 = vmatpush.msra.mxu0 %v975
        %4656 = vmatpush.msra.mxu0 %v943
        %4657 = vmatpush.msra.mxu0 %v911
        %4658 = vmatpush.msra.mxu0 %v879
        %4659 = vmatpush.msra.mxu0 %v847
        %4660 = vmatmul.f32.gmra.mxu0 %v290
        %v4661 = vpop.f32.mrf.mxu0
        %v4662 = vadd.f32 %v4621, %v4661
        %4663 = vmatmul.f32.gmra.mxu0 %v293
        %v4664 = vpop.f32.mrf.mxu0
        %v4665 = vadd.f32 %v4624, %v4664
        %4666 = vmatmul.f32.gmra.mxu0 %v296
        %v4667 = vpop.f32.mrf.mxu0
        %v4668 = vadd.f32 %v4627, %v4667
        %4669 = vmatmul.f32.gmra.mxu0 %v299
        %v4670 = vpop.f32.mrf.mxu0
        %v4671 = vadd.f32 %v4630, %v4670
        %4672 = vmatmul.f32.gmra.mxu0 %v302
        %v4673 = vpop.f32.mrf.mxu0
        %v4674 = vadd.f32 %v4633, %v4673
        %4675 = vmatmul.f32.gmra.mxu0 %v305
        %v4676 = vpop.f32.mrf.mxu0
        %v4677 = vadd.f32 %v4636, %v4676
        %4678 = vmatmul.f32.gmra.mxu0 %v308
        %v4679 = vpop.f32.mrf.mxu0
        %v4680 = vadd.f32 %v4639, %v4679
        %4681 = vmatmul.f32.gmra.mxu0 %v311
        %v4682 = vpop.f32.mrf.mxu0
        %v4683 = vadd.f32 %v4642, %v4682
        %4684 = vdwg.mxu0
        %4685 = vmatpush.msra.mxu0 %v1839
        %4686 = vmatpush.msra.mxu0 %v1807
        %4687 = vmatpush.msra.mxu0 %v1775
        %4688 = vmatpush.msra.mxu0 %v1743
        %4689 = vmatpush.msra.mxu0 %v1711
        %4690 = vmatpush.msra.mxu0 %v1679
        %4691 = vmatpush.msra.mxu0 %v1647
        %4692 = vmatpush.msra.mxu0 %v1615
        %4693 = vmatpush.msra.mxu0 %v1583
        %4694 = vmatpush.msra.mxu0 %v1551
        %4695 = vmatpush.msra.mxu0 %v1519
        %4696 = vmatpush.msra.mxu0 %v1487
        %4697 = vmatpush.msra.mxu0 %v1455
        %4698 = vmatpush.msra.mxu0 %v1423
        %4699 = vmatpush.msra.mxu0 %v1391
        %4700 = vmatpush.msra.mxu0 %v1359
        %4701 = vmatmul.f32.gmra.mxu0 %v291
        %v4702 = vpop.f32.mrf.mxu0
        %v4703 = vadd.f32 %v4662, %v4702
        %4704 = vmatmul.f32.gmra.mxu0 %v294
        %v4705 = vpop.f32.mrf.mxu0
        %v4706 = vadd.f32 %v4665, %v4705
        %4707 = vmatmul.f32.gmra.mxu0 %v297
        %v4708 = vpop.f32.mrf.mxu0
        %v4709 = vadd.f32 %v4668, %v4708
        %4710 = vmatmul.f32.gmra.mxu0 %v300
        %v4711 = vpop.f32.mrf.mxu0
        %v4712 = vadd.f32 %v4671, %v4711
        %4713 = vmatmul.f32.gmra.mxu0 %v303
        %v4714 = vpop.f32.mrf.mxu0
        %v4715 = vadd.f32 %v4674, %v4714
        %4716 = vmatmul.f32.gmra.mxu0 %v306
        %v4717 = vpop.f32.mrf.mxu0
        %v4718 = vadd.f32 %v4677, %v4717
        %4719 = vmatmul.f32.gmra.mxu0 %v309
        %v4720 = vpop.f32.mrf.mxu0
        %v4721 = vadd.f32 %v4680, %v4720
        %4722 = vmatmul.f32.gmra.mxu0 %v312
        %v4723 = vpop.f32.mrf.mxu0
        %v4724 = vadd.f32 %v4683, %v4723
        %4725 = vdwg.mxu0
        %4726 = vmatpush.msra.mxu0 %v816
        %4727 = vmatpush.msra.mxu0 %v784
        %4728 = vmatpush.msra.mxu0 %v752
        %4729 = vmatpush.msra.mxu0 %v720
        %4730 = vmatpush.msra.mxu0 %v688
        %4731 = vmatpush.msra.mxu0 %v656
        %4732 = vmatpush.msra.mxu0 %v624
        %4733 = vmatpush.msra.mxu0 %v592
        %4734 = vmatpush.msra.mxu0 %v560
        %4735 = vmatpush.msra.mxu0 %v528
        %4736 = vmatpush.msra.mxu0 %v496
        %4737 = vmatpush.msra.mxu0 %v464
        %4738 = vmatpush.msra.mxu0 %v432
        %4739 = vmatpush.msra.mxu0 %v400
        %4740 = vmatpush.msra.mxu0 %v368
        %4741 = vmatpush.msra.mxu0 %v336
        %4742 = vmatmul.f32.gmra.mxu0 %v289
        %v4743 = vpop.f32.mrf.mxu0
        %v4744 = vadd.f32 %v1860, %v4743
        %4745 = vmatmul.f32.gmra.mxu0 %v292
        %v4746 = vpop.f32.mrf.mxu0
        %v4747 = vadd.f32 %v1865, %v4746
        %4748 = vmatmul.f32.gmra.mxu0 %v295
        %v4749 = vpop.f32.mrf.mxu0
        %v4750 = vadd.f32 %v1870, %v4749
        %4751 = vmatmul.f32.gmra.mxu0 %v298
        %v4752 = vpop.f32.mrf.mxu0
        %v4753 = vadd.f32 %v1875, %v4752
        %4754 = vmatmul.f32.gmra.mxu0 %v301
        %v4755 = vpop.f32.mrf.mxu0
        %v4756 = vadd.f32 %v1880, %v4755
        %4757 = vmatmul.f32.gmra.mxu0 %v304
        %v4758 = vpop.f32.mrf.mxu0
        %v4759 = vadd.f32 %v1885, %v4758
        %4760 = vmatmul.f32.gmra.mxu0 %v307
        %v4761 = vpop.f32.mrf.mxu0
        %v4762 = vadd.f32 %v1890, %v4761
        %4763 = vmatmul.f32.gmra.mxu0 %v310
        %v4764 = vpop.f32.mrf.mxu0
        %v4765 = vadd.f32 %v1895, %v4764
        %4766 = vdwg.mxu0
        %4767 = vmatpush.msra.mxu0 %v1328
        %4768 = vmatpush.msra.mxu0 %v1296
        %4769 = vmatpush.msra.mxu0 %v1264
        %4770 = vmatpush.msra.mxu0 %v1232
        %4771 = vmatpush.msra.mxu0 %v1200
        %4772 = vmatpush.msra.mxu0 %v1168
        %4773 = vmatpush.msra.mxu0 %v1136
        %4774 = vmatpush.msra.mxu0 %v1104
        %4775 = vmatpush.msra.mxu0 %v1072
        %4776 = vmatpush.msra.mxu0 %v1040
        %4777 = vmatpush.msra.mxu0 %v1008
        %4778 = vmatpush.msra.mxu0 %v976
        %4779 = vmatpush.msra.mxu0 %v944
        %4780 = vmatpush.msra.mxu0 %v912
        %4781 = vmatpush.msra.mxu0 %v880
        %4782 = vmatpush.msra.mxu0 %v848
        %4783 = vmatmul.f32.gmra.mxu0 %v290
        %v4784 = vpop.f32.mrf.mxu0
        %v4785 = vadd.f32 %v4744, %v4784
        %4786 = vmatmul.f32.gmra.mxu0 %v293
        %v4787 = vpop.f32.mrf.mxu0
        %v4788 = vadd.f32 %v4747, %v4787
        %4789 = vmatmul.f32.gmra.mxu0 %v296
        %v4790 = vpop.f32.mrf.mxu0
        %v4791 = vadd.f32 %v4750, %v4790
        %4792 = vmatmul.f32.gmra.mxu0 %v299
        %v4793 = vpop.f32.mrf.mxu0
        %v4794 = vadd.f32 %v4753, %v4793
        %4795 = vmatmul.f32.gmra.mxu0 %v302
        %v4796 = vpop.f32.mrf.mxu0
        %v4797 = vadd.f32 %v4756, %v4796
        %4798 = vmatmul.f32.gmra.mxu0 %v305
        %v4799 = vpop.f32.mrf.mxu0
        %v4800 = vadd.f32 %v4759, %v4799
        %4801 = vmatmul.f32.gmra.mxu0 %v308
        %v4802 = vpop.f32.mrf.mxu0
        %v4803 = vadd.f32 %v4762, %v4802
        %4804 = vmatmul.f32.gmra.mxu0 %v311
        %v4805 = vpop.f32.mrf.mxu0
        %v4806 = vadd.f32 %v4765, %v4805
        %4807 = vdwg.mxu0
        %4808 = vmatpush.msra.mxu0 %v1840
        %4809 = vmatpush.msra.mxu0 %v1808
        %4810 = vmatpush.msra.mxu0 %v1776
        %4811 = vmatpush.msra.mxu0 %v1744
        %4812 = vmatpush.msra.mxu0 %v1712
        %4813 = vmatpush.msra.mxu0 %v1680
        %4814 = vmatpush.msra.mxu0 %v1648
        %4815 = vmatpush.msra.mxu0 %v1616
        %4816 = vmatpush.msra.mxu0 %v1584
        %4817 = vmatpush.msra.mxu0 %v1552
        %4818 = vmatpush.msra.mxu0 %v1520
        %4819 = vmatpush.msra.mxu0 %v1488
        %4820 = vmatpush.msra.mxu0 %v1456
        %4821 = vmatpush.msra.mxu0 %v1424
        %4822 = vmatpush.msra.mxu0 %v1392
        %4823 = vmatpush.msra.mxu0 %v1360
        %4824 = vmatmul.f32.gmra.mxu0 %v291
        %v4825 = vpop.f32.mrf.mxu0
        %v4826 = vadd.f32 %v4785, %v4825
        %4827 = vmatmul.f32.gmra.mxu0 %v294
        %v4828 = vpop.f32.mrf.mxu0
        %v4829 = vadd.f32 %v4788, %v4828
        %4830 = vmatmul.f32.gmra.mxu0 %v297
        %v4831 = vpop.f32.mrf.mxu0
        %v4832 = vadd.f32 %v4791, %v4831
        %4833 = vmatmul.f32.gmra.mxu0 %v300
        %v4834 = vpop.f32.mrf.mxu0
        %v4835 = vadd.f32 %v4794, %v4834
        %4836 = vmatmul.f32.gmra.mxu0 %v303
        %v4837 = vpop.f32.mrf.mxu0
        %v4838 = vadd.f32 %v4797, %v4837
        %4839 = vmatmul.f32.gmra.mxu0 %v306
        %v4840 = vpop.f32.mrf.mxu0
        %v4841 = vadd.f32 %v4800, %v4840
        %4842 = vmatmul.f32.gmra.mxu0 %v309
        %v4843 = vpop.f32.mrf.mxu0
        %v4844 = vadd.f32 %v4803, %v4843
        %4845 = vmatmul.f32.gmra.mxu0 %v312
        %v4846 = vpop.f32.mrf.mxu0
        %v4847 = vadd.f32 %v4806, %v4846
        %4848 = vdwg.mxu0
        %4849 = vmatpush.msra.mxu0 %v817
        %4850 = vmatpush.msra.mxu0 %v785
        %4851 = vmatpush.msra.mxu0 %v753
        %4852 = vmatpush.msra.mxu0 %v721
        %4853 = vmatpush.msra.mxu0 %v689
        %4854 = vmatpush.msra.mxu0 %v657
        %4855 = vmatpush.msra.mxu0 %v625
        %4856 = vmatpush.msra.mxu0 %v593
        %4857 = vmatpush.msra.mxu0 %v561
        %4858 = vmatpush.msra.mxu0 %v529
        %4859 = vmatpush.msra.mxu0 %v497
        %4860 = vmatpush.msra.mxu0 %v465
        %4861 = vmatpush.msra.mxu0 %v433
        %4862 = vmatpush.msra.mxu0 %v401
        %4863 = vmatpush.msra.mxu0 %v369
        %4864 = vmatpush.msra.mxu0 %v337
        %4865 = vmatmul.f32.gmra.mxu0 %v289
        %v4866 = vpop.f32.mrf.mxu0
        %v4867 = vadd.f32 %v1860, %v4866
        %4868 = vmatmul.f32.gmra.mxu0 %v292
        %v4869 = vpop.f32.mrf.mxu0
        %v4870 = vadd.f32 %v1865, %v4869
        %4871 = vmatmul.f32.gmra.mxu0 %v295
        %v4872 = vpop.f32.mrf.mxu0
        %v4873 = vadd.f32 %v1870, %v4872
        %4874 = vmatmul.f32.gmra.mxu0 %v298
        %v4875 = vpop.f32.mrf.mxu0
        %v4876 = vadd.f32 %v1875, %v4875
        %4877 = vmatmul.f32.gmra.mxu0 %v301
        %v4878 = vpop.f32.mrf.mxu0
        %v4879 = vadd.f32 %v1880, %v4878
        %4880 = vmatmul.f32.gmra.mxu0 %v304
        %v4881 = vpop.f32.mrf.mxu0
        %v4882 = vadd.f32 %v1885, %v4881
        %4883 = vmatmul.f32.gmra.mxu0 %v307
        %v4884 = vpop.f32.mrf.mxu0
        %v4885 = vadd.f32 %v1890, %v4884
        %4886 = vmatmul.f32.gmra.mxu0 %v310
        %v4887 = vpop.f32.mrf.mxu0
        %v4888 = vadd.f32 %v1895, %v4887
        %4889 = vdwg.mxu0
        %4890 = vmatpush.msra.mxu0 %v1329
        %4891 = vmatpush.msra.mxu0 %v1297
        %4892 = vmatpush.msra.mxu0 %v1265
        %4893 = vmatpush.msra.mxu0 %v1233
        %4894 = vmatpush.msra.mxu0 %v1201
        %4895 = vmatpush.msra.mxu0 %v1169
        %4896 = vmatpush.msra.mxu0 %v1137
        %4897 = vmatpush.msra.mxu0 %v1105
        %4898 = vmatpush.msra.mxu0 %v1073
        %4899 = vmatpush.msra.mxu0 %v1041
        %4900 = vmatpush.msra.mxu0 %v1009
        %4901 = vmatpush.msra.mxu0 %v977
        %4902 = vmatpush.msra.mxu0 %v945
        %4903 = vmatpush.msra.mxu0 %v913
        %4904 = vmatpush.msra.mxu0 %v881
        %4905 = vmatpush.msra.mxu0 %v849
        %4906 = vmatmul.f32.gmra.mxu0 %v290
        %v4907 = vpop.f32.mrf.mxu0
        %v4908 = vadd.f32 %v4867, %v4907
        %4909 = vmatmul.f32.gmra.mxu0 %v293
        %v4910 = vpop.f32.mrf.mxu0
        %v4911 = vadd.f32 %v4870, %v4910
        %4912 = vmatmul.f32.gmra.mxu0 %v296
        %v4913 = vpop.f32.mrf.mxu0
        %v4914 = vadd.f32 %v4873, %v4913
        %4915 = vmatmul.f32.gmra.mxu0 %v299
        %v4916 = vpop.f32.mrf.mxu0
        %v4917 = vadd.f32 %v4876, %v4916
        %4918 = vmatmul.f32.gmra.mxu0 %v302
        %v4919 = vpop.f32.mrf.mxu0
        %v4920 = vadd.f32 %v4879, %v4919
        %4921 = vmatmul.f32.gmra.mxu0 %v305
        %v4922 = vpop.f32.mrf.mxu0
        %v4923 = vadd.f32 %v4882, %v4922
        %4924 = vmatmul.f32.gmra.mxu0 %v308
        %v4925 = vpop.f32.mrf.mxu0
        %v4926 = vadd.f32 %v4885, %v4925
        %4927 = vmatmul.f32.gmra.mxu0 %v311
        %v4928 = vpop.f32.mrf.mxu0
        %v4929 = vadd.f32 %v4888, %v4928
        %4930 = vdwg.mxu0
        %4931 = vmatpush.msra.mxu0 %v1841
        %4932 = vmatpush.msra.mxu0 %v1809
        %4933 = vmatpush.msra.mxu0 %v1777
        %4934 = vmatpush.msra.mxu0 %v1745
        %4935 = vmatpush.msra.mxu0 %v1713
        %4936 = vmatpush.msra.mxu0 %v1681
        %4937 = vmatpush.msra.mxu0 %v1649
        %4938 = vmatpush.msra.mxu0 %v1617
        %4939 = vmatpush.msra.mxu0 %v1585
        %4940 = vmatpush.msra.mxu0 %v1553
        %4941 = vmatpush.msra.mxu0 %v1521
        %4942 = vmatpush.msra.mxu0 %v1489
        %4943 = vmatpush.msra.mxu0 %v1457
        %4944 = vmatpush.msra.mxu0 %v1425
        %4945 = vmatpush.msra.mxu0 %v1393
        %4946 = vmatpush.msra.mxu0 %v1361
        %4947 = vmatmul.f32.gmra.mxu0 %v291
        %v4948 = vpop.f32.mrf.mxu0
        %v4949 = vadd.f32 %v4908, %v4948
        %4950 = vmatmul.f32.gmra.mxu0 %v294
        %v4951 = vpop.f32.mrf.mxu0
        %v4952 = vadd.f32 %v4911, %v4951
        %4953 = vmatmul.f32.gmra.mxu0 %v297
        %v4954 = vpop.f32.mrf.mxu0
        %v4955 = vadd.f32 %v4914, %v4954
        %4956 = vmatmul.f32.gmra.mxu0 %v300
        %v4957 = vpop.f32.mrf.mxu0
        %v4958 = vadd.f32 %v4917, %v4957
        %4959 = vmatmul.f32.gmra.mxu0 %v303
        %v4960 = vpop.f32.mrf.mxu0
        %v4961 = vadd.f32 %v4920, %v4960
        %4962 = vmatmul.f32.gmra.mxu0 %v306
        %v4963 = vpop.f32.mrf.mxu0
        %v4964 = vadd.f32 %v4923, %v4963
        %4965 = vmatmul.f32.gmra.mxu0 %v309
        %v4966 = vpop.f32.mrf.mxu0
        %v4967 = vadd.f32 %v4926, %v4966
        %4968 = vmatmul.f32.gmra.mxu0 %v312
        %v4969 = vpop.f32.mrf.mxu0
        %v4970 = vadd.f32 %v4929, %v4969
        %4971 = vdwg.mxu0
        %4972 = vmatpush.msra.mxu0 %v818
        %4973 = vmatpush.msra.mxu0 %v786
        %4974 = vmatpush.msra.mxu0 %v754
        %4975 = vmatpush.msra.mxu0 %v722
        %4976 = vmatpush.msra.mxu0 %v690
        %4977 = vmatpush.msra.mxu0 %v658
        %4978 = vmatpush.msra.mxu0 %v626
        %4979 = vmatpush.msra.mxu0 %v594
        %4980 = vmatpush.msra.mxu0 %v562
        %4981 = vmatpush.msra.mxu0 %v530
        %4982 = vmatpush.msra.mxu0 %v498
        %4983 = vmatpush.msra.mxu0 %v466
        %4984 = vmatpush.msra.mxu0 %v434
        %4985 = vmatpush.msra.mxu0 %v402
        %4986 = vmatpush.msra.mxu0 %v370
        %4987 = vmatpush.msra.mxu0 %v338
        %4988 = vmatmul.f32.gmra.mxu0 %v289
        %v4989 = vpop.f32.mrf.mxu0
        %v4990 = vadd.f32 %v1860, %v4989
        %4991 = vmatmul.f32.gmra.mxu0 %v292
        %v4992 = vpop.f32.mrf.mxu0
        %v4993 = vadd.f32 %v1865, %v4992
        %4994 = vmatmul.f32.gmra.mxu0 %v295
        %v4995 = vpop.f32.mrf.mxu0
        %v4996 = vadd.f32 %v1870, %v4995
        %4997 = vmatmul.f32.gmra.mxu0 %v298
        %v4998 = vpop.f32.mrf.mxu0
        %v4999 = vadd.f32 %v1875, %v4998
        %5000 = vmatmul.f32.gmra.mxu0 %v301
        %v5001 = vpop.f32.mrf.mxu0
        %v5002 = vadd.f32 %v1880, %v5001
        %5003 = vmatmul.f32.gmra.mxu0 %v304
        %v5004 = vpop.f32.mrf.mxu0
        %v5005 = vadd.f32 %v1885, %v5004
        %5006 = vmatmul.f32.gmra.mxu0 %v307
        %v5007 = vpop.f32.mrf.mxu0
        %v5008 = vadd.f32 %v1890, %v5007
        %5009 = vmatmul.f32.gmra.mxu0 %v310
        %v5010 = vpop.f32.mrf.mxu0
        %v5011 = vadd.f32 %v1895, %v5010
        %5012 = vdwg.mxu0
        %5013 = vmatpush.msra.mxu0 %v1330
        %5014 = vmatpush.msra.mxu0 %v1298
        %5015 = vmatpush.msra.mxu0 %v1266
        %5016 = vmatpush.msra.mxu0 %v1234
        %5017 = vmatpush.msra.mxu0 %v1202
        %5018 = vmatpush.msra.mxu0 %v1170
        %5019 = vmatpush.msra.mxu0 %v1138
        %5020 = vmatpush.msra.mxu0 %v1106
        %5021 = vmatpush.msra.mxu0 %v1074
        %5022 = vmatpush.msra.mxu0 %v1042
        %5023 = vmatpush.msra.mxu0 %v1010
        %5024 = vmatpush.msra.mxu0 %v978
        %5025 = vmatpush.msra.mxu0 %v946
        %5026 = vmatpush.msra.mxu0 %v914
        %5027 = vmatpush.msra.mxu0 %v882
        %5028 = vmatpush.msra.mxu0 %v850
        %5029 = vmatmul.f32.gmra.mxu0 %v290
        %v5030 = vpop.f32.mrf.mxu0
        %v5031 = vadd.f32 %v4990, %v5030
        %5032 = vmatmul.f32.gmra.mxu0 %v293
        %v5033 = vpop.f32.mrf.mxu0
        %v5034 = vadd.f32 %v4993, %v5033
        %5035 = vmatmul.f32.gmra.mxu0 %v296
        %v5036 = vpop.f32.mrf.mxu0
        %v5037 = vadd.f32 %v4996, %v5036
        %5038 = vmatmul.f32.gmra.mxu0 %v299
        %v5039 = vpop.f32.mrf.mxu0
        %v5040 = vadd.f32 %v4999, %v5039
        %5041 = vmatmul.f32.gmra.mxu0 %v302
        %v5042 = vpop.f32.mrf.mxu0
        %v5043 = vadd.f32 %v5002, %v5042
        %5044 = vmatmul.f32.gmra.mxu0 %v305
        %v5045 = vpop.f32.mrf.mxu0
        %v5046 = vadd.f32 %v5005, %v5045
        %5047 = vmatmul.f32.gmra.mxu0 %v308
        %v5048 = vpop.f32.mrf.mxu0
        %v5049 = vadd.f32 %v5008, %v5048
        %5050 = vmatmul.f32.gmra.mxu0 %v311
        %v5051 = vpop.f32.mrf.mxu0
        %v5052 = vadd.f32 %v5011, %v5051
        %5053 = vdwg.mxu0
        %5054 = vmatpush.msra.mxu0 %v1842
        %5055 = vmatpush.msra.mxu0 %v1810
        %5056 = vmatpush.msra.mxu0 %v1778
        %5057 = vmatpush.msra.mxu0 %v1746
        %5058 = vmatpush.msra.mxu0 %v1714
        %5059 = vmatpush.msra.mxu0 %v1682
        %5060 = vmatpush.msra.mxu0 %v1650
        %5061 = vmatpush.msra.mxu0 %v1618
        %5062 = vmatpush.msra.mxu0 %v1586
        %5063 = vmatpush.msra.mxu0 %v1554
        %5064 = vmatpush.msra.mxu0 %v1522
        %5065 = vmatpush.msra.mxu0 %v1490
        %5066 = vmatpush.msra.mxu0 %v1458
        %5067 = vmatpush.msra.mxu0 %v1426
        %5068 = vmatpush.msra.mxu0 %v1394
        %5069 = vmatpush.msra.mxu0 %v1362
        %5070 = vmatmul.f32.gmra.mxu0 %v291
        %v5071 = vpop.f32.mrf.mxu0
        %v5072 = vadd.f32 %v5031, %v5071
        %5073 = vmatmul.f32.gmra.mxu0 %v294
        %v5074 = vpop.f32.mrf.mxu0
        %v5075 = vadd.f32 %v5034, %v5074
        %5076 = vmatmul.f32.gmra.mxu0 %v297
        %v5077 = vpop.f32.mrf.mxu0
        %v5078 = vadd.f32 %v5037, %v5077
        %5079 = vmatmul.f32.gmra.mxu0 %v300
        %v5080 = vpop.f32.mrf.mxu0
        %v5081 = vadd.f32 %v5040, %v5080
        %5082 = vmatmul.f32.gmra.mxu0 %v303
        %v5083 = vpop.f32.mrf.mxu0
        %v5084 = vadd.f32 %v5043, %v5083
        %5085 = vmatmul.f32.gmra.mxu0 %v306
        %v5086 = vpop.f32.mrf.mxu0
        %v5087 = vadd.f32 %v5046, %v5086
        %5088 = vmatmul.f32.gmra.mxu0 %v309
        %v5089 = vpop.f32.mrf.mxu0
        %v5090 = vadd.f32 %v5049, %v5089
        %5091 = vmatmul.f32.gmra.mxu0 %v312
        %v5092 = vpop.f32.mrf.mxu0
        %v5093 = vadd.f32 %v5052, %v5092
        %5094 = vdwg.mxu0
        %5095 = vmatpush.msra.mxu0 %v819
        %5096 = vmatpush.msra.mxu0 %v787
        %5097 = vmatpush.msra.mxu0 %v755
        %5098 = vmatpush.msra.mxu0 %v723
        %5099 = vmatpush.msra.mxu0 %v691
        %5100 = vmatpush.msra.mxu0 %v659
        %5101 = vmatpush.msra.mxu0 %v627
        %5102 = vmatpush.msra.mxu0 %v595
        %5103 = vmatpush.msra.mxu0 %v563
        %5104 = vmatpush.msra.mxu0 %v531
        %5105 = vmatpush.msra.mxu0 %v499
        %5106 = vmatpush.msra.mxu0 %v467
        %5107 = vmatpush.msra.mxu0 %v435
        %5108 = vmatpush.msra.mxu0 %v403
        %5109 = vmatpush.msra.mxu0 %v371
        %5110 = vmatpush.msra.mxu0 %v339
        %5111 = vmatmul.f32.gmra.mxu0 %v289
        %v5112 = vpop.f32.mrf.mxu0
        %v5113 = vadd.f32 %v1860, %v5112
        %5114 = vmatmul.f32.gmra.mxu0 %v292
        %v5115 = vpop.f32.mrf.mxu0
        %v5116 = vadd.f32 %v1865, %v5115
        %5117 = vmatmul.f32.gmra.mxu0 %v295
        %v5118 = vpop.f32.mrf.mxu0
        %v5119 = vadd.f32 %v1870, %v5118
        %5120 = vmatmul.f32.gmra.mxu0 %v298
        %v5121 = vpop.f32.mrf.mxu0
        %v5122 = vadd.f32 %v1875, %v5121
        %5123 = vmatmul.f32.gmra.mxu0 %v301
        %v5124 = vpop.f32.mrf.mxu0
        %v5125 = vadd.f32 %v1880, %v5124
        %5126 = vmatmul.f32.gmra.mxu0 %v304
        %v5127 = vpop.f32.mrf.mxu0
        %v5128 = vadd.f32 %v1885, %v5127
        %5129 = vmatmul.f32.gmra.mxu0 %v307
        %v5130 = vpop.f32.mrf.mxu0
        %v5131 = vadd.f32 %v1890, %v5130
        %5132 = vmatmul.f32.gmra.mxu0 %v310
        %v5133 = vpop.f32.mrf.mxu0
        %v5134 = vadd.f32 %v1895, %v5133
        %5135 = vdwg.mxu0
        %5136 = vmatpush.msra.mxu0 %v1331
        %5137 = vmatpush.msra.mxu0 %v1299
        %5138 = vmatpush.msra.mxu0 %v1267
        %5139 = vmatpush.msra.mxu0 %v1235
        %5140 = vmatpush.msra.mxu0 %v1203
        %5141 = vmatpush.msra.mxu0 %v1171
        %5142 = vmatpush.msra.mxu0 %v1139
        %5143 = vmatpush.msra.mxu0 %v1107
        %5144 = vmatpush.msra.mxu0 %v1075
        %5145 = vmatpush.msra.mxu0 %v1043
        %5146 = vmatpush.msra.mxu0 %v1011
        %5147 = vmatpush.msra.mxu0 %v979
        %5148 = vmatpush.msra.mxu0 %v947
        %5149 = vmatpush.msra.mxu0 %v915
        %5150 = vmatpush.msra.mxu0 %v883
        %5151 = vmatpush.msra.mxu0 %v851
        %5152 = vmatmul.f32.gmra.mxu0 %v290
        %v5153 = vpop.f32.mrf.mxu0
        %v5154 = vadd.f32 %v5113, %v5153
        %5155 = vmatmul.f32.gmra.mxu0 %v293
        %v5156 = vpop.f32.mrf.mxu0
        %v5157 = vadd.f32 %v5116, %v5156
        %5158 = vmatmul.f32.gmra.mxu0 %v296
        %v5159 = vpop.f32.mrf.mxu0
        %v5160 = vadd.f32 %v5119, %v5159
        %5161 = vmatmul.f32.gmra.mxu0 %v299
        %v5162 = vpop.f32.mrf.mxu0
        %v5163 = vadd.f32 %v5122, %v5162
        %5164 = vmatmul.f32.gmra.mxu0 %v302
        %v5165 = vpop.f32.mrf.mxu0
        %v5166 = vadd.f32 %v5125, %v5165
        %5167 = vmatmul.f32.gmra.mxu0 %v305
        %v5168 = vpop.f32.mrf.mxu0
        %v5169 = vadd.f32 %v5128, %v5168
        %5170 = vmatmul.f32.gmra.mxu0 %v308
        %v5171 = vpop.f32.mrf.mxu0
        %v5172 = vadd.f32 %v5131, %v5171
        %5173 = vmatmul.f32.gmra.mxu0 %v311
        %v5174 = vpop.f32.mrf.mxu0
        %v5175 = vadd.f32 %v5134, %v5174
        %5176 = vdwg.mxu0
        %5177 = vmatpush.msra.mxu0 %v1843
        %5178 = vmatpush.msra.mxu0 %v1811
        %5179 = vmatpush.msra.mxu0 %v1779
        %5180 = vmatpush.msra.mxu0 %v1747
        %5181 = vmatpush.msra.mxu0 %v1715
        %5182 = vmatpush.msra.mxu0 %v1683
        %5183 = vmatpush.msra.mxu0 %v1651
        %5184 = vmatpush.msra.mxu0 %v1619
        %5185 = vmatpush.msra.mxu0 %v1587
        %5186 = vmatpush.msra.mxu0 %v1555
        %5187 = vmatpush.msra.mxu0 %v1523
        %5188 = vmatpush.msra.mxu0 %v1491
        %5189 = vmatpush.msra.mxu0 %v1459
        %5190 = vmatpush.msra.mxu0 %v1427
        %5191 = vmatpush.msra.mxu0 %v1395
        %5192 = vmatpush.msra.mxu0 %v1363
        %5193 = vmatmul.f32.gmra.mxu0 %v291
        %v5194 = vpop.f32.mrf.mxu0
        %v5195 = vadd.f32 %v5154, %v5194
        %5196 = vmatmul.f32.gmra.mxu0 %v294
        %v5197 = vpop.f32.mrf.mxu0
        %v5198 = vadd.f32 %v5157, %v5197
        %5199 = vmatmul.f32.gmra.mxu0 %v297
        %v5200 = vpop.f32.mrf.mxu0
        %v5201 = vadd.f32 %v5160, %v5200
        %5202 = vmatmul.f32.gmra.mxu0 %v300
        %v5203 = vpop.f32.mrf.mxu0
        %v5204 = vadd.f32 %v5163, %v5203
        %5205 = vmatmul.f32.gmra.mxu0 %v303
        %v5206 = vpop.f32.mrf.mxu0
        %v5207 = vadd.f32 %v5166, %v5206
        %5208 = vmatmul.f32.gmra.mxu0 %v306
        %v5209 = vpop.f32.mrf.mxu0
        %v5210 = vadd.f32 %v5169, %v5209
        %5211 = vmatmul.f32.gmra.mxu0 %v309
        %v5212 = vpop.f32.mrf.mxu0
        %v5213 = vadd.f32 %v5172, %v5212
        %5214 = vmatmul.f32.gmra.mxu0 %v312
        %v5215 = vpop.f32.mrf.mxu0
        %v5216 = vadd.f32 %v5175, %v5215
        %5217 = vdwg.mxu0
        %5218 = vmatpush.msra.mxu0 %v820
        %5219 = vmatpush.msra.mxu0 %v788
        %5220 = vmatpush.msra.mxu0 %v756
        %5221 = vmatpush.msra.mxu0 %v724
        %5222 = vmatpush.msra.mxu0 %v692
        %5223 = vmatpush.msra.mxu0 %v660
        %5224 = vmatpush.msra.mxu0 %v628
        %5225 = vmatpush.msra.mxu0 %v596
        %5226 = vmatpush.msra.mxu0 %v564
        %5227 = vmatpush.msra.mxu0 %v532
        %5228 = vmatpush.msra.mxu0 %v500
        %5229 = vmatpush.msra.mxu0 %v468
        %5230 = vmatpush.msra.mxu0 %v436
        %5231 = vmatpush.msra.mxu0 %v404
        %5232 = vmatpush.msra.mxu0 %v372
        %5233 = vmatpush.msra.mxu0 %v340
        %5234 = vmatmul.f32.gmra.mxu0 %v289
        %v5235 = vpop.f32.mrf.mxu0
        %v5236 = vadd.f32 %v1860, %v5235
        %5237 = vmatmul.f32.gmra.mxu0 %v292
        %v5238 = vpop.f32.mrf.mxu0
        %v5239 = vadd.f32 %v1865, %v5238
        %5240 = vmatmul.f32.gmra.mxu0 %v295
        %v5241 = vpop.f32.mrf.mxu0
        %v5242 = vadd.f32 %v1870, %v5241
        %5243 = vmatmul.f32.gmra.mxu0 %v298
        %v5244 = vpop.f32.mrf.mxu0
        %v5245 = vadd.f32 %v1875, %v5244
        %5246 = vmatmul.f32.gmra.mxu0 %v301
        %v5247 = vpop.f32.mrf.mxu0
        %v5248 = vadd.f32 %v1880, %v5247
        %5249 = vmatmul.f32.gmra.mxu0 %v304
        %v5250 = vpop.f32.mrf.mxu0
        %v5251 = vadd.f32 %v1885, %v5250
        %5252 = vmatmul.f32.gmra.mxu0 %v307
        %v5253 = vpop.f32.mrf.mxu0
        %v5254 = vadd.f32 %v1890, %v5253
        %5255 = vmatmul.f32.gmra.mxu0 %v310
        %v5256 = vpop.f32.mrf.mxu0
        %v5257 = vadd.f32 %v1895, %v5256
        %5258 = vdwg.mxu0
        %5259 = vmatpush.msra.mxu0 %v1332
        %5260 = vmatpush.msra.mxu0 %v1300
        %5261 = vmatpush.msra.mxu0 %v1268
        %5262 = vmatpush.msra.mxu0 %v1236
        %5263 = vmatpush.msra.mxu0 %v1204
        %5264 = vmatpush.msra.mxu0 %v1172
        %5265 = vmatpush.msra.mxu0 %v1140
        %5266 = vmatpush.msra.mxu0 %v1108
        %5267 = vmatpush.msra.mxu0 %v1076
        %5268 = vmatpush.msra.mxu0 %v1044
        %5269 = vmatpush.msra.mxu0 %v1012
        %5270 = vmatpush.msra.mxu0 %v980
        %5271 = vmatpush.msra.mxu0 %v948
        %5272 = vmatpush.msra.mxu0 %v916
        %5273 = vmatpush.msra.mxu0 %v884
        %5274 = vmatpush.msra.mxu0 %v852
        %5275 = vmatmul.f32.gmra.mxu0 %v290
        %v5276 = vpop.f32.mrf.mxu0
        %v5277 = vadd.f32 %v5236, %v5276
        %5278 = vmatmul.f32.gmra.mxu0 %v293
        %v5279 = vpop.f32.mrf.mxu0
        %v5280 = vadd.f32 %v5239, %v5279
        %5281 = vmatmul.f32.gmra.mxu0 %v296
        %v5282 = vpop.f32.mrf.mxu0
        %v5283 = vadd.f32 %v5242, %v5282
        %5284 = vmatmul.f32.gmra.mxu0 %v299
        %v5285 = vpop.f32.mrf.mxu0
        %v5286 = vadd.f32 %v5245, %v5285
        %5287 = vmatmul.f32.gmra.mxu0 %v302
        %v5288 = vpop.f32.mrf.mxu0
        %v5289 = vadd.f32 %v5248, %v5288
        %5290 = vmatmul.f32.gmra.mxu0 %v305
        %v5291 = vpop.f32.mrf.mxu0
        %v5292 = vadd.f32 %v5251, %v5291
        %5293 = vmatmul.f32.gmra.mxu0 %v308
        %v5294 = vpop.f32.mrf.mxu0
        %v5295 = vadd.f32 %v5254, %v5294
        %5296 = vmatmul.f32.gmra.mxu0 %v311
        %v5297 = vpop.f32.mrf.mxu0
        %v5298 = vadd.f32 %v5257, %v5297
        %5299 = vdwg.mxu0
        %5300 = vmatpush.msra.mxu0 %v1844
        %5301 = vmatpush.msra.mxu0 %v1812
        %5302 = vmatpush.msra.mxu0 %v1780
        %5303 = vmatpush.msra.mxu0 %v1748
        %5304 = vmatpush.msra.mxu0 %v1716
        %5305 = vmatpush.msra.mxu0 %v1684
        %5306 = vmatpush.msra.mxu0 %v1652
        %5307 = vmatpush.msra.mxu0 %v1620
        %5308 = vmatpush.msra.mxu0 %v1588
        %5309 = vmatpush.msra.mxu0 %v1556
        %5310 = vmatpush.msra.mxu0 %v1524
        %5311 = vmatpush.msra.mxu0 %v1492
        %5312 = vmatpush.msra.mxu0 %v1460
        %5313 = vmatpush.msra.mxu0 %v1428
        %5314 = vmatpush.msra.mxu0 %v1396
        %5315 = vmatpush.msra.mxu0 %v1364
        %5316 = vmatmul.f32.gmra.mxu0 %v291
        %v5317 = vpop.f32.mrf.mxu0
        %v5318 = vadd.f32 %v5277, %v5317
        %5319 = vmatmul.f32.gmra.mxu0 %v294
        %v5320 = vpop.f32.mrf.mxu0
        %v5321 = vadd.f32 %v5280, %v5320
        %5322 = vmatmul.f32.gmra.mxu0 %v297
        %v5323 = vpop.f32.mrf.mxu0
        %v5324 = vadd.f32 %v5283, %v5323
        %5325 = vmatmul.f32.gmra.mxu0 %v300
        %v5326 = vpop.f32.mrf.mxu0
        %v5327 = vadd.f32 %v5286, %v5326
        %5328 = vmatmul.f32.gmra.mxu0 %v303
        %v5329 = vpop.f32.mrf.mxu0
        %v5330 = vadd.f32 %v5289, %v5329
        %5331 = vmatmul.f32.gmra.mxu0 %v306
        %v5332 = vpop.f32.mrf.mxu0
        %v5333 = vadd.f32 %v5292, %v5332
        %5334 = vmatmul.f32.gmra.mxu0 %v309
        %v5335 = vpop.f32.mrf.mxu0
        %v5336 = vadd.f32 %v5295, %v5335
        %5337 = vmatmul.f32.gmra.mxu0 %v312
        %v5338 = vpop.f32.mrf.mxu0
        %v5339 = vadd.f32 %v5298, %v5338
        %5340 = vdwg.mxu0
        %5341 = vmatpush.msra.mxu0 %v821
        %5342 = vmatpush.msra.mxu0 %v789
        %5343 = vmatpush.msra.mxu0 %v757
        %5344 = vmatpush.msra.mxu0 %v725
        %5345 = vmatpush.msra.mxu0 %v693
        %5346 = vmatpush.msra.mxu0 %v661
        %5347 = vmatpush.msra.mxu0 %v629
        %5348 = vmatpush.msra.mxu0 %v597
        %5349 = vmatpush.msra.mxu0 %v565
        %5350 = vmatpush.msra.mxu0 %v533
        %5351 = vmatpush.msra.mxu0 %v501
        %5352 = vmatpush.msra.mxu0 %v469
        %5353 = vmatpush.msra.mxu0 %v437
        %5354 = vmatpush.msra.mxu0 %v405
        %5355 = vmatpush.msra.mxu0 %v373
        %5356 = vmatpush.msra.mxu0 %v341
        %5357 = vmatmul.f32.gmra.mxu0 %v289
        %v5358 = vpop.f32.mrf.mxu0
        %v5359 = vadd.f32 %v1860, %v5358
        %5360 = vmatmul.f32.gmra.mxu0 %v292
        %v5361 = vpop.f32.mrf.mxu0
        %v5362 = vadd.f32 %v1865, %v5361
        %5363 = vmatmul.f32.gmra.mxu0 %v295
        %v5364 = vpop.f32.mrf.mxu0
        %v5365 = vadd.f32 %v1870, %v5364
        %5366 = vmatmul.f32.gmra.mxu0 %v298
        %v5367 = vpop.f32.mrf.mxu0
        %v5368 = vadd.f32 %v1875, %v5367
        %5369 = vmatmul.f32.gmra.mxu0 %v301
        %v5370 = vpop.f32.mrf.mxu0
        %v5371 = vadd.f32 %v1880, %v5370
        %5372 = vmatmul.f32.gmra.mxu0 %v304
        %v5373 = vpop.f32.mrf.mxu0
        %v5374 = vadd.f32 %v1885, %v5373
        %5375 = vmatmul.f32.gmra.mxu0 %v307
        %v5376 = vpop.f32.mrf.mxu0
        %v5377 = vadd.f32 %v1890, %v5376
        %5378 = vmatmul.f32.gmra.mxu0 %v310
        %v5379 = vpop.f32.mrf.mxu0
        %v5380 = vadd.f32 %v1895, %v5379
        %5381 = vdwg.mxu0
        %5382 = vmatpush.msra.mxu0 %v1333
        %5383 = vmatpush.msra.mxu0 %v1301
        %5384 = vmatpush.msra.mxu0 %v1269
        %5385 = vmatpush.msra.mxu0 %v1237
        %5386 = vmatpush.msra.mxu0 %v1205
        %5387 = vmatpush.msra.mxu0 %v1173
        %5388 = vmatpush.msra.mxu0 %v1141
        %5389 = vmatpush.msra.mxu0 %v1109
        %5390 = vmatpush.msra.mxu0 %v1077
        %5391 = vmatpush.msra.mxu0 %v1045
        %5392 = vmatpush.msra.mxu0 %v1013
        %5393 = vmatpush.msra.mxu0 %v981
        %5394 = vmatpush.msra.mxu0 %v949
        %5395 = vmatpush.msra.mxu0 %v917
        %5396 = vmatpush.msra.mxu0 %v885
        %5397 = vmatpush.msra.mxu0 %v853
        %5398 = vmatmul.f32.gmra.mxu0 %v290
        %v5399 = vpop.f32.mrf.mxu0
        %v5400 = vadd.f32 %v5359, %v5399
        %5401 = vmatmul.f32.gmra.mxu0 %v293
        %v5402 = vpop.f32.mrf.mxu0
        %v5403 = vadd.f32 %v5362, %v5402
        %5404 = vmatmul.f32.gmra.mxu0 %v296
        %v5405 = vpop.f32.mrf.mxu0
        %v5406 = vadd.f32 %v5365, %v5405
        %5407 = vmatmul.f32.gmra.mxu0 %v299
        %v5408 = vpop.f32.mrf.mxu0
        %v5409 = vadd.f32 %v5368, %v5408
        %5410 = vmatmul.f32.gmra.mxu0 %v302
        %v5411 = vpop.f32.mrf.mxu0
        %v5412 = vadd.f32 %v5371, %v5411
        %5413 = vmatmul.f32.gmra.mxu0 %v305
        %v5414 = vpop.f32.mrf.mxu0
        %v5415 = vadd.f32 %v5374, %v5414
        %5416 = vmatmul.f32.gmra.mxu0 %v308
        %v5417 = vpop.f32.mrf.mxu0
        %v5418 = vadd.f32 %v5377, %v5417
        %5419 = vmatmul.f32.gmra.mxu0 %v311
        %v5420 = vpop.f32.mrf.mxu0
        %v5421 = vadd.f32 %v5380, %v5420
        %5422 = vdwg.mxu0
        %5423 = vmatpush.msra.mxu0 %v1845
        %5424 = vmatpush.msra.mxu0 %v1813
        %5425 = vmatpush.msra.mxu0 %v1781
        %5426 = vmatpush.msra.mxu0 %v1749
        %5427 = vmatpush.msra.mxu0 %v1717
        %5428 = vmatpush.msra.mxu0 %v1685
        %5429 = vmatpush.msra.mxu0 %v1653
        %5430 = vmatpush.msra.mxu0 %v1621
        %5431 = vmatpush.msra.mxu0 %v1589
        %5432 = vmatpush.msra.mxu0 %v1557
        %5433 = vmatpush.msra.mxu0 %v1525
        %5434 = vmatpush.msra.mxu0 %v1493
        %5435 = vmatpush.msra.mxu0 %v1461
        %5436 = vmatpush.msra.mxu0 %v1429
        %5437 = vmatpush.msra.mxu0 %v1397
        %5438 = vmatpush.msra.mxu0 %v1365
        %5439 = vmatmul.f32.gmra.mxu0 %v291
        %v5440 = vpop.f32.mrf.mxu0
        %v5441 = vadd.f32 %v5400, %v5440
        %5442 = vmatmul.f32.gmra.mxu0 %v294
        %v5443 = vpop.f32.mrf.mxu0
        %v5444 = vadd.f32 %v5403, %v5443
        %5445 = vmatmul.f32.gmra.mxu0 %v297
        %v5446 = vpop.f32.mrf.mxu0
        %v5447 = vadd.f32 %v5406, %v5446
        %5448 = vmatmul.f32.gmra.mxu0 %v300
        %v5449 = vpop.f32.mrf.mxu0
        %v5450 = vadd.f32 %v5409, %v5449
        %5451 = vmatmul.f32.gmra.mxu0 %v303
        %v5452 = vpop.f32.mrf.mxu0
        %v5453 = vadd.f32 %v5412, %v5452
        %5454 = vmatmul.f32.gmra.mxu0 %v306
        %v5455 = vpop.f32.mrf.mxu0
        %v5456 = vadd.f32 %v5415, %v5455
        %5457 = vmatmul.f32.gmra.mxu0 %v309
        %v5458 = vpop.f32.mrf.mxu0
        %v5459 = vadd.f32 %v5418, %v5458
        %5460 = vmatmul.f32.gmra.mxu0 %v312
        %v5461 = vpop.f32.mrf.mxu0
        %v5462 = vadd.f32 %v5421, %v5461
        %5463 = vdwg.mxu0
        %5464 = vmatpush.msra.mxu0 %v822
        %5465 = vmatpush.msra.mxu0 %v790
        %5466 = vmatpush.msra.mxu0 %v758
        %5467 = vmatpush.msra.mxu0 %v726
        %5468 = vmatpush.msra.mxu0 %v694
        %5469 = vmatpush.msra.mxu0 %v662
        %5470 = vmatpush.msra.mxu0 %v630
        %5471 = vmatpush.msra.mxu0 %v598
        %5472 = vmatpush.msra.mxu0 %v566
        %5473 = vmatpush.msra.mxu0 %v534
        %5474 = vmatpush.msra.mxu0 %v502
        %5475 = vmatpush.msra.mxu0 %v470
        %5476 = vmatpush.msra.mxu0 %v438
        %5477 = vmatpush.msra.mxu0 %v406
        %5478 = vmatpush.msra.mxu0 %v374
        %5479 = vmatpush.msra.mxu0 %v342
        %5480 = vmatmul.f32.gmra.mxu0 %v289
        %v5481 = vpop.f32.mrf.mxu0
        %v5482 = vadd.f32 %v1860, %v5481
        %5483 = vmatmul.f32.gmra.mxu0 %v292
        %v5484 = vpop.f32.mrf.mxu0
        %v5485 = vadd.f32 %v1865, %v5484
        %5486 = vmatmul.f32.gmra.mxu0 %v295
        %v5487 = vpop.f32.mrf.mxu0
        %v5488 = vadd.f32 %v1870, %v5487
        %5489 = vmatmul.f32.gmra.mxu0 %v298
        %v5490 = vpop.f32.mrf.mxu0
        %v5491 = vadd.f32 %v1875, %v5490
        %5492 = vmatmul.f32.gmra.mxu0 %v301
        %v5493 = vpop.f32.mrf.mxu0
        %v5494 = vadd.f32 %v1880, %v5493
        %5495 = vmatmul.f32.gmra.mxu0 %v304
        %v5496 = vpop.f32.mrf.mxu0
        %v5497 = vadd.f32 %v1885, %v5496
        %5498 = vmatmul.f32.gmra.mxu0 %v307
        %v5499 = vpop.f32.mrf.mxu0
        %v5500 = vadd.f32 %v1890, %v5499
        %5501 = vmatmul.f32.gmra.mxu0 %v310
        %v5502 = vpop.f32.mrf.mxu0
        %v5503 = vadd.f32 %v1895, %v5502
        %5504 = vdwg.mxu0
        %5505 = vmatpush.msra.mxu0 %v1334
        %5506 = vmatpush.msra.mxu0 %v1302
        %5507 = vmatpush.msra.mxu0 %v1270
        %5508 = vmatpush.msra.mxu0 %v1238
        %5509 = vmatpush.msra.mxu0 %v1206
        %5510 = vmatpush.msra.mxu0 %v1174
        %5511 = vmatpush.msra.mxu0 %v1142
        %5512 = vmatpush.msra.mxu0 %v1110
        %5513 = vmatpush.msra.mxu0 %v1078
        %5514 = vmatpush.msra.mxu0 %v1046
        %5515 = vmatpush.msra.mxu0 %v1014
        %5516 = vmatpush.msra.mxu0 %v982
        %5517 = vmatpush.msra.mxu0 %v950
        %5518 = vmatpush.msra.mxu0 %v918
        %5519 = vmatpush.msra.mxu0 %v886
        %5520 = vmatpush.msra.mxu0 %v854
        %5521 = vmatmul.f32.gmra.mxu0 %v290
        %v5522 = vpop.f32.mrf.mxu0
        %v5523 = vadd.f32 %v5482, %v5522
        %5524 = vmatmul.f32.gmra.mxu0 %v293
        %v5525 = vpop.f32.mrf.mxu0
        %v5526 = vadd.f32 %v5485, %v5525
        %5527 = vmatmul.f32.gmra.mxu0 %v296
        %v5528 = vpop.f32.mrf.mxu0
        %v5529 = vadd.f32 %v5488, %v5528
        %5530 = vmatmul.f32.gmra.mxu0 %v299
        %v5531 = vpop.f32.mrf.mxu0
        %v5532 = vadd.f32 %v5491, %v5531
        %5533 = vmatmul.f32.gmra.mxu0 %v302
        %v5534 = vpop.f32.mrf.mxu0
        %v5535 = vadd.f32 %v5494, %v5534
        %5536 = vmatmul.f32.gmra.mxu0 %v305
        %v5537 = vpop.f32.mrf.mxu0
        %v5538 = vadd.f32 %v5497, %v5537
        %5539 = vmatmul.f32.gmra.mxu0 %v308
        %v5540 = vpop.f32.mrf.mxu0
        %v5541 = vadd.f32 %v5500, %v5540
        %5542 = vmatmul.f32.gmra.mxu0 %v311
        %v5543 = vpop.f32.mrf.mxu0
        %v5544 = vadd.f32 %v5503, %v5543
        %5545 = vdwg.mxu0
        %5546 = vmatpush.msra.mxu0 %v1846
        %5547 = vmatpush.msra.mxu0 %v1814
        %5548 = vmatpush.msra.mxu0 %v1782
        %5549 = vmatpush.msra.mxu0 %v1750
        %5550 = vmatpush.msra.mxu0 %v1718
        %5551 = vmatpush.msra.mxu0 %v1686
        %5552 = vmatpush.msra.mxu0 %v1654
        %5553 = vmatpush.msra.mxu0 %v1622
        %5554 = vmatpush.msra.mxu0 %v1590
        %5555 = vmatpush.msra.mxu0 %v1558
        %5556 = vmatpush.msra.mxu0 %v1526
        %5557 = vmatpush.msra.mxu0 %v1494
        %5558 = vmatpush.msra.mxu0 %v1462
        %5559 = vmatpush.msra.mxu0 %v1430
        %5560 = vmatpush.msra.mxu0 %v1398
        %5561 = vmatpush.msra.mxu0 %v1366
        %5562 = vmatmul.f32.gmra.mxu0 %v291
        %v5563 = vpop.f32.mrf.mxu0
        %v5564 = vadd.f32 %v5523, %v5563
        %5565 = vmatmul.f32.gmra.mxu0 %v294
        %v5566 = vpop.f32.mrf.mxu0
        %v5567 = vadd.f32 %v5526, %v5566
        %5568 = vmatmul.f32.gmra.mxu0 %v297
        %v5569 = vpop.f32.mrf.mxu0
        %v5570 = vadd.f32 %v5529, %v5569
        %5571 = vmatmul.f32.gmra.mxu0 %v300
        %v5572 = vpop.f32.mrf.mxu0
        %v5573 = vadd.f32 %v5532, %v5572
        %5574 = vmatmul.f32.gmra.mxu0 %v303
        %v5575 = vpop.f32.mrf.mxu0
        %v5576 = vadd.f32 %v5535, %v5575
        %5577 = vmatmul.f32.gmra.mxu0 %v306
        %v5578 = vpop.f32.mrf.mxu0
        %v5579 = vadd.f32 %v5538, %v5578
        %5580 = vmatmul.f32.gmra.mxu0 %v309
        %v5581 = vpop.f32.mrf.mxu0
        %v5582 = vadd.f32 %v5541, %v5581
        %5583 = vmatmul.f32.gmra.mxu0 %v312
        %v5584 = vpop.f32.mrf.mxu0
        %v5585 = vadd.f32 %v5544, %v5584
        %5586 = vdwg.mxu0
        %5587 = vmatpush.msra.mxu0 %v823
        %5588 = vmatpush.msra.mxu0 %v791
        %5589 = vmatpush.msra.mxu0 %v759
        %5590 = vmatpush.msra.mxu0 %v727
        %5591 = vmatpush.msra.mxu0 %v695
        %5592 = vmatpush.msra.mxu0 %v663
        %5593 = vmatpush.msra.mxu0 %v631
        %5594 = vmatpush.msra.mxu0 %v599
        %5595 = vmatpush.msra.mxu0 %v567
        %5596 = vmatpush.msra.mxu0 %v535
        %5597 = vmatpush.msra.mxu0 %v503
        %5598 = vmatpush.msra.mxu0 %v471
        %5599 = vmatpush.msra.mxu0 %v439
        %5600 = vmatpush.msra.mxu0 %v407
        %5601 = vmatpush.msra.mxu0 %v375
        %5602 = vmatpush.msra.mxu0 %v343
        %5603 = vmatmul.f32.gmra.mxu0 %v289
        %v5604 = vpop.f32.mrf.mxu0
        %v5605 = vadd.f32 %v1860, %v5604
        %5606 = vmatmul.f32.gmra.mxu0 %v292
        %v5607 = vpop.f32.mrf.mxu0
        %v5608 = vadd.f32 %v1865, %v5607
        %5609 = vmatmul.f32.gmra.mxu0 %v295
        %v5610 = vpop.f32.mrf.mxu0
        %v5611 = vadd.f32 %v1870, %v5610
        %5612 = vmatmul.f32.gmra.mxu0 %v298
        %v5613 = vpop.f32.mrf.mxu0
        %v5614 = vadd.f32 %v1875, %v5613
        %5615 = vmatmul.f32.gmra.mxu0 %v301
        %v5616 = vpop.f32.mrf.mxu0
        %v5617 = vadd.f32 %v1880, %v5616
        %5618 = vmatmul.f32.gmra.mxu0 %v304
        %v5619 = vpop.f32.mrf.mxu0
        %v5620 = vadd.f32 %v1885, %v5619
        %5621 = vmatmul.f32.gmra.mxu0 %v307
        %v5622 = vpop.f32.mrf.mxu0
        %v5623 = vadd.f32 %v1890, %v5622
        %5624 = vmatmul.f32.gmra.mxu0 %v310
        %v5625 = vpop.f32.mrf.mxu0
        %v5626 = vadd.f32 %v1895, %v5625
        %5627 = vdwg.mxu0
        %5628 = vmatpush.msra.mxu0 %v1335
        %5629 = vmatpush.msra.mxu0 %v1303
        %5630 = vmatpush.msra.mxu0 %v1271
        %5631 = vmatpush.msra.mxu0 %v1239
        %5632 = vmatpush.msra.mxu0 %v1207
        %5633 = vmatpush.msra.mxu0 %v1175
        %5634 = vmatpush.msra.mxu0 %v1143
        %5635 = vmatpush.msra.mxu0 %v1111
        %5636 = vmatpush.msra.mxu0 %v1079
        %5637 = vmatpush.msra.mxu0 %v1047
        %5638 = vmatpush.msra.mxu0 %v1015
        %5639 = vmatpush.msra.mxu0 %v983
        %5640 = vmatpush.msra.mxu0 %v951
        %5641 = vmatpush.msra.mxu0 %v919
        %5642 = vmatpush.msra.mxu0 %v887
        %5643 = vmatpush.msra.mxu0 %v855
        %5644 = vmatmul.f32.gmra.mxu0 %v290
        %v5645 = vpop.f32.mrf.mxu0
        %v5646 = vadd.f32 %v5605, %v5645
        %5647 = vmatmul.f32.gmra.mxu0 %v293
        %v5648 = vpop.f32.mrf.mxu0
        %v5649 = vadd.f32 %v5608, %v5648
        %5650 = vmatmul.f32.gmra.mxu0 %v296
        %v5651 = vpop.f32.mrf.mxu0
        %v5652 = vadd.f32 %v5611, %v5651
        %5653 = vmatmul.f32.gmra.mxu0 %v299
        %v5654 = vpop.f32.mrf.mxu0
        %v5655 = vadd.f32 %v5614, %v5654
        %5656 = vmatmul.f32.gmra.mxu0 %v302
        %v5657 = vpop.f32.mrf.mxu0
        %v5658 = vadd.f32 %v5617, %v5657
        %5659 = vmatmul.f32.gmra.mxu0 %v305
        %v5660 = vpop.f32.mrf.mxu0
        %v5661 = vadd.f32 %v5620, %v5660
        %5662 = vmatmul.f32.gmra.mxu0 %v308
        %v5663 = vpop.f32.mrf.mxu0
        %v5664 = vadd.f32 %v5623, %v5663
        %5665 = vmatmul.f32.gmra.mxu0 %v311
        %v5666 = vpop.f32.mrf.mxu0
        %v5667 = vadd.f32 %v5626, %v5666
        %5668 = vdwg.mxu0
        %5669 = vmatpush.msra.mxu0 %v1847
        %5670 = vmatpush.msra.mxu0 %v1815
        %5671 = vmatpush.msra.mxu0 %v1783
        %5672 = vmatpush.msra.mxu0 %v1751
        %5673 = vmatpush.msra.mxu0 %v1719
        %5674 = vmatpush.msra.mxu0 %v1687
        %5675 = vmatpush.msra.mxu0 %v1655
        %5676 = vmatpush.msra.mxu0 %v1623
        %5677 = vmatpush.msra.mxu0 %v1591
        %5678 = vmatpush.msra.mxu0 %v1559
        %5679 = vmatpush.msra.mxu0 %v1527
        %5680 = vmatpush.msra.mxu0 %v1495
        %5681 = vmatpush.msra.mxu0 %v1463
        %5682 = vmatpush.msra.mxu0 %v1431
        %5683 = vmatpush.msra.mxu0 %v1399
        %5684 = vmatpush.msra.mxu0 %v1367
        %5685 = vmatmul.f32.gmra.mxu0 %v291
        %v5686 = vpop.f32.mrf.mxu0
        %v5687 = vadd.f32 %v5646, %v5686
        %5688 = vmatmul.f32.gmra.mxu0 %v294
        %v5689 = vpop.f32.mrf.mxu0
        %v5690 = vadd.f32 %v5649, %v5689
        %5691 = vmatmul.f32.gmra.mxu0 %v297
        %v5692 = vpop.f32.mrf.mxu0
        %v5693 = vadd.f32 %v5652, %v5692
        %5694 = vmatmul.f32.gmra.mxu0 %v300
        %v5695 = vpop.f32.mrf.mxu0
        %v5696 = vadd.f32 %v5655, %v5695
        %5697 = vmatmul.f32.gmra.mxu0 %v303
        %v5698 = vpop.f32.mrf.mxu0
        %v5699 = vadd.f32 %v5658, %v5698
        %5700 = vmatmul.f32.gmra.mxu0 %v306
        %v5701 = vpop.f32.mrf.mxu0
        %v5702 = vadd.f32 %v5661, %v5701
        %5703 = vmatmul.f32.gmra.mxu0 %v309
        %v5704 = vpop.f32.mrf.mxu0
        %v5705 = vadd.f32 %v5664, %v5704
        %5706 = vmatmul.f32.gmra.mxu0 %v312
        %v5707 = vpop.f32.mrf.mxu0
        %v5708 = vadd.f32 %v5667, %v5707
        %5709 = vdwg.mxu0
        %5710 = vmatpush.msra.mxu0 %v824
        %5711 = vmatpush.msra.mxu0 %v792
        %5712 = vmatpush.msra.mxu0 %v760
        %5713 = vmatpush.msra.mxu0 %v728
        %5714 = vmatpush.msra.mxu0 %v696
        %5715 = vmatpush.msra.mxu0 %v664
        %5716 = vmatpush.msra.mxu0 %v632
        %5717 = vmatpush.msra.mxu0 %v600
        %5718 = vmatpush.msra.mxu0 %v568
        %5719 = vmatpush.msra.mxu0 %v536
        %5720 = vmatpush.msra.mxu0 %v504
        %5721 = vmatpush.msra.mxu0 %v472
        %5722 = vmatpush.msra.mxu0 %v440
        %5723 = vmatpush.msra.mxu0 %v408
        %5724 = vmatpush.msra.mxu0 %v376
        %5725 = vmatpush.msra.mxu0 %v344
        %5726 = vmatmul.f32.gmra.mxu0 %v289
        %v5727 = vpop.f32.mrf.mxu0
        %v5728 = vadd.f32 %v1860, %v5727
        %5729 = vmatmul.f32.gmra.mxu0 %v292
        %v5730 = vpop.f32.mrf.mxu0
        %v5731 = vadd.f32 %v1865, %v5730
        %5732 = vmatmul.f32.gmra.mxu0 %v295
        %v5733 = vpop.f32.mrf.mxu0
        %v5734 = vadd.f32 %v1870, %v5733
        %5735 = vmatmul.f32.gmra.mxu0 %v298
        %v5736 = vpop.f32.mrf.mxu0
        %v5737 = vadd.f32 %v1875, %v5736
        %5738 = vmatmul.f32.gmra.mxu0 %v301
        %v5739 = vpop.f32.mrf.mxu0
        %v5740 = vadd.f32 %v1880, %v5739
        %5741 = vmatmul.f32.gmra.mxu0 %v304
        %v5742 = vpop.f32.mrf.mxu0
        %v5743 = vadd.f32 %v1885, %v5742
        %5744 = vmatmul.f32.gmra.mxu0 %v307
        %v5745 = vpop.f32.mrf.mxu0
        %v5746 = vadd.f32 %v1890, %v5745
        %5747 = vmatmul.f32.gmra.mxu0 %v310
        %v5748 = vpop.f32.mrf.mxu0
        %v5749 = vadd.f32 %v1895, %v5748
        %5750 = vdwg.mxu0
        %5751 = vmatpush.msra.mxu0 %v1336
        %5752 = vmatpush.msra.mxu0 %v1304
        %5753 = vmatpush.msra.mxu0 %v1272
        %5754 = vmatpush.msra.mxu0 %v1240
        %5755 = vmatpush.msra.mxu0 %v1208
        %5756 = vmatpush.msra.mxu0 %v1176
        %5757 = vmatpush.msra.mxu0 %v1144
        %5758 = vmatpush.msra.mxu0 %v1112
        %5759 = vmatpush.msra.mxu0 %v1080
        %5760 = vmatpush.msra.mxu0 %v1048
        %5761 = vmatpush.msra.mxu0 %v1016
        %5762 = vmatpush.msra.mxu0 %v984
        %5763 = vmatpush.msra.mxu0 %v952
        %5764 = vmatpush.msra.mxu0 %v920
        %5765 = vmatpush.msra.mxu0 %v888
        %5766 = vmatpush.msra.mxu0 %v856
        %5767 = vmatmul.f32.gmra.mxu0 %v290
        %v5768 = vpop.f32.mrf.mxu0
        %v5769 = vadd.f32 %v5728, %v5768
        %5770 = vmatmul.f32.gmra.mxu0 %v293
        %v5771 = vpop.f32.mrf.mxu0
        %v5772 = vadd.f32 %v5731, %v5771
        %5773 = vmatmul.f32.gmra.mxu0 %v296
        %v5774 = vpop.f32.mrf.mxu0
        %v5775 = vadd.f32 %v5734, %v5774
        %5776 = vmatmul.f32.gmra.mxu0 %v299
        %v5777 = vpop.f32.mrf.mxu0
        %v5778 = vadd.f32 %v5737, %v5777
        %5779 = vmatmul.f32.gmra.mxu0 %v302
        %v5780 = vpop.f32.mrf.mxu0
        %v5781 = vadd.f32 %v5740, %v5780
        %5782 = vmatmul.f32.gmra.mxu0 %v305
        %v5783 = vpop.f32.mrf.mxu0
        %v5784 = vadd.f32 %v5743, %v5783
        %5785 = vmatmul.f32.gmra.mxu0 %v308
        %v5786 = vpop.f32.mrf.mxu0
        %v5787 = vadd.f32 %v5746, %v5786
        %5788 = vmatmul.f32.gmra.mxu0 %v311
        %v5789 = vpop.f32.mrf.mxu0
        %v5790 = vadd.f32 %v5749, %v5789
        %5791 = vdwg.mxu0
        %5792 = vmatpush.msra.mxu0 %v1848
        %5793 = vmatpush.msra.mxu0 %v1816
        %5794 = vmatpush.msra.mxu0 %v1784
        %5795 = vmatpush.msra.mxu0 %v1752
        %5796 = vmatpush.msra.mxu0 %v1720
        %5797 = vmatpush.msra.mxu0 %v1688
        %5798 = vmatpush.msra.mxu0 %v1656
        %5799 = vmatpush.msra.mxu0 %v1624
        %5800 = vmatpush.msra.mxu0 %v1592
        %5801 = vmatpush.msra.mxu0 %v1560
        %5802 = vmatpush.msra.mxu0 %v1528
        %5803 = vmatpush.msra.mxu0 %v1496
        %5804 = vmatpush.msra.mxu0 %v1464
        %5805 = vmatpush.msra.mxu0 %v1432
        %5806 = vmatpush.msra.mxu0 %v1400
        %5807 = vmatpush.msra.mxu0 %v1368
        %5808 = vmatmul.f32.gmra.mxu0 %v291
        %v5809 = vpop.f32.mrf.mxu0
        %v5810 = vadd.f32 %v5769, %v5809
        %5811 = vmatmul.f32.gmra.mxu0 %v294
        %v5812 = vpop.f32.mrf.mxu0
        %v5813 = vadd.f32 %v5772, %v5812
        %5814 = vmatmul.f32.gmra.mxu0 %v297
        %v5815 = vpop.f32.mrf.mxu0
        %v5816 = vadd.f32 %v5775, %v5815
        %5817 = vmatmul.f32.gmra.mxu0 %v300
        %v5818 = vpop.f32.mrf.mxu0
        %v5819 = vadd.f32 %v5778, %v5818
        %5820 = vmatmul.f32.gmra.mxu0 %v303
        %v5821 = vpop.f32.mrf.mxu0
        %v5822 = vadd.f32 %v5781, %v5821
        %5823 = vmatmul.f32.gmra.mxu0 %v306
        %v5824 = vpop.f32.mrf.mxu0
        %v5825 = vadd.f32 %v5784, %v5824
        %5826 = vmatmul.f32.gmra.mxu0 %v309
        %v5827 = vpop.f32.mrf.mxu0
        %v5828 = vadd.f32 %v5787, %v5827
        %5829 = vmatmul.f32.gmra.mxu0 %v312
        %v5830 = vpop.f32.mrf.mxu0
        %v5831 = vadd.f32 %v5790, %v5830
        %5832 = vdwg.mxu0
        %v5833 = vmax.f32 %v1997, 0.0
        %v5834 = vmax.f32 %v2120, 0.0
        %v5835 = vmax.f32 %v2243, 0.0
        %v5836 = vmax.f32 %v2366, 0.0
        %v5837 = vmax.f32 %v2489, 0.0
        %v5838 = vmax.f32 %v2612, 0.0
        %v5839 = vmax.f32 %v2735, 0.0
        %v5840 = vmax.f32 %v2858, 0.0
        %v5841 = vmax.f32 %v2981, 0.0
        %v5842 = vmax.f32 %v3104, 0.0
        %v5843 = vmax.f32 %v3227, 0.0
        %v5844 = vmax.f32 %v3350, 0.0
        %v5845 = vmax.f32 %v3473, 0.0
        %v5846 = vmax.f32 %v3596, 0.0
        %v5847 = vmax.f32 %v3719, 0.0
        %v5848 = vmax.f32 %v3842, 0.0
        %v5849 = vmax.f32 %v3965, 0.0
        %v5850 = vmax.f32 %v4088, 0.0
        %v5851 = vmax.f32 %v4211, 0.0
        %v5852 = vmax.f32 %v4334, 0.0
        %v5853 = vmax.f32 %v4457, 0.0
        %v5854 = vmax.f32 %v4580, 0.0
        %v5855 = vmax.f32 %v4703, 0.0
        %v5856 = vmax.f32 %v4826, 0.0
        %v5857 = vmax.f32 %v4949, 0.0
        %v5858 = vmax.f32 %v5072, 0.0
        %v5859 = vmax.f32 %v5195, 0.0
        %v5860 = vmax.f32 %v5318, 0.0
        %v5861 = vmax.f32 %v5441, 0.0
        %v5862 = vmax.f32 %v5564, 0.0
        %v5863 = vmax.f32 %v5687, 0.0
        %v5864 = vmax.f32 %v5810, 0.0
        %v5865 = vmax.f32 %v2000, 0.0
        %v5866 = vmax.f32 %v2123, 0.0
        %v5867 = vmax.f32 %v2246, 0.0
        %v5868 = vmax.f32 %v2369, 0.0
        %v5869 = vmax.f32 %v2492, 0.0
        %v5870 = vmax.f32 %v2615, 0.0
        %v5871 = vmax.f32 %v2738, 0.0
        %v5872 = vmax.f32 %v2861, 0.0
        %v5873 = vmax.f32 %v2984, 0.0
        %v5874 = vmax.f32 %v3107, 0.0
        %v5875 = vmax.f32 %v3230, 0.0
        %v5876 = vmax.f32 %v3353, 0.0
        %v5877 = vmax.f32 %v3476, 0.0
        %v5878 = vmax.f32 %v3599, 0.0
        %v5879 = vmax.f32 %v3722, 0.0
        %v5880 = vmax.f32 %v3845, 0.0
        %v5881 = vmax.f32 %v3968, 0.0
        %v5882 = vmax.f32 %v4091, 0.0
        %v5883 = vmax.f32 %v4214, 0.0
        %v5884 = vmax.f32 %v4337, 0.0
        %v5885 = vmax.f32 %v4460, 0.0
        %v5886 = vmax.f32 %v4583, 0.0
        %v5887 = vmax.f32 %v4706, 0.0
        %v5888 = vmax.f32 %v4829, 0.0
        %v5889 = vmax.f32 %v4952, 0.0
        %v5890 = vmax.f32 %v5075, 0.0
        %v5891 = vmax.f32 %v5198, 0.0
        %v5892 = vmax.f32 %v5321, 0.0
        %v5893 = vmax.f32 %v5444, 0.0
        %v5894 = vmax.f32 %v5567, 0.0
        %v5895 = vmax.f32 %v5690, 0.0
        %v5896 = vmax.f32 %v5813, 0.0
        %v5897 = vmax.f32 %v2003, 0.0
        %v5898 = vmax.f32 %v2126, 0.0
        %v5899 = vmax.f32 %v2249, 0.0
        %v5900 = vmax.f32 %v2372, 0.0
        %v5901 = vmax.f32 %v2495, 0.0
        %v5902 = vmax.f32 %v2618, 0.0
        %v5903 = vmax.f32 %v2741, 0.0
        %v5904 = vmax.f32 %v2864, 0.0
        %v5905 = vmax.f32 %v2987, 0.0
        %v5906 = vmax.f32 %v3110, 0.0
        %v5907 = vmax.f32 %v3233, 0.0
        %v5908 = vmax.f32 %v3356, 0.0
        %v5909 = vmax.f32 %v3479, 0.0
        %v5910 = vmax.f32 %v3602, 0.0
        %v5911 = vmax.f32 %v3725, 0.0
        %v5912 = vmax.f32 %v3848, 0.0
        %v5913 = vmax.f32 %v3971, 0.0
        %v5914 = vmax.f32 %v4094, 0.0
        %v5915 = vmax.f32 %v4217, 0.0
        %v5916 = vmax.f32 %v4340, 0.0
        %v5917 = vmax.f32 %v4463, 0.0
        %v5918 = vmax.f32 %v4586, 0.0
        %v5919 = vmax.f32 %v4709, 0.0
        %v5920 = vmax.f32 %v4832, 0.0
        %v5921 = vmax.f32 %v4955, 0.0
        %v5922 = vmax.f32 %v5078, 0.0
        %v5923 = vmax.f32 %v5201, 0.0
        %v5924 = vmax.f32 %v5324, 0.0
        %v5925 = vmax.f32 %v5447, 0.0
        %v5926 = vmax.f32 %v5570, 0.0
        %v5927 = vmax.f32 %v5693, 0.0
        %v5928 = vmax.f32 %v5816, 0.0
        %v5929 = vmax.f32 %v2006, 0.0
        %v5930 = vmax.f32 %v2129, 0.0
        %v5931 = vmax.f32 %v2252, 0.0
        %v5932 = vmax.f32 %v2375, 0.0
        %v5933 = vmax.f32 %v2498, 0.0
        %v5934 = vmax.f32 %v2621, 0.0
        %v5935 = vmax.f32 %v2744, 0.0
        %v5936 = vmax.f32 %v2867, 0.0
        %v5937 = vmax.f32 %v2990, 0.0
        %v5938 = vmax.f32 %v3113, 0.0
        %v5939 = vmax.f32 %v3236, 0.0
        %v5940 = vmax.f32 %v3359, 0.0
        %v5941 = vmax.f32 %v3482, 0.0
        %v5942 = vmax.f32 %v3605, 0.0
        %v5943 = vmax.f32 %v3728, 0.0
        %v5944 = vmax.f32 %v3851, 0.0
        %v5945 = vmax.f32 %v3974, 0.0
        %v5946 = vmax.f32 %v4097, 0.0
        %v5947 = vmax.f32 %v4220, 0.0
        %v5948 = vmax.f32 %v4343, 0.0
        %v5949 = vmax.f32 %v4466, 0.0
        %v5950 = vmax.f32 %v4589, 0.0
        %v5951 = vmax.f32 %v4712, 0.0
        %v5952 = vmax.f32 %v4835, 0.0
        %v5953 = vmax.f32 %v4958, 0.0
        %v5954 = vmax.f32 %v5081, 0.0
        %v5955 = vmax.f32 %v5204, 0.0
        %v5956 = vmax.f32 %v5327, 0.0
        %v5957 = vmax.f32 %v5450, 0.0
        %v5958 = vmax.f32 %v5573, 0.0
        %v5959 = vmax.f32 %v5696, 0.0
        %v5960 = vmax.f32 %v5819, 0.0
        %v5961 = vmax.f32 %v2009, 0.0
        %v5962 = vmax.f32 %v2132, 0.0
        %v5963 = vmax.f32 %v2255, 0.0
        %v5964 = vmax.f32 %v2378, 0.0
        %v5965 = vmax.f32 %v2501, 0.0
        %v5966 = vmax.f32 %v2624, 0.0
        %v5967 = vmax.f32 %v2747, 0.0
        %v5968 = vmax.f32 %v2870, 0.0
        %v5969 = vmax.f32 %v2993, 0.0
        %v5970 = vmax.f32 %v3116, 0.0
        %v5971 = vmax.f32 %v3239, 0.0
        %v5972 = vmax.f32 %v3362, 0.0
        %v5973 = vmax.f32 %v3485, 0.0
        %v5974 = vmax.f32 %v3608, 0.0
        %v5975 = vmax.f32 %v3731, 0.0
        %v5976 = vmax.f32 %v3854, 0.0
        %v5977 = vmax.f32 %v3977, 0.0
        %v5978 = vmax.f32 %v4100, 0.0
        %v5979 = vmax.f32 %v4223, 0.0
        %v5980 = vmax.f32 %v4346, 0.0
        %v5981 = vmax.f32 %v4469, 0.0
        %v5982 = vmax.f32 %v4592, 0.0
        %v5983 = vmax.f32 %v4715, 0.0
        %v5984 = vmax.f32 %v4838, 0.0
        %v5985 = vmax.f32 %v4961, 0.0
        %v5986 = vmax.f32 %v5084, 0.0
        %v5987 = vmax.f32 %v5207, 0.0
        %v5988 = vmax.f32 %v5330, 0.0
        %v5989 = vmax.f32 %v5453, 0.0
        %v5990 = vmax.f32 %v5576, 0.0
        %v5991 = vmax.f32 %v5699, 0.0
        %v5992 = vmax.f32 %v5822, 0.0
        %v5993 = vmax.f32 %v2012, 0.0
        %v5994 = vmax.f32 %v2135, 0.0
        %v5995 = vmax.f32 %v2258, 0.0
        %v5996 = vmax.f32 %v2381, 0.0
        %v5997 = vmax.f32 %v2504, 0.0
        %v5998 = vmax.f32 %v2627, 0.0
        %v5999 = vmax.f32 %v2750, 0.0
        %v6000 = vmax.f32 %v2873, 0.0
        %v6001 = vmax.f32 %v2996, 0.0
        %v6002 = vmax.f32 %v3119, 0.0
        %v6003 = vmax.f32 %v3242, 0.0
        %v6004 = vmax.f32 %v3365, 0.0
        %v6005 = vmax.f32 %v3488, 0.0
        %v6006 = vmax.f32 %v3611, 0.0
        %v6007 = vmax.f32 %v3734, 0.0
        %v6008 = vmax.f32 %v3857, 0.0
        %v6009 = vmax.f32 %v3980, 0.0
        %v6010 = vmax.f32 %v4103, 0.0
        %v6011 = vmax.f32 %v4226, 0.0
        %v6012 = vmax.f32 %v4349, 0.0
        %v6013 = vmax.f32 %v4472, 0.0
        %v6014 = vmax.f32 %v4595, 0.0
        %v6015 = vmax.f32 %v4718, 0.0
        %v6016 = vmax.f32 %v4841, 0.0
        %v6017 = vmax.f32 %v4964, 0.0
        %v6018 = vmax.f32 %v5087, 0.0
        %v6019 = vmax.f32 %v5210, 0.0
        %v6020 = vmax.f32 %v5333, 0.0
        %v6021 = vmax.f32 %v5456, 0.0
        %v6022 = vmax.f32 %v5579, 0.0
        %v6023 = vmax.f32 %v5702, 0.0
        %v6024 = vmax.f32 %v5825, 0.0
        %v6025 = vmax.f32 %v2015, 0.0
        %v6026 = vmax.f32 %v2138, 0.0
        %v6027 = vmax.f32 %v2261, 0.0
        %v6028 = vmax.f32 %v2384, 0.0
        %v6029 = vmax.f32 %v2507, 0.0
        %v6030 = vmax.f32 %v2630, 0.0
        %v6031 = vmax.f32 %v2753, 0.0
        %v6032 = vmax.f32 %v2876, 0.0
        %v6033 = vmax.f32 %v2999, 0.0
        %v6034 = vmax.f32 %v3122, 0.0
        %v6035 = vmax.f32 %v3245, 0.0
        %v6036 = vmax.f32 %v3368, 0.0
        %v6037 = vmax.f32 %v3491, 0.0
        %v6038 = vmax.f32 %v3614, 0.0
        %v6039 = vmax.f32 %v3737, 0.0
        %v6040 = vmax.f32 %v3860, 0.0
        %v6041 = vmax.f32 %v3983, 0.0
        %v6042 = vmax.f32 %v4106, 0.0
        %v6043 = vmax.f32 %v4229, 0.0
        %v6044 = vmax.f32 %v4352, 0.0
        %v6045 = vmax.f32 %v4475, 0.0
        %v6046 = vmax.f32 %v4598, 0.0
        %v6047 = vmax.f32 %v4721, 0.0
        %v6048 = vmax.f32 %v4844, 0.0
        %v6049 = vmax.f32 %v4967, 0.0
        %v6050 = vmax.f32 %v5090, 0.0
        %v6051 = vmax.f32 %v5213, 0.0
        %v6052 = vmax.f32 %v5336, 0.0
        %v6053 = vmax.f32 %v5459, 0.0
        %v6054 = vmax.f32 %v5582, 0.0
        %v6055 = vmax.f32 %v5705, 0.0
        %v6056 = vmax.f32 %v5828, 0.0
        %v6057 = vmax.f32 %v2018, 0.0
        %v6058 = vmax.f32 %v2141, 0.0
        %v6059 = vmax.f32 %v2264, 0.0
        %v6060 = vmax.f32 %v2387, 0.0
        %v6061 = vmax.f32 %v2510, 0.0
        %v6062 = vmax.f32 %v2633, 0.0
        %v6063 = vmax.f32 %v2756, 0.0
        %v6064 = vmax.f32 %v2879, 0.0
        %v6065 = vmax.f32 %v3002, 0.0
        %v6066 = vmax.f32 %v3125, 0.0
        %v6067 = vmax.f32 %v3248, 0.0
        %v6068 = vmax.f32 %v3371, 0.0
        %v6069 = vmax.f32 %v3494, 0.0
        %v6070 = vmax.f32 %v3617, 0.0
        %v6071 = vmax.f32 %v3740, 0.0
        %v6072 = vmax.f32 %v3863, 0.0
        %v6073 = vmax.f32 %v3986, 0.0
        %v6074 = vmax.f32 %v4109, 0.0
        %v6075 = vmax.f32 %v4232, 0.0
        %v6076 = vmax.f32 %v4355, 0.0
        %v6077 = vmax.f32 %v4478, 0.0
        %v6078 = vmax.f32 %v4601, 0.0
        %v6079 = vmax.f32 %v4724, 0.0
        %v6080 = vmax.f32 %v4847, 0.0
        %v6081 = vmax.f32 %v4970, 0.0
        %v6082 = vmax.f32 %v5093, 0.0
        %v6083 = vmax.f32 %v5216, 0.0
        %v6084 = vmax.f32 %v5339, 0.0
        %v6085 = vmax.f32 %v5462, 0.0
        %v6086 = vmax.f32 %v5585, 0.0
        %v6087 = vmax.f32 %v5708, 0.0
        %v6088 = vmax.f32 %v5831, 0.0
        %v6089 = vld [vmem:[#allocation4] sm:$0x3f]
        %v6090 = vld [vmem:[%s4] sm:$0x3f]
        %6092 = vset.pattern.permute.xlu0 0
        %6093 = vperm.xlu0 %6092, %v6090
        %v6094 = vpop.permute.xlu0 %6093
        %vm6096 = vcmask 490496
        %v6098 = vsel %vm6096, %v6089, 0
        %vm6100 = vcmask 1043456
        %v6102 = vsel %vm6100, %v6057, 0
        %v6105 = vsel %vm6100, %v6058, 0
        %v6108 = vsel %vm6100, %v6059, 0
        %v6111 = vsel %vm6100, %v6060, 0
        %v6114 = vsel %vm6100, %v6061, 0
        %v6117 = vsel %vm6100, %v6062, 0
        %v6120 = vsel %vm6100, %v6063, 0
        %v6123 = vsel %vm6100, %v6064, 0
        %v6126 = vsel %vm6100, %v6065, 0
        %v6129 = vsel %vm6100, %v6066, 0
        %v6132 = vsel %vm6100, %v6067, 0
        %v6135 = vsel %vm6100, %v6068, 0
        %v6138 = vsel %vm6100, %v6069, 0
        %v6141 = vsel %vm6100, %v6070, 0
        %v6144 = vsel %vm6100, %v6071, 0
        %v6147 = vsel %vm6100, %v6072, 0
        %v6150 = vsel %vm6100, %v6073, 0
        %v6153 = vsel %vm6100, %v6074, 0
        %v6156 = vsel %vm6100, %v6075, 0
        %v6159 = vsel %vm6100, %v6076, 0
        %v6162 = vsel %vm6100, %v6077, 0
        %v6165 = vsel %vm6100, %v6078, 0
        %v6168 = vsel %vm6100, %v6079, 0
        %v6171 = vsel %vm6100, %v6080, 0
        %v6174 = vsel %vm6100, %v6081, 0
        %v6177 = vsel %vm6100, %v6082, 0
        %v6180 = vsel %vm6100, %v6083, 0
        %v6183 = vsel %vm6100, %v6084, 0
        %v6186 = vsel %vm6100, %v6085, 0
        %v6189 = vsel %vm6100, %v6086, 0
        %v6192 = vsel %vm6100, %v6087, 0
        %v6195 = vsel %vm6100, %v6088, 0
        %6197 = vmatpush.msra.mxu0 0.0
        %6198 = vmatpush.msra.mxu0 0.0
        %6199 = vmatpush.msra.mxu0 0.0
        %6200 = vmatpush.msra.mxu0 0.0
        %6201 = vmatpush.msra.mxu0 0.0
        %6202 = vmatpush.msra.mxu0 0.0
        %6203 = vmatpush.msra.mxu0 0.0
        %6204 = vmatpush.msra.mxu0 0.0
        %6205 = vmatpush.msra.mxu0 %v6102
        %6206 = vmatpush.msra.mxu0 %v6025
        %6207 = vmatpush.msra.mxu0 %v5993
        %6208 = vmatpush.msra.mxu0 %v5961
        %6209 = vmatpush.msra.mxu0 %v5929
        %6210 = vmatpush.msra.mxu0 %v5897
        %6211 = vmatpush.msra.mxu0 %v5865
        %6212 = vmatpush.msra.mxu0 %v5833
        %6213 = vmatmul.f32.gmra.mxu0 %v6098
        %v6214 = vpop.f32.mrf.mxu0
        %v6215 = vadd.f32 %v6094, %v6214
        %6216 = vdwg.mxu0
        %6217 = vmatpush.msra.mxu0 0.0
        %6218 = vmatpush.msra.mxu0 0.0
        %6219 = vmatpush.msra.mxu0 0.0
        %6220 = vmatpush.msra.mxu0 0.0
        %6221 = vmatpush.msra.mxu0 0.0
        %6222 = vmatpush.msra.mxu0 0.0
        %6223 = vmatpush.msra.mxu0 0.0
        %6224 = vmatpush.msra.mxu0 0.0
        %6225 = vmatpush.msra.mxu0 %v6105
        %6226 = vmatpush.msra.mxu0 %v6026
        %6227 = vmatpush.msra.mxu0 %v5994
        %6228 = vmatpush.msra.mxu0 %v5962
        %6229 = vmatpush.msra.mxu0 %v5930
        %6230 = vmatpush.msra.mxu0 %v5898
        %6231 = vmatpush.msra.mxu0 %v5866
        %6232 = vmatpush.msra.mxu0 %v5834
        %6233 = vmatmul.f32.gmra.mxu0 %v6098
        %v6234 = vpop.f32.mrf.mxu0
        %v6235 = vadd.f32 %v6094, %v6234
        %6236 = vdwg.mxu0
        %6237 = vmatpush.msra.mxu0 0.0
        %6238 = vmatpush.msra.mxu0 0.0
        %6239 = vmatpush.msra.mxu0 0.0
        %6240 = vmatpush.msra.mxu0 0.0
        %6241 = vmatpush.msra.mxu0 0.0
        %6242 = vmatpush.msra.mxu0 0.0
        %6243 = vmatpush.msra.mxu0 0.0
        %6244 = vmatpush.msra.mxu0 0.0
        %6245 = vmatpush.msra.mxu0 %v6108
        %6246 = vmatpush.msra.mxu0 %v6027
        %6247 = vmatpush.msra.mxu0 %v5995
        %6248 = vmatpush.msra.mxu0 %v5963
        %6249 = vmatpush.msra.mxu0 %v5931
        %6250 = vmatpush.msra.mxu0 %v5899
        %6251 = vmatpush.msra.mxu0 %v5867
        %6252 = vmatpush.msra.mxu0 %v5835
        %6253 = vmatmul.f32.gmra.mxu0 %v6098
        %v6254 = vpop.f32.mrf.mxu0
        %v6255 = vadd.f32 %v6094, %v6254
        %6256 = vdwg.mxu0
        %6257 = vmatpush.msra.mxu0 0.0
        %6258 = vmatpush.msra.mxu0 0.0
        %6259 = vmatpush.msra.mxu0 0.0
        %6260 = vmatpush.msra.mxu0 0.0
        %6261 = vmatpush.msra.mxu0 0.0
        %6262 = vmatpush.msra.mxu0 0.0
        %6263 = vmatpush.msra.mxu0 0.0
        %6264 = vmatpush.msra.mxu0 0.0
        %6265 = vmatpush.msra.mxu0 %v6111
        %6266 = vmatpush.msra.mxu0 %v6028
        %6267 = vmatpush.msra.mxu0 %v5996
        %6268 = vmatpush.msra.mxu0 %v5964
        %6269 = vmatpush.msra.mxu0 %v5932
        %6270 = vmatpush.msra.mxu0 %v5900
        %6271 = vmatpush.msra.mxu0 %v5868
        %6272 = vmatpush.msra.mxu0 %v5836
        %6273 = vmatmul.f32.gmra.mxu0 %v6098
        %v6274 = vpop.f32.mrf.mxu0
        %v6275 = vadd.f32 %v6094, %v6274
        %6276 = vdwg.mxu0
        %6277 = vmatpush.msra.mxu0 0.0
        %6278 = vmatpush.msra.mxu0 0.0
        %6279 = vmatpush.msra.mxu0 0.0
        %6280 = vmatpush.msra.mxu0 0.0
        %6281 = vmatpush.msra.mxu0 0.0
        %6282 = vmatpush.msra.mxu0 0.0
        %6283 = vmatpush.msra.mxu0 0.0
        %6284 = vmatpush.msra.mxu0 0.0
        %6285 = vmatpush.msra.mxu0 %v6114
        %6286 = vmatpush.msra.mxu0 %v6029
        %6287 = vmatpush.msra.mxu0 %v5997
        %6288 = vmatpush.msra.mxu0 %v5965
        %6289 = vmatpush.msra.mxu0 %v5933
        %6290 = vmatpush.msra.mxu0 %v5901
        %6291 = vmatpush.msra.mxu0 %v5869
        %6292 = vmatpush.msra.mxu0 %v5837
        %6293 = vmatmul.f32.gmra.mxu0 %v6098
        %v6294 = vpop.f32.mrf.mxu0
        %v6295 = vadd.f32 %v6094, %v6294
        %6296 = vdwg.mxu0
        %6297 = vmatpush.msra.mxu0 0.0
        %6298 = vmatpush.msra.mxu0 0.0
        %6299 = vmatpush.msra.mxu0 0.0
        %6300 = vmatpush.msra.mxu0 0.0
        %6301 = vmatpush.msra.mxu0 0.0
        %6302 = vmatpush.msra.mxu0 0.0
        %6303 = vmatpush.msra.mxu0 0.0
        %6304 = vmatpush.msra.mxu0 0.0
        %6305 = vmatpush.msra.mxu0 %v6117
        %6306 = vmatpush.msra.mxu0 %v6030
        %6307 = vmatpush.msra.mxu0 %v5998
        %6308 = vmatpush.msra.mxu0 %v5966
        %6309 = vmatpush.msra.mxu0 %v5934
        %6310 = vmatpush.msra.mxu0 %v5902
        %6311 = vmatpush.msra.mxu0 %v5870
        %6312 = vmatpush.msra.mxu0 %v5838
        %6313 = vmatmul.f32.gmra.mxu0 %v6098
        %v6314 = vpop.f32.mrf.mxu0
        %v6315 = vadd.f32 %v6094, %v6314
        %6316 = vdwg.mxu0
        %6317 = vmatpush.msra.mxu0 0.0
        %6318 = vmatpush.msra.mxu0 0.0
        %6319 = vmatpush.msra.mxu0 0.0
        %6320 = vmatpush.msra.mxu0 0.0
        %6321 = vmatpush.msra.mxu0 0.0
        %6322 = vmatpush.msra.mxu0 0.0
        %6323 = vmatpush.msra.mxu0 0.0
        %6324 = vmatpush.msra.mxu0 0.0
        %6325 = vmatpush.msra.mxu0 %v6120
        %6326 = vmatpush.msra.mxu0 %v6031
        %6327 = vmatpush.msra.mxu0 %v5999
        %6328 = vmatpush.msra.mxu0 %v5967
        %6329 = vmatpush.msra.mxu0 %v5935
        %6330 = vmatpush.msra.mxu0 %v5903
        %6331 = vmatpush.msra.mxu0 %v5871
        %6332 = vmatpush.msra.mxu0 %v5839
        %6333 = vmatmul.f32.gmra.mxu0 %v6098
        %v6334 = vpop.f32.mrf.mxu0
        %v6335 = vadd.f32 %v6094, %v6334
        %6336 = vdwg.mxu0
        %6337 = vmatpush.msra.mxu0 0.0
        %6338 = vmatpush.msra.mxu0 0.0
        %6339 = vmatpush.msra.mxu0 0.0
        %6340 = vmatpush.msra.mxu0 0.0
        %6341 = vmatpush.msra.mxu0 0.0
        %6342 = vmatpush.msra.mxu0 0.0
        %6343 = vmatpush.msra.mxu0 0.0
        %6344 = vmatpush.msra.mxu0 0.0
        %6345 = vmatpush.msra.mxu0 %v6123
        %6346 = vmatpush.msra.mxu0 %v6032
        %6347 = vmatpush.msra.mxu0 %v6000
        %6348 = vmatpush.msra.mxu0 %v5968
        %6349 = vmatpush.msra.mxu0 %v5936
        %6350 = vmatpush.msra.mxu0 %v5904
        %6351 = vmatpush.msra.mxu0 %v5872
        %6352 = vmatpush.msra.mxu0 %v5840
        %6353 = vmatmul.f32.gmra.mxu0 %v6098
        %v6354 = vpop.f32.mrf.mxu0
        %v6355 = vadd.f32 %v6094, %v6354
        %6356 = vdwg.mxu0
        %6357 = vmatpush.msra.mxu0 0.0
        %6358 = vmatpush.msra.mxu0 0.0
        %6359 = vmatpush.msra.mxu0 0.0
        %6360 = vmatpush.msra.mxu0 0.0
        %6361 = vmatpush.msra.mxu0 0.0
        %6362 = vmatpush.msra.mxu0 0.0
        %6363 = vmatpush.msra.mxu0 0.0
        %6364 = vmatpush.msra.mxu0 0.0
        %6365 = vmatpush.msra.mxu0 %v6126
        %6366 = vmatpush.msra.mxu0 %v6033
        %6367 = vmatpush.msra.mxu0 %v6001
        %6368 = vmatpush.msra.mxu0 %v5969
        %6369 = vmatpush.msra.mxu0 %v5937
        %6370 = vmatpush.msra.mxu0 %v5905
        %6371 = vmatpush.msra.mxu0 %v5873
        %6372 = vmatpush.msra.mxu0 %v5841
        %6373 = vmatmul.f32.gmra.mxu0 %v6098
        %v6374 = vpop.f32.mrf.mxu0
        %v6375 = vadd.f32 %v6094, %v6374
        %6376 = vdwg.mxu0
        %6377 = vmatpush.msra.mxu0 0.0
        %6378 = vmatpush.msra.mxu0 0.0
        %6379 = vmatpush.msra.mxu0 0.0
        %6380 = vmatpush.msra.mxu0 0.0
        %6381 = vmatpush.msra.mxu0 0.0
        %6382 = vmatpush.msra.mxu0 0.0
        %6383 = vmatpush.msra.mxu0 0.0
        %6384 = vmatpush.msra.mxu0 0.0
        %6385 = vmatpush.msra.mxu0 %v6129
        %6386 = vmatpush.msra.mxu0 %v6034
        %6387 = vmatpush.msra.mxu0 %v6002
        %6388 = vmatpush.msra.mxu0 %v5970
        %6389 = vmatpush.msra.mxu0 %v5938
        %6390 = vmatpush.msra.mxu0 %v5906
        %6391 = vmatpush.msra.mxu0 %v5874
        %6392 = vmatpush.msra.mxu0 %v5842
        %6393 = vmatmul.f32.gmra.mxu0 %v6098
        %v6394 = vpop.f32.mrf.mxu0
        %v6395 = vadd.f32 %v6094, %v6394
        %6396 = vdwg.mxu0
        %6397 = vmatpush.msra.mxu0 0.0
        %6398 = vmatpush.msra.mxu0 0.0
        %6399 = vmatpush.msra.mxu0 0.0
        %6400 = vmatpush.msra.mxu0 0.0
        %6401 = vmatpush.msra.mxu0 0.0
        %6402 = vmatpush.msra.mxu0 0.0
        %6403 = vmatpush.msra.mxu0 0.0
        %6404 = vmatpush.msra.mxu0 0.0
        %6405 = vmatpush.msra.mxu0 %v6132
        %6406 = vmatpush.msra.mxu0 %v6035
        %6407 = vmatpush.msra.mxu0 %v6003
        %6408 = vmatpush.msra.mxu0 %v5971
        %6409 = vmatpush.msra.mxu0 %v5939
        %6410 = vmatpush.msra.mxu0 %v5907
        %6411 = vmatpush.msra.mxu0 %v5875
        %6412 = vmatpush.msra.mxu0 %v5843
        %6413 = vmatmul.f32.gmra.mxu0 %v6098
        %v6414 = vpop.f32.mrf.mxu0
        %v6415 = vadd.f32 %v6094, %v6414
        %6416 = vdwg.mxu0
        %6417 = vmatpush.msra.mxu0 0.0
        %6418 = vmatpush.msra.mxu0 0.0
        %6419 = vmatpush.msra.mxu0 0.0
        %6420 = vmatpush.msra.mxu0 0.0
        %6421 = vmatpush.msra.mxu0 0.0
        %6422 = vmatpush.msra.mxu0 0.0
        %6423 = vmatpush.msra.mxu0 0.0
        %6424 = vmatpush.msra.mxu0 0.0
        %6425 = vmatpush.msra.mxu0 %v6135
        %6426 = vmatpush.msra.mxu0 %v6036
        %6427 = vmatpush.msra.mxu0 %v6004
        %6428 = vmatpush.msra.mxu0 %v5972
        %6429 = vmatpush.msra.mxu0 %v5940
        %6430 = vmatpush.msra.mxu0 %v5908
        %6431 = vmatpush.msra.mxu0 %v5876
        %6432 = vmatpush.msra.mxu0 %v5844
        %6433 = vmatmul.f32.gmra.mxu0 %v6098
        %v6434 = vpop.f32.mrf.mxu0
        %v6435 = vadd.f32 %v6094, %v6434
        %6436 = vdwg.mxu0
        %6437 = vmatpush.msra.mxu0 0.0
        %6438 = vmatpush.msra.mxu0 0.0
        %6439 = vmatpush.msra.mxu0 0.0
        %6440 = vmatpush.msra.mxu0 0.0
        %6441 = vmatpush.msra.mxu0 0.0
        %6442 = vmatpush.msra.mxu0 0.0
        %6443 = vmatpush.msra.mxu0 0.0
        %6444 = vmatpush.msra.mxu0 0.0
        %6445 = vmatpush.msra.mxu0 %v6138
        %6446 = vmatpush.msra.mxu0 %v6037
        %6447 = vmatpush.msra.mxu0 %v6005
        %6448 = vmatpush.msra.mxu0 %v5973
        %6449 = vmatpush.msra.mxu0 %v5941
        %6450 = vmatpush.msra.mxu0 %v5909
        %6451 = vmatpush.msra.mxu0 %v5877
        %6452 = vmatpush.msra.mxu0 %v5845
        %6453 = vmatmul.f32.gmra.mxu0 %v6098
        %v6454 = vpop.f32.mrf.mxu0
        %v6455 = vadd.f32 %v6094, %v6454
        %6456 = vdwg.mxu0
        %6457 = vmatpush.msra.mxu0 0.0
        %6458 = vmatpush.msra.mxu0 0.0
        %6459 = vmatpush.msra.mxu0 0.0
        %6460 = vmatpush.msra.mxu0 0.0
        %6461 = vmatpush.msra.mxu0 0.0
        %6462 = vmatpush.msra.mxu0 0.0
        %6463 = vmatpush.msra.mxu0 0.0
        %6464 = vmatpush.msra.mxu0 0.0
        %6465 = vmatpush.msra.mxu0 %v6141
        %6466 = vmatpush.msra.mxu0 %v6038
        %6467 = vmatpush.msra.mxu0 %v6006
        %6468 = vmatpush.msra.mxu0 %v5974
        %6469 = vmatpush.msra.mxu0 %v5942
        %6470 = vmatpush.msra.mxu0 %v5910
        %6471 = vmatpush.msra.mxu0 %v5878
        %6472 = vmatpush.msra.mxu0 %v5846
        %6473 = vmatmul.f32.gmra.mxu0 %v6098
        %v6474 = vpop.f32.mrf.mxu0
        %v6475 = vadd.f32 %v6094, %v6474
        %6476 = vdwg.mxu0
        %6477 = vmatpush.msra.mxu0 0.0
        %6478 = vmatpush.msra.mxu0 0.0
        %6479 = vmatpush.msra.mxu0 0.0
        %6480 = vmatpush.msra.mxu0 0.0
        %6481 = vmatpush.msra.mxu0 0.0
        %6482 = vmatpush.msra.mxu0 0.0
        %6483 = vmatpush.msra.mxu0 0.0
        %6484 = vmatpush.msra.mxu0 0.0
        %6485 = vmatpush.msra.mxu0 %v6144
        %6486 = vmatpush.msra.mxu0 %v6039
        %6487 = vmatpush.msra.mxu0 %v6007
        %6488 = vmatpush.msra.mxu0 %v5975
        %6489 = vmatpush.msra.mxu0 %v5943
        %6490 = vmatpush.msra.mxu0 %v5911
        %6491 = vmatpush.msra.mxu0 %v5879
        %6492 = vmatpush.msra.mxu0 %v5847
        %6493 = vmatmul.f32.gmra.mxu0 %v6098
        %v6494 = vpop.f32.mrf.mxu0
        %v6495 = vadd.f32 %v6094, %v6494
        %6496 = vdwg.mxu0
        %6497 = vmatpush.msra.mxu0 0.0
        %6498 = vmatpush.msra.mxu0 0.0
        %6499 = vmatpush.msra.mxu0 0.0
        %6500 = vmatpush.msra.mxu0 0.0
        %6501 = vmatpush.msra.mxu0 0.0
        %6502 = vmatpush.msra.mxu0 0.0
        %6503 = vmatpush.msra.mxu0 0.0
        %6504 = vmatpush.msra.mxu0 0.0
        %6505 = vmatpush.msra.mxu0 %v6147
        %6506 = vmatpush.msra.mxu0 %v6040
        %6507 = vmatpush.msra.mxu0 %v6008
        %6508 = vmatpush.msra.mxu0 %v5976
        %6509 = vmatpush.msra.mxu0 %v5944
        %6510 = vmatpush.msra.mxu0 %v5912
        %6511 = vmatpush.msra.mxu0 %v5880
        %6512 = vmatpush.msra.mxu0 %v5848
        %6513 = vmatmul.f32.gmra.mxu0 %v6098
        %v6514 = vpop.f32.mrf.mxu0
        %v6515 = vadd.f32 %v6094, %v6514
        %6516 = vdwg.mxu0
        %6517 = vmatpush.msra.mxu0 0.0
        %6518 = vmatpush.msra.mxu0 0.0
        %6519 = vmatpush.msra.mxu0 0.0
        %6520 = vmatpush.msra.mxu0 0.0
        %6521 = vmatpush.msra.mxu0 0.0
        %6522 = vmatpush.msra.mxu0 0.0
        %6523 = vmatpush.msra.mxu0 0.0
        %6524 = vmatpush.msra.mxu0 0.0
        %6525 = vmatpush.msra.mxu0 %v6150
        %6526 = vmatpush.msra.mxu0 %v6041
        %6527 = vmatpush.msra.mxu0 %v6009
        %6528 = vmatpush.msra.mxu0 %v5977
        %6529 = vmatpush.msra.mxu0 %v5945
        %6530 = vmatpush.msra.mxu0 %v5913
        %6531 = vmatpush.msra.mxu0 %v5881
        %6532 = vmatpush.msra.mxu0 %v5849
        %6533 = vmatmul.f32.gmra.mxu0 %v6098
        %v6534 = vpop.f32.mrf.mxu0
        %v6535 = vadd.f32 %v6094, %v6534
        %6536 = vdwg.mxu0
        %6537 = vmatpush.msra.mxu0 0.0
        %6538 = vmatpush.msra.mxu0 0.0
        %6539 = vmatpush.msra.mxu0 0.0
        %6540 = vmatpush.msra.mxu0 0.0
        %6541 = vmatpush.msra.mxu0 0.0
        %6542 = vmatpush.msra.mxu0 0.0
        %6543 = vmatpush.msra.mxu0 0.0
        %6544 = vmatpush.msra.mxu0 0.0
        %6545 = vmatpush.msra.mxu0 %v6153
        %6546 = vmatpush.msra.mxu0 %v6042
        %6547 = vmatpush.msra.mxu0 %v6010
        %6548 = vmatpush.msra.mxu0 %v5978
        %6549 = vmatpush.msra.mxu0 %v5946
        %6550 = vmatpush.msra.mxu0 %v5914
        %6551 = vmatpush.msra.mxu0 %v5882
        %6552 = vmatpush.msra.mxu0 %v5850
        %6553 = vmatmul.f32.gmra.mxu0 %v6098
        %v6554 = vpop.f32.mrf.mxu0
        %v6555 = vadd.f32 %v6094, %v6554
        %6556 = vdwg.mxu0
        %6557 = vmatpush.msra.mxu0 0.0
        %6558 = vmatpush.msra.mxu0 0.0
        %6559 = vmatpush.msra.mxu0 0.0
        %6560 = vmatpush.msra.mxu0 0.0
        %6561 = vmatpush.msra.mxu0 0.0
        %6562 = vmatpush.msra.mxu0 0.0
        %6563 = vmatpush.msra.mxu0 0.0
        %6564 = vmatpush.msra.mxu0 0.0
        %6565 = vmatpush.msra.mxu0 %v6156
        %6566 = vmatpush.msra.mxu0 %v6043
        %6567 = vmatpush.msra.mxu0 %v6011
        %6568 = vmatpush.msra.mxu0 %v5979
        %6569 = vmatpush.msra.mxu0 %v5947
        %6570 = vmatpush.msra.mxu0 %v5915
        %6571 = vmatpush.msra.mxu0 %v5883
        %6572 = vmatpush.msra.mxu0 %v5851
        %6573 = vmatmul.f32.gmra.mxu0 %v6098
        %v6574 = vpop.f32.mrf.mxu0
        %v6575 = vadd.f32 %v6094, %v6574
        %6576 = vdwg.mxu0
        %6577 = vmatpush.msra.mxu0 0.0
        %6578 = vmatpush.msra.mxu0 0.0
        %6579 = vmatpush.msra.mxu0 0.0
        %6580 = vmatpush.msra.mxu0 0.0
        %6581 = vmatpush.msra.mxu0 0.0
        %6582 = vmatpush.msra.mxu0 0.0
        %6583 = vmatpush.msra.mxu0 0.0
        %6584 = vmatpush.msra.mxu0 0.0
        %6585 = vmatpush.msra.mxu0 %v6159
        %6586 = vmatpush.msra.mxu0 %v6044
        %6587 = vmatpush.msra.mxu0 %v6012
        %6588 = vmatpush.msra.mxu0 %v5980
        %6589 = vmatpush.msra.mxu0 %v5948
        %6590 = vmatpush.msra.mxu0 %v5916
        %6591 = vmatpush.msra.mxu0 %v5884
        %6592 = vmatpush.msra.mxu0 %v5852
        %6593 = vmatmul.f32.gmra.mxu0 %v6098
        %v6594 = vpop.f32.mrf.mxu0
        %v6595 = vadd.f32 %v6094, %v6594
        %6596 = vdwg.mxu0
        %6597 = vmatpush.msra.mxu0 0.0
        %6598 = vmatpush.msra.mxu0 0.0
        %6599 = vmatpush.msra.mxu0 0.0
        %6600 = vmatpush.msra.mxu0 0.0
        %6601 = vmatpush.msra.mxu0 0.0
        %6602 = vmatpush.msra.mxu0 0.0
        %6603 = vmatpush.msra.mxu0 0.0
        %6604 = vmatpush.msra.mxu0 0.0
        %6605 = vmatpush.msra.mxu0 %v6162
        %6606 = vmatpush.msra.mxu0 %v6045
        %6607 = vmatpush.msra.mxu0 %v6013
        %6608 = vmatpush.msra.mxu0 %v5981
        %6609 = vmatpush.msra.mxu0 %v5949
        %6610 = vmatpush.msra.mxu0 %v5917
        %6611 = vmatpush.msra.mxu0 %v5885
        %6612 = vmatpush.msra.mxu0 %v5853
        %6613 = vmatmul.f32.gmra.mxu0 %v6098
        %v6614 = vpop.f32.mrf.mxu0
        %v6615 = vadd.f32 %v6094, %v6614
        %6616 = vdwg.mxu0
        %6617 = vmatpush.msra.mxu0 0.0
        %6618 = vmatpush.msra.mxu0 0.0
        %6619 = vmatpush.msra.mxu0 0.0
        %6620 = vmatpush.msra.mxu0 0.0
        %6621 = vmatpush.msra.mxu0 0.0
        %6622 = vmatpush.msra.mxu0 0.0
        %6623 = vmatpush.msra.mxu0 0.0
        %6624 = vmatpush.msra.mxu0 0.0
        %6625 = vmatpush.msra.mxu0 %v6165
        %6626 = vmatpush.msra.mxu0 %v6046
        %6627 = vmatpush.msra.mxu0 %v6014
        %6628 = vmatpush.msra.mxu0 %v5982
        %6629 = vmatpush.msra.mxu0 %v5950
        %6630 = vmatpush.msra.mxu0 %v5918
        %6631 = vmatpush.msra.mxu0 %v5886
        %6632 = vmatpush.msra.mxu0 %v5854
        %6633 = vmatmul.f32.gmra.mxu0 %v6098
        %v6634 = vpop.f32.mrf.mxu0
        %v6635 = vadd.f32 %v6094, %v6634
        %6636 = vdwg.mxu0
        %6637 = vmatpush.msra.mxu0 0.0
        %6638 = vmatpush.msra.mxu0 0.0
        %6639 = vmatpush.msra.mxu0 0.0
        %6640 = vmatpush.msra.mxu0 0.0
        %6641 = vmatpush.msra.mxu0 0.0
        %6642 = vmatpush.msra.mxu0 0.0
        %6643 = vmatpush.msra.mxu0 0.0
        %6644 = vmatpush.msra.mxu0 0.0
        %6645 = vmatpush.msra.mxu0 %v6168
        %6646 = vmatpush.msra.mxu0 %v6047
        %6647 = vmatpush.msra.mxu0 %v6015
        %6648 = vmatpush.msra.mxu0 %v5983
        %6649 = vmatpush.msra.mxu0 %v5951
        %6650 = vmatpush.msra.mxu0 %v5919
        %6651 = vmatpush.msra.mxu0 %v5887
        %6652 = vmatpush.msra.mxu0 %v5855
        %6653 = vmatmul.f32.gmra.mxu0 %v6098
        %v6654 = vpop.f32.mrf.mxu0
        %v6655 = vadd.f32 %v6094, %v6654
        %6656 = vdwg.mxu0
        %6657 = vmatpush.msra.mxu0 0.0
        %6658 = vmatpush.msra.mxu0 0.0
        %6659 = vmatpush.msra.mxu0 0.0
        %6660 = vmatpush.msra.mxu0 0.0
        %6661 = vmatpush.msra.mxu0 0.0
        %6662 = vmatpush.msra.mxu0 0.0
        %6663 = vmatpush.msra.mxu0 0.0
        %6664 = vmatpush.msra.mxu0 0.0
        %6665 = vmatpush.msra.mxu0 %v6171
        %6666 = vmatpush.msra.mxu0 %v6048
        %6667 = vmatpush.msra.mxu0 %v6016
        %6668 = vmatpush.msra.mxu0 %v5984
        %6669 = vmatpush.msra.mxu0 %v5952
        %6670 = vmatpush.msra.mxu0 %v5920
        %6671 = vmatpush.msra.mxu0 %v5888
        %6672 = vmatpush.msra.mxu0 %v5856
        %6673 = vmatmul.f32.gmra.mxu0 %v6098
        %v6674 = vpop.f32.mrf.mxu0
        %v6675 = vadd.f32 %v6094, %v6674
        %6676 = vdwg.mxu0
        %6677 = vmatpush.msra.mxu0 0.0
        %6678 = vmatpush.msra.mxu0 0.0
        %6679 = vmatpush.msra.mxu0 0.0
        %6680 = vmatpush.msra.mxu0 0.0
        %6681 = vmatpush.msra.mxu0 0.0
        %6682 = vmatpush.msra.mxu0 0.0
        %6683 = vmatpush.msra.mxu0 0.0
        %6684 = vmatpush.msra.mxu0 0.0
        %6685 = vmatpush.msra.mxu0 %v6174
        %6686 = vmatpush.msra.mxu0 %v6049
        %6687 = vmatpush.msra.mxu0 %v6017
        %6688 = vmatpush.msra.mxu0 %v5985
        %6689 = vmatpush.msra.mxu0 %v5953
        %6690 = vmatpush.msra.mxu0 %v5921
        %6691 = vmatpush.msra.mxu0 %v5889
        %6692 = vmatpush.msra.mxu0 %v5857
        %6693 = vmatmul.f32.gmra.mxu0 %v6098
        %v6694 = vpop.f32.mrf.mxu0
        %v6695 = vadd.f32 %v6094, %v6694
        %6696 = vdwg.mxu0
        %6697 = vmatpush.msra.mxu0 0.0
        %6698 = vmatpush.msra.mxu0 0.0
        %6699 = vmatpush.msra.mxu0 0.0
        %6700 = vmatpush.msra.mxu0 0.0
        %6701 = vmatpush.msra.mxu0 0.0
        %6702 = vmatpush.msra.mxu0 0.0
        %6703 = vmatpush.msra.mxu0 0.0
        %6704 = vmatpush.msra.mxu0 0.0
        %6705 = vmatpush.msra.mxu0 %v6177
        %6706 = vmatpush.msra.mxu0 %v6050
        %6707 = vmatpush.msra.mxu0 %v6018
        %6708 = vmatpush.msra.mxu0 %v5986
        %6709 = vmatpush.msra.mxu0 %v5954
        %6710 = vmatpush.msra.mxu0 %v5922
        %6711 = vmatpush.msra.mxu0 %v5890
        %6712 = vmatpush.msra.mxu0 %v5858
        %6713 = vmatmul.f32.gmra.mxu0 %v6098
        %v6714 = vpop.f32.mrf.mxu0
        %v6715 = vadd.f32 %v6094, %v6714
        %6716 = vdwg.mxu0
        %6717 = vmatpush.msra.mxu0 0.0
        %6718 = vmatpush.msra.mxu0 0.0
        %6719 = vmatpush.msra.mxu0 0.0
        %6720 = vmatpush.msra.mxu0 0.0
        %6721 = vmatpush.msra.mxu0 0.0
        %6722 = vmatpush.msra.mxu0 0.0
        %6723 = vmatpush.msra.mxu0 0.0
        %6724 = vmatpush.msra.mxu0 0.0
        %6725 = vmatpush.msra.mxu0 %v6180
        %6726 = vmatpush.msra.mxu0 %v6051
        %6727 = vmatpush.msra.mxu0 %v6019
        %6728 = vmatpush.msra.mxu0 %v5987
        %6729 = vmatpush.msra.mxu0 %v5955
        %6730 = vmatpush.msra.mxu0 %v5923
        %6731 = vmatpush.msra.mxu0 %v5891
        %6732 = vmatpush.msra.mxu0 %v5859
        %6733 = vmatmul.f32.gmra.mxu0 %v6098
        %v6734 = vpop.f32.mrf.mxu0
        %v6735 = vadd.f32 %v6094, %v6734
        %6736 = vdwg.mxu0
        %6737 = vmatpush.msra.mxu0 0.0
        %6738 = vmatpush.msra.mxu0 0.0
        %6739 = vmatpush.msra.mxu0 0.0
        %6740 = vmatpush.msra.mxu0 0.0
        %6741 = vmatpush.msra.mxu0 0.0
        %6742 = vmatpush.msra.mxu0 0.0
        %6743 = vmatpush.msra.mxu0 0.0
        %6744 = vmatpush.msra.mxu0 0.0
        %6745 = vmatpush.msra.mxu0 %v6183
        %6746 = vmatpush.msra.mxu0 %v6052
        %6747 = vmatpush.msra.mxu0 %v6020
        %6748 = vmatpush.msra.mxu0 %v5988
        %6749 = vmatpush.msra.mxu0 %v5956
        %6750 = vmatpush.msra.mxu0 %v5924
        %6751 = vmatpush.msra.mxu0 %v5892
        %6752 = vmatpush.msra.mxu0 %v5860
        %6753 = vmatmul.f32.gmra.mxu0 %v6098
        %v6754 = vpop.f32.mrf.mxu0
        %v6755 = vadd.f32 %v6094, %v6754
        %6756 = vdwg.mxu0
        %6757 = vmatpush.msra.mxu0 0.0
        %6758 = vmatpush.msra.mxu0 0.0
        %6759 = vmatpush.msra.mxu0 0.0
        %6760 = vmatpush.msra.mxu0 0.0
        %6761 = vmatpush.msra.mxu0 0.0
        %6762 = vmatpush.msra.mxu0 0.0
        %6763 = vmatpush.msra.mxu0 0.0
        %6764 = vmatpush.msra.mxu0 0.0
        %6765 = vmatpush.msra.mxu0 %v6186
        %6766 = vmatpush.msra.mxu0 %v6053
        %6767 = vmatpush.msra.mxu0 %v6021
        %6768 = vmatpush.msra.mxu0 %v5989
        %6769 = vmatpush.msra.mxu0 %v5957
        %6770 = vmatpush.msra.mxu0 %v5925
        %6771 = vmatpush.msra.mxu0 %v5893
        %6772 = vmatpush.msra.mxu0 %v5861
        %6773 = vmatmul.f32.gmra.mxu0 %v6098
        %v6774 = vpop.f32.mrf.mxu0
        %v6775 = vadd.f32 %v6094, %v6774
        %6776 = vdwg.mxu0
        %6777 = vmatpush.msra.mxu0 0.0
        %6778 = vmatpush.msra.mxu0 0.0
        %6779 = vmatpush.msra.mxu0 0.0
        %6780 = vmatpush.msra.mxu0 0.0
        %6781 = vmatpush.msra.mxu0 0.0
        %6782 = vmatpush.msra.mxu0 0.0
        %6783 = vmatpush.msra.mxu0 0.0
        %6784 = vmatpush.msra.mxu0 0.0
        %6785 = vmatpush.msra.mxu0 %v6189
        %6786 = vmatpush.msra.mxu0 %v6054
        %6787 = vmatpush.msra.mxu0 %v6022
        %6788 = vmatpush.msra.mxu0 %v5990
        %6789 = vmatpush.msra.mxu0 %v5958
        %6790 = vmatpush.msra.mxu0 %v5926
        %6791 = vmatpush.msra.mxu0 %v5894
        %6792 = vmatpush.msra.mxu0 %v5862
        %6793 = vmatmul.f32.gmra.mxu0 %v6098
        %v6794 = vpop.f32.mrf.mxu0
        %v6795 = vadd.f32 %v6094, %v6794
        %6796 = vdwg.mxu0
        %6797 = vmatpush.msra.mxu0 0.0
        %6798 = vmatpush.msra.mxu0 0.0
        %6799 = vmatpush.msra.mxu0 0.0
        %6800 = vmatpush.msra.mxu0 0.0
        %6801 = vmatpush.msra.mxu0 0.0
        %6802 = vmatpush.msra.mxu0 0.0
        %6803 = vmatpush.msra.mxu0 0.0
        %6804 = vmatpush.msra.mxu0 0.0
        %6805 = vmatpush.msra.mxu0 %v6192
        %6806 = vmatpush.msra.mxu0 %v6055
        %6807 = vmatpush.msra.mxu0 %v6023
        %6808 = vmatpush.msra.mxu0 %v5991
        %6809 = vmatpush.msra.mxu0 %v5959
        %6810 = vmatpush.msra.mxu0 %v5927
        %6811 = vmatpush.msra.mxu0 %v5895
        %6812 = vmatpush.msra.mxu0 %v5863
        %6813 = vmatmul.f32.gmra.mxu0 %v6098
        %v6814 = vpop.f32.mrf.mxu0
        %v6815 = vadd.f32 %v6094, %v6814
        %6816 = vdwg.mxu0
        %6817 = vmatpush.msra.mxu0 0.0
        %6818 = vmatpush.msra.mxu0 0.0
        %6819 = vmatpush.msra.mxu0 0.0
        %6820 = vmatpush.msra.mxu0 0.0
        %6821 = vmatpush.msra.mxu0 0.0
        %6822 = vmatpush.msra.mxu0 0.0
        %6823 = vmatpush.msra.mxu0 0.0
        %6824 = vmatpush.msra.mxu0 0.0
        %6825 = vmatpush.msra.mxu0 %v6195
        %6826 = vmatpush.msra.mxu0 %v6056
        %6827 = vmatpush.msra.mxu0 %v6024
        %6828 = vmatpush.msra.mxu0 %v5992
        %6829 = vmatpush.msra.mxu0 %v5960
        %6830 = vmatpush.msra.mxu0 %v5928
        %6831 = vmatpush.msra.mxu0 %v5896
        %6832 = vmatpush.msra.mxu0 %v5864
        %6833 = vmatmul.f32.gmra.mxu0 %v6098
        %v6834 = vpop.f32.mrf.mxu0
        %v6835 = vadd.f32 %v6094, %v6834
        %6836 = vdwg.mxu0
        %6837 = vst [vmem:[%s287] sm:$0x3f] %v6215
        %6838 = vst [vmem:[%s287 + $0x8] sm:$0x3f] %v6235
        %6839 = vst [vmem:[%s287 + $0x10] sm:$0x3f] %v6255
        %6840 = vst [vmem:[%s287 + $0x18] sm:$0x3f] %v6275
        %6841 = vst [vmem:[%s287 + $0x20] sm:$0x3f] %v6295
        %6842 = vst [vmem:[%s287 + $0x28] sm:$0x3f] %v6315
        %6843 = vst [vmem:[%s287 + $0x30] sm:$0x3f] %v6335
        %6844 = vst [vmem:[%s287 + $0x38] sm:$0x3f] %v6355
        %6845 = vst [vmem:[%s287 + $0x40] sm:$0x3f] %v6375
        %6846 = vst [vmem:[%s287 + $0x48] sm:$0x3f] %v6395
        %6847 = vst [vmem:[%s287 + $0x50] sm:$0x3f] %v6415
        %6848 = vst [vmem:[%s287 + $0x58] sm:$0x3f] %v6435
        %6849 = vst [vmem:[%s287 + $0x60] sm:$0x3f] %v6455
        %6850 = vst [vmem:[%s287 + $0x68] sm:$0x3f] %v6475
        %6851 = vst [vmem:[%s287 + $0x70] sm:$0x3f] %v6495
        %6852 = vst [vmem:[%s287 + $0x78] sm:$0x3f] %v6515
        %6853 = vst [vmem:[%s287 + $0x80] sm:$0x3f] %v6535
        %6854 = vst [vmem:[%s287 + $0x88] sm:$0x3f] %v6555
        %6855 = vst [vmem:[%s287 + $0x90] sm:$0x3f] %v6575
        %6856 = vst [vmem:[%s287 + $0x98] sm:$0x3f] %v6595
        %6857 = vst [vmem:[%s287 + $0xa0] sm:$0x3f] %v6615
        %6858 = vst [vmem:[%s287 + $0xa8] sm:$0x3f] %v6635
        %6859 = vst [vmem:[%s287 + $0xb0] sm:$0x3f] %v6655
        %6860 = vst [vmem:[%s287 + $0xb8] sm:$0x3f] %v6675
        %6861 = vst [vmem:[%s287 + $0xc0] sm:$0x3f] %v6695
        %6862 = vst [vmem:[%s287 + $0xc8] sm:$0x3f] %v6715
        %6863 = vst [vmem:[%s287 + $0xd0] sm:$0x3f] %v6735
        %6864 = vst [vmem:[%s287 + $0xd8] sm:$0x3f] %v6755
        %6865 = vst [vmem:[%s287 + $0xe0] sm:$0x3f] %v6775
        %6866 = vst [vmem:[%s287 + $0xe8] sm:$0x3f] %v6795
        %6867 = vst [vmem:[%s287 + $0xf0] sm:$0x3f] %v6815
        %6868 = vst [vmem:[%s287 + $0xf8] sm:$0x3f] %v6835
        %s6869 = smul.u32 32, %s22
        %p6870 = scmp.lt.s32.totalorder %s23, 1
        %s6871 = scalar_select %p6870, %s23, 1
        %p6872 = scmp.lt.s32.totalorder %s6869, 31
        %s6873 = scalar_select %p6872, %s6869, 31
        %s6874 = smul.addr %s6871, 32
        %s6875 = sadd.s32 %s6873, %s6874
        %s6876 = smul.addr %s6875, 8
        %s6877 = scalar_lea.vmem %s5, %s6876
        // Predicated region
        $region49: #{final_stage_forward.2} parent=39 // pred_check
          %p6878 = pneg %p165
        $region50: #{final_stage_forward.2} parent=39 // pred_check_branch
          %6880 = sbr.rel (%p6878) target = $region52
        $region51: #{final_stage_forward.2} parent=39 // pred_region
          %s6881 = smul.u32 32, %s22
        $region52: #{final_stage_forward.2} parent=39 // pred_fallthru
          _
      $region40: #{final_stage_forward.2} parent=5 // pred_fallthru
        _
      %p6882 = scmp.le.s32.totalorder 2, %s13
      // Predicated region
      $region53: #{final_stage_forward.2} parent=5 // pred_check
        %p6883 = pneg %p6882
      $region54: #{final_stage_forward.2} parent=5 // pred_check_branch
        %6885 = sbr.rel (%p6883) target = $region56
      $region55: #{final_stage_forward.2} parent=5 // pred_region
        %s6886 = ssub.s32 %s13, 2
        // Predicated region
        $region57: #{final_stage_forward.2} parent=55 // pred_check
          %p6887 = pneg %p171
        $region58: #{final_stage_forward.2} parent=55 // pred_check_branch
          %6889 = sbr.rel (%p6887) target = $region60
        $region59: #{final_stage_forward.2} parent=55 // pred_region
          %s6890 = smul.u32 32, %s24
          %p6891 = scmp.lt.s32.totalorder %s25, 1
          %s6892 = scalar_select %p6891, %s25, 1
          %p6893 = scmp.lt.s32.totalorder %s6890, 31
          %s6894 = scalar_select %p6893, %s6890, 31
          %s6895 = smul.addr %s6892, 32
          %s6896 = sadd.s32 %s6894, %s6895
          %s6897 = smul.addr %s6896, 8
          %s6898 = scalar_lea.vmem %s5, %s6897
        $region60: #{final_stage_forward.2} parent=55 // pred_fallthru
          _
      $region56: #{final_stage_forward.2} parent=5 // pred_fallthru
        _
    $region6: #{final_stage_forward.2} parent=1 // loop_footer
      %s17 = sadd.s32 1, %s13
    $region7: #{final_stage_forward.2} parent=1 // loop_footer_branch
      %12 = sbr.rel target = $region3
    $region8: #{final_stage_forward.2} parent=1 // loop_exit
      _
    %6899 = vsyncpa [#allocation3], 1
    %s6900 = scalar_lea.sflag [#allocation3], 1
    %6901 = vsyncpa %s6900, 1
    %6902 = vsyncpa [#allocation5], 1

</llo_original>
